<compile_context>
chip_gen: v7x
topology: tpu7x:2x2x1
jax: 0.10.0
libtpu: 0.0.40
codegen_flags: <defaults>
</compile_context>

<pallas_src>
import jax
import jax.numpy as jnp
from jax.experimental import pallas as pl
from jax.experimental.pallas import tpu as pltpu


HID = 256
FEAT = 4096           # lane-aligned feature width (depth column handled separately)


# ----------------------------------------------------------------------------
# Fused spatial-graph + temporal-transformer + classifier kernel
# (one batch element per grid step).
# ----------------------------------------------------------------------------
def _layer_norm(x, gamma, beta, eps=1e-5):
    mu = jnp.mean(x, axis=-1, keepdims=True)
    var = jnp.mean((x - mu) * (x - mu), axis=-1, keepdims=True)
    return (x - mu) * jax.lax.rsqrt(var + eps) * gamma + beta


def _fused_kernel(feat_ref, depth_ref, w1_ref, w1d_ref, b1_ref, adj_ref, pool_ref,
                  wqkv_ref, bqkv_ref, wo_ref, bo_ref, g1_ref, be1_ref,
                  wf1_ref, bf1_ref, wf2_ref, bf2_ref, g2_ref, be2_ref,
                  wc_ref, bc_ref, probs_ref):
    # ---- Spatial encoder: all T*N nodes of this batch in ONE MXU matmul ----
    feat = feat_ref[0]                                                    # (TN, FEAT) bf16
    h = jnp.dot(feat, w1_ref[...], preferred_element_type=jnp.float32)    # (TN, H) f32
    # Rank-1 depth column (4097th input feature) + bias, on the VPU.
    h = h + depth_ref[0] * w1d_ref[...] + b1_ref[...]
    # NOTE: padded node rows (if any) also receive b1; the block-diagonal
    # adj/pool matrices have zero rows/columns for them, so padding never
    # leaks into real nodes or the pooled mean.
    # Residual + neighbor-mean fused: adj_ref already holds (I + A_mean).
    g = jnp.maximum(jnp.dot(adj_ref[...], h, preferred_element_type=jnp.float32), 0.0)
    s = jnp.dot(pool_ref[...], g, preferred_element_type=jnp.float32)     # (T, H) per-frame pool

    # ---- Temporal transformer block (single-head, post-norm) ----
    hdim = s.shape[-1]
    s_b = s.astype(jnp.bfloat16)
    qkv = jnp.dot(s_b, wqkv_ref[...],
                  preferred_element_type=jnp.float32) + bqkv_ref[...]     # (T, 3H)
    q = qkv[:, :hdim].astype(jnp.bfloat16)
    k = qkv[:, hdim:2 * hdim].astype(jnp.bfloat16)
    v = qkv[:, 2 * hdim:].astype(jnp.bfloat16)
    # scores = q @ k^T without an explicit transpose (contract on last dims).
    scores = jax.lax.dot_general(q, k, (((1,), (1,)), ((), ())),
                                 preferred_element_type=jnp.float32)
    scores = scores * (1.0 / jnp.sqrt(float(hdim)))
    scores = scores - jnp.max(scores, axis=-1, keepdims=True)
    p = jnp.exp(scores)
    p = p * pl.reciprocal(jnp.sum(p, axis=-1, keepdims=True), approx=True)
    attn = jnp.dot(p.astype(jnp.bfloat16), v,
                   preferred_element_type=jnp.float32)                    # (T, H)
    attn = jnp.dot(attn.astype(jnp.bfloat16), wo_ref[...],
                   preferred_element_type=jnp.float32) + bo_ref[...]
    x1 = _layer_norm(s + attn, g1_ref[...], be1_ref[...])
    # Feed-forward.
    f = jnp.dot(x1.astype(jnp.bfloat16), wf1_ref[...],
                preferred_element_type=jnp.float32) + bf1_ref[...]
    f = jnp.maximum(f, 0.0)
    f = jnp.dot(f.astype(jnp.bfloat16), wf2_ref[...],
                preferred_element_type=jnp.float32) + bf2_ref[...]
    x2 = _layer_norm(x1 + f, g2_ref[...], be2_ref[...])                   # temporal_out

    # ---- Classifier + sigmoid (dropout is identity at eval) ----
    logits = jnp.dot(x2, wc_ref[...], preferred_element_type=jnp.float32) + bc_ref[...]
    probs = jax.nn.sigmoid(logits)                                        # (T, 1)
    probs_ref[0] = jnp.broadcast_to(probs, probs_ref.shape[1:])           # lane-dense write


def fused_forward(feat, depth, params, adj, pool):
    b, tn_pad, _ = feat.shape
    t = pool.shape[0]
    hid = HID

    def full(shape):
        return pl.BlockSpec(shape, lambda i, _s=shape: tuple(0 for _ in _s))

    probs_wide = pl.pallas_call(
        _fused_kernel,
        out_shape=jax.ShapeDtypeStruct((b, t, 128), jnp.float32),
        grid=(b,),
        in_specs=[
            pl.BlockSpec((1, tn_pad, FEAT), lambda i: (i, 0, 0)),   # features (bf16)
            pl.BlockSpec((1, tn_pad, 1), lambda i: (i, 0, 0)),      # depths   (f32)
            full((FEAT, hid)), full((1, hid)), full((1, hid)),      # w1, w1_depth, b1
            full((tn_pad, tn_pad)), full((t, tn_pad)),              # I+adj (block-diag), pool
            full((hid, 3 * hid)), full((1, 3 * hid)),               # wqkv, bqkv
            full((hid, hid)), full((1, hid)),                       # wo, bo
            full((1, hid)), full((1, hid)),                         # ln1 gamma, beta
            full((hid, 2 * hid)), full((1, 2 * hid)),               # wf1, bf1
            full((2 * hid, hid)), full((1, hid)),                   # wf2, bf2
            full((1, hid)), full((1, hid)),                         # ln2 gamma, beta
            full((hid, 1)), full((1, 1)),                           # classifier w, b
        ],
        out_specs=pl.BlockSpec((1, t, 128), lambda i: (i, 0, 0)),
        compiler_params=pltpu.CompilerParams(
            dimension_semantics=("parallel",)),                     # 1 batch / core on v7x
    )(feat, depth,
      params["w1"], params["w1d"], params["b1"], adj, pool,
      params["wqkv"], params["bqkv"], params["wo"], params["bo"],
      params["g1"], params["be1"],
      params["wf1"], params["bf1"], params["wf2"], params["bf2"],
      params["g2"], params["be2"],
      params["wc"], params["bc"])
    return probs_wide[:, :, 0]                                      # (B, T)


# ----------------------------------------------------------------------------
# Parameters and graph auxiliary matrices
# ----------------------------------------------------------------------------
def init_params(key):
    ks = jax.random.split(key, 8)
    sc = 0.02
    p = {}
    # Spatial encoder Linear(4097 -> 256): split the depth (last) input row out.
    w1_full = jax.random.normal(ks[0], (FEAT + 1, HID), jnp.float32) * (1.0 / jnp.sqrt(FEAT + 1))
    p["w1"] = w1_full[:FEAT].astype(jnp.bfloat16)        # (4096, 256) bf16 MXU operand
    p["w1d"] = w1_full[FEAT:FEAT + 1]                    # (1, 256) f32 depth row
    p["b1"] = jnp.zeros((1, HID), jnp.float32)
    # Temporal transformer block (fused QKV weight).
    wq = jax.random.normal(ks[1], (HID, HID), jnp.float32) * sc
    wk = jax.random.normal(ks[2], (HID, HID), jnp.float32) * sc
    wv = jax.random.normal(ks[3], (HID, HID), jnp.float32) * sc
    p["wqkv"] = jnp.concatenate([wq, wk, wv], axis=1).astype(jnp.bfloat16)   # (256, 768)
    p["bqkv"] = jnp.zeros((1, 3 * HID), jnp.float32)
    p["wo"] = (jax.random.normal(ks[4], (HID, HID), jnp.float32) * sc).astype(jnp.bfloat16)
    p["bo"] = jnp.zeros((1, HID), jnp.float32)
    p["g1"] = jnp.ones((1, HID), jnp.float32)
    p["be1"] = jnp.zeros((1, HID), jnp.float32)
    p["wf1"] = (jax.random.normal(ks[5], (HID, 2 * HID), jnp.float32) * sc).astype(jnp.bfloat16)
    p["bf1"] = jnp.zeros((1, 2 * HID), jnp.float32)
    p["wf2"] = (jax.random.normal(ks[6], (2 * HID, HID), jnp.float32) * sc).astype(jnp.bfloat16)
    p["bf2"] = jnp.zeros((1, HID), jnp.float32)
    p["g2"] = jnp.ones((1, HID), jnp.float32)
    p["be2"] = jnp.zeros((1, HID), jnp.float32)
    # Classifier Linear(256, 1).
    p["wc"] = jax.random.normal(ks[7], (HID, 1), jnp.float32) * sc
    p["bc"] = jnp.zeros((1, 1), jnp.float32)
    return p


def graph_aux(n_obj, t):
    """Block-diagonal (I + neighbor-mean) and per-frame mean-pool matrices over T*N nodes."""
    tn = t * n_obj
    tn_pad = ((tn + 7) // 8) * 8                       # sublane multiple
    eye_n = jnp.eye(n_obj, dtype=jnp.float32)
    # Fully-connected graph (torch.combinations + reversed edges), no self-loop.
    frame_adj = (1.0 - eye_n) * (1.0 / max(n_obj - 1, 1))
    adj = jnp.kron(jnp.eye(t, dtype=jnp.float32), frame_adj)              # (tn, tn)
    adj_plus = adj + jnp.eye(tn, dtype=jnp.float32)                       # fold residual h + msg
    adj_plus = jnp.pad(adj_plus, ((0, tn_pad - tn), (0, tn_pad - tn)))
    pool = jnp.kron(jnp.eye(t, dtype=jnp.float32),
                    jnp.full((1, n_obj), 1.0 / n_obj, jnp.float32))       # (t, tn)
    pool = jnp.pad(pool, ((0, 0), (0, tn_pad - tn)))
    return adj_plus, pool


# ----------------------------------------------------------------------------
# Full model wrapper
# ----------------------------------------------------------------------------
@jax.jit
def forward(object_features, object_depths, params, adj, pool):
    # object_features: (B, T, N, 4096), object_depths: (B, T, N, 1)
    b, t, n, _ = object_features.shape
    tn = t * n
    tn_pad = adj.shape[0]
    feat = object_features.reshape(b, tn, FEAT)
    depth = object_depths.reshape(b, tn, 1)
    if tn_pad != tn:                                   # static-shape pad (none for T=8, N=4)
        feat = jnp.pad(feat, ((0, 0), (0, tn_pad - tn), (0, 0)))
        depth = jnp.pad(depth, ((0, 0), (0, tn_pad - tn), (0, 0)))
    feat = feat.astype(jnp.bfloat16)                   # bf16 MXU operand, half HBM traffic
    depth = depth.astype(jnp.float32)
    probs = fused_forward(feat, depth, params, adj, pool)        # (B, T)
    # Dropout is identity at inference -> second MC pass identical -> zero gap.
    uncertainty = jnp.zeros_like(probs)
    return probs, uncertainty


if __name__ == "__main__":
    key = jax.random.PRNGKey(0)
    k_feat, k_depth, k_param = jax.random.split(key, 3)

    B, T, N = 2, 8, 4
    object_features = jax.random.normal(k_feat, (B, T, N, FEAT), jnp.float32) * 0.05
    object_depths = jax.random.normal(k_depth, (B, T, N, 1), jnp.float32)

    params = init_params(k_param)
    adj, pool = graph_aux(N, T)

    probs, uncertainty = forward(object_features, object_depths, params, adj, pool)
    probs = jax.block_until_ready(probs)
    uncertainty = jax.block_until_ready(uncertainty)

    assert probs.shape == (B, T) and uncertainty.shape == (B, T)
    assert bool(jnp.all(jnp.isfinite(probs)))
    assert bool(jnp.all((probs >= 0.0) & (probs <= 1.0)))
    assert bool(jnp.all(uncertainty == 0.0))
    print("KERNEL_OK")
</pallas_src>

<mosaic_0001>
module attributes {stable_mosaic.version = 11 : i64} {
  func.func @_fused_kernel(%arg0: i32, %arg1: memref<1x32x4096xbf16, #tpu.memory_space<vmem>>, %arg2: memref<1x32x1xf32, #tpu.memory_space<vmem>>, %arg3: memref<4096x256xbf16, #tpu.memory_space<vmem>>, %arg4: memref<1x256xf32, #tpu.memory_space<vmem>>, %arg5: memref<1x256xf32, #tpu.memory_space<vmem>>, %arg6: memref<32x32xf32, #tpu.memory_space<vmem>>, %arg7: memref<8x32xf32, #tpu.memory_space<vmem>>, %arg8: memref<256x768xbf16, #tpu.memory_space<vmem>>, %arg9: memref<1x768xf32, #tpu.memory_space<vmem>>, %arg10: memref<256x256xbf16, #tpu.memory_space<vmem>>, %arg11: memref<1x256xf32, #tpu.memory_space<vmem>>, %arg12: memref<1x256xf32, #tpu.memory_space<vmem>>, %arg13: memref<1x256xf32, #tpu.memory_space<vmem>>, %arg14: memref<256x512xbf16, #tpu.memory_space<vmem>>, %arg15: memref<1x512xf32, #tpu.memory_space<vmem>>, %arg16: memref<512x256xbf16, #tpu.memory_space<vmem>>, %arg17: memref<1x256xf32, #tpu.memory_space<vmem>>, %arg18: memref<1x256xf32, #tpu.memory_space<vmem>>, %arg19: memref<1x256xf32, #tpu.memory_space<vmem>>, %arg20: memref<256x1xf32, #tpu.memory_space<vmem>>, %arg21: memref<1x1xf32, #tpu.memory_space<vmem>>, %arg22: memref<1x8x128xf32, #tpu.memory_space<vmem>>) attributes {dimension_semantics = [#tpu.dimension_semantics<parallel>], iteration_bounds = array<i64: 2>, scalar_prefetch = 0 : i64, scratch_operands = 0 : i64, tpu.core_type = #tpu.core_type<tc>, window_params = [{transform_indices = @transform_0, window_bounds = array<i64: 1, 32, 4096>}, {transform_indices = @transform_1, window_bounds = array<i64: 1, 32, 1>}, {pipeline_mode = #tpu.pipeline_mode<synchronous>, transform_indices = @transform_2, window_bounds = array<i64: 4096, 256>}, {pipeline_mode = #tpu.pipeline_mode<synchronous>, transform_indices = @transform_3, window_bounds = array<i64: 1, 256>}, {pipeline_mode = #tpu.pipeline_mode<synchronous>, transform_indices = @transform_4, window_bounds = array<i64: 1, 256>}, {pipeline_mode = #tpu.pipeline_mode<synchronous>, transform_indices = @transform_5, window_bounds = array<i64: 32, 32>}, {pipeline_mode = #tpu.pipeline_mode<synchronous>, transform_indices = @transform_6, window_bounds = array<i64: 8, 32>}, {pipeline_mode = #tpu.pipeline_mode<synchronous>, transform_indices = @transform_7, window_bounds = array<i64: 256, 768>}, {pipeline_mode = #tpu.pipeline_mode<synchronous>, transform_indices = @transform_8, window_bounds = array<i64: 1, 768>}, {pipeline_mode = #tpu.pipeline_mode<synchronous>, transform_indices = @transform_9, window_bounds = array<i64: 256, 256>}, {pipeline_mode = #tpu.pipeline_mode<synchronous>, transform_indices = @transform_10, window_bounds = array<i64: 1, 256>}, {pipeline_mode = #tpu.pipeline_mode<synchronous>, transform_indices = @transform_11, window_bounds = array<i64: 1, 256>}, {pipeline_mode = #tpu.pipeline_mode<synchronous>, transform_indices = @transform_12, window_bounds = array<i64: 1, 256>}, {pipeline_mode = #tpu.pipeline_mode<synchronous>, transform_indices = @transform_13, window_bounds = array<i64: 256, 512>}, {pipeline_mode = #tpu.pipeline_mode<synchronous>, transform_indices = @transform_14, window_bounds = array<i64: 1, 512>}, {pipeline_mode = #tpu.pipeline_mode<synchronous>, transform_indices = @transform_15, window_bounds = array<i64: 512, 256>}, {pipeline_mode = #tpu.pipeline_mode<synchronous>, transform_indices = @transform_16, window_bounds = array<i64: 1, 256>}, {pipeline_mode = #tpu.pipeline_mode<synchronous>, transform_indices = @transform_17, window_bounds = array<i64: 1, 256>}, {pipeline_mode = #tpu.pipeline_mode<synchronous>, transform_indices = @transform_18, window_bounds = array<i64: 1, 256>}, {pipeline_mode = #tpu.pipeline_mode<synchronous>, transform_indices = @transform_19, window_bounds = array<i64: 256, 1>}, {pipeline_mode = #tpu.pipeline_mode<synchronous>, transform_indices = @transform_20, window_bounds = array<i64: 1, 1>}, {transform_indices = @transform_21, window_bounds = array<i64: 1, 8, 128>}]} {
    %c0 = arith.constant 0 : index
    %c0_0 = arith.constant 0 : index
    %c0_1 = arith.constant 0 : index
    %0 = vector.load %arg1[%c0, %c0_0, %c0_1] : memref<1x32x4096xbf16, #tpu.memory_space<vmem>>, vector<1x32x4096xbf16>
    %1 = vector.shape_cast %0 : vector<1x32x4096xbf16> to vector<32x4096xbf16>
    %c0_2 = arith.constant 0 : index
    %c0_3 = arith.constant 0 : index
    %2 = vector.load %arg3[%c0_2, %c0_3] : memref<4096x256xbf16, #tpu.memory_space<vmem>>, vector<4096x256xbf16>
    %cst = arith.constant dense<0.000000e+00> : vector<32x256xf32>
    %3 = tpu.matmul %1, %2, %cst {dimension_numbers = #tpu.dot_dimension_numbers<[1], [0], [0], [1], [0, 0, 1, 1], [], []>} : vector<32x4096xbf16>, vector<4096x256xbf16>, vector<32x256xf32> -> vector<32x256xf32>
    %c0_4 = arith.constant 0 : index
    %c0_5 = arith.constant 0 : index
    %c0_6 = arith.constant 0 : index
    %4 = vector.load %arg2[%c0_4, %c0_5, %c0_6] : memref<1x32x1xf32, #tpu.memory_space<vmem>>, vector<1x32x1xf32>
    %5 = vector.shape_cast %4 : vector<1x32x1xf32> to vector<32x1xf32>
    %c0_7 = arith.constant 0 : index
    %c0_8 = arith.constant 0 : index
    %6 = vector.load %arg4[%c0_7, %c0_8] : memref<1x256xf32, #tpu.memory_space<vmem>>, vector<1x256xf32>
    %7 = vector.broadcast %5 : vector<32x1xf32> to vector<32x256xf32>
    %8 = vector.broadcast %6 : vector<1x256xf32> to vector<32x256xf32>
    %9 = arith.mulf %7, %8 : vector<32x256xf32>
    %10 = arith.addf %3, %9 : vector<32x256xf32>
    %c0_9 = arith.constant 0 : index
    %c0_10 = arith.constant 0 : index
    %11 = vector.load %arg5[%c0_9, %c0_10] : memref<1x256xf32, #tpu.memory_space<vmem>>, vector<1x256xf32>
    %12 = vector.broadcast %11 : vector<1x256xf32> to vector<32x256xf32>
    %13 = arith.addf %10, %12 : vector<32x256xf32>
    %c0_11 = arith.constant 0 : index
    %c0_12 = arith.constant 0 : index
    %14 = vector.load %arg6[%c0_11, %c0_12] : memref<32x32xf32, #tpu.memory_space<vmem>>, vector<32x32xf32>
    %cst_13 = arith.constant dense<0.000000e+00> : vector<32x256xf32>
    %15 = tpu.matmul %14, %13, %cst_13 {dimension_numbers = #tpu.dot_dimension_numbers<[1], [0], [0], [1], [0, 0, 1, 1], [], []>} : vector<32x32xf32>, vector<32x256xf32>, vector<32x256xf32> -> vector<32x256xf32>
    %cst_14 = arith.constant 0.000000e+00 : f32
    %16 = vector.broadcast %cst_14 : f32 to vector<32x256xf32>
    %17 = arith.maximumf %15, %16 : vector<32x256xf32>
    %c0_15 = arith.constant 0 : index
    %c0_16 = arith.constant 0 : index
    %18 = vector.load %arg7[%c0_15, %c0_16] : memref<8x32xf32, #tpu.memory_space<vmem>>, vector<8x32xf32>
    %cst_17 = arith.constant dense<0.000000e+00> : vector<8x256xf32>
    %19 = tpu.matmul %18, %17, %cst_17 {dimension_numbers = #tpu.dot_dimension_numbers<[1], [0], [0], [1], [0, 0, 1, 1], [], []>} : vector<8x32xf32>, vector<32x256xf32>, vector<8x256xf32> -> vector<8x256xf32>
    %20 = arith.truncf %19 : vector<8x256xf32> to vector<8x256xbf16>
    %c0_18 = arith.constant 0 : index
    %c0_19 = arith.constant 0 : index
    %21 = vector.load %arg8[%c0_18, %c0_19] : memref<256x768xbf16, #tpu.memory_space<vmem>>, vector<256x768xbf16>
    %cst_20 = arith.constant dense<0.000000e+00> : vector<8x768xf32>
    %22 = tpu.matmul %20, %21, %cst_20 {dimension_numbers = #tpu.dot_dimension_numbers<[1], [0], [0], [1], [0, 0, 1, 1], [], []>} : vector<8x256xbf16>, vector<256x768xbf16>, vector<8x768xf32> -> vector<8x768xf32>
    %c0_21 = arith.constant 0 : index
    %c0_22 = arith.constant 0 : index
    %23 = vector.load %arg9[%c0_21, %c0_22] : memref<1x768xf32, #tpu.memory_space<vmem>>, vector<1x768xf32>
    %24 = vector.broadcast %23 : vector<1x768xf32> to vector<8x768xf32>
    %25 = arith.addf %22, %24 : vector<8x768xf32>
    %26 = vector.extract_strided_slice %25 {offsets = [0, 0], sizes = [8, 256], strides = [1, 1]} : vector<8x768xf32> to vector<8x256xf32>
    %27 = arith.truncf %26 : vector<8x256xf32> to vector<8x256xbf16>
    %28 = vector.extract_strided_slice %25 {offsets = [0, 256], sizes = [8, 256], strides = [1, 1]} : vector<8x768xf32> to vector<8x256xf32>
    %29 = arith.truncf %28 : vector<8x256xf32> to vector<8x256xbf16>
    %30 = vector.extract_strided_slice %25 {offsets = [0, 512], sizes = [8, 256], strides = [1, 1]} : vector<8x768xf32> to vector<8x256xf32>
    %31 = arith.truncf %30 : vector<8x256xf32> to vector<8x256xbf16>
    %cst_23 = arith.constant dense<0.000000e+00> : vector<8x8xf32>
    %32 = tpu.matmul %27, %29, %cst_23 {dimension_numbers = #tpu.dot_dimension_numbers<[1], [1], [0], [0], [0, 0, 1, 0], [], []>} : vector<8x256xbf16>, vector<8x256xbf16>, vector<8x8xf32> -> vector<8x8xf32>
    %cst_24 = arith.constant 2.560000e+02 : f32
    %33 = math.sqrt %cst_24 : f32
    %cst_25 = arith.constant 1.000000e+00 : f32
    %34 = arith.divf %cst_25, %33 : f32
    %35 = vector.broadcast %34 : f32 to vector<8x8xf32>
    %36 = arith.mulf %32, %35 : vector<8x8xf32>
    %cst_26 = arith.constant dense<0xFF800000> : vector<8xf32>
    %37 = vector.multi_reduction <maximumf>, %36, %cst_26 [1] : vector<8x8xf32> to vector<8xf32>
    %38 = vector.shape_cast %37 : vector<8xf32> to vector<8x1xf32>
    %39 = vector.broadcast %38 : vector<8x1xf32> to vector<8x8xf32>
    %40 = arith.subf %36, %39 : vector<8x8xf32>
    %41 = math.exp %40 : vector<8x8xf32>
    %cst_27 = arith.constant dense<0.000000e+00> : vector<8xf32>
    %42 = vector.multi_reduction <add>, %41, %cst_27 [1] : vector<8x8xf32> to vector<8xf32>
    %43 = vector.shape_cast %42 : vector<8xf32> to vector<8x1xf32>
    %44 = tpu.reciprocal %43 {approx = true} : vector<8x1xf32> -> vector<8x1xf32>
    %45 = vector.broadcast %44 : vector<8x1xf32> to vector<8x8xf32>
    %46 = arith.mulf %41, %45 : vector<8x8xf32>
    %47 = arith.truncf %46 : vector<8x8xf32> to vector<8x8xbf16>
    %cst_28 = arith.constant dense<0.000000e+00> : vector<8x256xf32>
    %48 = tpu.matmul %47, %31, %cst_28 {dimension_numbers = #tpu.dot_dimension_numbers<[1], [0], [0], [1], [0, 0, 1, 1], [], []>} : vector<8x8xbf16>, vector<8x256xbf16>, vector<8x256xf32> -> vector<8x256xf32>
    %49 = arith.truncf %48 : vector<8x256xf32> to vector<8x256xbf16>
    %c0_29 = arith.constant 0 : index
    %c0_30 = arith.constant 0 : index
    %50 = vector.load %arg10[%c0_29, %c0_30] : memref<256x256xbf16, #tpu.memory_space<vmem>>, vector<256x256xbf16>
    %cst_31 = arith.constant dense<0.000000e+00> : vector<8x256xf32>
    %51 = tpu.matmul %49, %50, %cst_31 {dimension_numbers = #tpu.dot_dimension_numbers<[1], [0], [0], [1], [0, 0, 1, 1], [], []>} : vector<8x256xbf16>, vector<256x256xbf16>, vector<8x256xf32> -> vector<8x256xf32>
    %c0_32 = arith.constant 0 : index
    %c0_33 = arith.constant 0 : index
    %52 = vector.load %arg11[%c0_32, %c0_33] : memref<1x256xf32, #tpu.memory_space<vmem>>, vector<1x256xf32>
    %53 = vector.broadcast %52 : vector<1x256xf32> to vector<8x256xf32>
    %54 = arith.addf %51, %53 : vector<8x256xf32>
    %55 = arith.addf %19, %54 : vector<8x256xf32>
    %c0_34 = arith.constant 0 : index
    %c0_35 = arith.constant 0 : index
    %56 = vector.load %arg12[%c0_34, %c0_35] : memref<1x256xf32, #tpu.memory_space<vmem>>, vector<1x256xf32>
    %c0_36 = arith.constant 0 : index
    %c0_37 = arith.constant 0 : index
    %57 = vector.load %arg13[%c0_36, %c0_37] : memref<1x256xf32, #tpu.memory_space<vmem>>, vector<1x256xf32>
    %cst_38 = arith.constant dense<0.000000e+00> : vector<8xf32>
    %58 = vector.multi_reduction <add>, %55, %cst_38 [1] : vector<8x256xf32> to vector<8xf32>
    %59 = vector.shape_cast %58 : vector<8xf32> to vector<8x1xf32>
    %cst_39 = arith.constant 2.560000e+02 : f32
    %60 = vector.broadcast %cst_39 : f32 to vector<8x1xf32>
    %61 = arith.divf %59, %60 : vector<8x1xf32>
    %62 = vector.broadcast %61 : vector<8x1xf32> to vector<8x256xf32>
    %63 = arith.subf %55, %62 : vector<8x256xf32>
    %64 = vector.broadcast %61 : vector<8x1xf32> to vector<8x256xf32>
    %65 = arith.subf %55, %64 : vector<8x256xf32>
    %66 = arith.mulf %63, %65 : vector<8x256xf32>
    %cst_40 = arith.constant dense<0.000000e+00> : vector<8xf32>
    %67 = vector.multi_reduction <add>, %66, %cst_40 [1] : vector<8x256xf32> to vector<8xf32>
    %68 = vector.shape_cast %67 : vector<8xf32> to vector<8x1xf32>
    %cst_41 = arith.constant 2.560000e+02 : f32
    %69 = vector.broadcast %cst_41 : f32 to vector<8x1xf32>
    %70 = arith.divf %68, %69 : vector<8x1xf32>
    %71 = vector.broadcast %61 : vector<8x1xf32> to vector<8x256xf32>
    %72 = arith.subf %55, %71 : vector<8x256xf32>
    %cst_42 = arith.constant 9.99999974E-6 : f32
    %73 = vector.broadcast %cst_42 : f32 to vector<8x1xf32>
    %74 = arith.addf %70, %73 : vector<8x1xf32>
    %75 = math.rsqrt %74 : vector<8x1xf32>
    %76 = vector.broadcast %75 : vector<8x1xf32> to vector<8x256xf32>
    %77 = arith.mulf %72, %76 : vector<8x256xf32>
    %78 = vector.broadcast %56 : vector<1x256xf32> to vector<8x256xf32>
    %79 = arith.mulf %77, %78 : vector<8x256xf32>
    %80 = vector.broadcast %57 : vector<1x256xf32> to vector<8x256xf32>
    %81 = arith.addf %79, %80 : vector<8x256xf32>
    %82 = arith.truncf %81 : vector<8x256xf32> to vector<8x256xbf16>
    %c0_43 = arith.constant 0 : index
    %c0_44 = arith.constant 0 : index
    %83 = vector.load %arg14[%c0_43, %c0_44] : memref<256x512xbf16, #tpu.memory_space<vmem>>, vector<256x512xbf16>
    %cst_45 = arith.constant dense<0.000000e+00> : vector<8x512xf32>
    %84 = tpu.matmul %82, %83, %cst_45 {dimension_numbers = #tpu.dot_dimension_numbers<[1], [0], [0], [1], [0, 0, 1, 1], [], []>} : vector<8x256xbf16>, vector<256x512xbf16>, vector<8x512xf32> -> vector<8x512xf32>
    %c0_46 = arith.constant 0 : index
    %c0_47 = arith.constant 0 : index
    %85 = vector.load %arg15[%c0_46, %c0_47] : memref<1x512xf32, #tpu.memory_space<vmem>>, vector<1x512xf32>
    %86 = vector.broadcast %85 : vector<1x512xf32> to vector<8x512xf32>
    %87 = arith.addf %84, %86 : vector<8x512xf32>
    %cst_48 = arith.constant 0.000000e+00 : f32
    %88 = vector.broadcast %cst_48 : f32 to vector<8x512xf32>
    %89 = arith.maximumf %87, %88 : vector<8x512xf32>
    %90 = arith.truncf %89 : vector<8x512xf32> to vector<8x512xbf16>
    %c0_49 = arith.constant 0 : index
    %c0_50 = arith.constant 0 : index
    %91 = vector.load %arg16[%c0_49, %c0_50] : memref<512x256xbf16, #tpu.memory_space<vmem>>, vector<512x256xbf16>
    %cst_51 = arith.constant dense<0.000000e+00> : vector<8x256xf32>
    %92 = tpu.matmul %90, %91, %cst_51 {dimension_numbers = #tpu.dot_dimension_numbers<[1], [0], [0], [1], [0, 0, 1, 1], [], []>} : vector<8x512xbf16>, vector<512x256xbf16>, vector<8x256xf32> -> vector<8x256xf32>
    %c0_52 = arith.constant 0 : index
    %c0_53 = arith.constant 0 : index
    %93 = vector.load %arg17[%c0_52, %c0_53] : memref<1x256xf32, #tpu.memory_space<vmem>>, vector<1x256xf32>
    %94 = vector.broadcast %93 : vector<1x256xf32> to vector<8x256xf32>
    %95 = arith.addf %92, %94 : vector<8x256xf32>
    %96 = arith.addf %81, %95 : vector<8x256xf32>
    %c0_54 = arith.constant 0 : index
    %c0_55 = arith.constant 0 : index
    %97 = vector.load %arg18[%c0_54, %c0_55] : memref<1x256xf32, #tpu.memory_space<vmem>>, vector<1x256xf32>
    %c0_56 = arith.constant 0 : index
    %c0_57 = arith.constant 0 : index
    %98 = vector.load %arg19[%c0_56, %c0_57] : memref<1x256xf32, #tpu.memory_space<vmem>>, vector<1x256xf32>
    %cst_58 = arith.constant dense<0.000000e+00> : vector<8xf32>
    %99 = vector.multi_reduction <add>, %96, %cst_58 [1] : vector<8x256xf32> to vector<8xf32>
    %100 = vector.shape_cast %99 : vector<8xf32> to vector<8x1xf32>
    %cst_59 = arith.constant 2.560000e+02 : f32
    %101 = vector.broadcast %cst_59 : f32 to vector<8x1xf32>
    %102 = arith.divf %100, %101 : vector<8x1xf32>
    %103 = vector.broadcast %102 : vector<8x1xf32> to vector<8x256xf32>
    %104 = arith.subf %96, %103 : vector<8x256xf32>
    %105 = vector.broadcast %102 : vector<8x1xf32> to vector<8x256xf32>
    %106 = arith.subf %96, %105 : vector<8x256xf32>
    %107 = arith.mulf %104, %106 : vector<8x256xf32>
    %cst_60 = arith.constant dense<0.000000e+00> : vector<8xf32>
    %108 = vector.multi_reduction <add>, %107, %cst_60 [1] : vector<8x256xf32> to vector<8xf32>
    %109 = vector.shape_cast %108 : vector<8xf32> to vector<8x1xf32>
    %cst_61 = arith.constant 2.560000e+02 : f32
    %110 = vector.broadcast %cst_61 : f32 to vector<8x1xf32>
    %111 = arith.divf %109, %110 : vector<8x1xf32>
    %112 = vector.broadcast %102 : vector<8x1xf32> to vector<8x256xf32>
    %113 = arith.subf %96, %112 : vector<8x256xf32>
    %cst_62 = arith.constant 9.99999974E-6 : f32
    %114 = vector.broadcast %cst_62 : f32 to vector<8x1xf32>
    %115 = arith.addf %111, %114 : vector<8x1xf32>
    %116 = math.rsqrt %115 : vector<8x1xf32>
    %117 = vector.broadcast %116 : vector<8x1xf32> to vector<8x256xf32>
    %118 = arith.mulf %113, %117 : vector<8x256xf32>
    %119 = vector.broadcast %97 : vector<1x256xf32> to vector<8x256xf32>
    %120 = arith.mulf %118, %119 : vector<8x256xf32>
    %121 = vector.broadcast %98 : vector<1x256xf32> to vector<8x256xf32>
    %122 = arith.addf %120, %121 : vector<8x256xf32>
    %c0_63 = arith.constant 0 : index
    %c0_64 = arith.constant 0 : index
    %123 = vector.load %arg20[%c0_63, %c0_64] : memref<256x1xf32, #tpu.memory_space<vmem>>, vector<256x1xf32>
    %cst_65 = arith.constant dense<0.000000e+00> : vector<8x1xf32>
    %124 = tpu.matmul %122, %123, %cst_65 {dimension_numbers = #tpu.dot_dimension_numbers<[1], [0], [0], [1], [0, 0, 1, 1], [], []>} : vector<8x256xf32>, vector<256x1xf32>, vector<8x1xf32> -> vector<8x1xf32>
    %c0_66 = arith.constant 0 : index
    %c0_67 = arith.constant 0 : index
    %125 = vector.load %arg21[%c0_66, %c0_67] : memref<1x1xf32, #tpu.memory_space<vmem>>, vector<1x1xf32>
    %126 = vector.broadcast %125 : vector<1x1xf32> to vector<8x1xf32>
    %127 = arith.addf %124, %126 : vector<8x1xf32>
    %128 = arith.negf %127 : vector<8x1xf32>
    %129 = math.exp %128 : vector<8x1xf32>
    %cst_68 = arith.constant 1.000000e+00 : f32
    %130 = vector.broadcast %cst_68 : f32 to vector<8x1xf32>
    %131 = arith.addf %130, %129 : vector<8x1xf32>
    %132 = arith.divf %130, %131 : vector<8x1xf32>
    %133 = vector.shape_cast %132 : vector<8x1xf32> to vector<8x1xf32>
    %134 = vector.broadcast %133 : vector<8x1xf32> to vector<8x128xf32>
    %c0_69 = arith.constant 0 : index
    %c0_70 = arith.constant 0 : index
    %c0_71 = arith.constant 0 : index
    %135 = vector.load %arg22[%c0_69, %c0_70, %c0_71] : memref<1x8x128xf32, #tpu.memory_space<vmem>>, vector<1x8x128xf32>
    %136 = vector.shape_cast %135 : vector<1x8x128xf32> to vector<8x128xf32>
    %137 = vector.shape_cast %134 : vector<8x128xf32> to vector<1x8x128xf32>
    tpu.vector_store %arg22[%c0_69, %c0_70, %c0_71], %137 {strides = array<i32>} : memref<1x8x128xf32, #tpu.memory_space<vmem>>, vector<1x8x128xf32>,
    return
  }
  func.func @transform_0(%arg0: i32) -> (i32, i32, i32) {
    %c0_i32 = arith.constant 0 : i32
    %c0_i32_0 = arith.constant 0 : i32
    %c0_i32_1 = arith.constant 0 : i32
    return %arg0, %c0_i32, %c0_i32_0 : i32, i32, i32
  }
  func.func @transform_1(%arg0: i32) -> (i32, i32, i32) {
    %c0_i32 = arith.constant 0 : i32
    %c0_i32_0 = arith.constant 0 : i32
    %c0_i32_1 = arith.constant 0 : i32
    return %arg0, %c0_i32, %c0_i32_0 : i32, i32, i32
  }
  func.func @transform_2(%arg0: i32) -> (i32, i32) {
    %c0_i32 = arith.constant 0 : i32
    %c0_i32_0 = arith.constant 0 : i32
    %c0_i32_1 = arith.constant 0 : i32
    return %c0_i32, %c0_i32_0 : i32, i32
  }
  func.func @transform_3(%arg0: i32) -> (i32, i32) {
    %c0_i32 = arith.constant 0 : i32
    %c0_i32_0 = arith.constant 0 : i32
    %c0_i32_1 = arith.constant 0 : i32
    return %c0_i32, %c0_i32_0 : i32, i32
  }
  func.func @transform_4(%arg0: i32) -> (i32, i32) {
    %c0_i32 = arith.constant 0 : i32
    %c0_i32_0 = arith.constant 0 : i32
    %c0_i32_1 = arith.constant 0 : i32
    return %c0_i32, %c0_i32_0 : i32, i32
  }
  func.func @transform_5(%arg0: i32) -> (i32, i32) {
    %c0_i32 = arith.constant 0 : i32
    %c0_i32_0 = arith.constant 0 : i32
    %c0_i32_1 = arith.constant 0 : i32
    return %c0_i32, %c0_i32_0 : i32, i32
  }
  func.func @transform_6(%arg0: i32) -> (i32, i32) {
    %c0_i32 = arith.constant 0 : i32
    %c0_i32_0 = arith.constant 0 : i32
    %c0_i32_1 = arith.constant 0 : i32
    return %c0_i32, %c0_i32_0 : i32, i32
  }
  func.func @transform_7(%arg0: i32) -> (i32, i32) {
    %c0_i32 = arith.constant 0 : i32
    %c0_i32_0 = arith.constant 0 : i32
    %c0_i32_1 = arith.constant 0 : i32
    return %c0_i32, %c0_i32_0 : i32, i32
  }
  func.func @transform_8(%arg0: i32) -> (i32, i32) {
    %c0_i32 = arith.constant 0 : i32
    %c0_i32_0 = arith.constant 0 : i32
    %c0_i32_1 = arith.constant 0 : i32
    return %c0_i32, %c0_i32_0 : i32, i32
  }
  func.func @transform_9(%arg0: i32) -> (i32, i32) {
    %c0_i32 = arith.constant 0 : i32
    %c0_i32_0 = arith.constant 0 : i32
    %c0_i32_1 = arith.constant 0 : i32
    return %c0_i32, %c0_i32_0 : i32, i32
  }
  func.func @transform_10(%arg0: i32) -> (i32, i32) {
    %c0_i32 = arith.constant 0 : i32
    %c0_i32_0 = arith.constant 0 : i32
    %c0_i32_1 = arith.constant 0 : i32
    return %c0_i32, %c0_i32_0 : i32, i32
  }
  func.func @transform_11(%arg0: i32) -> (i32, i32) {
    %c0_i32 = arith.constant 0 : i32
    %c0_i32_0 = arith.constant 0 : i32
    %c0_i32_1 = arith.constant 0 : i32
    return %c0_i32, %c0_i32_0 : i32, i32
  }
  func.func @transform_12(%arg0: i32) -> (i32, i32) {
    %c0_i32 = arith.constant 0 : i32
    %c0_i32_0 = arith.constant 0 : i32
    %c0_i32_1 = arith.constant 0 : i32
    return %c0_i32, %c0_i32_0 : i32, i32
  }
  func.func @transform_13(%arg0: i32) -> (i32, i32) {
    %c0_i32 = arith.constant 0 : i32
    %c0_i32_0 = arith.constant 0 : i32
    %c0_i32_1 = arith.constant 0 : i32
    return %c0_i32, %c0_i32_0 : i32, i32
  }
  func.func @transform_14(%arg0: i32) -> (i32, i32) {
    %c0_i32 = arith.constant 0 : i32
    %c0_i32_0 = arith.constant 0 : i32
    %c0_i32_1 = arith.constant 0 : i32
    return %c0_i32, %c0_i32_0 : i32, i32
  }
  func.func @transform_15(%arg0: i32) -> (i32, i32) {
    %c0_i32 = arith.constant 0 : i32
    %c0_i32_0 = arith.constant 0 : i32
    %c0_i32_1 = arith.constant 0 : i32
    return %c0_i32, %c0_i32_0 : i32, i32
  }
  func.func @transform_16(%arg0: i32) -> (i32, i32) {
    %c0_i32 = arith.constant 0 : i32
    %c0_i32_0 = arith.constant 0 : i32
    %c0_i32_1 = arith.constant 0 : i32
    return %c0_i32, %c0_i32_0 : i32, i32
  }
  func.func @transform_17(%arg0: i32) -> (i32, i32) {
    %c0_i32 = arith.constant 0 : i32
    %c0_i32_0 = arith.constant 0 : i32
    %c0_i32_1 = arith.constant 0 : i32
    return %c0_i32, %c0_i32_0 : i32, i32
  }
  func.func @transform_18(%arg0: i32) -> (i32, i32) {
    %c0_i32 = arith.constant 0 : i32
    %c0_i32_0 = arith.constant 0 : i32
    %c0_i32_1 = arith.constant 0 : i32
    return %c0_i32, %c0_i32_0 : i32, i32
  }
  func.func @transform_19(%arg0: i32) -> (i32, i32) {
    %c0_i32 = arith.constant 0 : i32
    %c0_i32_0 = arith.constant 0 : i32
    %c0_i32_1 = arith.constant 0 : i32
    return %c0_i32, %c0_i32_0 : i32, i32
  }
  func.func @transform_20(%arg0: i32) -> (i32, i32) {
    %c0_i32 = arith.constant 0 : i32
    %c0_i32_0 = arith.constant 0 : i32
    %c0_i32_1 = arith.constant 0 : i32
    return %c0_i32, %c0_i32_0 : i32, i32
  }
  func.func @transform_21(%arg0: i32) -> (i32, i32, i32) {
    %c0_i32 = arith.constant 0 : i32
    %c0_i32_0 = arith.constant 0 : i32
    %c0_i32_1 = arith.constant 0 : i32
    return %arg0, %c0_i32, %c0_i32_0 : i32, i32, i32
  }
}

</mosaic_0001>

<llo_original>
// kernel: forward.1
$region0: #{forward.1}
  #allocation0 [shape = 'u32[]', space=smem, size = 0x4, offset = 0x4, fixed_abs, tag = 'smem constant byte address 0x4 - core index']
  #allocation1 [shape = 'u32[144,128]{1,0:T(1,128)}', space=vmem, size = 0x12000, scoped, tag = 'internal scratch']
  #allocation2 [shape = 'f32[1,1]{1,0:T(1,128)S(1)}', space=vmem, size = 0x200, scoped, tag = 'scoped memory for forward.1']
  %s0 = inlined_call_operand.vmem [shape: bf16[2,32,4096], index: 0, kind: input, shape index: {}]
  %s1 = inlined_call_operand.vmem [shape: f32[2,32,1], index: 1, kind: input, shape index: {}]
  %s2 = inlined_call_operand.vmem [shape: bf16[4096,256], index: 2, kind: input, shape index: {}]
  %s3 = inlined_call_operand.vmem [shape: f32[1,256], index: 3, kind: input, shape index: {}]
  %s4 = inlined_call_operand.vmem [shape: f32[1,256], index: 4, kind: input, shape index: {}]
  %s5 = inlined_call_operand.vmem [shape: f32[32,32], index: 5, kind: input, shape index: {}]
  %s6 = inlined_call_operand.vmem [shape: f32[8,32], index: 6, kind: input, shape index: {}]
  %s7 = inlined_call_operand.vmem [shape: bf16[256,768], index: 7, kind: input, shape index: {}]
  %s8 = inlined_call_operand.vmem [shape: f32[1,768], index: 8, kind: input, shape index: {}]
  %s9 = inlined_call_operand.hbm [shape: bf16[256,256], index: 9, kind: input, shape index: {}]
  %s10 = inlined_call_operand.vmem [shape: f32[1,256], index: 10, kind: input, shape index: {}]
  %s11 = inlined_call_operand.vmem [shape: f32[1,256], index: 11, kind: input, shape index: {}]
  %s12 = inlined_call_operand.vmem [shape: f32[1,256], index: 12, kind: input, shape index: {}]
  %s13 = inlined_call_operand.vmem [shape: bf16[256,512], index: 13, kind: input, shape index: {}]
  %s14 = inlined_call_operand.vmem [shape: f32[1,512], index: 14, kind: input, shape index: {}]
  %s15 = inlined_call_operand.hbm [shape: bf16[512,256], index: 15, kind: input, shape index: {}]
  %s16 = inlined_call_operand.vmem [shape: f32[1,256], index: 16, kind: input, shape index: {}]
  %s17 = inlined_call_operand.vmem [shape: f32[1,256], index: 17, kind: input, shape index: {}]
  %s18 = inlined_call_operand.vmem [shape: f32[1,256], index: 18, kind: input, shape index: {}]
  %s19 = inlined_call_operand.vmem [shape: f32[256,1], index: 19, kind: input, shape index: {}]
  %s20 = inlined_call_operand.<no memory space> [shape: f32[1,1], index: 20, kind: input, shape index: {}]
  %s21 = inlined_call_operand.vmem [shape: f32[2,8,128], index: 21, kind: output, shape index: {}]
  %s22 = sld [smem:[#allocation0]]
  $region125: #{forward.1} parent=0
    _
  %s24 = ssub.s32 1, %s22
  %s25 = scalar_select 0, %s24, %s22
  %v26 = vstv %s20
  %27 = vst [vmem:[#allocation2] sm:$0x1] %v26
  $region1: #{forward.1} parent=0
    #allocation3 [shape = 'u8[131072]{0}', space=vmem, size = 0x20000, scoped, tag = 'input window, operand 9, single buffered']
    #allocation4 [shape = 's32[2]{0}', space=sflag, size = 0x8, scoped, tag = 'scoped memory for forward.1']
    #allocation5 [shape = 'u8[262144]{0}', space=vmem, size = 0x40000, scoped, tag = 'input window, operand 15, single buffered']
    #allocation6 [shape = 's32[1]{0}', space=sflag, size = 0x4, scoped, tag = 'scoped memory for forward.1']
    %28 = vsyncpa [#allocation4], 0
    %29 = vsyncpa [#allocation6], 0
    loop: start=0, step=1, limit=4
    $region2: #{forward.1} parent=1 // loop_pre_header
      _
    $region3: #{forward.1} parent=1 // loop_header
      %s31 = sphi 0, %s35
      %p32 = scmp.ge.s32.totalorder %s31, 4
      %s41 = sphi 0, %s43
      %s44 = sphi 0, %s41
      %s45 = sphi 0, %s44
      %s61 = sphi 0, %s45
      %s67 = sphi 0, %s69
      %s70 = sphi 0, %s67
      %s71 = sphi 0, %s70
      %s87 = sphi 0, %s71
      %s91 = sphi 0, %s91
      %s93 = sphi 0, %s91
      %s94 = sphi 0, %s93
      %s108 = sphi 0, %s94
      %s112 = sphi 0, %s112
      %s114 = sphi 0, %s112
      %s115 = sphi 0, %s114
      %s129 = sphi 0, %s115
      %s133 = sphi 0, %s133
      %s135 = sphi 0, %s133
      %s136 = sphi 0, %s135
      %s150 = sphi 0, %s136
      %s154 = sphi 0, %s154
      %s156 = sphi 0, %s154
      %s157 = sphi 0, %s156
      %s171 = sphi 0, %s157
      %s175 = sphi 0, %s175
      %s177 = sphi 0, %s175
      %s178 = sphi 0, %s177
      %s192 = sphi 0, %s178
      %s196 = sphi 0, %s196
      %s198 = sphi 0, %s196
      %s199 = sphi 0, %s198
      %s213 = sphi 0, %s199
      %s217 = sphi 0, %s217
      %s219 = sphi 0, %s217
      %s220 = sphi 0, %s219
      %s234 = sphi 0, %s220
      %s238 = sphi 0, %s238
      %s240 = sphi 0, %s238
      %s241 = sphi 0, %s240
      %s255 = sphi 0, %s241
      %s259 = sphi 0, %s259
      %s261 = sphi 0, %s259
      %s262 = sphi 0, %s261
      %s276 = sphi 0, %s262
      %s280 = sphi 0, %s280
      %s282 = sphi 0, %s280
      %s283 = sphi 0, %s282
      %s297 = sphi 0, %s283
      %s301 = sphi 0, %s301
      %s303 = sphi 0, %s301
      %s304 = sphi 0, %s303
      %s318 = sphi 0, %s304
      %s322 = sphi 0, %s322
      %s324 = sphi 0, %s322
      %s325 = sphi 0, %s324
      %s339 = sphi 0, %s325
      %s343 = sphi 0, %s343
      %s345 = sphi 0, %s343
      %s346 = sphi 0, %s345
      %s360 = sphi 0, %s346
      %s364 = sphi 0, %s364
      %s366 = sphi 0, %s364
      %s367 = sphi 0, %s366
      %s381 = sphi 0, %s367
      %s385 = sphi 0, %s385
      %s387 = sphi 0, %s385
      %s388 = sphi 0, %s387
      %s402 = sphi 0, %s388
      %s406 = sphi 0, %s406
      %s408 = sphi 0, %s406
      %s409 = sphi 0, %s408
      %s423 = sphi 0, %s409
      %s427 = sphi 0, %s427
      %s429 = sphi 0, %s427
      %s430 = sphi 0, %s429
      %s444 = sphi 0, %s430
      %s448 = sphi 0, %s448
      %s450 = sphi 0, %s448
      %s451 = sphi 0, %s450
      %s465 = sphi 0, %s451
      %s469 = sphi 0, %s469
      %s471 = sphi 0, %s469
      %s472 = sphi 0, %s471
      %s486 = sphi 0, %s472
      %s492 = sphi 0, %s494
      %s495 = sphi 0, %s492
      %s496 = sphi 0, %s495
      %s512 = sphi 0, %s496
    $region4: #{forward.1} parent=1 // loop_header_branch
      %34 = sbr.rel (%p32) target = $region8
    $region5: #{forward.1} parent=1 // loop_body
      %s36 = ssub.s32 %s31, 1
      %s37 = ssub.s32 %s31, 2
      %s38 = sadd.s32 %s31, 1
      %s39 = ssub.s32 %s31, %s38
      %p40 = scmp.eq.s32.totalorder %s39, 0
      %s42 = sadd.s32 %s41, 1
      %s43 = scalar_select %p40, %s41, %s42
      %p46 = pneg %p40
      %p47 = scmp.eq.s32.totalorder %s31, 1
      %p48 = por %p46, %p47
      %p49 = scmp.ne.s32.totalorder %s41, %s44
      %p50 = scmp.eq.s32.totalorder %s31, 0
      %p51 = por %p49, %p50
      %p52 = scmp.ne.s32.totalorder %s41, %s44
      %p53 = scmp.eq.s32.totalorder %s36, 1
      %p54 = por %p52, %p53
      %p55 = scmp.ne.s32.totalorder %s44, %s45
      %p56 = scmp.eq.s32.totalorder %s36, 0
      %p57 = por %p55, %p56
      %p58 = scmp.ne.s32.totalorder %s44, %s45
      %p59 = scmp.eq.s32.totalorder %s37, 1
      %p60 = por %p58, %p59
      %p62 = scmp.ne.s32.totalorder %s45, %s61
      %p63 = scmp.eq.s32.totalorder %s37, 0
      %p64 = por %p62, %p63
      %s65 = ssub.s32 %s31, %s38
      %p66 = scmp.eq.s32.totalorder %s65, 0
      %s68 = sadd.s32 %s67, 1
      %s69 = scalar_select %p66, %s67, %s68
      %p72 = pneg %p66
      %p73 = scmp.eq.s32.totalorder %s31, 1
      %p74 = por %p72, %p73
      %p75 = scmp.ne.s32.totalorder %s67, %s70
      %p76 = scmp.eq.s32.totalorder %s31, 0
      %p77 = por %p75, %p76
      %p78 = scmp.ne.s32.totalorder %s67, %s70
      %p79 = scmp.eq.s32.totalorder %s36, 1
      %p80 = por %p78, %p79
      %p81 = scmp.ne.s32.totalorder %s70, %s71
      %p82 = scmp.eq.s32.totalorder %s36, 0
      %p83 = por %p81, %p82
      %p84 = scmp.ne.s32.totalorder %s70, %s71
      %p85 = scmp.eq.s32.totalorder %s37, 1
      %p86 = por %p84, %p85
      %p88 = scmp.ne.s32.totalorder %s71, %s87
      %p89 = scmp.eq.s32.totalorder %s37, 0
      %p90 = por %p88, %p89
      %s92 = sadd.s32 %s91, 1
      %p95 = scmp.eq.s32.totalorder %s31, 1
      %p96 = scmp.ne.s32.totalorder %s91, %s93
      %p97 = scmp.eq.s32.totalorder %s31, 0
      %p98 = por %p96, %p97
      %p99 = scmp.ne.s32.totalorder %s91, %s93
      %p100 = scmp.eq.s32.totalorder %s36, 1
      %p101 = por %p99, %p100
      %p102 = scmp.ne.s32.totalorder %s93, %s94
      %p103 = scmp.eq.s32.totalorder %s36, 0
      %p104 = por %p102, %p103
      %p105 = scmp.ne.s32.totalorder %s93, %s94
      %p106 = scmp.eq.s32.totalorder %s37, 1
      %p107 = por %p105, %p106
      %p109 = scmp.ne.s32.totalorder %s94, %s108
      %p110 = scmp.eq.s32.totalorder %s37, 0
      %p111 = por %p109, %p110
      %s113 = sadd.s32 %s112, 1
      %p116 = scmp.eq.s32.totalorder %s31, 1
      %p117 = scmp.ne.s32.totalorder %s112, %s114
      %p118 = scmp.eq.s32.totalorder %s31, 0
      %p119 = por %p117, %p118
      %p120 = scmp.ne.s32.totalorder %s112, %s114
      %p121 = scmp.eq.s32.totalorder %s36, 1
      %p122 = por %p120, %p121
      %p123 = scmp.ne.s32.totalorder %s114, %s115
      %p124 = scmp.eq.s32.totalorder %s36, 0
      %p125 = por %p123, %p124
      %p126 = scmp.ne.s32.totalorder %s114, %s115
      %p127 = scmp.eq.s32.totalorder %s37, 1
      %p128 = por %p126, %p127
      %p130 = scmp.ne.s32.totalorder %s115, %s129
      %p131 = scmp.eq.s32.totalorder %s37, 0
      %p132 = por %p130, %p131
      %s134 = sadd.s32 %s133, 1
      %p137 = scmp.eq.s32.totalorder %s31, 1
      %p138 = scmp.ne.s32.totalorder %s133, %s135
      %p139 = scmp.eq.s32.totalorder %s31, 0
      %p140 = por %p138, %p139
      %p141 = scmp.ne.s32.totalorder %s133, %s135
      %p142 = scmp.eq.s32.totalorder %s36, 1
      %p143 = por %p141, %p142
      %p144 = scmp.ne.s32.totalorder %s135, %s136
      %p145 = scmp.eq.s32.totalorder %s36, 0
      %p146 = por %p144, %p145
      %p147 = scmp.ne.s32.totalorder %s135, %s136
      %p148 = scmp.eq.s32.totalorder %s37, 1
      %p149 = por %p147, %p148
      %p151 = scmp.ne.s32.totalorder %s136, %s150
      %p152 = scmp.eq.s32.totalorder %s37, 0
      %p153 = por %p151, %p152
      %s155 = sadd.s32 %s154, 1
      %p158 = scmp.eq.s32.totalorder %s31, 1
      %p159 = scmp.ne.s32.totalorder %s154, %s156
      %p160 = scmp.eq.s32.totalorder %s31, 0
      %p161 = por %p159, %p160
      %p162 = scmp.ne.s32.totalorder %s154, %s156
      %p163 = scmp.eq.s32.totalorder %s36, 1
      %p164 = por %p162, %p163
      %p165 = scmp.ne.s32.totalorder %s156, %s157
      %p166 = scmp.eq.s32.totalorder %s36, 0
      %p167 = por %p165, %p166
      %p168 = scmp.ne.s32.totalorder %s156, %s157
      %p169 = scmp.eq.s32.totalorder %s37, 1
      %p170 = por %p168, %p169
      %p172 = scmp.ne.s32.totalorder %s157, %s171
      %p173 = scmp.eq.s32.totalorder %s37, 0
      %p174 = por %p172, %p173
      %s176 = sadd.s32 %s175, 1
      %p179 = scmp.eq.s32.totalorder %s31, 1
      %p180 = scmp.ne.s32.totalorder %s175, %s177
      %p181 = scmp.eq.s32.totalorder %s31, 0
      %p182 = por %p180, %p181
      %p183 = scmp.ne.s32.totalorder %s175, %s177
      %p184 = scmp.eq.s32.totalorder %s36, 1
      %p185 = por %p183, %p184
      %p186 = scmp.ne.s32.totalorder %s177, %s178
      %p187 = scmp.eq.s32.totalorder %s36, 0
      %p188 = por %p186, %p187
      %p189 = scmp.ne.s32.totalorder %s177, %s178
      %p190 = scmp.eq.s32.totalorder %s37, 1
      %p191 = por %p189, %p190
      %p193 = scmp.ne.s32.totalorder %s178, %s192
      %p194 = scmp.eq.s32.totalorder %s37, 0
      %p195 = por %p193, %p194
      %s197 = sadd.s32 %s196, 1
      %p200 = scmp.eq.s32.totalorder %s31, 1
      %p201 = scmp.ne.s32.totalorder %s196, %s198
      %p202 = scmp.eq.s32.totalorder %s31, 0
      %p203 = por %p201, %p202
      %p204 = scmp.ne.s32.totalorder %s196, %s198
      %p205 = scmp.eq.s32.totalorder %s36, 1
      %p206 = por %p204, %p205
      %p207 = scmp.ne.s32.totalorder %s198, %s199
      %p208 = scmp.eq.s32.totalorder %s36, 0
      %p209 = por %p207, %p208
      %p210 = scmp.ne.s32.totalorder %s198, %s199
      %p211 = scmp.eq.s32.totalorder %s37, 1
      %p212 = por %p210, %p211
      %p214 = scmp.ne.s32.totalorder %s199, %s213
      %p215 = scmp.eq.s32.totalorder %s37, 0
      %p216 = por %p214, %p215
      %s218 = sadd.s32 %s217, 1
      %p221 = scmp.eq.s32.totalorder %s31, 1
      %p222 = scmp.ne.s32.totalorder %s217, %s219
      %p223 = scmp.eq.s32.totalorder %s31, 0
      %p224 = por %p222, %p223
      %p225 = scmp.ne.s32.totalorder %s217, %s219
      %p226 = scmp.eq.s32.totalorder %s36, 1
      %p227 = por %p225, %p226
      %p228 = scmp.ne.s32.totalorder %s219, %s220
      %p229 = scmp.eq.s32.totalorder %s36, 0
      %p230 = por %p228, %p229
      %p231 = scmp.ne.s32.totalorder %s219, %s220
      %p232 = scmp.eq.s32.totalorder %s37, 1
      %p233 = por %p231, %p232
      %p235 = scmp.ne.s32.totalorder %s220, %s234
      %p236 = scmp.eq.s32.totalorder %s37, 0
      %p237 = por %p235, %p236
      %s239 = sadd.s32 %s238, 1
      %p242 = scmp.eq.s32.totalorder %s31, 1
      %p243 = scmp.ne.s32.totalorder %s238, %s240
      %p244 = scmp.eq.s32.totalorder %s31, 0
      %p245 = por %p243, %p244
      %p246 = scmp.ne.s32.totalorder %s238, %s240
      %p247 = scmp.eq.s32.totalorder %s36, 1
      %p248 = por %p246, %p247
      %p249 = scmp.ne.s32.totalorder %s240, %s241
      %p250 = scmp.eq.s32.totalorder %s36, 0
      %p251 = por %p249, %p250
      %p252 = scmp.ne.s32.totalorder %s240, %s241
      %p253 = scmp.eq.s32.totalorder %s37, 1
      %p254 = por %p252, %p253
      %p256 = scmp.ne.s32.totalorder %s241, %s255
      %p257 = scmp.eq.s32.totalorder %s37, 0
      %p258 = por %p256, %p257
      %s260 = sadd.s32 %s259, 1
      %p263 = scmp.eq.s32.totalorder %s31, 1
      %p264 = scmp.ne.s32.totalorder %s259, %s261
      %p265 = scmp.eq.s32.totalorder %s31, 0
      %p266 = por %p264, %p265
      %p267 = scmp.ne.s32.totalorder %s259, %s261
      %p268 = scmp.eq.s32.totalorder %s36, 1
      %p269 = por %p267, %p268
      %p270 = scmp.ne.s32.totalorder %s261, %s262
      %p271 = scmp.eq.s32.totalorder %s36, 0
      %p272 = por %p270, %p271
      %p273 = scmp.ne.s32.totalorder %s261, %s262
      %p274 = scmp.eq.s32.totalorder %s37, 1
      %p275 = por %p273, %p274
      %p277 = scmp.ne.s32.totalorder %s262, %s276
      %p278 = scmp.eq.s32.totalorder %s37, 0
      %p279 = por %p277, %p278
      %s281 = sadd.s32 %s280, 1
      %p284 = scmp.eq.s32.totalorder %s31, 1
      %p285 = scmp.ne.s32.totalorder %s280, %s282
      %p286 = scmp.eq.s32.totalorder %s31, 0
      %p287 = por %p285, %p286
      %p288 = scmp.ne.s32.totalorder %s280, %s282
      %p289 = scmp.eq.s32.totalorder %s36, 1
      %p290 = por %p288, %p289
      %p291 = scmp.ne.s32.totalorder %s282, %s283
      %p292 = scmp.eq.s32.totalorder %s36, 0
      %p293 = por %p291, %p292
      %p294 = scmp.ne.s32.totalorder %s282, %s283
      %p295 = scmp.eq.s32.totalorder %s37, 1
      %p296 = por %p294, %p295
      %p298 = scmp.ne.s32.totalorder %s283, %s297
      %p299 = scmp.eq.s32.totalorder %s37, 0
      %p300 = por %p298, %p299
      %s302 = sadd.s32 %s301, 1
      %p305 = scmp.eq.s32.totalorder %s31, 1
      %p306 = scmp.ne.s32.totalorder %s301, %s303
      %p307 = scmp.eq.s32.totalorder %s31, 0
      %p308 = por %p306, %p307
      %p309 = scmp.ne.s32.totalorder %s301, %s303
      %p310 = scmp.eq.s32.totalorder %s36, 1
      %p311 = por %p309, %p310
      %p312 = scmp.ne.s32.totalorder %s303, %s304
      %p313 = scmp.eq.s32.totalorder %s36, 0
      %p314 = por %p312, %p313
      %p315 = scmp.ne.s32.totalorder %s303, %s304
      %p316 = scmp.eq.s32.totalorder %s37, 1
      %p317 = por %p315, %p316
      %p319 = scmp.ne.s32.totalorder %s304, %s318
      %p320 = scmp.eq.s32.totalorder %s37, 0
      %p321 = por %p319, %p320
      %s323 = sadd.s32 %s322, 1
      %p326 = scmp.eq.s32.totalorder %s31, 1
      %p327 = scmp.ne.s32.totalorder %s322, %s324
      %p328 = scmp.eq.s32.totalorder %s31, 0
      %p329 = por %p327, %p328
      %p330 = scmp.ne.s32.totalorder %s322, %s324
      %p331 = scmp.eq.s32.totalorder %s36, 1
      %p332 = por %p330, %p331
      %p333 = scmp.ne.s32.totalorder %s324, %s325
      %p334 = scmp.eq.s32.totalorder %s36, 0
      %p335 = por %p333, %p334
      %p336 = scmp.ne.s32.totalorder %s324, %s325
      %p337 = scmp.eq.s32.totalorder %s37, 1
      %p338 = por %p336, %p337
      %p340 = scmp.ne.s32.totalorder %s325, %s339
      %p341 = scmp.eq.s32.totalorder %s37, 0
      %p342 = por %p340, %p341
      %s344 = sadd.s32 %s343, 1
      %p347 = scmp.eq.s32.totalorder %s31, 1
      %p348 = scmp.ne.s32.totalorder %s343, %s345
      %p349 = scmp.eq.s32.totalorder %s31, 0
      %p350 = por %p348, %p349
      %p351 = scmp.ne.s32.totalorder %s343, %s345
      %p352 = scmp.eq.s32.totalorder %s36, 1
      %p353 = por %p351, %p352
      %p354 = scmp.ne.s32.totalorder %s345, %s346
      %p355 = scmp.eq.s32.totalorder %s36, 0
      %p356 = por %p354, %p355
      %p357 = scmp.ne.s32.totalorder %s345, %s346
      %p358 = scmp.eq.s32.totalorder %s37, 1
      %p359 = por %p357, %p358
      %p361 = scmp.ne.s32.totalorder %s346, %s360
      %p362 = scmp.eq.s32.totalorder %s37, 0
      %p363 = por %p361, %p362
      %s365 = sadd.s32 %s364, 1
      %p368 = scmp.eq.s32.totalorder %s31, 1
      %p369 = scmp.ne.s32.totalorder %s364, %s366
      %p370 = scmp.eq.s32.totalorder %s31, 0
      %p371 = por %p369, %p370
      %p372 = scmp.ne.s32.totalorder %s364, %s366
      %p373 = scmp.eq.s32.totalorder %s36, 1
      %p374 = por %p372, %p373
      %p375 = scmp.ne.s32.totalorder %s366, %s367
      %p376 = scmp.eq.s32.totalorder %s36, 0
      %p377 = por %p375, %p376
      %p378 = scmp.ne.s32.totalorder %s366, %s367
      %p379 = scmp.eq.s32.totalorder %s37, 1
      %p380 = por %p378, %p379
      %p382 = scmp.ne.s32.totalorder %s367, %s381
      %p383 = scmp.eq.s32.totalorder %s37, 0
      %p384 = por %p382, %p383
      %s386 = sadd.s32 %s385, 1
      %p389 = scmp.eq.s32.totalorder %s31, 1
      %p390 = scmp.ne.s32.totalorder %s385, %s387
      %p391 = scmp.eq.s32.totalorder %s31, 0
      %p392 = por %p390, %p391
      %p393 = scmp.ne.s32.totalorder %s385, %s387
      %p394 = scmp.eq.s32.totalorder %s36, 1
      %p395 = por %p393, %p394
      %p396 = scmp.ne.s32.totalorder %s387, %s388
      %p397 = scmp.eq.s32.totalorder %s36, 0
      %p398 = por %p396, %p397
      %p399 = scmp.ne.s32.totalorder %s387, %s388
      %p400 = scmp.eq.s32.totalorder %s37, 1
      %p401 = por %p399, %p400
      %p403 = scmp.ne.s32.totalorder %s388, %s402
      %p404 = scmp.eq.s32.totalorder %s37, 0
      %p405 = por %p403, %p404
      %s407 = sadd.s32 %s406, 1
      %p410 = scmp.eq.s32.totalorder %s31, 1
      %p411 = scmp.ne.s32.totalorder %s406, %s408
      %p412 = scmp.eq.s32.totalorder %s31, 0
      %p413 = por %p411, %p412
      %p414 = scmp.ne.s32.totalorder %s406, %s408
      %p415 = scmp.eq.s32.totalorder %s36, 1
      %p416 = por %p414, %p415
      %p417 = scmp.ne.s32.totalorder %s408, %s409
      %p418 = scmp.eq.s32.totalorder %s36, 0
      %p419 = por %p417, %p418
      %p420 = scmp.ne.s32.totalorder %s408, %s409
      %p421 = scmp.eq.s32.totalorder %s37, 1
      %p422 = por %p420, %p421
      %p424 = scmp.ne.s32.totalorder %s409, %s423
      %p425 = scmp.eq.s32.totalorder %s37, 0
      %p426 = por %p424, %p425
      %s428 = sadd.s32 %s427, 1
      %p431 = scmp.eq.s32.totalorder %s31, 1
      %p432 = scmp.ne.s32.totalorder %s427, %s429
      %p433 = scmp.eq.s32.totalorder %s31, 0
      %p434 = por %p432, %p433
      %p435 = scmp.ne.s32.totalorder %s427, %s429
      %p436 = scmp.eq.s32.totalorder %s36, 1
      %p437 = por %p435, %p436
      %p438 = scmp.ne.s32.totalorder %s429, %s430
      %p439 = scmp.eq.s32.totalorder %s36, 0
      %p440 = por %p438, %p439
      %p441 = scmp.ne.s32.totalorder %s429, %s430
      %p442 = scmp.eq.s32.totalorder %s37, 1
      %p443 = por %p441, %p442
      %p445 = scmp.ne.s32.totalorder %s430, %s444
      %p446 = scmp.eq.s32.totalorder %s37, 0
      %p447 = por %p445, %p446
      %s449 = sadd.s32 %s448, 1
      %p452 = scmp.eq.s32.totalorder %s31, 1
      %p453 = scmp.ne.s32.totalorder %s448, %s450
      %p454 = scmp.eq.s32.totalorder %s31, 0
      %p455 = por %p453, %p454
      %p456 = scmp.ne.s32.totalorder %s448, %s450
      %p457 = scmp.eq.s32.totalorder %s36, 1
      %p458 = por %p456, %p457
      %p459 = scmp.ne.s32.totalorder %s450, %s451
      %p460 = scmp.eq.s32.totalorder %s36, 0
      %p461 = por %p459, %p460
      %p462 = scmp.ne.s32.totalorder %s450, %s451
      %p463 = scmp.eq.s32.totalorder %s37, 1
      %p464 = por %p462, %p463
      %p466 = scmp.ne.s32.totalorder %s451, %s465
      %p467 = scmp.eq.s32.totalorder %s37, 0
      %p468 = por %p466, %p467
      %s470 = sadd.s32 %s469, 1
      %p473 = scmp.eq.s32.totalorder %s31, 1
      %p474 = scmp.ne.s32.totalorder %s469, %s471
      %p475 = scmp.eq.s32.totalorder %s31, 0
      %p476 = por %p474, %p475
      %p477 = scmp.ne.s32.totalorder %s469, %s471
      %p478 = scmp.eq.s32.totalorder %s36, 1
      %p479 = por %p477, %p478
      %p480 = scmp.ne.s32.totalorder %s471, %s472
      %p481 = scmp.eq.s32.totalorder %s36, 0
      %p482 = por %p480, %p481
      %p483 = scmp.ne.s32.totalorder %s471, %s472
      %p484 = scmp.eq.s32.totalorder %s37, 1
      %p485 = por %p483, %p484
      %p487 = scmp.ne.s32.totalorder %s472, %s486
      %p488 = scmp.eq.s32.totalorder %s37, 0
      %p489 = por %p487, %p488
      %s490 = ssub.s32 %s31, %s38
      %p491 = scmp.eq.s32.totalorder %s490, 0
      %s493 = sadd.s32 %s492, 1
      %s494 = scalar_select %p491, %s492, %s493
      %p497 = pneg %p491
      %p498 = scmp.eq.s32.totalorder %s31, 1
      %p499 = por %p497, %p498
      %p500 = scmp.ne.s32.totalorder %s492, %s495
      %p501 = scmp.eq.s32.totalorder %s31, 0
      %p502 = por %p500, %p501
      %p503 = scmp.ne.s32.totalorder %s492, %s495
      %p504 = scmp.eq.s32.totalorder %s36, 1
      %p505 = por %p503, %p504
      %p506 = scmp.ne.s32.totalorder %s495, %s496
      %p507 = scmp.eq.s32.totalorder %s36, 0
      %p508 = por %p506, %p507
      %p509 = scmp.ne.s32.totalorder %s495, %s496
      %p510 = scmp.eq.s32.totalorder %s37, 1
      %p511 = por %p509, %p510
      %p513 = scmp.ne.s32.totalorder %s496, %s512
      %p514 = scmp.eq.s32.totalorder %s37, 0
      %p515 = por %p513, %p514
      %p516 = scmp.le.s32.totalorder 1, %s31
      %p517 = scmp.lt.s32.totalorder %s31, 3
      %p518 = pnand %p516, %p517
      %p519 = pneg %p518
      // Predicated region
      $region9: #{forward.1} parent=5 // pred_check
        _
      $region10: #{forward.1} parent=5 // pred_check_branch
        %521 = sbr.rel (%p518) target = $region12
      $region11: #{forward.1} parent=5 // pred_region
        %s522 = ssub.s32 %s31, 1
        // Predicated region
        $region13: #{forward.1} parent=11 // pred_check
          %p523 = pneg %p104
        $region14: #{forward.1} parent=11 // pred_check_branch
          %525 = sbr.rel (%p523) target = $region16
        $region15: #{forward.1} parent=11 // pred_region
          _
        $region16: #{forward.1} parent=11 // pred_fallthru
          _
        // Predicated region
        $region17: #{forward.1} parent=11 // pred_check
          %p526 = pneg %p125
        $region18: #{forward.1} parent=11 // pred_check_branch
          %528 = sbr.rel (%p526) target = $region20
        $region19: #{forward.1} parent=11 // pred_region
          _
        $region20: #{forward.1} parent=11 // pred_fallthru
          _
        // Predicated region
        $region21: #{forward.1} parent=11 // pred_check
          %p529 = pneg %p146
        $region22: #{forward.1} parent=11 // pred_check_branch
          %531 = sbr.rel (%p529) target = $region24
        $region23: #{forward.1} parent=11 // pred_region
          _
        $region24: #{forward.1} parent=11 // pred_fallthru
          _
        // Predicated region
        $region25: #{forward.1} parent=11 // pred_check
          %p532 = pneg %p167
        $region26: #{forward.1} parent=11 // pred_check_branch
          %534 = sbr.rel (%p532) target = $region28
        $region27: #{forward.1} parent=11 // pred_region
          _
        $region28: #{forward.1} parent=11 // pred_fallthru
          _
        // Predicated region
        $region29: #{forward.1} parent=11 // pred_check
          %p535 = pneg %p188
        $region30: #{forward.1} parent=11 // pred_check_branch
          %537 = sbr.rel (%p535) target = $region32
        $region31: #{forward.1} parent=11 // pred_region
          _
        $region32: #{forward.1} parent=11 // pred_fallthru
          _
        // Predicated region
        $region33: #{forward.1} parent=11 // pred_check
          %p538 = pneg %p209
        $region34: #{forward.1} parent=11 // pred_check_branch
          %540 = sbr.rel (%p538) target = $region36
        $region35: #{forward.1} parent=11 // pred_region
          _
        $region36: #{forward.1} parent=11 // pred_fallthru
          _
        // Predicated region
        $region37: #{forward.1} parent=11 // pred_check
          %p541 = pneg %p230
        $region38: #{forward.1} parent=11 // pred_check_branch
          %543 = sbr.rel (%p541) target = $region40
        $region39: #{forward.1} parent=11 // pred_region
          _
        $region40: #{forward.1} parent=11 // pred_fallthru
          _
        // Predicated region
        $region41: #{forward.1} parent=11 // pred_check
          %p544 = pneg %p251
        $region42: #{forward.1} parent=11 // pred_check_branch
          %546 = sbr.rel (%p544) target = $region44
        $region43: #{forward.1} parent=11 // pred_region
          %s548 = ssub.s32 4096, 4096
          %549 = vsyncadd [#allocation4], %s548
          %s550 = sshll.u32 [#allocation3], 4
          %s551 = int_to_ptr.vmem [resolvable:$true] %s550
          %556 = dma.hbm_to_vmem [thread:$0]  %s9, 4096, %s551, [#allocation4], 128, 128, 8
        $region44: #{forward.1} parent=11 // pred_fallthru
          _
        // Predicated region
        $region45: #{forward.1} parent=11 // pred_check
          %p557 = pneg %p272
        $region46: #{forward.1} parent=11 // pred_check_branch
          %559 = sbr.rel (%p557) target = $region48
        $region47: #{forward.1} parent=11 // pred_region
          _
        $region48: #{forward.1} parent=11 // pred_fallthru
          _
        // Predicated region
        $region49: #{forward.1} parent=11 // pred_check
          %p560 = pneg %p293
        $region50: #{forward.1} parent=11 // pred_check_branch
          %562 = sbr.rel (%p560) target = $region52
        $region51: #{forward.1} parent=11 // pred_region
          _
        $region52: #{forward.1} parent=11 // pred_fallthru
          _
        // Predicated region
        $region53: #{forward.1} parent=11 // pred_check
          %p563 = pneg %p314
        $region54: #{forward.1} parent=11 // pred_check_branch
          %565 = sbr.rel (%p563) target = $region56
        $region55: #{forward.1} parent=11 // pred_region
          _
        $region56: #{forward.1} parent=11 // pred_fallthru
          _
        // Predicated region
        $region57: #{forward.1} parent=11 // pred_check
          %p566 = pneg %p335
        $region58: #{forward.1} parent=11 // pred_check_branch
          %568 = sbr.rel (%p566) target = $region60
        $region59: #{forward.1} parent=11 // pred_region
          _
        $region60: #{forward.1} parent=11 // pred_fallthru
          _
        // Predicated region
        $region61: #{forward.1} parent=11 // pred_check
          %p569 = pneg %p356
        $region62: #{forward.1} parent=11 // pred_check_branch
          %571 = sbr.rel (%p569) target = $region64
        $region63: #{forward.1} parent=11 // pred_region
          _
        $region64: #{forward.1} parent=11 // pred_fallthru
          _
        // Predicated region
        $region65: #{forward.1} parent=11 // pred_check
          %p572 = pneg %p377
        $region66: #{forward.1} parent=11 // pred_check_branch
          %574 = sbr.rel (%p572) target = $region68
        $region67: #{forward.1} parent=11 // pred_region
          %s576 = ssub.s32 8192, 8192
          %577 = vsyncadd [#allocation6], %s576
          %s578 = sshll.u32 [#allocation5], 4
          %s579 = int_to_ptr.vmem [resolvable:$true] %s578
          %584 = dma.hbm_to_vmem [thread:$0]  %s15, 8192, %s579, [#allocation6], 128, 128, 8
        $region68: #{forward.1} parent=11 // pred_fallthru
          _
        // Predicated region
        $region69: #{forward.1} parent=11 // pred_check
          %p585 = pneg %p398
        $region70: #{forward.1} parent=11 // pred_check_branch
          %587 = sbr.rel (%p585) target = $region72
        $region71: #{forward.1} parent=11 // pred_region
          _
        $region72: #{forward.1} parent=11 // pred_fallthru
          _
        // Predicated region
        $region73: #{forward.1} parent=11 // pred_check
          %p588 = pneg %p419
        $region74: #{forward.1} parent=11 // pred_check_branch
          %590 = sbr.rel (%p588) target = $region76
        $region75: #{forward.1} parent=11 // pred_region
          _
        $region76: #{forward.1} parent=11 // pred_fallthru
          _
        // Predicated region
        $region77: #{forward.1} parent=11 // pred_check
          %p591 = pneg %p440
        $region78: #{forward.1} parent=11 // pred_check_branch
          %593 = sbr.rel (%p591) target = $region80
        $region79: #{forward.1} parent=11 // pred_region
          _
        $region80: #{forward.1} parent=11 // pred_fallthru
          _
        // Predicated region
        $region81: #{forward.1} parent=11 // pred_check
          %p594 = pneg %p461
        $region82: #{forward.1} parent=11 // pred_check_branch
          %596 = sbr.rel (%p594) target = $region84
        $region83: #{forward.1} parent=11 // pred_region
          _
        $region84: #{forward.1} parent=11 // pred_fallthru
          _
        // Predicated region
        $region85: #{forward.1} parent=11 // pred_check
          %p597 = pneg %p482
        $region86: #{forward.1} parent=11 // pred_check_branch
          %599 = sbr.rel (%p597) target = $region88
        $region87: #{forward.1} parent=11 // pred_region
          _
        $region88: #{forward.1} parent=11 // pred_fallthru
          _
      $region12: #{forward.1} parent=5 // pred_fallthru
        _
      %p600 = scmp.lt.s32.totalorder %s31, 2
      // Predicated region
      $region89: #{forward.1} parent=5 // pred_check
        %p601 = pneg %p600
      $region90: #{forward.1} parent=5 // pred_check_branch
        %603 = sbr.rel (%p601) target = $region92
      $region91: #{forward.1} parent=5 // pred_region
        // Predicated region
        $region93: #{forward.1} parent=91 // pred_check
          %p604 = pneg %p51
        $region94: #{forward.1} parent=91 // pred_check_branch
          %606 = sbr.rel (%p604) target = $region96
        $region95: #{forward.1} parent=91 // pred_region
          %p607 = scmp.lt.s32.totalorder %s31, 1
          %s608 = scalar_select %p607, %s31, 1
          %s609 = smul.addr %s608, 128
          %s610 = smul.addr %s609, 4
          %s611 = scalar_lea.vmem %s0, %s610
        $region96: #{forward.1} parent=91 // pred_fallthru
          _
        // Predicated region
        $region97: #{forward.1} parent=91 // pred_check
          %p612 = pneg %p77
        $region98: #{forward.1} parent=91 // pred_check_branch
          %614 = sbr.rel (%p612) target = $region100
        $region99: #{forward.1} parent=91 // pred_region
          %p615 = scmp.lt.s32.totalorder %s31, 1
          %s616 = scalar_select %p615, %s31, 1
          %s617 = smul.addr %s616, 4
          %s618 = smul.addr %s617, 8
          %s619 = scalar_lea.vmem %s1, %s618
        $region100: #{forward.1} parent=91 // pred_fallthru
          _
      $region92: #{forward.1} parent=5 // pred_fallthru
        _
      %p620 = scmp.le.s32.totalorder 1, %s31
      %p621 = scmp.lt.s32.totalorder %s31, 3
      %p622 = pnand %p620, %p621
      %p623 = pneg %p622
      // Predicated region
      $region101: #{forward.1} parent=5 // pred_check
        _
      $region102: #{forward.1} parent=5 // pred_check_branch
        %625 = sbr.rel (%p622) target = $region104
      $region103: #{forward.1} parent=5 // pred_region
        %s626 = ssub.s32 %s31, 1
        // Predicated region
        $region105: #{forward.1} parent=103 // pred_check
          %p627 = pneg %p251
        $region106: #{forward.1} parent=103 // pred_check_branch
          %629 = sbr.rel (%p627) target = $region108
        $region107: #{forward.1} parent=103 // pred_region
          %630 = dma.done [#allocation4], 4096
        $region108: #{forward.1} parent=103 // pred_fallthru
          _
        // Predicated region
        $region109: #{forward.1} parent=103 // pred_check
          %p631 = pneg %p377
        $region110: #{forward.1} parent=103 // pred_check_branch
          %633 = sbr.rel (%p631) target = $region112
        $region111: #{forward.1} parent=103 // pred_region
          %634 = dma.done [#allocation6], 8192
        $region112: #{forward.1} parent=103 // pred_fallthru
          _
        %p635 = scmp.lt.s32.totalorder %s36, 1
        %s636 = scalar_select %p635, %s36, 1
        %s637 = smul.addr %s636, 128
        %s638 = smul.addr %s637, 4
        %s639 = scalar_lea.vmem %s0, %s638
        %p640 = pneg %p57
        %p641 = pneg %p54
        %p642 = scmp.lt.s32.totalorder %s36, 1
        %s643 = scalar_select %p642, %s36, 1
        %s644 = smul.addr %s643, 4
        %s645 = smul.addr %s644, 8
        %s646 = scalar_lea.vmem %s1, %s645
        %p647 = pneg %p83
        %p648 = pneg %p80
        %p649 = pneg %p104
        %p650 = pneg %p101
        %p651 = pneg %p125
        %p652 = pneg %p122
        %p653 = pneg %p146
        %p654 = pneg %p143
        %p655 = pneg %p167
        %p656 = pneg %p164
        %p657 = pneg %p188
        %p658 = pneg %p185
        %p659 = pneg %p209
        %p660 = pneg %p206
        %p661 = pneg %p230
        %p662 = pneg %p227
        %p663 = pneg %p251
        %p664 = pneg %p248
        %p665 = pneg %p272
        %p666 = pneg %p269
        %p667 = pneg %p293
        %p668 = pneg %p290
        %p669 = pneg %p314
        %p670 = pneg %p311
        %p671 = pneg %p335
        %p672 = pneg %p332
        %p673 = pneg %p356
        %p674 = pneg %p353
        %p675 = pneg %p377
        %p676 = pneg %p374
        %p677 = pneg %p398
        %p678 = pneg %p395
        %p679 = pneg %p419
        %p680 = pneg %p416
        %p681 = pneg %p440
        %p682 = pneg %p437
        %p683 = pneg %p461
        %p684 = pneg %p458
        %p685 = pneg %p482
        %p686 = pneg %p479
        %p687 = pneg %p508
        %p688 = pneg %p505
        %p689 = scmp.lt.s32.totalorder %s36, 1
        %s690 = scalar_select %p689, %s36, 1
        %s691 = smul.addr %s690, 8
        %s692 = scalar_lea.vmem %s21, %s691
        %p693 = scmp.lt.s32.totalorder %s36, 1
        %s694 = scalar_select %p693, %s36, 1
        %s695 = smul.addr %s694, 128
        %s696 = smul.addr %s695, 4
        %s697 = scalar_lea.vmem %s0, %s696
        %p698 = scmp.lt.s32.totalorder %s36, 1
        %s699 = scalar_select %p698, %s36, 1
        %s700 = smul.addr %s699, 4
        %s701 = smul.addr %s700, 8
        %s702 = scalar_lea.vmem %s1, %s701
        %p703 = scmp.lt.s32.totalorder %s36, 1
        %s704 = scalar_select %p703, %s36, 1
        %s705 = smul.addr %s704, 8
        %s706 = scalar_lea.vmem %s21, %s705
        %v708 = vld [vmem:[%s697] sm:$0xff]
        %v709 = vld [vmem:[%s697 + $0x8] sm:$0xff]
        %v710 = vld [vmem:[%s697 + $0x10] sm:$0xff]
        %v711 = vld [vmem:[%s697 + $0x18] sm:$0xff]
        %v712 = vld [vmem:[%s697 + $0x20] sm:$0xff]
        %v713 = vld [vmem:[%s697 + $0x28] sm:$0xff]
        %v714 = vld [vmem:[%s697 + $0x30] sm:$0xff]
        %v715 = vld [vmem:[%s697 + $0x38] sm:$0xff]
        %v716 = vld [vmem:[%s697 + $0x40] sm:$0xff]
        %v717 = vld [vmem:[%s697 + $0x48] sm:$0xff]
        %v718 = vld [vmem:[%s697 + $0x50] sm:$0xff]
        %v719 = vld [vmem:[%s697 + $0x58] sm:$0xff]
        %v720 = vld [vmem:[%s697 + $0x60] sm:$0xff]
        %v721 = vld [vmem:[%s697 + $0x68] sm:$0xff]
        %v722 = vld [vmem:[%s697 + $0x70] sm:$0xff]
        %v723 = vld [vmem:[%s697 + $0x78] sm:$0xff]
        %v724 = vld [vmem:[%s697 + $0x80] sm:$0xff]
        %v725 = vld [vmem:[%s697 + $0x88] sm:$0xff]
        %v726 = vld [vmem:[%s697 + $0x90] sm:$0xff]
        %v727 = vld [vmem:[%s697 + $0x98] sm:$0xff]
        %v728 = vld [vmem:[%s697 + $0xa0] sm:$0xff]
        %v729 = vld [vmem:[%s697 + $0xa8] sm:$0xff]
        %v730 = vld [vmem:[%s697 + $0xb0] sm:$0xff]
        %v731 = vld [vmem:[%s697 + $0xb8] sm:$0xff]
        %v732 = vld [vmem:[%s697 + $0xc0] sm:$0xff]
        %v733 = vld [vmem:[%s697 + $0xc8] sm:$0xff]
        %v734 = vld [vmem:[%s697 + $0xd0] sm:$0xff]
        %v735 = vld [vmem:[%s697 + $0xd8] sm:$0xff]
        %v736 = vld [vmem:[%s697 + $0xe0] sm:$0xff]
        %v737 = vld [vmem:[%s697 + $0xe8] sm:$0xff]
        %v738 = vld [vmem:[%s697 + $0xf0] sm:$0xff]
        %v739 = vld [vmem:[%s697 + $0xf8] sm:$0xff]
        %v740 = vld [vmem:[%s697 + $0x100] sm:$0xff]
        %v741 = vld [vmem:[%s697 + $0x108] sm:$0xff]
        %v742 = vld [vmem:[%s697 + $0x110] sm:$0xff]
        %v743 = vld [vmem:[%s697 + $0x118] sm:$0xff]
        %v744 = vld [vmem:[%s697 + $0x120] sm:$0xff]
        %v745 = vld [vmem:[%s697 + $0x128] sm:$0xff]
        %v746 = vld [vmem:[%s697 + $0x130] sm:$0xff]
        %v747 = vld [vmem:[%s697 + $0x138] sm:$0xff]
        %v748 = vld [vmem:[%s697 + $0x140] sm:$0xff]
        %v749 = vld [vmem:[%s697 + $0x148] sm:$0xff]
        %v750 = vld [vmem:[%s697 + $0x150] sm:$0xff]
        %v751 = vld [vmem:[%s697 + $0x158] sm:$0xff]
        %v752 = vld [vmem:[%s697 + $0x160] sm:$0xff]
        %v753 = vld [vmem:[%s697 + $0x168] sm:$0xff]
        %v754 = vld [vmem:[%s697 + $0x170] sm:$0xff]
        %v755 = vld [vmem:[%s697 + $0x178] sm:$0xff]
        %v756 = vld [vmem:[%s697 + $0x180] sm:$0xff]
        %v757 = vld [vmem:[%s697 + $0x188] sm:$0xff]
        %v758 = vld [vmem:[%s697 + $0x190] sm:$0xff]
        %v759 = vld [vmem:[%s697 + $0x198] sm:$0xff]
        %v760 = vld [vmem:[%s697 + $0x1a0] sm:$0xff]
        %v761 = vld [vmem:[%s697 + $0x1a8] sm:$0xff]
        %v762 = vld [vmem:[%s697 + $0x1b0] sm:$0xff]
        %v763 = vld [vmem:[%s697 + $0x1b8] sm:$0xff]
        %v764 = vld [vmem:[%s697 + $0x1c0] sm:$0xff]
        %v765 = vld [vmem:[%s697 + $0x1c8] sm:$0xff]
        %v766 = vld [vmem:[%s697 + $0x1d0] sm:$0xff]
        %v767 = vld [vmem:[%s697 + $0x1d8] sm:$0xff]
        %v768 = vld [vmem:[%s697 + $0x1e0] sm:$0xff]
        %v769 = vld [vmem:[%s697 + $0x1e8] sm:$0xff]
        %v770 = vld [vmem:[%s697 + $0x1f0] sm:$0xff]
        %v771 = vld [vmem:[%s697 + $0x1f8] sm:$0xff]
        %v772 = vld [vmem:[%s2] sm:$0xff]
        %v773 = vld [vmem:[%s2 + $0x8] sm:$0xff]
        %v774 = vld [vmem:[%s2 + $0x10] sm:$0xff]
        %v775 = vld [vmem:[%s2 + $0x18] sm:$0xff]
        %v776 = vld [vmem:[%s2 + $0x20] sm:$0xff]
        %v777 = vld [vmem:[%s2 + $0x28] sm:$0xff]
        %v778 = vld [vmem:[%s2 + $0x30] sm:$0xff]
        %v779 = vld [vmem:[%s2 + $0x38] sm:$0xff]
        %v780 = vld [vmem:[%s2 + $0x40] sm:$0xff]
        %v781 = vld [vmem:[%s2 + $0x48] sm:$0xff]
        %v782 = vld [vmem:[%s2 + $0x50] sm:$0xff]
        %v783 = vld [vmem:[%s2 + $0x58] sm:$0xff]
        %v784 = vld [vmem:[%s2 + $0x60] sm:$0xff]
        %v785 = vld [vmem:[%s2 + $0x68] sm:$0xff]
        %v786 = vld [vmem:[%s2 + $0x70] sm:$0xff]
        %v787 = vld [vmem:[%s2 + $0x78] sm:$0xff]
        %v788 = vld [vmem:[%s2 + $0x80] sm:$0xff]
        %v789 = vld [vmem:[%s2 + $0x88] sm:$0xff]
        %v790 = vld [vmem:[%s2 + $0x90] sm:$0xff]
        %v791 = vld [vmem:[%s2 + $0x98] sm:$0xff]
        %v792 = vld [vmem:[%s2 + $0xa0] sm:$0xff]
        %v793 = vld [vmem:[%s2 + $0xa8] sm:$0xff]
        %v794 = vld [vmem:[%s2 + $0xb0] sm:$0xff]
        %v795 = vld [vmem:[%s2 + $0xb8] sm:$0xff]
        %v796 = vld [vmem:[%s2 + $0xc0] sm:$0xff]
        %v797 = vld [vmem:[%s2 + $0xc8] sm:$0xff]
        %v798 = vld [vmem:[%s2 + $0xd0] sm:$0xff]
        %v799 = vld [vmem:[%s2 + $0xd8] sm:$0xff]
        %v800 = vld [vmem:[%s2 + $0xe0] sm:$0xff]
        %v801 = vld [vmem:[%s2 + $0xe8] sm:$0xff]
        %v802 = vld [vmem:[%s2 + $0xf0] sm:$0xff]
        %v803 = vld [vmem:[%s2 + $0xf8] sm:$0xff]
        %v804 = vld [vmem:[%s2 + $0x100] sm:$0xff]
        %v805 = vld [vmem:[%s2 + $0x108] sm:$0xff]
        %v806 = vld [vmem:[%s2 + $0x110] sm:$0xff]
        %v807 = vld [vmem:[%s2 + $0x118] sm:$0xff]
        %v808 = vld [vmem:[%s2 + $0x120] sm:$0xff]
        %v809 = vld [vmem:[%s2 + $0x128] sm:$0xff]
        %v810 = vld [vmem:[%s2 + $0x130] sm:$0xff]
        %v811 = vld [vmem:[%s2 + $0x138] sm:$0xff]
        %v812 = vld [vmem:[%s2 + $0x140] sm:$0xff]
        %v813 = vld [vmem:[%s2 + $0x148] sm:$0xff]
        %v814 = vld [vmem:[%s2 + $0x150] sm:$0xff]
        %v815 = vld [vmem:[%s2 + $0x158] sm:$0xff]
        %v816 = vld [vmem:[%s2 + $0x160] sm:$0xff]
        %v817 = vld [vmem:[%s2 + $0x168] sm:$0xff]
        %v818 = vld [vmem:[%s2 + $0x170] sm:$0xff]
        %v819 = vld [vmem:[%s2 + $0x178] sm:$0xff]
        %v820 = vld [vmem:[%s2 + $0x180] sm:$0xff]
        %v821 = vld [vmem:[%s2 + $0x188] sm:$0xff]
        %v822 = vld [vmem:[%s2 + $0x190] sm:$0xff]
        %v823 = vld [vmem:[%s2 + $0x198] sm:$0xff]
        %v824 = vld [vmem:[%s2 + $0x1a0] sm:$0xff]
        %v825 = vld [vmem:[%s2 + $0x1a8] sm:$0xff]
        %v826 = vld [vmem:[%s2 + $0x1b0] sm:$0xff]
        %v827 = vld [vmem:[%s2 + $0x1b8] sm:$0xff]
        %v828 = vld [vmem:[%s2 + $0x1c0] sm:$0xff]
        %v829 = vld [vmem:[%s2 + $0x1c8] sm:$0xff]
        %v830 = vld [vmem:[%s2 + $0x1d0] sm:$0xff]
        %v831 = vld [vmem:[%s2 + $0x1d8] sm:$0xff]
        %v832 = vld [vmem:[%s2 + $0x1e0] sm:$0xff]
        %v833 = vld [vmem:[%s2 + $0x1e8] sm:$0xff]
        %v834 = vld [vmem:[%s2 + $0x1f0] sm:$0xff]
        %v835 = vld [vmem:[%s2 + $0x1f8] sm:$0xff]
        %v836 = vld [vmem:[%s2 + $0x200] sm:$0xff]
        %v837 = vld [vmem:[%s2 + $0x208] sm:$0xff]
        %v838 = vld [vmem:[%s2 + $0x210] sm:$0xff]
        %v839 = vld [vmem:[%s2 + $0x218] sm:$0xff]
        %v840 = vld [vmem:[%s2 + $0x220] sm:$0xff]
        %v841 = vld [vmem:[%s2 + $0x228] sm:$0xff]
        %v842 = vld [vmem:[%s2 + $0x230] sm:$0xff]
        %v843 = vld [vmem:[%s2 + $0x238] sm:$0xff]
        %v844 = vld [vmem:[%s2 + $0x240] sm:$0xff]
        %v845 = vld [vmem:[%s2 + $0x248] sm:$0xff]
        %v846 = vld [vmem:[%s2 + $0x250] sm:$0xff]
        %v847 = vld [vmem:[%s2 + $0x258] sm:$0xff]
        %v848 = vld [vmem:[%s2 + $0x260] sm:$0xff]
        %v849 = vld [vmem:[%s2 + $0x268] sm:$0xff]
        %v850 = vld [vmem:[%s2 + $0x270] sm:$0xff]
        %v851 = vld [vmem:[%s2 + $0x278] sm:$0xff]
        %v852 = vld [vmem:[%s2 + $0x280] sm:$0xff]
        %v853 = vld [vmem:[%s2 + $0x288] sm:$0xff]
        %v854 = vld [vmem:[%s2 + $0x290] sm:$0xff]
        %v855 = vld [vmem:[%s2 + $0x298] sm:$0xff]
        %v856 = vld [vmem:[%s2 + $0x2a0] sm:$0xff]
        %v857 = vld [vmem:[%s2 + $0x2a8] sm:$0xff]
        %v858 = vld [vmem:[%s2 + $0x2b0] sm:$0xff]
        %v859 = vld [vmem:[%s2 + $0x2b8] sm:$0xff]
        %v860 = vld [vmem:[%s2 + $0x2c0] sm:$0xff]
        %v861 = vld [vmem:[%s2 + $0x2c8] sm:$0xff]
        %v862 = vld [vmem:[%s2 + $0x2d0] sm:$0xff]
        %v863 = vld [vmem:[%s2 + $0x2d8] sm:$0xff]
        %v864 = vld [vmem:[%s2 + $0x2e0] sm:$0xff]
        %v865 = vld [vmem:[%s2 + $0x2e8] sm:$0xff]
        %v866 = vld [vmem:[%s2 + $0x2f0] sm:$0xff]
        %v867 = vld [vmem:[%s2 + $0x2f8] sm:$0xff]
        %v868 = vld [vmem:[%s2 + $0x300] sm:$0xff]
        %v869 = vld [vmem:[%s2 + $0x308] sm:$0xff]
        %v870 = vld [vmem:[%s2 + $0x310] sm:$0xff]
        %v871 = vld [vmem:[%s2 + $0x318] sm:$0xff]
        %v872 = vld [vmem:[%s2 + $0x320] sm:$0xff]
        %v873 = vld [vmem:[%s2 + $0x328] sm:$0xff]
        %v874 = vld [vmem:[%s2 + $0x330] sm:$0xff]
        %v875 = vld [vmem:[%s2 + $0x338] sm:$0xff]
        %v876 = vld [vmem:[%s2 + $0x340] sm:$0xff]
        %v877 = vld [vmem:[%s2 + $0x348] sm:$0xff]
        %v878 = vld [vmem:[%s2 + $0x350] sm:$0xff]
        %v879 = vld [vmem:[%s2 + $0x358] sm:$0xff]
        %v880 = vld [vmem:[%s2 + $0x360] sm:$0xff]
        %v881 = vld [vmem:[%s2 + $0x368] sm:$0xff]
        %v882 = vld [vmem:[%s2 + $0x370] sm:$0xff]
        %v883 = vld [vmem:[%s2 + $0x378] sm:$0xff]
        %v884 = vld [vmem:[%s2 + $0x380] sm:$0xff]
        %v885 = vld [vmem:[%s2 + $0x388] sm:$0xff]
        %v886 = vld [vmem:[%s2 + $0x390] sm:$0xff]
        %v887 = vld [vmem:[%s2 + $0x398] sm:$0xff]
        %v888 = vld [vmem:[%s2 + $0x3a0] sm:$0xff]
        %v889 = vld [vmem:[%s2 + $0x3a8] sm:$0xff]
        %v890 = vld [vmem:[%s2 + $0x3b0] sm:$0xff]
        %v891 = vld [vmem:[%s2 + $0x3b8] sm:$0xff]
        %v892 = vld [vmem:[%s2 + $0x3c0] sm:$0xff]
        %v893 = vld [vmem:[%s2 + $0x3c8] sm:$0xff]
        %v894 = vld [vmem:[%s2 + $0x3d0] sm:$0xff]
        %v895 = vld [vmem:[%s2 + $0x3d8] sm:$0xff]
        %v896 = vld [vmem:[%s2 + $0x3e0] sm:$0xff]
        %v897 = vld [vmem:[%s2 + $0x3e8] sm:$0xff]
        %v898 = vld [vmem:[%s2 + $0x3f0] sm:$0xff]
        %v899 = vld [vmem:[%s2 + $0x3f8] sm:$0xff]
        %v900 = vld [vmem:[%s2 + $0x400] sm:$0xff]
        %v901 = vld [vmem:[%s2 + $0x408] sm:$0xff]
        %v902 = vld [vmem:[%s2 + $0x410] sm:$0xff]
        %v903 = vld [vmem:[%s2 + $0x418] sm:$0xff]
        %v904 = vld [vmem:[%s2 + $0x420] sm:$0xff]
        %v905 = vld [vmem:[%s2 + $0x428] sm:$0xff]
        %v906 = vld [vmem:[%s2 + $0x430] sm:$0xff]
        %v907 = vld [vmem:[%s2 + $0x438] sm:$0xff]
        %v908 = vld [vmem:[%s2 + $0x440] sm:$0xff]
        %v909 = vld [vmem:[%s2 + $0x448] sm:$0xff]
        %v910 = vld [vmem:[%s2 + $0x450] sm:$0xff]
        %v911 = vld [vmem:[%s2 + $0x458] sm:$0xff]
        %v912 = vld [vmem:[%s2 + $0x460] sm:$0xff]
        %v913 = vld [vmem:[%s2 + $0x468] sm:$0xff]
        %v914 = vld [vmem:[%s2 + $0x470] sm:$0xff]
        %v915 = vld [vmem:[%s2 + $0x478] sm:$0xff]
        %v916 = vld [vmem:[%s2 + $0x480] sm:$0xff]
        %v917 = vld [vmem:[%s2 + $0x488] sm:$0xff]
        %v918 = vld [vmem:[%s2 + $0x490] sm:$0xff]
        %v919 = vld [vmem:[%s2 + $0x498] sm:$0xff]
        %v920 = vld [vmem:[%s2 + $0x4a0] sm:$0xff]
        %v921 = vld [vmem:[%s2 + $0x4a8] sm:$0xff]
        %v922 = vld [vmem:[%s2 + $0x4b0] sm:$0xff]
        %v923 = vld [vmem:[%s2 + $0x4b8] sm:$0xff]
        %v924 = vld [vmem:[%s2 + $0x4c0] sm:$0xff]
        %v925 = vld [vmem:[%s2 + $0x4c8] sm:$0xff]
        %v926 = vld [vmem:[%s2 + $0x4d0] sm:$0xff]
        %v927 = vld [vmem:[%s2 + $0x4d8] sm:$0xff]
        %v928 = vld [vmem:[%s2 + $0x4e0] sm:$0xff]
        %v929 = vld [vmem:[%s2 + $0x4e8] sm:$0xff]
        %v930 = vld [vmem:[%s2 + $0x4f0] sm:$0xff]
        %v931 = vld [vmem:[%s2 + $0x4f8] sm:$0xff]
        %v932 = vld [vmem:[%s2 + $0x500] sm:$0xff]
        %v933 = vld [vmem:[%s2 + $0x508] sm:$0xff]
        %v934 = vld [vmem:[%s2 + $0x510] sm:$0xff]
        %v935 = vld [vmem:[%s2 + $0x518] sm:$0xff]
        %v936 = vld [vmem:[%s2 + $0x520] sm:$0xff]
        %v937 = vld [vmem:[%s2 + $0x528] sm:$0xff]
        %v938 = vld [vmem:[%s2 + $0x530] sm:$0xff]
        %v939 = vld [vmem:[%s2 + $0x538] sm:$0xff]
        %v940 = vld [vmem:[%s2 + $0x540] sm:$0xff]
        %v941 = vld [vmem:[%s2 + $0x548] sm:$0xff]
        %v942 = vld [vmem:[%s2 + $0x550] sm:$0xff]
        %v943 = vld [vmem:[%s2 + $0x558] sm:$0xff]
        %v944 = vld [vmem:[%s2 + $0x560] sm:$0xff]
        %v945 = vld [vmem:[%s2 + $0x568] sm:$0xff]
        %v946 = vld [vmem:[%s2 + $0x570] sm:$0xff]
        %v947 = vld [vmem:[%s2 + $0x578] sm:$0xff]
        %v948 = vld [vmem:[%s2 + $0x580] sm:$0xff]
        %v949 = vld [vmem:[%s2 + $0x588] sm:$0xff]
        %v950 = vld [vmem:[%s2 + $0x590] sm:$0xff]
        %v951 = vld [vmem:[%s2 + $0x598] sm:$0xff]
        %v952 = vld [vmem:[%s2 + $0x5a0] sm:$0xff]
        %v953 = vld [vmem:[%s2 + $0x5a8] sm:$0xff]
        %v954 = vld [vmem:[%s2 + $0x5b0] sm:$0xff]
        %v955 = vld [vmem:[%s2 + $0x5b8] sm:$0xff]
        %v956 = vld [vmem:[%s2 + $0x5c0] sm:$0xff]
        %v957 = vld [vmem:[%s2 + $0x5c8] sm:$0xff]
        %v958 = vld [vmem:[%s2 + $0x5d0] sm:$0xff]
        %v959 = vld [vmem:[%s2 + $0x5d8] sm:$0xff]
        %v960 = vld [vmem:[%s2 + $0x5e0] sm:$0xff]
        %v961 = vld [vmem:[%s2 + $0x5e8] sm:$0xff]
        %v962 = vld [vmem:[%s2 + $0x5f0] sm:$0xff]
        %v963 = vld [vmem:[%s2 + $0x5f8] sm:$0xff]
        %v964 = vld [vmem:[%s2 + $0x600] sm:$0xff]
        %v965 = vld [vmem:[%s2 + $0x608] sm:$0xff]
        %v966 = vld [vmem:[%s2 + $0x610] sm:$0xff]
        %v967 = vld [vmem:[%s2 + $0x618] sm:$0xff]
        %v968 = vld [vmem:[%s2 + $0x620] sm:$0xff]
        %v969 = vld [vmem:[%s2 + $0x628] sm:$0xff]
        %v970 = vld [vmem:[%s2 + $0x630] sm:$0xff]
        %v971 = vld [vmem:[%s2 + $0x638] sm:$0xff]
        %v972 = vld [vmem:[%s2 + $0x640] sm:$0xff]
        %v973 = vld [vmem:[%s2 + $0x648] sm:$0xff]
        %v974 = vld [vmem:[%s2 + $0x650] sm:$0xff]
        %v975 = vld [vmem:[%s2 + $0x658] sm:$0xff]
        %v976 = vld [vmem:[%s2 + $0x660] sm:$0xff]
        %v977 = vld [vmem:[%s2 + $0x668] sm:$0xff]
        %v978 = vld [vmem:[%s2 + $0x670] sm:$0xff]
        %v979 = vld [vmem:[%s2 + $0x678] sm:$0xff]
        %v980 = vld [vmem:[%s2 + $0x680] sm:$0xff]
        %v981 = vld [vmem:[%s2 + $0x688] sm:$0xff]
        %v982 = vld [vmem:[%s2 + $0x690] sm:$0xff]
        %v983 = vld [vmem:[%s2 + $0x698] sm:$0xff]
        %v984 = vld [vmem:[%s2 + $0x6a0] sm:$0xff]
        %v985 = vld [vmem:[%s2 + $0x6a8] sm:$0xff]
        %v986 = vld [vmem:[%s2 + $0x6b0] sm:$0xff]
        %v987 = vld [vmem:[%s2 + $0x6b8] sm:$0xff]
        %v988 = vld [vmem:[%s2 + $0x6c0] sm:$0xff]
        %v989 = vld [vmem:[%s2 + $0x6c8] sm:$0xff]
        %v990 = vld [vmem:[%s2 + $0x6d0] sm:$0xff]
        %v991 = vld [vmem:[%s2 + $0x6d8] sm:$0xff]
        %v992 = vld [vmem:[%s2 + $0x6e0] sm:$0xff]
        %v993 = vld [vmem:[%s2 + $0x6e8] sm:$0xff]
        %v994 = vld [vmem:[%s2 + $0x6f0] sm:$0xff]
        %v995 = vld [vmem:[%s2 + $0x6f8] sm:$0xff]
        %v996 = vld [vmem:[%s2 + $0x700] sm:$0xff]
        %v997 = vld [vmem:[%s2 + $0x708] sm:$0xff]
        %v998 = vld [vmem:[%s2 + $0x710] sm:$0xff]
        %v999 = vld [vmem:[%s2 + $0x718] sm:$0xff]
        %v1000 = vld [vmem:[%s2 + $0x720] sm:$0xff]
        %v1001 = vld [vmem:[%s2 + $0x728] sm:$0xff]
        %v1002 = vld [vmem:[%s2 + $0x730] sm:$0xff]
        %v1003 = vld [vmem:[%s2 + $0x738] sm:$0xff]
        %v1004 = vld [vmem:[%s2 + $0x740] sm:$0xff]
        %v1005 = vld [vmem:[%s2 + $0x748] sm:$0xff]
        %v1006 = vld [vmem:[%s2 + $0x750] sm:$0xff]
        %v1007 = vld [vmem:[%s2 + $0x758] sm:$0xff]
        %v1008 = vld [vmem:[%s2 + $0x760] sm:$0xff]
        %v1009 = vld [vmem:[%s2 + $0x768] sm:$0xff]
        %v1010 = vld [vmem:[%s2 + $0x770] sm:$0xff]
        %v1011 = vld [vmem:[%s2 + $0x778] sm:$0xff]
        %v1012 = vld [vmem:[%s2 + $0x780] sm:$0xff]
        %v1013 = vld [vmem:[%s2 + $0x788] sm:$0xff]
        %v1014 = vld [vmem:[%s2 + $0x790] sm:$0xff]
        %v1015 = vld [vmem:[%s2 + $0x798] sm:$0xff]
        %v1016 = vld [vmem:[%s2 + $0x7a0] sm:$0xff]
        %v1017 = vld [vmem:[%s2 + $0x7a8] sm:$0xff]
        %v1018 = vld [vmem:[%s2 + $0x7b0] sm:$0xff]
        %v1019 = vld [vmem:[%s2 + $0x7b8] sm:$0xff]
        %v1020 = vld [vmem:[%s2 + $0x7c0] sm:$0xff]
        %v1021 = vld [vmem:[%s2 + $0x7c8] sm:$0xff]
        %v1022 = vld [vmem:[%s2 + $0x7d0] sm:$0xff]
        %v1023 = vld [vmem:[%s2 + $0x7d8] sm:$0xff]
        %v1024 = vld [vmem:[%s2 + $0x7e0] sm:$0xff]
        %v1025 = vld [vmem:[%s2 + $0x7e8] sm:$0xff]
        %v1026 = vld [vmem:[%s2 + $0x7f0] sm:$0xff]
        %v1027 = vld [vmem:[%s2 + $0x7f8] sm:$0xff]
        %v1028 = vld [vmem:[%s2 + $0x800] sm:$0xff]
        %v1029 = vld [vmem:[%s2 + $0x808] sm:$0xff]
        %v1030 = vld [vmem:[%s2 + $0x810] sm:$0xff]
        %v1031 = vld [vmem:[%s2 + $0x818] sm:$0xff]
        %v1032 = vld [vmem:[%s2 + $0x820] sm:$0xff]
        %v1033 = vld [vmem:[%s2 + $0x828] sm:$0xff]
        %v1034 = vld [vmem:[%s2 + $0x830] sm:$0xff]
        %v1035 = vld [vmem:[%s2 + $0x838] sm:$0xff]
        %v1036 = vld [vmem:[%s2 + $0x840] sm:$0xff]
        %v1037 = vld [vmem:[%s2 + $0x848] sm:$0xff]
        %v1038 = vld [vmem:[%s2 + $0x850] sm:$0xff]
        %v1039 = vld [vmem:[%s2 + $0x858] sm:$0xff]
        %v1040 = vld [vmem:[%s2 + $0x860] sm:$0xff]
        %v1041 = vld [vmem:[%s2 + $0x868] sm:$0xff]
        %v1042 = vld [vmem:[%s2 + $0x870] sm:$0xff]
        %v1043 = vld [vmem:[%s2 + $0x878] sm:$0xff]
        %v1044 = vld [vmem:[%s2 + $0x880] sm:$0xff]
        %v1045 = vld [vmem:[%s2 + $0x888] sm:$0xff]
        %v1046 = vld [vmem:[%s2 + $0x890] sm:$0xff]
        %v1047 = vld [vmem:[%s2 + $0x898] sm:$0xff]
        %v1048 = vld [vmem:[%s2 + $0x8a0] sm:$0xff]
        %v1049 = vld [vmem:[%s2 + $0x8a8] sm:$0xff]
        %v1050 = vld [vmem:[%s2 + $0x8b0] sm:$0xff]
        %v1051 = vld [vmem:[%s2 + $0x8b8] sm:$0xff]
        %v1052 = vld [vmem:[%s2 + $0x8c0] sm:$0xff]
        %v1053 = vld [vmem:[%s2 + $0x8c8] sm:$0xff]
        %v1054 = vld [vmem:[%s2 + $0x8d0] sm:$0xff]
        %v1055 = vld [vmem:[%s2 + $0x8d8] sm:$0xff]
        %v1056 = vld [vmem:[%s2 + $0x8e0] sm:$0xff]
        %v1057 = vld [vmem:[%s2 + $0x8e8] sm:$0xff]
        %v1058 = vld [vmem:[%s2 + $0x8f0] sm:$0xff]
        %v1059 = vld [vmem:[%s2 + $0x8f8] sm:$0xff]
        %v1060 = vld [vmem:[%s2 + $0x900] sm:$0xff]
        %v1061 = vld [vmem:[%s2 + $0x908] sm:$0xff]
        %v1062 = vld [vmem:[%s2 + $0x910] sm:$0xff]
        %v1063 = vld [vmem:[%s2 + $0x918] sm:$0xff]
        %v1064 = vld [vmem:[%s2 + $0x920] sm:$0xff]
        %v1065 = vld [vmem:[%s2 + $0x928] sm:$0xff]
        %v1066 = vld [vmem:[%s2 + $0x930] sm:$0xff]
        %v1067 = vld [vmem:[%s2 + $0x938] sm:$0xff]
        %v1068 = vld [vmem:[%s2 + $0x940] sm:$0xff]
        %v1069 = vld [vmem:[%s2 + $0x948] sm:$0xff]
        %v1070 = vld [vmem:[%s2 + $0x950] sm:$0xff]
        %v1071 = vld [vmem:[%s2 + $0x958] sm:$0xff]
        %v1072 = vld [vmem:[%s2 + $0x960] sm:$0xff]
        %v1073 = vld [vmem:[%s2 + $0x968] sm:$0xff]
        %v1074 = vld [vmem:[%s2 + $0x970] sm:$0xff]
        %v1075 = vld [vmem:[%s2 + $0x978] sm:$0xff]
        %v1076 = vld [vmem:[%s2 + $0x980] sm:$0xff]
        %v1077 = vld [vmem:[%s2 + $0x988] sm:$0xff]
        %v1078 = vld [vmem:[%s2 + $0x990] sm:$0xff]
        %v1079 = vld [vmem:[%s2 + $0x998] sm:$0xff]
        %v1080 = vld [vmem:[%s2 + $0x9a0] sm:$0xff]
        %v1081 = vld [vmem:[%s2 + $0x9a8] sm:$0xff]
        %v1082 = vld [vmem:[%s2 + $0x9b0] sm:$0xff]
        %v1083 = vld [vmem:[%s2 + $0x9b8] sm:$0xff]
        %v1084 = vld [vmem:[%s2 + $0x9c0] sm:$0xff]
        %v1085 = vld [vmem:[%s2 + $0x9c8] sm:$0xff]
        %v1086 = vld [vmem:[%s2 + $0x9d0] sm:$0xff]
        %v1087 = vld [vmem:[%s2 + $0x9d8] sm:$0xff]
        %v1088 = vld [vmem:[%s2 + $0x9e0] sm:$0xff]
        %v1089 = vld [vmem:[%s2 + $0x9e8] sm:$0xff]
        %v1090 = vld [vmem:[%s2 + $0x9f0] sm:$0xff]
        %v1091 = vld [vmem:[%s2 + $0x9f8] sm:$0xff]
        %v1092 = vld [vmem:[%s2 + $0xa00] sm:$0xff]
        %v1093 = vld [vmem:[%s2 + $0xa08] sm:$0xff]
        %v1094 = vld [vmem:[%s2 + $0xa10] sm:$0xff]
        %v1095 = vld [vmem:[%s2 + $0xa18] sm:$0xff]
        %v1096 = vld [vmem:[%s2 + $0xa20] sm:$0xff]
        %v1097 = vld [vmem:[%s2 + $0xa28] sm:$0xff]
        %v1098 = vld [vmem:[%s2 + $0xa30] sm:$0xff]
        %v1099 = vld [vmem:[%s2 + $0xa38] sm:$0xff]
        %v1100 = vld [vmem:[%s2 + $0xa40] sm:$0xff]
        %v1101 = vld [vmem:[%s2 + $0xa48] sm:$0xff]
        %v1102 = vld [vmem:[%s2 + $0xa50] sm:$0xff]
        %v1103 = vld [vmem:[%s2 + $0xa58] sm:$0xff]
        %v1104 = vld [vmem:[%s2 + $0xa60] sm:$0xff]
        %v1105 = vld [vmem:[%s2 + $0xa68] sm:$0xff]
        %v1106 = vld [vmem:[%s2 + $0xa70] sm:$0xff]
        %v1107 = vld [vmem:[%s2 + $0xa78] sm:$0xff]
        %v1108 = vld [vmem:[%s2 + $0xa80] sm:$0xff]
        %v1109 = vld [vmem:[%s2 + $0xa88] sm:$0xff]
        %v1110 = vld [vmem:[%s2 + $0xa90] sm:$0xff]
        %v1111 = vld [vmem:[%s2 + $0xa98] sm:$0xff]
        %v1112 = vld [vmem:[%s2 + $0xaa0] sm:$0xff]
        %v1113 = vld [vmem:[%s2 + $0xaa8] sm:$0xff]
        %v1114 = vld [vmem:[%s2 + $0xab0] sm:$0xff]
        %v1115 = vld [vmem:[%s2 + $0xab8] sm:$0xff]
        %v1116 = vld [vmem:[%s2 + $0xac0] sm:$0xff]
        %v1117 = vld [vmem:[%s2 + $0xac8] sm:$0xff]
        %v1118 = vld [vmem:[%s2 + $0xad0] sm:$0xff]
        %v1119 = vld [vmem:[%s2 + $0xad8] sm:$0xff]
        %v1120 = vld [vmem:[%s2 + $0xae0] sm:$0xff]
        %v1121 = vld [vmem:[%s2 + $0xae8] sm:$0xff]
        %v1122 = vld [vmem:[%s2 + $0xaf0] sm:$0xff]
        %v1123 = vld [vmem:[%s2 + $0xaf8] sm:$0xff]
        %v1124 = vld [vmem:[%s2 + $0xb00] sm:$0xff]
        %v1125 = vld [vmem:[%s2 + $0xb08] sm:$0xff]
        %v1126 = vld [vmem:[%s2 + $0xb10] sm:$0xff]
        %v1127 = vld [vmem:[%s2 + $0xb18] sm:$0xff]
        %v1128 = vld [vmem:[%s2 + $0xb20] sm:$0xff]
        %v1129 = vld [vmem:[%s2 + $0xb28] sm:$0xff]
        %v1130 = vld [vmem:[%s2 + $0xb30] sm:$0xff]
        %v1131 = vld [vmem:[%s2 + $0xb38] sm:$0xff]
        %v1132 = vld [vmem:[%s2 + $0xb40] sm:$0xff]
        %v1133 = vld [vmem:[%s2 + $0xb48] sm:$0xff]
        %v1134 = vld [vmem:[%s2 + $0xb50] sm:$0xff]
        %v1135 = vld [vmem:[%s2 + $0xb58] sm:$0xff]
        %v1136 = vld [vmem:[%s2 + $0xb60] sm:$0xff]
        %v1137 = vld [vmem:[%s2 + $0xb68] sm:$0xff]
        %v1138 = vld [vmem:[%s2 + $0xb70] sm:$0xff]
        %v1139 = vld [vmem:[%s2 + $0xb78] sm:$0xff]
        %v1140 = vld [vmem:[%s2 + $0xb80] sm:$0xff]
        %v1141 = vld [vmem:[%s2 + $0xb88] sm:$0xff]
        %v1142 = vld [vmem:[%s2 + $0xb90] sm:$0xff]
        %v1143 = vld [vmem:[%s2 + $0xb98] sm:$0xff]
        %v1144 = vld [vmem:[%s2 + $0xba0] sm:$0xff]
        %v1145 = vld [vmem:[%s2 + $0xba8] sm:$0xff]
        %v1146 = vld [vmem:[%s2 + $0xbb0] sm:$0xff]
        %v1147 = vld [vmem:[%s2 + $0xbb8] sm:$0xff]
        %v1148 = vld [vmem:[%s2 + $0xbc0] sm:$0xff]
        %v1149 = vld [vmem:[%s2 + $0xbc8] sm:$0xff]
        %v1150 = vld [vmem:[%s2 + $0xbd0] sm:$0xff]
        %v1151 = vld [vmem:[%s2 + $0xbd8] sm:$0xff]
        %v1152 = vld [vmem:[%s2 + $0xbe0] sm:$0xff]
        %v1153 = vld [vmem:[%s2 + $0xbe8] sm:$0xff]
        %v1154 = vld [vmem:[%s2 + $0xbf0] sm:$0xff]
        %v1155 = vld [vmem:[%s2 + $0xbf8] sm:$0xff]
        %v1156 = vld [vmem:[%s2 + $0xc00] sm:$0xff]
        %v1157 = vld [vmem:[%s2 + $0xc08] sm:$0xff]
        %v1158 = vld [vmem:[%s2 + $0xc10] sm:$0xff]
        %v1159 = vld [vmem:[%s2 + $0xc18] sm:$0xff]
        %v1160 = vld [vmem:[%s2 + $0xc20] sm:$0xff]
        %v1161 = vld [vmem:[%s2 + $0xc28] sm:$0xff]
        %v1162 = vld [vmem:[%s2 + $0xc30] sm:$0xff]
        %v1163 = vld [vmem:[%s2 + $0xc38] sm:$0xff]
        %v1164 = vld [vmem:[%s2 + $0xc40] sm:$0xff]
        %v1165 = vld [vmem:[%s2 + $0xc48] sm:$0xff]
        %v1166 = vld [vmem:[%s2 + $0xc50] sm:$0xff]
        %v1167 = vld [vmem:[%s2 + $0xc58] sm:$0xff]
        %v1168 = vld [vmem:[%s2 + $0xc60] sm:$0xff]
        %v1169 = vld [vmem:[%s2 + $0xc68] sm:$0xff]
        %v1170 = vld [vmem:[%s2 + $0xc70] sm:$0xff]
        %v1171 = vld [vmem:[%s2 + $0xc78] sm:$0xff]
        %v1172 = vld [vmem:[%s2 + $0xc80] sm:$0xff]
        %v1173 = vld [vmem:[%s2 + $0xc88] sm:$0xff]
        %v1174 = vld [vmem:[%s2 + $0xc90] sm:$0xff]
        %v1175 = vld [vmem:[%s2 + $0xc98] sm:$0xff]
        %v1176 = vld [vmem:[%s2 + $0xca0] sm:$0xff]
        %v1177 = vld [vmem:[%s2 + $0xca8] sm:$0xff]
        %v1178 = vld [vmem:[%s2 + $0xcb0] sm:$0xff]
        %v1179 = vld [vmem:[%s2 + $0xcb8] sm:$0xff]
        %v1180 = vld [vmem:[%s2 + $0xcc0] sm:$0xff]
        %v1181 = vld [vmem:[%s2 + $0xcc8] sm:$0xff]
        %v1182 = vld [vmem:[%s2 + $0xcd0] sm:$0xff]
        %v1183 = vld [vmem:[%s2 + $0xcd8] sm:$0xff]
        %v1184 = vld [vmem:[%s2 + $0xce0] sm:$0xff]
        %v1185 = vld [vmem:[%s2 + $0xce8] sm:$0xff]
        %v1186 = vld [vmem:[%s2 + $0xcf0] sm:$0xff]
        %v1187 = vld [vmem:[%s2 + $0xcf8] sm:$0xff]
        %v1188 = vld [vmem:[%s2 + $0xd00] sm:$0xff]
        %v1189 = vld [vmem:[%s2 + $0xd08] sm:$0xff]
        %v1190 = vld [vmem:[%s2 + $0xd10] sm:$0xff]
        %v1191 = vld [vmem:[%s2 + $0xd18] sm:$0xff]
        %v1192 = vld [vmem:[%s2 + $0xd20] sm:$0xff]
        %v1193 = vld [vmem:[%s2 + $0xd28] sm:$0xff]
        %v1194 = vld [vmem:[%s2 + $0xd30] sm:$0xff]
        %v1195 = vld [vmem:[%s2 + $0xd38] sm:$0xff]
        %v1196 = vld [vmem:[%s2 + $0xd40] sm:$0xff]
        %v1197 = vld [vmem:[%s2 + $0xd48] sm:$0xff]
        %v1198 = vld [vmem:[%s2 + $0xd50] sm:$0xff]
        %v1199 = vld [vmem:[%s2 + $0xd58] sm:$0xff]
        %v1200 = vld [vmem:[%s2 + $0xd60] sm:$0xff]
        %v1201 = vld [vmem:[%s2 + $0xd68] sm:$0xff]
        %v1202 = vld [vmem:[%s2 + $0xd70] sm:$0xff]
        %v1203 = vld [vmem:[%s2 + $0xd78] sm:$0xff]
        %v1204 = vld [vmem:[%s2 + $0xd80] sm:$0xff]
        %v1205 = vld [vmem:[%s2 + $0xd88] sm:$0xff]
        %v1206 = vld [vmem:[%s2 + $0xd90] sm:$0xff]
        %v1207 = vld [vmem:[%s2 + $0xd98] sm:$0xff]
        %v1208 = vld [vmem:[%s2 + $0xda0] sm:$0xff]
        %v1209 = vld [vmem:[%s2 + $0xda8] sm:$0xff]
        %v1210 = vld [vmem:[%s2 + $0xdb0] sm:$0xff]
        %v1211 = vld [vmem:[%s2 + $0xdb8] sm:$0xff]
        %v1212 = vld [vmem:[%s2 + $0xdc0] sm:$0xff]
        %v1213 = vld [vmem:[%s2 + $0xdc8] sm:$0xff]
        %v1214 = vld [vmem:[%s2 + $0xdd0] sm:$0xff]
        %v1215 = vld [vmem:[%s2 + $0xdd8] sm:$0xff]
        %v1216 = vld [vmem:[%s2 + $0xde0] sm:$0xff]
        %v1217 = vld [vmem:[%s2 + $0xde8] sm:$0xff]
        %v1218 = vld [vmem:[%s2 + $0xdf0] sm:$0xff]
        %v1219 = vld [vmem:[%s2 + $0xdf8] sm:$0xff]
        %v1220 = vld [vmem:[%s2 + $0xe00] sm:$0xff]
        %v1221 = vld [vmem:[%s2 + $0xe08] sm:$0xff]
        %v1222 = vld [vmem:[%s2 + $0xe10] sm:$0xff]
        %v1223 = vld [vmem:[%s2 + $0xe18] sm:$0xff]
        %v1224 = vld [vmem:[%s2 + $0xe20] sm:$0xff]
        %v1225 = vld [vmem:[%s2 + $0xe28] sm:$0xff]
        %v1226 = vld [vmem:[%s2 + $0xe30] sm:$0xff]
        %v1227 = vld [vmem:[%s2 + $0xe38] sm:$0xff]
        %v1228 = vld [vmem:[%s2 + $0xe40] sm:$0xff]
        %v1229 = vld [vmem:[%s2 + $0xe48] sm:$0xff]
        %v1230 = vld [vmem:[%s2 + $0xe50] sm:$0xff]
        %v1231 = vld [vmem:[%s2 + $0xe58] sm:$0xff]
        %v1232 = vld [vmem:[%s2 + $0xe60] sm:$0xff]
        %v1233 = vld [vmem:[%s2 + $0xe68] sm:$0xff]
        %v1234 = vld [vmem:[%s2 + $0xe70] sm:$0xff]
        %v1235 = vld [vmem:[%s2 + $0xe78] sm:$0xff]
        %v1236 = vld [vmem:[%s2 + $0xe80] sm:$0xff]
        %v1237 = vld [vmem:[%s2 + $0xe88] sm:$0xff]
        %v1238 = vld [vmem:[%s2 + $0xe90] sm:$0xff]
        %v1239 = vld [vmem:[%s2 + $0xe98] sm:$0xff]
        %v1240 = vld [vmem:[%s2 + $0xea0] sm:$0xff]
        %v1241 = vld [vmem:[%s2 + $0xea8] sm:$0xff]
        %v1242 = vld [vmem:[%s2 + $0xeb0] sm:$0xff]
        %v1243 = vld [vmem:[%s2 + $0xeb8] sm:$0xff]
        %v1244 = vld [vmem:[%s2 + $0xec0] sm:$0xff]
        %v1245 = vld [vmem:[%s2 + $0xec8] sm:$0xff]
        %v1246 = vld [vmem:[%s2 + $0xed0] sm:$0xff]
        %v1247 = vld [vmem:[%s2 + $0xed8] sm:$0xff]
        %v1248 = vld [vmem:[%s2 + $0xee0] sm:$0xff]
        %v1249 = vld [vmem:[%s2 + $0xee8] sm:$0xff]
        %v1250 = vld [vmem:[%s2 + $0xef0] sm:$0xff]
        %v1251 = vld [vmem:[%s2 + $0xef8] sm:$0xff]
        %v1252 = vld [vmem:[%s2 + $0xf00] sm:$0xff]
        %v1253 = vld [vmem:[%s2 + $0xf08] sm:$0xff]
        %v1254 = vld [vmem:[%s2 + $0xf10] sm:$0xff]
        %v1255 = vld [vmem:[%s2 + $0xf18] sm:$0xff]
        %v1256 = vld [vmem:[%s2 + $0xf20] sm:$0xff]
        %v1257 = vld [vmem:[%s2 + $0xf28] sm:$0xff]
        %v1258 = vld [vmem:[%s2 + $0xf30] sm:$0xff]
        %v1259 = vld [vmem:[%s2 + $0xf38] sm:$0xff]
        %v1260 = vld [vmem:[%s2 + $0xf40] sm:$0xff]
        %v1261 = vld [vmem:[%s2 + $0xf48] sm:$0xff]
        %v1262 = vld [vmem:[%s2 + $0xf50] sm:$0xff]
        %v1263 = vld [vmem:[%s2 + $0xf58] sm:$0xff]
        %v1264 = vld [vmem:[%s2 + $0xf60] sm:$0xff]
        %v1265 = vld [vmem:[%s2 + $0xf68] sm:$0xff]
        %v1266 = vld [vmem:[%s2 + $0xf70] sm:$0xff]
        %v1267 = vld [vmem:[%s2 + $0xf78] sm:$0xff]
        %v1268 = vld [vmem:[%s2 + $0xf80] sm:$0xff]
        %v1269 = vld [vmem:[%s2 + $0xf88] sm:$0xff]
        %v1270 = vld [vmem:[%s2 + $0xf90] sm:$0xff]
        %v1271 = vld [vmem:[%s2 + $0xf98] sm:$0xff]
        %v1272 = vld [vmem:[%s2 + $0xfa0] sm:$0xff]
        %v1273 = vld [vmem:[%s2 + $0xfa8] sm:$0xff]
        %v1274 = vld [vmem:[%s2 + $0xfb0] sm:$0xff]
        %v1275 = vld [vmem:[%s2 + $0xfb8] sm:$0xff]
        %v1276 = vld [vmem:[%s2 + $0xfc0] sm:$0xff]
        %v1277 = vld [vmem:[%s2 + $0xfc8] sm:$0xff]
        %v1278 = vld [vmem:[%s2 + $0xfd0] sm:$0xff]
        %v1279 = vld [vmem:[%s2 + $0xfd8] sm:$0xff]
        %v1280 = vld [vmem:[%s2 + $0xfe0] sm:$0xff]
        %v1281 = vld [vmem:[%s2 + $0xfe8] sm:$0xff]
        %v1282 = vld [vmem:[%s2 + $0xff0] sm:$0xff]
        %v1283 = vld [vmem:[%s2 + $0xff8] sm:$0xff]
        %v1284 = vld [vmem:[%s702] sm:$0xff]
        %v1285 = vld [vmem:[%s702 + $0x8] sm:$0xff]
        %v1286 = vld [vmem:[%s702 + $0x10] sm:$0xff]
        %v1287 = vld [vmem:[%s702 + $0x18] sm:$0xff]
        %v1288 = vld [vmem:[%s3] sm:$0x3]
        %1290 = vset.pattern.permute.xlu0 0
        %1291 = vperm.xlu0 %1290, %v1284
        %v1292 = vpop.permute.xlu0 %1291
        %1295 = vset.pattern.permute.xlu0 0
        %1296 = vperm.xlu0 %1295, %v1285
        %v1297 = vpop.permute.xlu0 %1296
        %1300 = vset.pattern.permute.xlu0 0
        %1301 = vperm.xlu0 %1300, %v1286
        %v1302 = vpop.permute.xlu0 %1301
        %1305 = vset.pattern.permute.xlu0 0
        %1306 = vperm.xlu0 %1305, %v1287
        %v1307 = vpop.permute.xlu0 %1306
        %v1310 = vlaneseq
        %v1311 = vshrl.u32 %v1310, 7
        %v1312 = vsub.s32 0, %v1311
        %v1313 = vrot.slane %v1288, %v1312
        %v1314 = vlaneseq
        %v1315 = vshrl.u32 %v1314, 7
        %v1316 = vsub.s32 1, %v1315
        %v1317 = vrot.slane %v1288, %v1316
        %v1320 = vmul.f32 %v1292, %v1313
        %v1321 = vmul.f32 %v1292, %v1317
        %v1322 = vmul.f32 %v1297, %v1313
        %v1323 = vmul.f32 %v1297, %v1317
        %v1324 = vmul.f32 %v1302, %v1313
        %v1325 = vmul.f32 %v1302, %v1317
        %v1326 = vmul.f32 %v1307, %v1313
        %v1327 = vmul.f32 %v1307, %v1317
        %v1392 = vunpack.c.l.b16 %v708
        %v1393 = vunpack.c.h.b16 %v708
        %v1394 = vunpack.c.l.b16 %v709
        %v1395 = vunpack.c.h.b16 %v709
        %v1396 = vunpack.c.l.b16 %v710
        %v1397 = vunpack.c.h.b16 %v710
        %v1398 = vunpack.c.l.b16 %v711
        %v1399 = vunpack.c.h.b16 %v711
        %v1400 = vunpack.c.l.b16 %v712
        %v1401 = vunpack.c.h.b16 %v712
        %v1402 = vunpack.c.l.b16 %v713
        %v1403 = vunpack.c.h.b16 %v713
        %v1404 = vunpack.c.l.b16 %v714
        %v1405 = vunpack.c.h.b16 %v714
        %v1406 = vunpack.c.l.b16 %v715
        %v1407 = vunpack.c.h.b16 %v715
        %v1408 = vunpack.c.l.b16 %v716
        %v1409 = vunpack.c.h.b16 %v716
        %v1410 = vunpack.c.l.b16 %v717
        %v1411 = vunpack.c.h.b16 %v717
        %v1412 = vunpack.c.l.b16 %v718
        %v1413 = vunpack.c.h.b16 %v718
        %v1414 = vunpack.c.l.b16 %v719
        %v1415 = vunpack.c.h.b16 %v719
        %v1416 = vunpack.c.l.b16 %v720
        %v1417 = vunpack.c.h.b16 %v720
        %v1418 = vunpack.c.l.b16 %v721
        %v1419 = vunpack.c.h.b16 %v721
        %v1420 = vunpack.c.l.b16 %v722
        %v1421 = vunpack.c.h.b16 %v722
        %v1422 = vunpack.c.l.b16 %v723
        %v1423 = vunpack.c.h.b16 %v723
        %v1424 = vunpack.c.l.b16 %v724
        %v1425 = vunpack.c.h.b16 %v724
        %v1426 = vunpack.c.l.b16 %v725
        %v1427 = vunpack.c.h.b16 %v725
        %v1428 = vunpack.c.l.b16 %v726
        %v1429 = vunpack.c.h.b16 %v726
        %v1430 = vunpack.c.l.b16 %v727
        %v1431 = vunpack.c.h.b16 %v727
        %v1432 = vunpack.c.l.b16 %v728
        %v1433 = vunpack.c.h.b16 %v728
        %v1434 = vunpack.c.l.b16 %v729
        %v1435 = vunpack.c.h.b16 %v729
        %v1436 = vunpack.c.l.b16 %v730
        %v1437 = vunpack.c.h.b16 %v730
        %v1438 = vunpack.c.l.b16 %v731
        %v1439 = vunpack.c.h.b16 %v731
        %v1440 = vunpack.c.l.b16 %v732
        %v1441 = vunpack.c.h.b16 %v732
        %v1442 = vunpack.c.l.b16 %v733
        %v1443 = vunpack.c.h.b16 %v733
        %v1444 = vunpack.c.l.b16 %v734
        %v1445 = vunpack.c.h.b16 %v734
        %v1446 = vunpack.c.l.b16 %v735
        %v1447 = vunpack.c.h.b16 %v735
        %v1448 = vunpack.c.l.b16 %v736
        %v1449 = vunpack.c.h.b16 %v736
        %v1450 = vunpack.c.l.b16 %v737
        %v1451 = vunpack.c.h.b16 %v737
        %v1452 = vunpack.c.l.b16 %v738
        %v1453 = vunpack.c.h.b16 %v738
        %v1454 = vunpack.c.l.b16 %v739
        %v1455 = vunpack.c.h.b16 %v739
        %v1456 = vunpack.c.l.b16 %v740
        %v1457 = vunpack.c.h.b16 %v740
        %v1458 = vunpack.c.l.b16 %v741
        %v1459 = vunpack.c.h.b16 %v741
        %v1460 = vunpack.c.l.b16 %v742
        %v1461 = vunpack.c.h.b16 %v742
        %v1462 = vunpack.c.l.b16 %v743
        %v1463 = vunpack.c.h.b16 %v743
        %v1464 = vunpack.c.l.b16 %v744
        %v1465 = vunpack.c.h.b16 %v744
        %v1466 = vunpack.c.l.b16 %v745
        %v1467 = vunpack.c.h.b16 %v745
        %v1468 = vunpack.c.l.b16 %v746
        %v1469 = vunpack.c.h.b16 %v746
        %v1470 = vunpack.c.l.b16 %v747
        %v1471 = vunpack.c.h.b16 %v747
        %v1472 = vunpack.c.l.b16 %v748
        %v1473 = vunpack.c.h.b16 %v748
        %v1474 = vunpack.c.l.b16 %v749
        %v1475 = vunpack.c.h.b16 %v749
        %v1476 = vunpack.c.l.b16 %v750
        %v1477 = vunpack.c.h.b16 %v750
        %v1478 = vunpack.c.l.b16 %v751
        %v1479 = vunpack.c.h.b16 %v751
        %v1480 = vunpack.c.l.b16 %v752
        %v1481 = vunpack.c.h.b16 %v752
        %v1482 = vunpack.c.l.b16 %v753
        %v1483 = vunpack.c.h.b16 %v753
        %v1484 = vunpack.c.l.b16 %v754
        %v1485 = vunpack.c.h.b16 %v754
        %v1486 = vunpack.c.l.b16 %v755
        %v1487 = vunpack.c.h.b16 %v755
        %v1488 = vunpack.c.l.b16 %v756
        %v1489 = vunpack.c.h.b16 %v756
        %v1490 = vunpack.c.l.b16 %v757
        %v1491 = vunpack.c.h.b16 %v757
        %v1492 = vunpack.c.l.b16 %v758
        %v1493 = vunpack.c.h.b16 %v758
        %v1494 = vunpack.c.l.b16 %v759
        %v1495 = vunpack.c.h.b16 %v759
        %v1496 = vunpack.c.l.b16 %v760
        %v1497 = vunpack.c.h.b16 %v760
        %v1498 = vunpack.c.l.b16 %v761
        %v1499 = vunpack.c.h.b16 %v761
        %v1500 = vunpack.c.l.b16 %v762
        %v1501 = vunpack.c.h.b16 %v762
        %v1502 = vunpack.c.l.b16 %v763
        %v1503 = vunpack.c.h.b16 %v763
        %v1504 = vunpack.c.l.b16 %v764
        %v1505 = vunpack.c.h.b16 %v764
        %v1506 = vunpack.c.l.b16 %v765
        %v1507 = vunpack.c.h.b16 %v765
        %v1508 = vunpack.c.l.b16 %v766
        %v1509 = vunpack.c.h.b16 %v766
        %v1510 = vunpack.c.l.b16 %v767
        %v1511 = vunpack.c.h.b16 %v767
        %v1512 = vunpack.c.l.b16 %v768
        %v1513 = vunpack.c.h.b16 %v768
        %v1514 = vunpack.c.l.b16 %v769
        %v1515 = vunpack.c.h.b16 %v769
        %v1516 = vunpack.c.l.b16 %v770
        %v1517 = vunpack.c.h.b16 %v770
        %v1518 = vunpack.c.l.b16 %v771
        %v1519 = vunpack.c.h.b16 %v771
        %v1520 = vpack.c.b16 %v1424, %v1392
        %v1521 = vpack.c.b16 %v1425, %v1393
        %v1522 = vpack.c.b16 %v1426, %v1394
        %v1523 = vpack.c.b16 %v1427, %v1395
        %v1524 = vpack.c.b16 %v1428, %v1396
        %v1525 = vpack.c.b16 %v1429, %v1397
        %v1526 = vpack.c.b16 %v1430, %v1398
        %v1527 = vpack.c.b16 %v1431, %v1399
        %v1528 = vpack.c.b16 %v1432, %v1400
        %v1529 = vpack.c.b16 %v1433, %v1401
        %v1530 = vpack.c.b16 %v1434, %v1402
        %v1531 = vpack.c.b16 %v1435, %v1403
        %v1532 = vpack.c.b16 %v1436, %v1404
        %v1533 = vpack.c.b16 %v1437, %v1405
        %v1534 = vpack.c.b16 %v1438, %v1406
        %v1535 = vpack.c.b16 %v1439, %v1407
        %v1536 = vpack.c.b16 %v1440, %v1408
        %v1537 = vpack.c.b16 %v1441, %v1409
        %v1538 = vpack.c.b16 %v1442, %v1410
        %v1539 = vpack.c.b16 %v1443, %v1411
        %v1540 = vpack.c.b16 %v1444, %v1412
        %v1541 = vpack.c.b16 %v1445, %v1413
        %v1542 = vpack.c.b16 %v1446, %v1414
        %v1543 = vpack.c.b16 %v1447, %v1415
        %v1544 = vpack.c.b16 %v1448, %v1416
        %v1545 = vpack.c.b16 %v1449, %v1417
        %v1546 = vpack.c.b16 %v1450, %v1418
        %v1547 = vpack.c.b16 %v1451, %v1419
        %v1548 = vpack.c.b16 %v1452, %v1420
        %v1549 = vpack.c.b16 %v1453, %v1421
        %v1550 = vpack.c.b16 %v1454, %v1422
        %v1551 = vpack.c.b16 %v1455, %v1423
        %v1552 = vpack.c.b16 %v1488, %v1456
        %v1553 = vpack.c.b16 %v1489, %v1457
        %v1554 = vpack.c.b16 %v1490, %v1458
        %v1555 = vpack.c.b16 %v1491, %v1459
        %v1556 = vpack.c.b16 %v1492, %v1460
        %v1557 = vpack.c.b16 %v1493, %v1461
        %v1558 = vpack.c.b16 %v1494, %v1462
        %v1559 = vpack.c.b16 %v1495, %v1463
        %v1560 = vpack.c.b16 %v1496, %v1464
        %v1561 = vpack.c.b16 %v1497, %v1465
        %v1562 = vpack.c.b16 %v1498, %v1466
        %v1563 = vpack.c.b16 %v1499, %v1467
        %v1564 = vpack.c.b16 %v1500, %v1468
        %v1565 = vpack.c.b16 %v1501, %v1469
        %v1566 = vpack.c.b16 %v1502, %v1470
        %v1567 = vpack.c.b16 %v1503, %v1471
        %v1568 = vpack.c.b16 %v1504, %v1472
        %v1569 = vpack.c.b16 %v1505, %v1473
        %v1570 = vpack.c.b16 %v1506, %v1474
        %v1571 = vpack.c.b16 %v1507, %v1475
        %v1572 = vpack.c.b16 %v1508, %v1476
        %v1573 = vpack.c.b16 %v1509, %v1477
        %v1574 = vpack.c.b16 %v1510, %v1478
        %v1575 = vpack.c.b16 %v1511, %v1479
        %v1576 = vpack.c.b16 %v1512, %v1480
        %v1577 = vpack.c.b16 %v1513, %v1481
        %v1578 = vpack.c.b16 %v1514, %v1482
        %v1579 = vpack.c.b16 %v1515, %v1483
        %v1580 = vpack.c.b16 %v1516, %v1484
        %v1581 = vpack.c.b16 %v1517, %v1485
        %v1582 = vpack.c.b16 %v1518, %v1486
        %v1583 = vpack.c.b16 %v1519, %v1487
        %v2160 = vunpack.c.l.b16 %v772
        %v2161 = vunpack.c.h.b16 %v772
        %v2162 = vunpack.c.l.b16 %v773
        %v2163 = vunpack.c.h.b16 %v773
        %v2164 = vunpack.c.l.b16 %v774
        %v2165 = vunpack.c.h.b16 %v774
        %v2166 = vunpack.c.l.b16 %v775
        %v2167 = vunpack.c.h.b16 %v775
        %v2168 = vunpack.c.l.b16 %v776
        %v2169 = vunpack.c.h.b16 %v776
        %v2170 = vunpack.c.l.b16 %v777
        %v2171 = vunpack.c.h.b16 %v777
        %v2172 = vunpack.c.l.b16 %v778
        %v2173 = vunpack.c.h.b16 %v778
        %v2174 = vunpack.c.l.b16 %v779
        %v2175 = vunpack.c.h.b16 %v779
        %v2176 = vunpack.c.l.b16 %v780
        %v2177 = vunpack.c.h.b16 %v780
        %v2178 = vunpack.c.l.b16 %v781
        %v2179 = vunpack.c.h.b16 %v781
        %v2180 = vunpack.c.l.b16 %v782
        %v2181 = vunpack.c.h.b16 %v782
        %v2182 = vunpack.c.l.b16 %v783
        %v2183 = vunpack.c.h.b16 %v783
        %v2184 = vunpack.c.l.b16 %v784
        %v2185 = vunpack.c.h.b16 %v784
        %v2186 = vunpack.c.l.b16 %v785
        %v2187 = vunpack.c.h.b16 %v785
        %v2188 = vunpack.c.l.b16 %v786
        %v2189 = vunpack.c.h.b16 %v786
        %v2190 = vunpack.c.l.b16 %v787
        %v2191 = vunpack.c.h.b16 %v787
        %v2192 = vunpack.c.l.b16 %v788
        %v2193 = vunpack.c.h.b16 %v788
        %v2194 = vunpack.c.l.b16 %v789
        %v2195 = vunpack.c.h.b16 %v789
        %v2196 = vunpack.c.l.b16 %v790
        %v2197 = vunpack.c.h.b16 %v790
        %v2198 = vunpack.c.l.b16 %v791
        %v2199 = vunpack.c.h.b16 %v791
        %v2200 = vunpack.c.l.b16 %v792
        %v2201 = vunpack.c.h.b16 %v792
        %v2202 = vunpack.c.l.b16 %v793
        %v2203 = vunpack.c.h.b16 %v793
        %v2204 = vunpack.c.l.b16 %v794
        %v2205 = vunpack.c.h.b16 %v794
        %v2206 = vunpack.c.l.b16 %v795
        %v2207 = vunpack.c.h.b16 %v795
        %v2208 = vunpack.c.l.b16 %v796
        %v2209 = vunpack.c.h.b16 %v796
        %v2210 = vunpack.c.l.b16 %v797
        %v2211 = vunpack.c.h.b16 %v797
        %v2212 = vunpack.c.l.b16 %v798
        %v2213 = vunpack.c.h.b16 %v798
        %v2214 = vunpack.c.l.b16 %v799
        %v2215 = vunpack.c.h.b16 %v799
        %v2216 = vunpack.c.l.b16 %v800
        %v2217 = vunpack.c.h.b16 %v800
        %v2218 = vunpack.c.l.b16 %v801
        %v2219 = vunpack.c.h.b16 %v801
        %v2220 = vunpack.c.l.b16 %v802
        %v2221 = vunpack.c.h.b16 %v802
        %v2222 = vunpack.c.l.b16 %v803
        %v2223 = vunpack.c.h.b16 %v803
        %v2224 = vunpack.c.l.b16 %v804
        %v2225 = vunpack.c.h.b16 %v804
        %v2226 = vunpack.c.l.b16 %v805
        %v2227 = vunpack.c.h.b16 %v805
        %v2228 = vunpack.c.l.b16 %v806
        %v2229 = vunpack.c.h.b16 %v806
        %v2230 = vunpack.c.l.b16 %v807
        %v2231 = vunpack.c.h.b16 %v807
        %v2232 = vunpack.c.l.b16 %v808
        %v2233 = vunpack.c.h.b16 %v808
        %v2234 = vunpack.c.l.b16 %v809
        %v2235 = vunpack.c.h.b16 %v809
        %v2236 = vunpack.c.l.b16 %v810
        %v2237 = vunpack.c.h.b16 %v810
        %v2238 = vunpack.c.l.b16 %v811
        %v2239 = vunpack.c.h.b16 %v811
        %v2240 = vunpack.c.l.b16 %v812
        %v2241 = vunpack.c.h.b16 %v812
        %v2242 = vunpack.c.l.b16 %v813
        %v2243 = vunpack.c.h.b16 %v813
        %v2244 = vunpack.c.l.b16 %v814
        %v2245 = vunpack.c.h.b16 %v814
        %v2246 = vunpack.c.l.b16 %v815
        %v2247 = vunpack.c.h.b16 %v815
        %v2248 = vunpack.c.l.b16 %v816
        %v2249 = vunpack.c.h.b16 %v816
        %v2250 = vunpack.c.l.b16 %v817
        %v2251 = vunpack.c.h.b16 %v817
        %v2252 = vunpack.c.l.b16 %v818
        %v2253 = vunpack.c.h.b16 %v818
        %v2254 = vunpack.c.l.b16 %v819
        %v2255 = vunpack.c.h.b16 %v819
        %v2256 = vunpack.c.l.b16 %v820
        %v2257 = vunpack.c.h.b16 %v820
        %v2258 = vunpack.c.l.b16 %v821
        %v2259 = vunpack.c.h.b16 %v821
        %v2260 = vunpack.c.l.b16 %v822
        %v2261 = vunpack.c.h.b16 %v822
        %v2262 = vunpack.c.l.b16 %v823
        %v2263 = vunpack.c.h.b16 %v823
        %v2264 = vunpack.c.l.b16 %v824
        %v2265 = vunpack.c.h.b16 %v824
        %v2266 = vunpack.c.l.b16 %v825
        %v2267 = vunpack.c.h.b16 %v825
        %v2268 = vunpack.c.l.b16 %v826
        %v2269 = vunpack.c.h.b16 %v826
        %v2270 = vunpack.c.l.b16 %v827
        %v2271 = vunpack.c.h.b16 %v827
        %v2272 = vunpack.c.l.b16 %v828
        %v2273 = vunpack.c.h.b16 %v828
        %v2274 = vunpack.c.l.b16 %v829
        %v2275 = vunpack.c.h.b16 %v829
        %v2276 = vunpack.c.l.b16 %v830
        %v2277 = vunpack.c.h.b16 %v830
        %v2278 = vunpack.c.l.b16 %v831
        %v2279 = vunpack.c.h.b16 %v831
        %v2280 = vunpack.c.l.b16 %v832
        %v2281 = vunpack.c.h.b16 %v832
        %v2282 = vunpack.c.l.b16 %v833
        %v2283 = vunpack.c.h.b16 %v833
        %v2284 = vunpack.c.l.b16 %v834
        %v2285 = vunpack.c.h.b16 %v834
        %v2286 = vunpack.c.l.b16 %v835
        %v2287 = vunpack.c.h.b16 %v835
        %v2288 = vunpack.c.l.b16 %v836
        %v2289 = vunpack.c.h.b16 %v836
        %v2290 = vunpack.c.l.b16 %v837
        %v2291 = vunpack.c.h.b16 %v837
        %v2292 = vunpack.c.l.b16 %v838
        %v2293 = vunpack.c.h.b16 %v838
        %v2294 = vunpack.c.l.b16 %v839
        %v2295 = vunpack.c.h.b16 %v839
        %v2296 = vunpack.c.l.b16 %v840
        %v2297 = vunpack.c.h.b16 %v840
        %v2298 = vunpack.c.l.b16 %v841
        %v2299 = vunpack.c.h.b16 %v841
        %v2300 = vunpack.c.l.b16 %v842
        %v2301 = vunpack.c.h.b16 %v842
        %v2302 = vunpack.c.l.b16 %v843
        %v2303 = vunpack.c.h.b16 %v843
        %v2304 = vunpack.c.l.b16 %v844
        %v2305 = vunpack.c.h.b16 %v844
        %v2306 = vunpack.c.l.b16 %v845
        %v2307 = vunpack.c.h.b16 %v845
        %v2308 = vunpack.c.l.b16 %v846
        %v2309 = vunpack.c.h.b16 %v846
        %v2310 = vunpack.c.l.b16 %v847
        %v2311 = vunpack.c.h.b16 %v847
        %v2312 = vunpack.c.l.b16 %v848
        %v2313 = vunpack.c.h.b16 %v848
        %v2314 = vunpack.c.l.b16 %v849
        %v2315 = vunpack.c.h.b16 %v849
        %v2316 = vunpack.c.l.b16 %v850
        %v2317 = vunpack.c.h.b16 %v850
        %v2318 = vunpack.c.l.b16 %v851
        %v2319 = vunpack.c.h.b16 %v851
        %v2320 = vunpack.c.l.b16 %v852
        %v2321 = vunpack.c.h.b16 %v852
        %v2322 = vunpack.c.l.b16 %v853
        %v2323 = vunpack.c.h.b16 %v853
        %v2324 = vunpack.c.l.b16 %v854
        %v2325 = vunpack.c.h.b16 %v854
        %v2326 = vunpack.c.l.b16 %v855
        %v2327 = vunpack.c.h.b16 %v855
        %v2328 = vunpack.c.l.b16 %v856
        %v2329 = vunpack.c.h.b16 %v856
        %v2330 = vunpack.c.l.b16 %v857
        %v2331 = vunpack.c.h.b16 %v857
        %v2332 = vunpack.c.l.b16 %v858
        %v2333 = vunpack.c.h.b16 %v858
        %v2334 = vunpack.c.l.b16 %v859
        %v2335 = vunpack.c.h.b16 %v859
        %v2336 = vunpack.c.l.b16 %v860
        %v2337 = vunpack.c.h.b16 %v860
        %v2338 = vunpack.c.l.b16 %v861
        %v2339 = vunpack.c.h.b16 %v861
        %v2340 = vunpack.c.l.b16 %v862
        %v2341 = vunpack.c.h.b16 %v862
        %v2342 = vunpack.c.l.b16 %v863
        %v2343 = vunpack.c.h.b16 %v863
        %v2344 = vunpack.c.l.b16 %v864
        %v2345 = vunpack.c.h.b16 %v864
        %v2346 = vunpack.c.l.b16 %v865
        %v2347 = vunpack.c.h.b16 %v865
        %v2348 = vunpack.c.l.b16 %v866
        %v2349 = vunpack.c.h.b16 %v866
        %v2350 = vunpack.c.l.b16 %v867
        %v2351 = vunpack.c.h.b16 %v867
        %v2352 = vunpack.c.l.b16 %v868
        %v2353 = vunpack.c.h.b16 %v868
        %v2354 = vunpack.c.l.b16 %v869
        %v2355 = vunpack.c.h.b16 %v869
        %v2356 = vunpack.c.l.b16 %v870
        %v2357 = vunpack.c.h.b16 %v870
        %v2358 = vunpack.c.l.b16 %v871
        %v2359 = vunpack.c.h.b16 %v871
        %v2360 = vunpack.c.l.b16 %v872
        %v2361 = vunpack.c.h.b16 %v872
        %v2362 = vunpack.c.l.b16 %v873
        %v2363 = vunpack.c.h.b16 %v873
        %v2364 = vunpack.c.l.b16 %v874
        %v2365 = vunpack.c.h.b16 %v874
        %v2366 = vunpack.c.l.b16 %v875
        %v2367 = vunpack.c.h.b16 %v875
        %v2368 = vunpack.c.l.b16 %v876
        %v2369 = vunpack.c.h.b16 %v876
        %v2370 = vunpack.c.l.b16 %v877
        %v2371 = vunpack.c.h.b16 %v877
        %v2372 = vunpack.c.l.b16 %v878
        %v2373 = vunpack.c.h.b16 %v878
        %v2374 = vunpack.c.l.b16 %v879
        %v2375 = vunpack.c.h.b16 %v879
        %v2376 = vunpack.c.l.b16 %v880
        %v2377 = vunpack.c.h.b16 %v880
        %v2378 = vunpack.c.l.b16 %v881
        %v2379 = vunpack.c.h.b16 %v881
        %v2380 = vunpack.c.l.b16 %v882
        %v2381 = vunpack.c.h.b16 %v882
        %v2382 = vunpack.c.l.b16 %v883
        %v2383 = vunpack.c.h.b16 %v883
        %v2384 = vunpack.c.l.b16 %v884
        %v2385 = vunpack.c.h.b16 %v884
        %v2386 = vunpack.c.l.b16 %v885
        %v2387 = vunpack.c.h.b16 %v885
        %v2388 = vunpack.c.l.b16 %v886
        %v2389 = vunpack.c.h.b16 %v886
        %v2390 = vunpack.c.l.b16 %v887
        %v2391 = vunpack.c.h.b16 %v887
        %v2392 = vunpack.c.l.b16 %v888
        %v2393 = vunpack.c.h.b16 %v888
        %v2394 = vunpack.c.l.b16 %v889
        %v2395 = vunpack.c.h.b16 %v889
        %v2396 = vunpack.c.l.b16 %v890
        %v2397 = vunpack.c.h.b16 %v890
        %v2398 = vunpack.c.l.b16 %v891
        %v2399 = vunpack.c.h.b16 %v891
        %v2400 = vunpack.c.l.b16 %v892
        %v2401 = vunpack.c.h.b16 %v892
        %v2402 = vunpack.c.l.b16 %v893
        %v2403 = vunpack.c.h.b16 %v893
        %v2404 = vunpack.c.l.b16 %v894
        %v2405 = vunpack.c.h.b16 %v894
        %v2406 = vunpack.c.l.b16 %v895
        %v2407 = vunpack.c.h.b16 %v895
        %v2408 = vunpack.c.l.b16 %v896
        %v2409 = vunpack.c.h.b16 %v896
        %v2410 = vunpack.c.l.b16 %v897
        %v2411 = vunpack.c.h.b16 %v897
        %v2412 = vunpack.c.l.b16 %v898
        %v2413 = vunpack.c.h.b16 %v898
        %v2414 = vunpack.c.l.b16 %v899
        %v2415 = vunpack.c.h.b16 %v899
        %v2416 = vunpack.c.l.b16 %v900
        %v2417 = vunpack.c.h.b16 %v900
        %v2418 = vunpack.c.l.b16 %v901
        %v2419 = vunpack.c.h.b16 %v901
        %v2420 = vunpack.c.l.b16 %v902
        %v2421 = vunpack.c.h.b16 %v902
        %v2422 = vunpack.c.l.b16 %v903
        %v2423 = vunpack.c.h.b16 %v903
        %v2424 = vunpack.c.l.b16 %v904
        %v2425 = vunpack.c.h.b16 %v904
        %v2426 = vunpack.c.l.b16 %v905
        %v2427 = vunpack.c.h.b16 %v905
        %v2428 = vunpack.c.l.b16 %v906
        %v2429 = vunpack.c.h.b16 %v906
        %v2430 = vunpack.c.l.b16 %v907
        %v2431 = vunpack.c.h.b16 %v907
        %v2432 = vunpack.c.l.b16 %v908
        %v2433 = vunpack.c.h.b16 %v908
        %v2434 = vunpack.c.l.b16 %v909
        %v2435 = vunpack.c.h.b16 %v909
        %v2436 = vunpack.c.l.b16 %v910
        %v2437 = vunpack.c.h.b16 %v910
        %v2438 = vunpack.c.l.b16 %v911
        %v2439 = vunpack.c.h.b16 %v911
        %v2440 = vunpack.c.l.b16 %v912
        %v2441 = vunpack.c.h.b16 %v912
        %v2442 = vunpack.c.l.b16 %v913
        %v2443 = vunpack.c.h.b16 %v913
        %v2444 = vunpack.c.l.b16 %v914
        %v2445 = vunpack.c.h.b16 %v914
        %v2446 = vunpack.c.l.b16 %v915
        %v2447 = vunpack.c.h.b16 %v915
        %v2448 = vunpack.c.l.b16 %v916
        %v2449 = vunpack.c.h.b16 %v916
        %v2450 = vunpack.c.l.b16 %v917
        %v2451 = vunpack.c.h.b16 %v917
        %v2452 = vunpack.c.l.b16 %v918
        %v2453 = vunpack.c.h.b16 %v918
        %v2454 = vunpack.c.l.b16 %v919
        %v2455 = vunpack.c.h.b16 %v919
        %v2456 = vunpack.c.l.b16 %v920
        %v2457 = vunpack.c.h.b16 %v920
        %v2458 = vunpack.c.l.b16 %v921
        %v2459 = vunpack.c.h.b16 %v921
        %v2460 = vunpack.c.l.b16 %v922
        %v2461 = vunpack.c.h.b16 %v922
        %v2462 = vunpack.c.l.b16 %v923
        %v2463 = vunpack.c.h.b16 %v923
        %v2464 = vunpack.c.l.b16 %v924
        %v2465 = vunpack.c.h.b16 %v924
        %v2466 = vunpack.c.l.b16 %v925
        %v2467 = vunpack.c.h.b16 %v925
        %v2468 = vunpack.c.l.b16 %v926
        %v2469 = vunpack.c.h.b16 %v926
        %v2470 = vunpack.c.l.b16 %v927
        %v2471 = vunpack.c.h.b16 %v927
        %v2472 = vunpack.c.l.b16 %v928
        %v2473 = vunpack.c.h.b16 %v928
        %v2474 = vunpack.c.l.b16 %v929
        %v2475 = vunpack.c.h.b16 %v929
        %v2476 = vunpack.c.l.b16 %v930
        %v2477 = vunpack.c.h.b16 %v930
        %v2478 = vunpack.c.l.b16 %v931
        %v2479 = vunpack.c.h.b16 %v931
        %v2480 = vunpack.c.l.b16 %v932
        %v2481 = vunpack.c.h.b16 %v932
        %v2482 = vunpack.c.l.b16 %v933
        %v2483 = vunpack.c.h.b16 %v933
        %v2484 = vunpack.c.l.b16 %v934
        %v2485 = vunpack.c.h.b16 %v934
        %v2486 = vunpack.c.l.b16 %v935
        %v2487 = vunpack.c.h.b16 %v935
        %v2488 = vunpack.c.l.b16 %v936
        %v2489 = vunpack.c.h.b16 %v936
        %v2490 = vunpack.c.l.b16 %v937
        %v2491 = vunpack.c.h.b16 %v937
        %v2492 = vunpack.c.l.b16 %v938
        %v2493 = vunpack.c.h.b16 %v938
        %v2494 = vunpack.c.l.b16 %v939
        %v2495 = vunpack.c.h.b16 %v939
        %v2496 = vunpack.c.l.b16 %v940
        %v2497 = vunpack.c.h.b16 %v940
        %v2498 = vunpack.c.l.b16 %v941
        %v2499 = vunpack.c.h.b16 %v941
        %v2500 = vunpack.c.l.b16 %v942
        %v2501 = vunpack.c.h.b16 %v942
        %v2502 = vunpack.c.l.b16 %v943
        %v2503 = vunpack.c.h.b16 %v943
        %v2504 = vunpack.c.l.b16 %v944
        %v2505 = vunpack.c.h.b16 %v944
        %v2506 = vunpack.c.l.b16 %v945
        %v2507 = vunpack.c.h.b16 %v945
        %v2508 = vunpack.c.l.b16 %v946
        %v2509 = vunpack.c.h.b16 %v946
        %v2510 = vunpack.c.l.b16 %v947
        %v2511 = vunpack.c.h.b16 %v947
        %v2512 = vunpack.c.l.b16 %v948
        %v2513 = vunpack.c.h.b16 %v948
        %v2514 = vunpack.c.l.b16 %v949
        %v2515 = vunpack.c.h.b16 %v949
        %v2516 = vunpack.c.l.b16 %v950
        %v2517 = vunpack.c.h.b16 %v950
        %v2518 = vunpack.c.l.b16 %v951
        %v2519 = vunpack.c.h.b16 %v951
        %v2520 = vunpack.c.l.b16 %v952
        %v2521 = vunpack.c.h.b16 %v952
        %v2522 = vunpack.c.l.b16 %v953
        %v2523 = vunpack.c.h.b16 %v953
        %v2524 = vunpack.c.l.b16 %v954
        %v2525 = vunpack.c.h.b16 %v954
        %v2526 = vunpack.c.l.b16 %v955
        %v2527 = vunpack.c.h.b16 %v955
        %v2528 = vunpack.c.l.b16 %v956
        %v2529 = vunpack.c.h.b16 %v956
        %v2530 = vunpack.c.l.b16 %v957
        %v2531 = vunpack.c.h.b16 %v957
        %v2532 = vunpack.c.l.b16 %v958
        %v2533 = vunpack.c.h.b16 %v958
        %v2534 = vunpack.c.l.b16 %v959
        %v2535 = vunpack.c.h.b16 %v959
        %v2536 = vunpack.c.l.b16 %v960
        %v2537 = vunpack.c.h.b16 %v960
        %v2538 = vunpack.c.l.b16 %v961
        %v2539 = vunpack.c.h.b16 %v961
        %v2540 = vunpack.c.l.b16 %v962
        %v2541 = vunpack.c.h.b16 %v962
        %v2542 = vunpack.c.l.b16 %v963
        %v2543 = vunpack.c.h.b16 %v963
        %v2544 = vunpack.c.l.b16 %v964
        %v2545 = vunpack.c.h.b16 %v964
        %v2546 = vunpack.c.l.b16 %v965
        %v2547 = vunpack.c.h.b16 %v965
        %v2548 = vunpack.c.l.b16 %v966
        %v2549 = vunpack.c.h.b16 %v966
        %v2550 = vunpack.c.l.b16 %v967
        %v2551 = vunpack.c.h.b16 %v967
        %v2552 = vunpack.c.l.b16 %v968
        %v2553 = vunpack.c.h.b16 %v968
        %v2554 = vunpack.c.l.b16 %v969
        %v2555 = vunpack.c.h.b16 %v969
        %v2556 = vunpack.c.l.b16 %v970
        %v2557 = vunpack.c.h.b16 %v970
        %v2558 = vunpack.c.l.b16 %v971
        %v2559 = vunpack.c.h.b16 %v971
        %v2560 = vunpack.c.l.b16 %v972
        %v2561 = vunpack.c.h.b16 %v972
        %v2562 = vunpack.c.l.b16 %v973
        %v2563 = vunpack.c.h.b16 %v973
        %v2564 = vunpack.c.l.b16 %v974
        %v2565 = vunpack.c.h.b16 %v974
        %v2566 = vunpack.c.l.b16 %v975
        %v2567 = vunpack.c.h.b16 %v975
        %v2568 = vunpack.c.l.b16 %v976
        %v2569 = vunpack.c.h.b16 %v976
        %v2570 = vunpack.c.l.b16 %v977
        %v2571 = vunpack.c.h.b16 %v977
        %v2572 = vunpack.c.l.b16 %v978
        %v2573 = vunpack.c.h.b16 %v978
        %v2574 = vunpack.c.l.b16 %v979
        %v2575 = vunpack.c.h.b16 %v979
        %v2576 = vunpack.c.l.b16 %v980
        %v2577 = vunpack.c.h.b16 %v980
        %v2578 = vunpack.c.l.b16 %v981
        %v2579 = vunpack.c.h.b16 %v981
        %v2580 = vunpack.c.l.b16 %v982
        %v2581 = vunpack.c.h.b16 %v982
        %v2582 = vunpack.c.l.b16 %v983
        %v2583 = vunpack.c.h.b16 %v983
        %v2584 = vunpack.c.l.b16 %v984
        %v2585 = vunpack.c.h.b16 %v984
        %v2586 = vunpack.c.l.b16 %v985
        %v2587 = vunpack.c.h.b16 %v985
        %v2588 = vunpack.c.l.b16 %v986
        %v2589 = vunpack.c.h.b16 %v986
        %v2590 = vunpack.c.l.b16 %v987
        %v2591 = vunpack.c.h.b16 %v987
        %v2592 = vunpack.c.l.b16 %v988
        %v2593 = vunpack.c.h.b16 %v988
        %v2594 = vunpack.c.l.b16 %v989
        %v2595 = vunpack.c.h.b16 %v989
        %v2596 = vunpack.c.l.b16 %v990
        %v2597 = vunpack.c.h.b16 %v990
        %v2598 = vunpack.c.l.b16 %v991
        %v2599 = vunpack.c.h.b16 %v991
        %v2600 = vunpack.c.l.b16 %v992
        %v2601 = vunpack.c.h.b16 %v992
        %v2602 = vunpack.c.l.b16 %v993
        %v2603 = vunpack.c.h.b16 %v993
        %v2604 = vunpack.c.l.b16 %v994
        %v2605 = vunpack.c.h.b16 %v994
        %v2606 = vunpack.c.l.b16 %v995
        %v2607 = vunpack.c.h.b16 %v995
        %v2608 = vunpack.c.l.b16 %v996
        %v2609 = vunpack.c.h.b16 %v996
        %v2610 = vunpack.c.l.b16 %v997
        %v2611 = vunpack.c.h.b16 %v997
        %v2612 = vunpack.c.l.b16 %v998
        %v2613 = vunpack.c.h.b16 %v998
        %v2614 = vunpack.c.l.b16 %v999
        %v2615 = vunpack.c.h.b16 %v999
        %v2616 = vunpack.c.l.b16 %v1000
        %v2617 = vunpack.c.h.b16 %v1000
        %v2618 = vunpack.c.l.b16 %v1001
        %v2619 = vunpack.c.h.b16 %v1001
        %v2620 = vunpack.c.l.b16 %v1002
        %v2621 = vunpack.c.h.b16 %v1002
        %v2622 = vunpack.c.l.b16 %v1003
        %v2623 = vunpack.c.h.b16 %v1003
        %v2624 = vunpack.c.l.b16 %v1004
        %v2625 = vunpack.c.h.b16 %v1004
        %v2626 = vunpack.c.l.b16 %v1005
        %v2627 = vunpack.c.h.b16 %v1005
        %v2628 = vunpack.c.l.b16 %v1006
        %v2629 = vunpack.c.h.b16 %v1006
        %v2630 = vunpack.c.l.b16 %v1007
        %v2631 = vunpack.c.h.b16 %v1007
        %v2632 = vunpack.c.l.b16 %v1008
        %v2633 = vunpack.c.h.b16 %v1008
        %v2634 = vunpack.c.l.b16 %v1009
        %v2635 = vunpack.c.h.b16 %v1009
        %v2636 = vunpack.c.l.b16 %v1010
        %v2637 = vunpack.c.h.b16 %v1010
        %v2638 = vunpack.c.l.b16 %v1011
        %v2639 = vunpack.c.h.b16 %v1011
        %v2640 = vunpack.c.l.b16 %v1012
        %v2641 = vunpack.c.h.b16 %v1012
        %v2642 = vunpack.c.l.b16 %v1013
        %v2643 = vunpack.c.h.b16 %v1013
        %v2644 = vunpack.c.l.b16 %v1014
        %v2645 = vunpack.c.h.b16 %v1014
        %v2646 = vunpack.c.l.b16 %v1015
        %v2647 = vunpack.c.h.b16 %v1015
        %v2648 = vunpack.c.l.b16 %v1016
        %v2649 = vunpack.c.h.b16 %v1016
        %v2650 = vunpack.c.l.b16 %v1017
        %v2651 = vunpack.c.h.b16 %v1017
        %v2652 = vunpack.c.l.b16 %v1018
        %v2653 = vunpack.c.h.b16 %v1018
        %v2654 = vunpack.c.l.b16 %v1019
        %v2655 = vunpack.c.h.b16 %v1019
        %v2656 = vunpack.c.l.b16 %v1020
        %v2657 = vunpack.c.h.b16 %v1020
        %v2658 = vunpack.c.l.b16 %v1021
        %v2659 = vunpack.c.h.b16 %v1021
        %v2660 = vunpack.c.l.b16 %v1022
        %v2661 = vunpack.c.h.b16 %v1022
        %v2662 = vunpack.c.l.b16 %v1023
        %v2663 = vunpack.c.h.b16 %v1023
        %v2664 = vunpack.c.l.b16 %v1024
        %v2665 = vunpack.c.h.b16 %v1024
        %v2666 = vunpack.c.l.b16 %v1025
        %v2667 = vunpack.c.h.b16 %v1025
        %v2668 = vunpack.c.l.b16 %v1026
        %v2669 = vunpack.c.h.b16 %v1026
        %v2670 = vunpack.c.l.b16 %v1027
        %v2671 = vunpack.c.h.b16 %v1027
        %v2672 = vunpack.c.l.b16 %v1028
        %v2673 = vunpack.c.h.b16 %v1028
        %v2674 = vunpack.c.l.b16 %v1029
        %v2675 = vunpack.c.h.b16 %v1029
        %v2676 = vunpack.c.l.b16 %v1030
        %v2677 = vunpack.c.h.b16 %v1030
        %v2678 = vunpack.c.l.b16 %v1031
        %v2679 = vunpack.c.h.b16 %v1031
        %v2680 = vunpack.c.l.b16 %v1032
        %v2681 = vunpack.c.h.b16 %v1032
        %v2682 = vunpack.c.l.b16 %v1033
        %v2683 = vunpack.c.h.b16 %v1033
        %v2684 = vunpack.c.l.b16 %v1034
        %v2685 = vunpack.c.h.b16 %v1034
        %v2686 = vunpack.c.l.b16 %v1035
        %v2687 = vunpack.c.h.b16 %v1035
        %v2688 = vunpack.c.l.b16 %v1036
        %v2689 = vunpack.c.h.b16 %v1036
        %v2690 = vunpack.c.l.b16 %v1037
        %v2691 = vunpack.c.h.b16 %v1037
        %v2692 = vunpack.c.l.b16 %v1038
        %v2693 = vunpack.c.h.b16 %v1038
        %v2694 = vunpack.c.l.b16 %v1039
        %v2695 = vunpack.c.h.b16 %v1039
        %v2696 = vunpack.c.l.b16 %v1040
        %v2697 = vunpack.c.h.b16 %v1040
        %v2698 = vunpack.c.l.b16 %v1041
        %v2699 = vunpack.c.h.b16 %v1041
        %v2700 = vunpack.c.l.b16 %v1042
        %v2701 = vunpack.c.h.b16 %v1042
        %v2702 = vunpack.c.l.b16 %v1043
        %v2703 = vunpack.c.h.b16 %v1043
        %v2704 = vunpack.c.l.b16 %v1044
        %v2705 = vunpack.c.h.b16 %v1044
        %v2706 = vunpack.c.l.b16 %v1045
        %v2707 = vunpack.c.h.b16 %v1045
        %v2708 = vunpack.c.l.b16 %v1046
        %v2709 = vunpack.c.h.b16 %v1046
        %v2710 = vunpack.c.l.b16 %v1047
        %v2711 = vunpack.c.h.b16 %v1047
        %v2712 = vunpack.c.l.b16 %v1048
        %v2713 = vunpack.c.h.b16 %v1048
        %v2714 = vunpack.c.l.b16 %v1049
        %v2715 = vunpack.c.h.b16 %v1049
        %v2716 = vunpack.c.l.b16 %v1050
        %v2717 = vunpack.c.h.b16 %v1050
        %v2718 = vunpack.c.l.b16 %v1051
        %v2719 = vunpack.c.h.b16 %v1051
        %v2720 = vunpack.c.l.b16 %v1052
        %v2721 = vunpack.c.h.b16 %v1052
        %v2722 = vunpack.c.l.b16 %v1053
        %v2723 = vunpack.c.h.b16 %v1053
        %v2724 = vunpack.c.l.b16 %v1054
        %v2725 = vunpack.c.h.b16 %v1054
        %v2726 = vunpack.c.l.b16 %v1055
        %v2727 = vunpack.c.h.b16 %v1055
        %v2728 = vunpack.c.l.b16 %v1056
        %v2729 = vunpack.c.h.b16 %v1056
        %v2730 = vunpack.c.l.b16 %v1057
        %v2731 = vunpack.c.h.b16 %v1057
        %v2732 = vunpack.c.l.b16 %v1058
        %v2733 = vunpack.c.h.b16 %v1058
        %v2734 = vunpack.c.l.b16 %v1059
        %v2735 = vunpack.c.h.b16 %v1059
        %v2736 = vunpack.c.l.b16 %v1060
        %v2737 = vunpack.c.h.b16 %v1060
        %v2738 = vunpack.c.l.b16 %v1061
        %v2739 = vunpack.c.h.b16 %v1061
        %v2740 = vunpack.c.l.b16 %v1062
        %v2741 = vunpack.c.h.b16 %v1062
        %v2742 = vunpack.c.l.b16 %v1063
        %v2743 = vunpack.c.h.b16 %v1063
        %v2744 = vunpack.c.l.b16 %v1064
        %v2745 = vunpack.c.h.b16 %v1064
        %v2746 = vunpack.c.l.b16 %v1065
        %v2747 = vunpack.c.h.b16 %v1065
        %v2748 = vunpack.c.l.b16 %v1066
        %v2749 = vunpack.c.h.b16 %v1066
        %v2750 = vunpack.c.l.b16 %v1067
        %v2751 = vunpack.c.h.b16 %v1067
        %v2752 = vunpack.c.l.b16 %v1068
        %v2753 = vunpack.c.h.b16 %v1068
        %v2754 = vunpack.c.l.b16 %v1069
        %v2755 = vunpack.c.h.b16 %v1069
        %v2756 = vunpack.c.l.b16 %v1070
        %v2757 = vunpack.c.h.b16 %v1070
        %v2758 = vunpack.c.l.b16 %v1071
        %v2759 = vunpack.c.h.b16 %v1071
        %v2760 = vunpack.c.l.b16 %v1072
        %v2761 = vunpack.c.h.b16 %v1072
        %v2762 = vunpack.c.l.b16 %v1073
        %v2763 = vunpack.c.h.b16 %v1073
        %v2764 = vunpack.c.l.b16 %v1074
        %v2765 = vunpack.c.h.b16 %v1074
        %v2766 = vunpack.c.l.b16 %v1075
        %v2767 = vunpack.c.h.b16 %v1075
        %v2768 = vunpack.c.l.b16 %v1076
        %v2769 = vunpack.c.h.b16 %v1076
        %v2770 = vunpack.c.l.b16 %v1077
        %v2771 = vunpack.c.h.b16 %v1077
        %v2772 = vunpack.c.l.b16 %v1078
        %v2773 = vunpack.c.h.b16 %v1078
        %v2774 = vunpack.c.l.b16 %v1079
        %v2775 = vunpack.c.h.b16 %v1079
        %v2776 = vunpack.c.l.b16 %v1080
        %v2777 = vunpack.c.h.b16 %v1080
        %v2778 = vunpack.c.l.b16 %v1081
        %v2779 = vunpack.c.h.b16 %v1081
        %v2780 = vunpack.c.l.b16 %v1082
        %v2781 = vunpack.c.h.b16 %v1082
        %v2782 = vunpack.c.l.b16 %v1083
        %v2783 = vunpack.c.h.b16 %v1083
        %v2784 = vunpack.c.l.b16 %v1084
        %v2785 = vunpack.c.h.b16 %v1084
        %v2786 = vunpack.c.l.b16 %v1085
        %v2787 = vunpack.c.h.b16 %v1085
        %v2788 = vunpack.c.l.b16 %v1086
        %v2789 = vunpack.c.h.b16 %v1086
        %v2790 = vunpack.c.l.b16 %v1087
        %v2791 = vunpack.c.h.b16 %v1087
        %v2792 = vunpack.c.l.b16 %v1088
        %v2793 = vunpack.c.h.b16 %v1088
        %v2794 = vunpack.c.l.b16 %v1089
        %v2795 = vunpack.c.h.b16 %v1089
        %v2796 = vunpack.c.l.b16 %v1090
        %v2797 = vunpack.c.h.b16 %v1090
        %v2798 = vunpack.c.l.b16 %v1091
        %v2799 = vunpack.c.h.b16 %v1091
        %v2800 = vunpack.c.l.b16 %v1092
        %v2801 = vunpack.c.h.b16 %v1092
        %v2802 = vunpack.c.l.b16 %v1093
        %v2803 = vunpack.c.h.b16 %v1093
        %v2804 = vunpack.c.l.b16 %v1094
        %v2805 = vunpack.c.h.b16 %v1094
        %v2806 = vunpack.c.l.b16 %v1095
        %v2807 = vunpack.c.h.b16 %v1095
        %v2808 = vunpack.c.l.b16 %v1096
        %v2809 = vunpack.c.h.b16 %v1096
        %v2810 = vunpack.c.l.b16 %v1097
        %v2811 = vunpack.c.h.b16 %v1097
        %v2812 = vunpack.c.l.b16 %v1098
        %v2813 = vunpack.c.h.b16 %v1098
        %v2814 = vunpack.c.l.b16 %v1099
        %v2815 = vunpack.c.h.b16 %v1099
        %v2816 = vunpack.c.l.b16 %v1100
        %v2817 = vunpack.c.h.b16 %v1100
        %v2818 = vunpack.c.l.b16 %v1101
        %v2819 = vunpack.c.h.b16 %v1101
        %v2820 = vunpack.c.l.b16 %v1102
        %v2821 = vunpack.c.h.b16 %v1102
        %v2822 = vunpack.c.l.b16 %v1103
        %v2823 = vunpack.c.h.b16 %v1103
        %v2824 = vunpack.c.l.b16 %v1104
        %v2825 = vunpack.c.h.b16 %v1104
        %v2826 = vunpack.c.l.b16 %v1105
        %v2827 = vunpack.c.h.b16 %v1105
        %v2828 = vunpack.c.l.b16 %v1106
        %v2829 = vunpack.c.h.b16 %v1106
        %v2830 = vunpack.c.l.b16 %v1107
        %v2831 = vunpack.c.h.b16 %v1107
        %v2832 = vunpack.c.l.b16 %v1108
        %v2833 = vunpack.c.h.b16 %v1108
        %v2834 = vunpack.c.l.b16 %v1109
        %v2835 = vunpack.c.h.b16 %v1109
        %v2836 = vunpack.c.l.b16 %v1110
        %v2837 = vunpack.c.h.b16 %v1110
        %v2838 = vunpack.c.l.b16 %v1111
        %v2839 = vunpack.c.h.b16 %v1111
        %v2840 = vunpack.c.l.b16 %v1112
        %v2841 = vunpack.c.h.b16 %v1112
        %v2842 = vunpack.c.l.b16 %v1113
        %v2843 = vunpack.c.h.b16 %v1113
        %v2844 = vunpack.c.l.b16 %v1114
        %v2845 = vunpack.c.h.b16 %v1114
        %v2846 = vunpack.c.l.b16 %v1115
        %v2847 = vunpack.c.h.b16 %v1115
        %v2848 = vunpack.c.l.b16 %v1116
        %v2849 = vunpack.c.h.b16 %v1116
        %v2850 = vunpack.c.l.b16 %v1117
        %v2851 = vunpack.c.h.b16 %v1117
        %v2852 = vunpack.c.l.b16 %v1118
        %v2853 = vunpack.c.h.b16 %v1118
        %v2854 = vunpack.c.l.b16 %v1119
        %v2855 = vunpack.c.h.b16 %v1119
        %v2856 = vunpack.c.l.b16 %v1120
        %v2857 = vunpack.c.h.b16 %v1120
        %v2858 = vunpack.c.l.b16 %v1121
        %v2859 = vunpack.c.h.b16 %v1121
        %v2860 = vunpack.c.l.b16 %v1122
        %v2861 = vunpack.c.h.b16 %v1122
        %v2862 = vunpack.c.l.b16 %v1123
        %v2863 = vunpack.c.h.b16 %v1123
        %v2864 = vunpack.c.l.b16 %v1124
        %v2865 = vunpack.c.h.b16 %v1124
        %v2866 = vunpack.c.l.b16 %v1125
        %v2867 = vunpack.c.h.b16 %v1125
        %v2868 = vunpack.c.l.b16 %v1126
        %v2869 = vunpack.c.h.b16 %v1126
        %v2870 = vunpack.c.l.b16 %v1127
        %v2871 = vunpack.c.h.b16 %v1127
        %v2872 = vunpack.c.l.b16 %v1128
        %v2873 = vunpack.c.h.b16 %v1128
        %v2874 = vunpack.c.l.b16 %v1129
        %v2875 = vunpack.c.h.b16 %v1129
        %v2876 = vunpack.c.l.b16 %v1130
        %v2877 = vunpack.c.h.b16 %v1130
        %v2878 = vunpack.c.l.b16 %v1131
        %v2879 = vunpack.c.h.b16 %v1131
        %v2880 = vunpack.c.l.b16 %v1132
        %v2881 = vunpack.c.h.b16 %v1132
        %v2882 = vunpack.c.l.b16 %v1133
        %v2883 = vunpack.c.h.b16 %v1133
        %v2884 = vunpack.c.l.b16 %v1134
        %v2885 = vunpack.c.h.b16 %v1134
        %v2886 = vunpack.c.l.b16 %v1135
        %v2887 = vunpack.c.h.b16 %v1135
        %v2888 = vunpack.c.l.b16 %v1136
        %v2889 = vunpack.c.h.b16 %v1136
        %v2890 = vunpack.c.l.b16 %v1137
        %v2891 = vunpack.c.h.b16 %v1137
        %v2892 = vunpack.c.l.b16 %v1138
        %v2893 = vunpack.c.h.b16 %v1138
        %v2894 = vunpack.c.l.b16 %v1139
        %v2895 = vunpack.c.h.b16 %v1139
        %v2896 = vunpack.c.l.b16 %v1140
        %v2897 = vunpack.c.h.b16 %v1140
        %v2898 = vunpack.c.l.b16 %v1141
        %v2899 = vunpack.c.h.b16 %v1141
        %v2900 = vunpack.c.l.b16 %v1142
        %v2901 = vunpack.c.h.b16 %v1142
        %v2902 = vunpack.c.l.b16 %v1143
        %v2903 = vunpack.c.h.b16 %v1143
        %v2904 = vunpack.c.l.b16 %v1144
        %v2905 = vunpack.c.h.b16 %v1144
        %v2906 = vunpack.c.l.b16 %v1145
        %v2907 = vunpack.c.h.b16 %v1145
        %v2908 = vunpack.c.l.b16 %v1146
        %v2909 = vunpack.c.h.b16 %v1146
        %v2910 = vunpack.c.l.b16 %v1147
        %v2911 = vunpack.c.h.b16 %v1147
        %v2912 = vunpack.c.l.b16 %v1148
        %v2913 = vunpack.c.h.b16 %v1148
        %v2914 = vunpack.c.l.b16 %v1149
        %v2915 = vunpack.c.h.b16 %v1149
        %v2916 = vunpack.c.l.b16 %v1150
        %v2917 = vunpack.c.h.b16 %v1150
        %v2918 = vunpack.c.l.b16 %v1151
        %v2919 = vunpack.c.h.b16 %v1151
        %v2920 = vunpack.c.l.b16 %v1152
        %v2921 = vunpack.c.h.b16 %v1152
        %v2922 = vunpack.c.l.b16 %v1153
        %v2923 = vunpack.c.h.b16 %v1153
        %v2924 = vunpack.c.l.b16 %v1154
        %v2925 = vunpack.c.h.b16 %v1154
        %v2926 = vunpack.c.l.b16 %v1155
        %v2927 = vunpack.c.h.b16 %v1155
        %v2928 = vunpack.c.l.b16 %v1156
        %v2929 = vunpack.c.h.b16 %v1156
        %v2930 = vunpack.c.l.b16 %v1157
        %v2931 = vunpack.c.h.b16 %v1157
        %v2932 = vunpack.c.l.b16 %v1158
        %v2933 = vunpack.c.h.b16 %v1158
        %v2934 = vunpack.c.l.b16 %v1159
        %v2935 = vunpack.c.h.b16 %v1159
        %v2936 = vunpack.c.l.b16 %v1160
        %v2937 = vunpack.c.h.b16 %v1160
        %v2938 = vunpack.c.l.b16 %v1161
        %v2939 = vunpack.c.h.b16 %v1161
        %v2940 = vunpack.c.l.b16 %v1162
        %v2941 = vunpack.c.h.b16 %v1162
        %v2942 = vunpack.c.l.b16 %v1163
        %v2943 = vunpack.c.h.b16 %v1163
        %v2944 = vunpack.c.l.b16 %v1164
        %v2945 = vunpack.c.h.b16 %v1164
        %v2946 = vunpack.c.l.b16 %v1165
        %v2947 = vunpack.c.h.b16 %v1165
        %v2948 = vunpack.c.l.b16 %v1166
        %v2949 = vunpack.c.h.b16 %v1166
        %v2950 = vunpack.c.l.b16 %v1167
        %v2951 = vunpack.c.h.b16 %v1167
        %v2952 = vunpack.c.l.b16 %v1168
        %v2953 = vunpack.c.h.b16 %v1168
        %v2954 = vunpack.c.l.b16 %v1169
        %v2955 = vunpack.c.h.b16 %v1169
        %v2956 = vunpack.c.l.b16 %v1170
        %v2957 = vunpack.c.h.b16 %v1170
        %v2958 = vunpack.c.l.b16 %v1171
        %v2959 = vunpack.c.h.b16 %v1171
        %v2960 = vunpack.c.l.b16 %v1172
        %v2961 = vunpack.c.h.b16 %v1172
        %v2962 = vunpack.c.l.b16 %v1173
        %v2963 = vunpack.c.h.b16 %v1173
        %v2964 = vunpack.c.l.b16 %v1174
        %v2965 = vunpack.c.h.b16 %v1174
        %v2966 = vunpack.c.l.b16 %v1175
        %v2967 = vunpack.c.h.b16 %v1175
        %v2968 = vunpack.c.l.b16 %v1176
        %v2969 = vunpack.c.h.b16 %v1176
        %v2970 = vunpack.c.l.b16 %v1177
        %v2971 = vunpack.c.h.b16 %v1177
        %v2972 = vunpack.c.l.b16 %v1178
        %v2973 = vunpack.c.h.b16 %v1178
        %v2974 = vunpack.c.l.b16 %v1179
        %v2975 = vunpack.c.h.b16 %v1179
        %v2976 = vunpack.c.l.b16 %v1180
        %v2977 = vunpack.c.h.b16 %v1180
        %v2978 = vunpack.c.l.b16 %v1181
        %v2979 = vunpack.c.h.b16 %v1181
        %v2980 = vunpack.c.l.b16 %v1182
        %v2981 = vunpack.c.h.b16 %v1182
        %v2982 = vunpack.c.l.b16 %v1183
        %v2983 = vunpack.c.h.b16 %v1183
        %v2984 = vunpack.c.l.b16 %v1184
        %v2985 = vunpack.c.h.b16 %v1184
        %v2986 = vunpack.c.l.b16 %v1185
        %v2987 = vunpack.c.h.b16 %v1185
        %v2988 = vunpack.c.l.b16 %v1186
        %v2989 = vunpack.c.h.b16 %v1186
        %v2990 = vunpack.c.l.b16 %v1187
        %v2991 = vunpack.c.h.b16 %v1187
        %v2992 = vunpack.c.l.b16 %v1188
        %v2993 = vunpack.c.h.b16 %v1188
        %v2994 = vunpack.c.l.b16 %v1189
        %v2995 = vunpack.c.h.b16 %v1189
        %v2996 = vunpack.c.l.b16 %v1190
        %v2997 = vunpack.c.h.b16 %v1190
        %v2998 = vunpack.c.l.b16 %v1191
        %v2999 = vunpack.c.h.b16 %v1191
        %v3000 = vunpack.c.l.b16 %v1192
        %v3001 = vunpack.c.h.b16 %v1192
        %v3002 = vunpack.c.l.b16 %v1193
        %v3003 = vunpack.c.h.b16 %v1193
        %v3004 = vunpack.c.l.b16 %v1194
        %v3005 = vunpack.c.h.b16 %v1194
        %v3006 = vunpack.c.l.b16 %v1195
        %v3007 = vunpack.c.h.b16 %v1195
        %v3008 = vunpack.c.l.b16 %v1196
        %v3009 = vunpack.c.h.b16 %v1196
        %v3010 = vunpack.c.l.b16 %v1197
        %v3011 = vunpack.c.h.b16 %v1197
        %v3012 = vunpack.c.l.b16 %v1198
        %v3013 = vunpack.c.h.b16 %v1198
        %v3014 = vunpack.c.l.b16 %v1199
        %v3015 = vunpack.c.h.b16 %v1199
        %v3016 = vunpack.c.l.b16 %v1200
        %v3017 = vunpack.c.h.b16 %v1200
        %v3018 = vunpack.c.l.b16 %v1201
        %v3019 = vunpack.c.h.b16 %v1201
        %v3020 = vunpack.c.l.b16 %v1202
        %v3021 = vunpack.c.h.b16 %v1202
        %v3022 = vunpack.c.l.b16 %v1203
        %v3023 = vunpack.c.h.b16 %v1203
        %v3024 = vunpack.c.l.b16 %v1204
        %v3025 = vunpack.c.h.b16 %v1204
        %v3026 = vunpack.c.l.b16 %v1205
        %v3027 = vunpack.c.h.b16 %v1205
        %v3028 = vunpack.c.l.b16 %v1206
        %v3029 = vunpack.c.h.b16 %v1206
        %v3030 = vunpack.c.l.b16 %v1207
        %v3031 = vunpack.c.h.b16 %v1207
        %v3032 = vunpack.c.l.b16 %v1208
        %v3033 = vunpack.c.h.b16 %v1208
        %v3034 = vunpack.c.l.b16 %v1209
        %v3035 = vunpack.c.h.b16 %v1209
        %v3036 = vunpack.c.l.b16 %v1210
        %v3037 = vunpack.c.h.b16 %v1210
        %v3038 = vunpack.c.l.b16 %v1211
        %v3039 = vunpack.c.h.b16 %v1211
        %v3040 = vunpack.c.l.b16 %v1212
        %v3041 = vunpack.c.h.b16 %v1212
        %v3042 = vunpack.c.l.b16 %v1213
        %v3043 = vunpack.c.h.b16 %v1213
        %v3044 = vunpack.c.l.b16 %v1214
        %v3045 = vunpack.c.h.b16 %v1214
        %v3046 = vunpack.c.l.b16 %v1215
        %v3047 = vunpack.c.h.b16 %v1215
        %v3048 = vunpack.c.l.b16 %v1216
        %v3049 = vunpack.c.h.b16 %v1216
        %v3050 = vunpack.c.l.b16 %v1217
        %v3051 = vunpack.c.h.b16 %v1217
        %v3052 = vunpack.c.l.b16 %v1218
        %v3053 = vunpack.c.h.b16 %v1218
        %v3054 = vunpack.c.l.b16 %v1219
        %v3055 = vunpack.c.h.b16 %v1219
        %v3056 = vunpack.c.l.b16 %v1220
        %v3057 = vunpack.c.h.b16 %v1220
        %v3058 = vunpack.c.l.b16 %v1221
        %v3059 = vunpack.c.h.b16 %v1221
        %v3060 = vunpack.c.l.b16 %v1222
        %v3061 = vunpack.c.h.b16 %v1222
        %v3062 = vunpack.c.l.b16 %v1223
        %v3063 = vunpack.c.h.b16 %v1223
        %v3064 = vunpack.c.l.b16 %v1224
        %v3065 = vunpack.c.h.b16 %v1224
        %v3066 = vunpack.c.l.b16 %v1225
        %v3067 = vunpack.c.h.b16 %v1225
        %v3068 = vunpack.c.l.b16 %v1226
        %v3069 = vunpack.c.h.b16 %v1226
        %v3070 = vunpack.c.l.b16 %v1227
        %v3071 = vunpack.c.h.b16 %v1227
        %v3072 = vunpack.c.l.b16 %v1228
        %v3073 = vunpack.c.h.b16 %v1228
        %v3074 = vunpack.c.l.b16 %v1229
        %v3075 = vunpack.c.h.b16 %v1229
        %v3076 = vunpack.c.l.b16 %v1230
        %v3077 = vunpack.c.h.b16 %v1230
        %v3078 = vunpack.c.l.b16 %v1231
        %v3079 = vunpack.c.h.b16 %v1231
        %v3080 = vunpack.c.l.b16 %v1232
        %v3081 = vunpack.c.h.b16 %v1232
        %v3082 = vunpack.c.l.b16 %v1233
        %v3083 = vunpack.c.h.b16 %v1233
        %v3084 = vunpack.c.l.b16 %v1234
        %v3085 = vunpack.c.h.b16 %v1234
        %v3086 = vunpack.c.l.b16 %v1235
        %v3087 = vunpack.c.h.b16 %v1235
        %v3088 = vunpack.c.l.b16 %v1236
        %v3089 = vunpack.c.h.b16 %v1236
        %v3090 = vunpack.c.l.b16 %v1237
        %v3091 = vunpack.c.h.b16 %v1237
        %v3092 = vunpack.c.l.b16 %v1238
        %v3093 = vunpack.c.h.b16 %v1238
        %v3094 = vunpack.c.l.b16 %v1239
        %v3095 = vunpack.c.h.b16 %v1239
        %v3096 = vunpack.c.l.b16 %v1240
        %v3097 = vunpack.c.h.b16 %v1240
        %v3098 = vunpack.c.l.b16 %v1241
        %v3099 = vunpack.c.h.b16 %v1241
        %v3100 = vunpack.c.l.b16 %v1242
        %v3101 = vunpack.c.h.b16 %v1242
        %v3102 = vunpack.c.l.b16 %v1243
        %v3103 = vunpack.c.h.b16 %v1243
        %v3104 = vunpack.c.l.b16 %v1244
        %v3105 = vunpack.c.h.b16 %v1244
        %v3106 = vunpack.c.l.b16 %v1245
        %v3107 = vunpack.c.h.b16 %v1245
        %v3108 = vunpack.c.l.b16 %v1246
        %v3109 = vunpack.c.h.b16 %v1246
        %v3110 = vunpack.c.l.b16 %v1247
        %v3111 = vunpack.c.h.b16 %v1247
        %v3112 = vunpack.c.l.b16 %v1248
        %v3113 = vunpack.c.h.b16 %v1248
        %v3114 = vunpack.c.l.b16 %v1249
        %v3115 = vunpack.c.h.b16 %v1249
        %v3116 = vunpack.c.l.b16 %v1250
        %v3117 = vunpack.c.h.b16 %v1250
        %v3118 = vunpack.c.l.b16 %v1251
        %v3119 = vunpack.c.h.b16 %v1251
        %v3120 = vunpack.c.l.b16 %v1252
        %v3121 = vunpack.c.h.b16 %v1252
        %v3122 = vunpack.c.l.b16 %v1253
        %v3123 = vunpack.c.h.b16 %v1253
        %v3124 = vunpack.c.l.b16 %v1254
        %v3125 = vunpack.c.h.b16 %v1254
        %v3126 = vunpack.c.l.b16 %v1255
        %v3127 = vunpack.c.h.b16 %v1255
        %v3128 = vunpack.c.l.b16 %v1256
        %v3129 = vunpack.c.h.b16 %v1256
        %v3130 = vunpack.c.l.b16 %v1257
        %v3131 = vunpack.c.h.b16 %v1257
        %v3132 = vunpack.c.l.b16 %v1258
        %v3133 = vunpack.c.h.b16 %v1258
        %v3134 = vunpack.c.l.b16 %v1259
        %v3135 = vunpack.c.h.b16 %v1259
        %v3136 = vunpack.c.l.b16 %v1260
        %v3137 = vunpack.c.h.b16 %v1260
        %v3138 = vunpack.c.l.b16 %v1261
        %v3139 = vunpack.c.h.b16 %v1261
        %v3140 = vunpack.c.l.b16 %v1262
        %v3141 = vunpack.c.h.b16 %v1262
        %v3142 = vunpack.c.l.b16 %v1263
        %v3143 = vunpack.c.h.b16 %v1263
        %v3144 = vunpack.c.l.b16 %v1264
        %v3145 = vunpack.c.h.b16 %v1264
        %v3146 = vunpack.c.l.b16 %v1265
        %v3147 = vunpack.c.h.b16 %v1265
        %v3148 = vunpack.c.l.b16 %v1266
        %v3149 = vunpack.c.h.b16 %v1266
        %v3150 = vunpack.c.l.b16 %v1267
        %v3151 = vunpack.c.h.b16 %v1267
        %v3152 = vunpack.c.l.b16 %v1268
        %v3153 = vunpack.c.h.b16 %v1268
        %v3154 = vunpack.c.l.b16 %v1269
        %v3155 = vunpack.c.h.b16 %v1269
        %v3156 = vunpack.c.l.b16 %v1270
        %v3157 = vunpack.c.h.b16 %v1270
        %v3158 = vunpack.c.l.b16 %v1271
        %v3159 = vunpack.c.h.b16 %v1271
        %v3160 = vunpack.c.l.b16 %v1272
        %v3161 = vunpack.c.h.b16 %v1272
        %v3162 = vunpack.c.l.b16 %v1273
        %v3163 = vunpack.c.h.b16 %v1273
        %v3164 = vunpack.c.l.b16 %v1274
        %v3165 = vunpack.c.h.b16 %v1274
        %v3166 = vunpack.c.l.b16 %v1275
        %v3167 = vunpack.c.h.b16 %v1275
        %v3168 = vunpack.c.l.b16 %v1276
        %v3169 = vunpack.c.h.b16 %v1276
        %v3170 = vunpack.c.l.b16 %v1277
        %v3171 = vunpack.c.h.b16 %v1277
        %v3172 = vunpack.c.l.b16 %v1278
        %v3173 = vunpack.c.h.b16 %v1278
        %v3174 = vunpack.c.l.b16 %v1279
        %v3175 = vunpack.c.h.b16 %v1279
        %v3176 = vunpack.c.l.b16 %v1280
        %v3177 = vunpack.c.h.b16 %v1280
        %v3178 = vunpack.c.l.b16 %v1281
        %v3179 = vunpack.c.h.b16 %v1281
        %v3180 = vunpack.c.l.b16 %v1282
        %v3181 = vunpack.c.h.b16 %v1282
        %v3182 = vunpack.c.l.b16 %v1283
        %v3183 = vunpack.c.h.b16 %v1283
        %v3184 = vpack.c.b16 %v2162, %v2160
        %v3185 = vpack.c.b16 %v2163, %v2161
        %v3186 = vpack.c.b16 %v2166, %v2164
        %v3187 = vpack.c.b16 %v2167, %v2165
        %v3188 = vpack.c.b16 %v2170, %v2168
        %v3189 = vpack.c.b16 %v2171, %v2169
        %v3190 = vpack.c.b16 %v2174, %v2172
        %v3191 = vpack.c.b16 %v2175, %v2173
        %v3192 = vpack.c.b16 %v2178, %v2176
        %v3193 = vpack.c.b16 %v2179, %v2177
        %v3194 = vpack.c.b16 %v2182, %v2180
        %v3195 = vpack.c.b16 %v2183, %v2181
        %v3196 = vpack.c.b16 %v2186, %v2184
        %v3197 = vpack.c.b16 %v2187, %v2185
        %v3198 = vpack.c.b16 %v2190, %v2188
        %v3199 = vpack.c.b16 %v2191, %v2189
        %v3200 = vpack.c.b16 %v2194, %v2192
        %v3201 = vpack.c.b16 %v2195, %v2193
        %v3202 = vpack.c.b16 %v2198, %v2196
        %v3203 = vpack.c.b16 %v2199, %v2197
        %v3204 = vpack.c.b16 %v2202, %v2200
        %v3205 = vpack.c.b16 %v2203, %v2201
        %v3206 = vpack.c.b16 %v2206, %v2204
        %v3207 = vpack.c.b16 %v2207, %v2205
        %v3208 = vpack.c.b16 %v2210, %v2208
        %v3209 = vpack.c.b16 %v2211, %v2209
        %v3210 = vpack.c.b16 %v2214, %v2212
        %v3211 = vpack.c.b16 %v2215, %v2213
        %v3212 = vpack.c.b16 %v2218, %v2216
        %v3213 = vpack.c.b16 %v2219, %v2217
        %v3214 = vpack.c.b16 %v2222, %v2220
        %v3215 = vpack.c.b16 %v2223, %v2221
        %v3216 = vpack.c.b16 %v2226, %v2224
        %v3217 = vpack.c.b16 %v2227, %v2225
        %v3218 = vpack.c.b16 %v2230, %v2228
        %v3219 = vpack.c.b16 %v2231, %v2229
        %v3220 = vpack.c.b16 %v2234, %v2232
        %v3221 = vpack.c.b16 %v2235, %v2233
        %v3222 = vpack.c.b16 %v2238, %v2236
        %v3223 = vpack.c.b16 %v2239, %v2237
        %v3224 = vpack.c.b16 %v2242, %v2240
        %v3225 = vpack.c.b16 %v2243, %v2241
        %v3226 = vpack.c.b16 %v2246, %v2244
        %v3227 = vpack.c.b16 %v2247, %v2245
        %v3228 = vpack.c.b16 %v2250, %v2248
        %v3229 = vpack.c.b16 %v2251, %v2249
        %v3230 = vpack.c.b16 %v2254, %v2252
        %v3231 = vpack.c.b16 %v2255, %v2253
        %v3232 = vpack.c.b16 %v2258, %v2256
        %v3233 = vpack.c.b16 %v2259, %v2257
        %v3234 = vpack.c.b16 %v2262, %v2260
        %v3235 = vpack.c.b16 %v2263, %v2261
        %v3236 = vpack.c.b16 %v2266, %v2264
        %v3237 = vpack.c.b16 %v2267, %v2265
        %v3238 = vpack.c.b16 %v2270, %v2268
        %v3239 = vpack.c.b16 %v2271, %v2269
        %v3240 = vpack.c.b16 %v2274, %v2272
        %v3241 = vpack.c.b16 %v2275, %v2273
        %v3242 = vpack.c.b16 %v2278, %v2276
        %v3243 = vpack.c.b16 %v2279, %v2277
        %v3244 = vpack.c.b16 %v2282, %v2280
        %v3245 = vpack.c.b16 %v2283, %v2281
        %v3246 = vpack.c.b16 %v2286, %v2284
        %v3247 = vpack.c.b16 %v2287, %v2285
        %v3248 = vpack.c.b16 %v2290, %v2288
        %v3249 = vpack.c.b16 %v2291, %v2289
        %v3250 = vpack.c.b16 %v2294, %v2292
        %v3251 = vpack.c.b16 %v2295, %v2293
        %v3252 = vpack.c.b16 %v2298, %v2296
        %v3253 = vpack.c.b16 %v2299, %v2297
        %v3254 = vpack.c.b16 %v2302, %v2300
        %v3255 = vpack.c.b16 %v2303, %v2301
        %v3256 = vpack.c.b16 %v2306, %v2304
        %v3257 = vpack.c.b16 %v2307, %v2305
        %v3258 = vpack.c.b16 %v2310, %v2308
        %v3259 = vpack.c.b16 %v2311, %v2309
        %v3260 = vpack.c.b16 %v2314, %v2312
        %v3261 = vpack.c.b16 %v2315, %v2313
        %v3262 = vpack.c.b16 %v2318, %v2316
        %v3263 = vpack.c.b16 %v2319, %v2317
        %v3264 = vpack.c.b16 %v2322, %v2320
        %v3265 = vpack.c.b16 %v2323, %v2321
        %v3266 = vpack.c.b16 %v2326, %v2324
        %v3267 = vpack.c.b16 %v2327, %v2325
        %v3268 = vpack.c.b16 %v2330, %v2328
        %v3269 = vpack.c.b16 %v2331, %v2329
        %v3270 = vpack.c.b16 %v2334, %v2332
        %v3271 = vpack.c.b16 %v2335, %v2333
        %v3272 = vpack.c.b16 %v2338, %v2336
        %v3273 = vpack.c.b16 %v2339, %v2337
        %v3274 = vpack.c.b16 %v2342, %v2340
        %v3275 = vpack.c.b16 %v2343, %v2341
        %v3276 = vpack.c.b16 %v2346, %v2344
        %v3277 = vpack.c.b16 %v2347, %v2345
        %v3278 = vpack.c.b16 %v2350, %v2348
        %v3279 = vpack.c.b16 %v2351, %v2349
        %v3280 = vpack.c.b16 %v2354, %v2352
        %v3281 = vpack.c.b16 %v2355, %v2353
        %v3282 = vpack.c.b16 %v2358, %v2356
        %v3283 = vpack.c.b16 %v2359, %v2357
        %v3284 = vpack.c.b16 %v2362, %v2360
        %v3285 = vpack.c.b16 %v2363, %v2361
        %v3286 = vpack.c.b16 %v2366, %v2364
        %v3287 = vpack.c.b16 %v2367, %v2365
        %v3288 = vpack.c.b16 %v2370, %v2368
        %v3289 = vpack.c.b16 %v2371, %v2369
        %v3290 = vpack.c.b16 %v2374, %v2372
        %v3291 = vpack.c.b16 %v2375, %v2373
        %v3292 = vpack.c.b16 %v2378, %v2376
        %v3293 = vpack.c.b16 %v2379, %v2377
        %v3294 = vpack.c.b16 %v2382, %v2380
        %v3295 = vpack.c.b16 %v2383, %v2381
        %v3296 = vpack.c.b16 %v2386, %v2384
        %v3297 = vpack.c.b16 %v2387, %v2385
        %v3298 = vpack.c.b16 %v2390, %v2388
        %v3299 = vpack.c.b16 %v2391, %v2389
        %v3300 = vpack.c.b16 %v2394, %v2392
        %v3301 = vpack.c.b16 %v2395, %v2393
        %v3302 = vpack.c.b16 %v2398, %v2396
        %v3303 = vpack.c.b16 %v2399, %v2397
        %v3304 = vpack.c.b16 %v2402, %v2400
        %v3305 = vpack.c.b16 %v2403, %v2401
        %v3306 = vpack.c.b16 %v2406, %v2404
        %v3307 = vpack.c.b16 %v2407, %v2405
        %v3308 = vpack.c.b16 %v2410, %v2408
        %v3309 = vpack.c.b16 %v2411, %v2409
        %v3310 = vpack.c.b16 %v2414, %v2412
        %v3311 = vpack.c.b16 %v2415, %v2413
        %v3312 = vpack.c.b16 %v2418, %v2416
        %v3313 = vpack.c.b16 %v2419, %v2417
        %v3314 = vpack.c.b16 %v2422, %v2420
        %v3315 = vpack.c.b16 %v2423, %v2421
        %v3316 = vpack.c.b16 %v2426, %v2424
        %v3317 = vpack.c.b16 %v2427, %v2425
        %v3318 = vpack.c.b16 %v2430, %v2428
        %v3319 = vpack.c.b16 %v2431, %v2429
        %v3320 = vpack.c.b16 %v2434, %v2432
        %v3321 = vpack.c.b16 %v2435, %v2433
        %v3322 = vpack.c.b16 %v2438, %v2436
        %v3323 = vpack.c.b16 %v2439, %v2437
        %v3324 = vpack.c.b16 %v2442, %v2440
        %v3325 = vpack.c.b16 %v2443, %v2441
        %v3326 = vpack.c.b16 %v2446, %v2444
        %v3327 = vpack.c.b16 %v2447, %v2445
        %v3328 = vpack.c.b16 %v2450, %v2448
        %v3329 = vpack.c.b16 %v2451, %v2449
        %v3330 = vpack.c.b16 %v2454, %v2452
        %v3331 = vpack.c.b16 %v2455, %v2453
        %v3332 = vpack.c.b16 %v2458, %v2456
        %v3333 = vpack.c.b16 %v2459, %v2457
        %v3334 = vpack.c.b16 %v2462, %v2460
        %v3335 = vpack.c.b16 %v2463, %v2461
        %v3336 = vpack.c.b16 %v2466, %v2464
        %v3337 = vpack.c.b16 %v2467, %v2465
        %v3338 = vpack.c.b16 %v2470, %v2468
        %v3339 = vpack.c.b16 %v2471, %v2469
        %v3340 = vpack.c.b16 %v2474, %v2472
        %v3341 = vpack.c.b16 %v2475, %v2473
        %v3342 = vpack.c.b16 %v2478, %v2476
        %v3343 = vpack.c.b16 %v2479, %v2477
        %v3344 = vpack.c.b16 %v2482, %v2480
        %v3345 = vpack.c.b16 %v2483, %v2481
        %v3346 = vpack.c.b16 %v2486, %v2484
        %v3347 = vpack.c.b16 %v2487, %v2485
        %v3348 = vpack.c.b16 %v2490, %v2488
        %v3349 = vpack.c.b16 %v2491, %v2489
        %v3350 = vpack.c.b16 %v2494, %v2492
        %v3351 = vpack.c.b16 %v2495, %v2493
        %v3352 = vpack.c.b16 %v2498, %v2496
        %v3353 = vpack.c.b16 %v2499, %v2497
        %v3354 = vpack.c.b16 %v2502, %v2500
        %v3355 = vpack.c.b16 %v2503, %v2501
        %v3356 = vpack.c.b16 %v2506, %v2504
        %v3357 = vpack.c.b16 %v2507, %v2505
        %v3358 = vpack.c.b16 %v2510, %v2508
        %v3359 = vpack.c.b16 %v2511, %v2509
        %v3360 = vpack.c.b16 %v2514, %v2512
        %v3361 = vpack.c.b16 %v2515, %v2513
        %v3362 = vpack.c.b16 %v2518, %v2516
        %v3363 = vpack.c.b16 %v2519, %v2517
        %v3364 = vpack.c.b16 %v2522, %v2520
        %v3365 = vpack.c.b16 %v2523, %v2521
        %v3366 = vpack.c.b16 %v2526, %v2524
        %v3367 = vpack.c.b16 %v2527, %v2525
        %v3368 = vpack.c.b16 %v2530, %v2528
        %v3369 = vpack.c.b16 %v2531, %v2529
        %v3370 = vpack.c.b16 %v2534, %v2532
        %v3371 = vpack.c.b16 %v2535, %v2533
        %v3372 = vpack.c.b16 %v2538, %v2536
        %v3373 = vpack.c.b16 %v2539, %v2537
        %v3374 = vpack.c.b16 %v2542, %v2540
        %v3375 = vpack.c.b16 %v2543, %v2541
        %v3376 = vpack.c.b16 %v2546, %v2544
        %v3377 = vpack.c.b16 %v2547, %v2545
        %v3378 = vpack.c.b16 %v2550, %v2548
        %v3379 = vpack.c.b16 %v2551, %v2549
        %v3380 = vpack.c.b16 %v2554, %v2552
        %v3381 = vpack.c.b16 %v2555, %v2553
        %v3382 = vpack.c.b16 %v2558, %v2556
        %v3383 = vpack.c.b16 %v2559, %v2557
        %v3384 = vpack.c.b16 %v2562, %v2560
        %v3385 = vpack.c.b16 %v2563, %v2561
        %v3386 = vpack.c.b16 %v2566, %v2564
        %v3387 = vpack.c.b16 %v2567, %v2565
        %v3388 = vpack.c.b16 %v2570, %v2568
        %v3389 = vpack.c.b16 %v2571, %v2569
        %v3390 = vpack.c.b16 %v2574, %v2572
        %v3391 = vpack.c.b16 %v2575, %v2573
        %v3392 = vpack.c.b16 %v2578, %v2576
        %v3393 = vpack.c.b16 %v2579, %v2577
        %v3394 = vpack.c.b16 %v2582, %v2580
        %v3395 = vpack.c.b16 %v2583, %v2581
        %v3396 = vpack.c.b16 %v2586, %v2584
        %v3397 = vpack.c.b16 %v2587, %v2585
        %v3398 = vpack.c.b16 %v2590, %v2588
        %v3399 = vpack.c.b16 %v2591, %v2589
        %v3400 = vpack.c.b16 %v2594, %v2592
        %v3401 = vpack.c.b16 %v2595, %v2593
        %v3402 = vpack.c.b16 %v2598, %v2596
        %v3403 = vpack.c.b16 %v2599, %v2597
        %v3404 = vpack.c.b16 %v2602, %v2600
        %v3405 = vpack.c.b16 %v2603, %v2601
        %v3406 = vpack.c.b16 %v2606, %v2604
        %v3407 = vpack.c.b16 %v2607, %v2605
        %v3408 = vpack.c.b16 %v2610, %v2608
        %v3409 = vpack.c.b16 %v2611, %v2609
        %v3410 = vpack.c.b16 %v2614, %v2612
        %v3411 = vpack.c.b16 %v2615, %v2613
        %v3412 = vpack.c.b16 %v2618, %v2616
        %v3413 = vpack.c.b16 %v2619, %v2617
        %v3414 = vpack.c.b16 %v2622, %v2620
        %v3415 = vpack.c.b16 %v2623, %v2621
        %v3416 = vpack.c.b16 %v2626, %v2624
        %v3417 = vpack.c.b16 %v2627, %v2625
        %v3418 = vpack.c.b16 %v2630, %v2628
        %v3419 = vpack.c.b16 %v2631, %v2629
        %v3420 = vpack.c.b16 %v2634, %v2632
        %v3421 = vpack.c.b16 %v2635, %v2633
        %v3422 = vpack.c.b16 %v2638, %v2636
        %v3423 = vpack.c.b16 %v2639, %v2637
        %v3424 = vpack.c.b16 %v2642, %v2640
        %v3425 = vpack.c.b16 %v2643, %v2641
        %v3426 = vpack.c.b16 %v2646, %v2644
        %v3427 = vpack.c.b16 %v2647, %v2645
        %v3428 = vpack.c.b16 %v2650, %v2648
        %v3429 = vpack.c.b16 %v2651, %v2649
        %v3430 = vpack.c.b16 %v2654, %v2652
        %v3431 = vpack.c.b16 %v2655, %v2653
        %v3432 = vpack.c.b16 %v2658, %v2656
        %v3433 = vpack.c.b16 %v2659, %v2657
        %v3434 = vpack.c.b16 %v2662, %v2660
        %v3435 = vpack.c.b16 %v2663, %v2661
        %v3436 = vpack.c.b16 %v2666, %v2664
        %v3437 = vpack.c.b16 %v2667, %v2665
        %v3438 = vpack.c.b16 %v2670, %v2668
        %v3439 = vpack.c.b16 %v2671, %v2669
        %v3440 = vpack.c.b16 %v2674, %v2672
        %v3441 = vpack.c.b16 %v2675, %v2673
        %v3442 = vpack.c.b16 %v2678, %v2676
        %v3443 = vpack.c.b16 %v2679, %v2677
        %v3444 = vpack.c.b16 %v2682, %v2680
        %v3445 = vpack.c.b16 %v2683, %v2681
        %v3446 = vpack.c.b16 %v2686, %v2684
        %v3447 = vpack.c.b16 %v2687, %v2685
        %v3448 = vpack.c.b16 %v2690, %v2688
        %v3449 = vpack.c.b16 %v2691, %v2689
        %v3450 = vpack.c.b16 %v2694, %v2692
        %v3451 = vpack.c.b16 %v2695, %v2693
        %v3452 = vpack.c.b16 %v2698, %v2696
        %v3453 = vpack.c.b16 %v2699, %v2697
        %v3454 = vpack.c.b16 %v2702, %v2700
        %v3455 = vpack.c.b16 %v2703, %v2701
        %v3456 = vpack.c.b16 %v2706, %v2704
        %v3457 = vpack.c.b16 %v2707, %v2705
        %v3458 = vpack.c.b16 %v2710, %v2708
        %v3459 = vpack.c.b16 %v2711, %v2709
        %v3460 = vpack.c.b16 %v2714, %v2712
        %v3461 = vpack.c.b16 %v2715, %v2713
        %v3462 = vpack.c.b16 %v2718, %v2716
        %v3463 = vpack.c.b16 %v2719, %v2717
        %v3464 = vpack.c.b16 %v2722, %v2720
        %v3465 = vpack.c.b16 %v2723, %v2721
        %v3466 = vpack.c.b16 %v2726, %v2724
        %v3467 = vpack.c.b16 %v2727, %v2725
        %v3468 = vpack.c.b16 %v2730, %v2728
        %v3469 = vpack.c.b16 %v2731, %v2729
        %v3470 = vpack.c.b16 %v2734, %v2732
        %v3471 = vpack.c.b16 %v2735, %v2733
        %v3472 = vpack.c.b16 %v2738, %v2736
        %v3473 = vpack.c.b16 %v2739, %v2737
        %v3474 = vpack.c.b16 %v2742, %v2740
        %v3475 = vpack.c.b16 %v2743, %v2741
        %v3476 = vpack.c.b16 %v2746, %v2744
        %v3477 = vpack.c.b16 %v2747, %v2745
        %v3478 = vpack.c.b16 %v2750, %v2748
        %v3479 = vpack.c.b16 %v2751, %v2749
        %v3480 = vpack.c.b16 %v2754, %v2752
        %v3481 = vpack.c.b16 %v2755, %v2753
        %v3482 = vpack.c.b16 %v2758, %v2756
        %v3483 = vpack.c.b16 %v2759, %v2757
        %v3484 = vpack.c.b16 %v2762, %v2760
        %v3485 = vpack.c.b16 %v2763, %v2761
        %v3486 = vpack.c.b16 %v2766, %v2764
        %v3487 = vpack.c.b16 %v2767, %v2765
        %v3488 = vpack.c.b16 %v2770, %v2768
        %v3489 = vpack.c.b16 %v2771, %v2769
        %v3490 = vpack.c.b16 %v2774, %v2772
        %v3491 = vpack.c.b16 %v2775, %v2773
        %v3492 = vpack.c.b16 %v2778, %v2776
        %v3493 = vpack.c.b16 %v2779, %v2777
        %v3494 = vpack.c.b16 %v2782, %v2780
        %v3495 = vpack.c.b16 %v2783, %v2781
        %v3496 = vpack.c.b16 %v2786, %v2784
        %v3497 = vpack.c.b16 %v2787, %v2785
        %v3498 = vpack.c.b16 %v2790, %v2788
        %v3499 = vpack.c.b16 %v2791, %v2789
        %v3500 = vpack.c.b16 %v2794, %v2792
        %v3501 = vpack.c.b16 %v2795, %v2793
        %v3502 = vpack.c.b16 %v2798, %v2796
        %v3503 = vpack.c.b16 %v2799, %v2797
        %v3504 = vpack.c.b16 %v2802, %v2800
        %v3505 = vpack.c.b16 %v2803, %v2801
        %v3506 = vpack.c.b16 %v2806, %v2804
        %v3507 = vpack.c.b16 %v2807, %v2805
        %v3508 = vpack.c.b16 %v2810, %v2808
        %v3509 = vpack.c.b16 %v2811, %v2809
        %v3510 = vpack.c.b16 %v2814, %v2812
        %v3511 = vpack.c.b16 %v2815, %v2813
        %v3512 = vpack.c.b16 %v2818, %v2816
        %v3513 = vpack.c.b16 %v2819, %v2817
        %v3514 = vpack.c.b16 %v2822, %v2820
        %v3515 = vpack.c.b16 %v2823, %v2821
        %v3516 = vpack.c.b16 %v2826, %v2824
        %v3517 = vpack.c.b16 %v2827, %v2825
        %v3518 = vpack.c.b16 %v2830, %v2828
        %v3519 = vpack.c.b16 %v2831, %v2829
        %v3520 = vpack.c.b16 %v2834, %v2832
        %v3521 = vpack.c.b16 %v2835, %v2833
        %v3522 = vpack.c.b16 %v2838, %v2836
        %v3523 = vpack.c.b16 %v2839, %v2837
        %v3524 = vpack.c.b16 %v2842, %v2840
        %v3525 = vpack.c.b16 %v2843, %v2841
        %v3526 = vpack.c.b16 %v2846, %v2844
        %v3527 = vpack.c.b16 %v2847, %v2845
        %v3528 = vpack.c.b16 %v2850, %v2848
        %v3529 = vpack.c.b16 %v2851, %v2849
        %v3530 = vpack.c.b16 %v2854, %v2852
        %v3531 = vpack.c.b16 %v2855, %v2853
        %v3532 = vpack.c.b16 %v2858, %v2856
        %v3533 = vpack.c.b16 %v2859, %v2857
        %v3534 = vpack.c.b16 %v2862, %v2860
        %v3535 = vpack.c.b16 %v2863, %v2861
        %v3536 = vpack.c.b16 %v2866, %v2864
        %v3537 = vpack.c.b16 %v2867, %v2865
        %v3538 = vpack.c.b16 %v2870, %v2868
        %v3539 = vpack.c.b16 %v2871, %v2869
        %v3540 = vpack.c.b16 %v2874, %v2872
        %v3541 = vpack.c.b16 %v2875, %v2873
        %v3542 = vpack.c.b16 %v2878, %v2876
        %v3543 = vpack.c.b16 %v2879, %v2877
        %v3544 = vpack.c.b16 %v2882, %v2880
        %v3545 = vpack.c.b16 %v2883, %v2881
        %v3546 = vpack.c.b16 %v2886, %v2884
        %v3547 = vpack.c.b16 %v2887, %v2885
        %v3548 = vpack.c.b16 %v2890, %v2888
        %v3549 = vpack.c.b16 %v2891, %v2889
        %v3550 = vpack.c.b16 %v2894, %v2892
        %v3551 = vpack.c.b16 %v2895, %v2893
        %v3552 = vpack.c.b16 %v2898, %v2896
        %v3553 = vpack.c.b16 %v2899, %v2897
        %v3554 = vpack.c.b16 %v2902, %v2900
        %v3555 = vpack.c.b16 %v2903, %v2901
        %v3556 = vpack.c.b16 %v2906, %v2904
        %v3557 = vpack.c.b16 %v2907, %v2905
        %v3558 = vpack.c.b16 %v2910, %v2908
        %v3559 = vpack.c.b16 %v2911, %v2909
        %v3560 = vpack.c.b16 %v2914, %v2912
        %v3561 = vpack.c.b16 %v2915, %v2913
        %v3562 = vpack.c.b16 %v2918, %v2916
        %v3563 = vpack.c.b16 %v2919, %v2917
        %v3564 = vpack.c.b16 %v2922, %v2920
        %v3565 = vpack.c.b16 %v2923, %v2921
        %v3566 = vpack.c.b16 %v2926, %v2924
        %v3567 = vpack.c.b16 %v2927, %v2925
        %v3568 = vpack.c.b16 %v2930, %v2928
        %v3569 = vpack.c.b16 %v2931, %v2929
        %v3570 = vpack.c.b16 %v2934, %v2932
        %v3571 = vpack.c.b16 %v2935, %v2933
        %v3572 = vpack.c.b16 %v2938, %v2936
        %v3573 = vpack.c.b16 %v2939, %v2937
        %v3574 = vpack.c.b16 %v2942, %v2940
        %v3575 = vpack.c.b16 %v2943, %v2941
        %v3576 = vpack.c.b16 %v2946, %v2944
        %v3577 = vpack.c.b16 %v2947, %v2945
        %v3578 = vpack.c.b16 %v2950, %v2948
        %v3579 = vpack.c.b16 %v2951, %v2949
        %v3580 = vpack.c.b16 %v2954, %v2952
        %v3581 = vpack.c.b16 %v2955, %v2953
        %v3582 = vpack.c.b16 %v2958, %v2956
        %v3583 = vpack.c.b16 %v2959, %v2957
        %v3584 = vpack.c.b16 %v2962, %v2960
        %v3585 = vpack.c.b16 %v2963, %v2961
        %v3586 = vpack.c.b16 %v2966, %v2964
        %v3587 = vpack.c.b16 %v2967, %v2965
        %v3588 = vpack.c.b16 %v2970, %v2968
        %v3589 = vpack.c.b16 %v2971, %v2969
        %v3590 = vpack.c.b16 %v2974, %v2972
        %v3591 = vpack.c.b16 %v2975, %v2973
        %v3592 = vpack.c.b16 %v2978, %v2976
        %v3593 = vpack.c.b16 %v2979, %v2977
        %v3594 = vpack.c.b16 %v2982, %v2980
        %v3595 = vpack.c.b16 %v2983, %v2981
        %v3596 = vpack.c.b16 %v2986, %v2984
        %v3597 = vpack.c.b16 %v2987, %v2985
        %v3598 = vpack.c.b16 %v2990, %v2988
        %v3599 = vpack.c.b16 %v2991, %v2989
        %v3600 = vpack.c.b16 %v2994, %v2992
        %v3601 = vpack.c.b16 %v2995, %v2993
        %v3602 = vpack.c.b16 %v2998, %v2996
        %v3603 = vpack.c.b16 %v2999, %v2997
        %v3604 = vpack.c.b16 %v3002, %v3000
        %v3605 = vpack.c.b16 %v3003, %v3001
        %v3606 = vpack.c.b16 %v3006, %v3004
        %v3607 = vpack.c.b16 %v3007, %v3005
        %v3608 = vpack.c.b16 %v3010, %v3008
        %v3609 = vpack.c.b16 %v3011, %v3009
        %v3610 = vpack.c.b16 %v3014, %v3012
        %v3611 = vpack.c.b16 %v3015, %v3013
        %v3612 = vpack.c.b16 %v3018, %v3016
        %v3613 = vpack.c.b16 %v3019, %v3017
        %v3614 = vpack.c.b16 %v3022, %v3020
        %v3615 = vpack.c.b16 %v3023, %v3021
        %v3616 = vpack.c.b16 %v3026, %v3024
        %v3617 = vpack.c.b16 %v3027, %v3025
        %v3618 = vpack.c.b16 %v3030, %v3028
        %v3619 = vpack.c.b16 %v3031, %v3029
        %v3620 = vpack.c.b16 %v3034, %v3032
        %v3621 = vpack.c.b16 %v3035, %v3033
        %v3622 = vpack.c.b16 %v3038, %v3036
        %v3623 = vpack.c.b16 %v3039, %v3037
        %v3624 = vpack.c.b16 %v3042, %v3040
        %v3625 = vpack.c.b16 %v3043, %v3041
        %v3626 = vpack.c.b16 %v3046, %v3044
        %v3627 = vpack.c.b16 %v3047, %v3045
        %v3628 = vpack.c.b16 %v3050, %v3048
        %v3629 = vpack.c.b16 %v3051, %v3049
        %v3630 = vpack.c.b16 %v3054, %v3052
        %v3631 = vpack.c.b16 %v3055, %v3053
        %v3632 = vpack.c.b16 %v3058, %v3056
        %v3633 = vpack.c.b16 %v3059, %v3057
        %v3634 = vpack.c.b16 %v3062, %v3060
        %v3635 = vpack.c.b16 %v3063, %v3061
        %v3636 = vpack.c.b16 %v3066, %v3064
        %v3637 = vpack.c.b16 %v3067, %v3065
        %v3638 = vpack.c.b16 %v3070, %v3068
        %v3639 = vpack.c.b16 %v3071, %v3069
        %v3640 = vpack.c.b16 %v3074, %v3072
        %v3641 = vpack.c.b16 %v3075, %v3073
        %v3642 = vpack.c.b16 %v3078, %v3076
        %v3643 = vpack.c.b16 %v3079, %v3077
        %v3644 = vpack.c.b16 %v3082, %v3080
        %v3645 = vpack.c.b16 %v3083, %v3081
        %v3646 = vpack.c.b16 %v3086, %v3084
        %v3647 = vpack.c.b16 %v3087, %v3085
        %v3648 = vpack.c.b16 %v3090, %v3088
        %v3649 = vpack.c.b16 %v3091, %v3089
        %v3650 = vpack.c.b16 %v3094, %v3092
        %v3651 = vpack.c.b16 %v3095, %v3093
        %v3652 = vpack.c.b16 %v3098, %v3096
        %v3653 = vpack.c.b16 %v3099, %v3097
        %v3654 = vpack.c.b16 %v3102, %v3100
        %v3655 = vpack.c.b16 %v3103, %v3101
        %v3656 = vpack.c.b16 %v3106, %v3104
        %v3657 = vpack.c.b16 %v3107, %v3105
        %v3658 = vpack.c.b16 %v3110, %v3108
        %v3659 = vpack.c.b16 %v3111, %v3109
        %v3660 = vpack.c.b16 %v3114, %v3112
        %v3661 = vpack.c.b16 %v3115, %v3113
        %v3662 = vpack.c.b16 %v3118, %v3116
        %v3663 = vpack.c.b16 %v3119, %v3117
        %v3664 = vpack.c.b16 %v3122, %v3120
        %v3665 = vpack.c.b16 %v3123, %v3121
        %v3666 = vpack.c.b16 %v3126, %v3124
        %v3667 = vpack.c.b16 %v3127, %v3125
        %v3668 = vpack.c.b16 %v3130, %v3128
        %v3669 = vpack.c.b16 %v3131, %v3129
        %v3670 = vpack.c.b16 %v3134, %v3132
        %v3671 = vpack.c.b16 %v3135, %v3133
        %v3672 = vpack.c.b16 %v3138, %v3136
        %v3673 = vpack.c.b16 %v3139, %v3137
        %v3674 = vpack.c.b16 %v3142, %v3140
        %v3675 = vpack.c.b16 %v3143, %v3141
        %v3676 = vpack.c.b16 %v3146, %v3144
        %v3677 = vpack.c.b16 %v3147, %v3145
        %v3678 = vpack.c.b16 %v3150, %v3148
        %v3679 = vpack.c.b16 %v3151, %v3149
        %v3680 = vpack.c.b16 %v3154, %v3152
        %v3681 = vpack.c.b16 %v3155, %v3153
        %v3682 = vpack.c.b16 %v3158, %v3156
        %v3683 = vpack.c.b16 %v3159, %v3157
        %v3684 = vpack.c.b16 %v3162, %v3160
        %v3685 = vpack.c.b16 %v3163, %v3161
        %v3686 = vpack.c.b16 %v3166, %v3164
        %v3687 = vpack.c.b16 %v3167, %v3165
        %v3688 = vpack.c.b16 %v3170, %v3168
        %v3689 = vpack.c.b16 %v3171, %v3169
        %v3690 = vpack.c.b16 %v3174, %v3172
        %v3691 = vpack.c.b16 %v3175, %v3173
        %v3692 = vpack.c.b16 %v3178, %v3176
        %v3693 = vpack.c.b16 %v3179, %v3177
        %v3694 = vpack.c.b16 %v3182, %v3180
        %v3695 = vpack.c.b16 %v3183, %v3181
        %4208 = vmatprep.subr.bf16.mxu0 %v3185
        %4209 = vmatpush1.bf16.msra.mxu0 %v3184
        %4210 = vmatprep.subr.bf16.mxu0 %v3187
        %4211 = vmatpush1.bf16.msra.mxu0 %v3186
        %4212 = vmatprep.subr.bf16.mxu0 %v3189
        %4213 = vmatpush1.bf16.msra.mxu0 %v3188
        %4214 = vmatprep.subr.bf16.mxu0 %v3191
        %4215 = vmatpush1.bf16.msra.mxu0 %v3190
        %4216 = vmatprep.subr.bf16.mxu0 %v3193
        %4217 = vmatpush1.bf16.msra.mxu0 %v3192
        %4218 = vmatprep.subr.bf16.mxu0 %v3195
        %4219 = vmatpush1.bf16.msra.mxu0 %v3194
        %4220 = vmatprep.subr.bf16.mxu0 %v3197
        %4221 = vmatpush1.bf16.msra.mxu0 %v3196
        %4222 = vmatprep.subr.bf16.mxu0 %v3199
        %4223 = vmatpush1.bf16.msra.mxu0 %v3198
        %4224 = vmatprep.subr.bf16.mxu0 %v3201
        %4225 = vmatpush1.bf16.msra.mxu0 %v3200
        %4226 = vmatprep.subr.bf16.mxu0 %v3203
        %4227 = vmatpush1.bf16.msra.mxu0 %v3202
        %4228 = vmatprep.subr.bf16.mxu0 %v3205
        %4229 = vmatpush1.bf16.msra.mxu0 %v3204
        %4230 = vmatprep.subr.bf16.mxu0 %v3207
        %4231 = vmatpush1.bf16.msra.mxu0 %v3206
        %4232 = vmatprep.subr.bf16.mxu0 %v3209
        %4233 = vmatpush1.bf16.msra.mxu0 %v3208
        %4234 = vmatprep.subr.bf16.mxu0 %v3211
        %4235 = vmatpush1.bf16.msra.mxu0 %v3210
        %4236 = vmatprep.subr.bf16.mxu0 %v3213
        %4237 = vmatpush1.bf16.msra.mxu0 %v3212
        %4238 = vmatprep.subr.bf16.mxu0 %v3215
        %4239 = vmatpush1.bf16.msra.mxu0 %v3214
        %4240 = vmatprep.mubr.bf16.mxu0 %v1521
        %4241 = vmatmul.mubr.bf16.gmra.mrb[0].mxu0 %v1520
        %v4242 = vpop.f32.mrb[0].mxu0
        %v4243 = vadd.f32 %v1320, %v4242
        %v4244 = vpop.f32.mrb[0].mxu0
        %v4245 = vadd.f32 %v1321, %v4244
        %v4246 = vpop.f32.mrb[0].mxu0
        %v4247 = vadd.f32 %v1322, %v4246
        %v4248 = vpop.f32.mrb[0].mxu0
        %v4249 = vadd.f32 %v1323, %v4248
        %4250 = vmatprep.mubr.bf16.mxu0 %v1553
        %4251 = vmatmul.mubr.bf16.gmra.mrb[0].mxu0 %v1552
        %v4252 = vpop.f32.mrb[0].mxu0
        %v4253 = vadd.f32 %v1324, %v4252
        %v4254 = vpop.f32.mrb[0].mxu0
        %v4255 = vadd.f32 %v1325, %v4254
        %v4256 = vpop.f32.mrb[0].mxu0
        %v4257 = vadd.f32 %v1326, %v4256
        %v4258 = vpop.f32.mrb[0].mxu0
        %v4259 = vadd.f32 %v1327, %v4258
        %4260 = vdwg.mxu0
        %4261 = vmatprep.subr.bf16.mxu0 %v3217
        %4262 = vmatpush1.bf16.msra.mxu0 %v3216
        %4263 = vmatprep.subr.bf16.mxu0 %v3219
        %4264 = vmatpush1.bf16.msra.mxu0 %v3218
        %4265 = vmatprep.subr.bf16.mxu0 %v3221
        %4266 = vmatpush1.bf16.msra.mxu0 %v3220
        %4267 = vmatprep.subr.bf16.mxu0 %v3223
        %4268 = vmatpush1.bf16.msra.mxu0 %v3222
        %4269 = vmatprep.subr.bf16.mxu0 %v3225
        %4270 = vmatpush1.bf16.msra.mxu0 %v3224
        %4271 = vmatprep.subr.bf16.mxu0 %v3227
        %4272 = vmatpush1.bf16.msra.mxu0 %v3226
        %4273 = vmatprep.subr.bf16.mxu0 %v3229
        %4274 = vmatpush1.bf16.msra.mxu0 %v3228
        %4275 = vmatprep.subr.bf16.mxu0 %v3231
        %4276 = vmatpush1.bf16.msra.mxu0 %v3230
        %4277 = vmatprep.subr.bf16.mxu0 %v3233
        %4278 = vmatpush1.bf16.msra.mxu0 %v3232
        %4279 = vmatprep.subr.bf16.mxu0 %v3235
        %4280 = vmatpush1.bf16.msra.mxu0 %v3234
        %4281 = vmatprep.subr.bf16.mxu0 %v3237
        %4282 = vmatpush1.bf16.msra.mxu0 %v3236
        %4283 = vmatprep.subr.bf16.mxu0 %v3239
        %4284 = vmatpush1.bf16.msra.mxu0 %v3238
        %4285 = vmatprep.subr.bf16.mxu0 %v3241
        %4286 = vmatpush1.bf16.msra.mxu0 %v3240
        %4287 = vmatprep.subr.bf16.mxu0 %v3243
        %4288 = vmatpush1.bf16.msra.mxu0 %v3242
        %4289 = vmatprep.subr.bf16.mxu0 %v3245
        %4290 = vmatpush1.bf16.msra.mxu0 %v3244
        %4291 = vmatprep.subr.bf16.mxu0 %v3247
        %4292 = vmatpush1.bf16.msra.mxu0 %v3246
        %4293 = vmatprep.mubr.bf16.mxu0 %v1523
        %4294 = vmatmul.mubr.bf16.gmra.mrb[0].mxu0 %v1522
        %v4295 = vpop.f32.mrb[0].mxu0
        %v4296 = vadd.f32 %v4243, %v4295
        %v4297 = vpop.f32.mrb[0].mxu0
        %v4298 = vadd.f32 %v4245, %v4297
        %v4299 = vpop.f32.mrb[0].mxu0
        %v4300 = vadd.f32 %v4247, %v4299
        %v4301 = vpop.f32.mrb[0].mxu0
        %v4302 = vadd.f32 %v4249, %v4301
        %4303 = vmatprep.mubr.bf16.mxu0 %v1555
        %4304 = vmatmul.mubr.bf16.gmra.mrb[0].mxu0 %v1554
        %v4305 = vpop.f32.mrb[0].mxu0
        %v4306 = vadd.f32 %v4253, %v4305
        %v4307 = vpop.f32.mrb[0].mxu0
        %v4308 = vadd.f32 %v4255, %v4307
        %v4309 = vpop.f32.mrb[0].mxu0
        %v4310 = vadd.f32 %v4257, %v4309
        %v4311 = vpop.f32.mrb[0].mxu0
        %v4312 = vadd.f32 %v4259, %v4311
        %4313 = vdwg.mxu0
        %4314 = vmatprep.subr.bf16.mxu0 %v3249
        %4315 = vmatpush1.bf16.msra.mxu0 %v3248
        %4316 = vmatprep.subr.bf16.mxu0 %v3251
        %4317 = vmatpush1.bf16.msra.mxu0 %v3250
        %4318 = vmatprep.subr.bf16.mxu0 %v3253
        %4319 = vmatpush1.bf16.msra.mxu0 %v3252
        %4320 = vmatprep.subr.bf16.mxu0 %v3255
        %4321 = vmatpush1.bf16.msra.mxu0 %v3254
        %4322 = vmatprep.subr.bf16.mxu0 %v3257
        %4323 = vmatpush1.bf16.msra.mxu0 %v3256
        %4324 = vmatprep.subr.bf16.mxu0 %v3259
        %4325 = vmatpush1.bf16.msra.mxu0 %v3258
        %4326 = vmatprep.subr.bf16.mxu0 %v3261
        %4327 = vmatpush1.bf16.msra.mxu0 %v3260
        %4328 = vmatprep.subr.bf16.mxu0 %v3263
        %4329 = vmatpush1.bf16.msra.mxu0 %v3262
        %4330 = vmatprep.subr.bf16.mxu0 %v3265
        %4331 = vmatpush1.bf16.msra.mxu0 %v3264
        %4332 = vmatprep.subr.bf16.mxu0 %v3267
        %4333 = vmatpush1.bf16.msra.mxu0 %v3266
        %4334 = vmatprep.subr.bf16.mxu0 %v3269
        %4335 = vmatpush1.bf16.msra.mxu0 %v3268
        %4336 = vmatprep.subr.bf16.mxu0 %v3271
        %4337 = vmatpush1.bf16.msra.mxu0 %v3270
        %4338 = vmatprep.subr.bf16.mxu0 %v3273
        %4339 = vmatpush1.bf16.msra.mxu0 %v3272
        %4340 = vmatprep.subr.bf16.mxu0 %v3275
        %4341 = vmatpush1.bf16.msra.mxu0 %v3274
        %4342 = vmatprep.subr.bf16.mxu0 %v3277
        %4343 = vmatpush1.bf16.msra.mxu0 %v3276
        %4344 = vmatprep.subr.bf16.mxu0 %v3279
        %4345 = vmatpush1.bf16.msra.mxu0 %v3278
        %4346 = vmatprep.mubr.bf16.mxu0 %v1525
        %4347 = vmatmul.mubr.bf16.gmra.mrb[0].mxu0 %v1524
        %v4348 = vpop.f32.mrb[0].mxu0
        %v4349 = vadd.f32 %v4296, %v4348
        %v4350 = vpop.f32.mrb[0].mxu0
        %v4351 = vadd.f32 %v4298, %v4350
        %v4352 = vpop.f32.mrb[0].mxu0
        %v4353 = vadd.f32 %v4300, %v4352
        %v4354 = vpop.f32.mrb[0].mxu0
        %v4355 = vadd.f32 %v4302, %v4354
        %4356 = vmatprep.mubr.bf16.mxu0 %v1557
        %4357 = vmatmul.mubr.bf16.gmra.mrb[0].mxu0 %v1556
        %v4358 = vpop.f32.mrb[0].mxu0
        %v4359 = vadd.f32 %v4306, %v4358
        %v4360 = vpop.f32.mrb[0].mxu0
        %v4361 = vadd.f32 %v4308, %v4360
        %v4362 = vpop.f32.mrb[0].mxu0
        %v4363 = vadd.f32 %v4310, %v4362
        %v4364 = vpop.f32.mrb[0].mxu0
        %v4365 = vadd.f32 %v4312, %v4364
        %4366 = vdwg.mxu0
        %4367 = vmatprep.subr.bf16.mxu0 %v3281
        %4368 = vmatpush1.bf16.msra.mxu0 %v3280
        %4369 = vmatprep.subr.bf16.mxu0 %v3283
        %4370 = vmatpush1.bf16.msra.mxu0 %v3282
        %4371 = vmatprep.subr.bf16.mxu0 %v3285
        %4372 = vmatpush1.bf16.msra.mxu0 %v3284
        %4373 = vmatprep.subr.bf16.mxu0 %v3287
        %4374 = vmatpush1.bf16.msra.mxu0 %v3286
        %4375 = vmatprep.subr.bf16.mxu0 %v3289
        %4376 = vmatpush1.bf16.msra.mxu0 %v3288
        %4377 = vmatprep.subr.bf16.mxu0 %v3291
        %4378 = vmatpush1.bf16.msra.mxu0 %v3290
        %4379 = vmatprep.subr.bf16.mxu0 %v3293
        %4380 = vmatpush1.bf16.msra.mxu0 %v3292
        %4381 = vmatprep.subr.bf16.mxu0 %v3295
        %4382 = vmatpush1.bf16.msra.mxu0 %v3294
        %4383 = vmatprep.subr.bf16.mxu0 %v3297
        %4384 = vmatpush1.bf16.msra.mxu0 %v3296
        %4385 = vmatprep.subr.bf16.mxu0 %v3299
        %4386 = vmatpush1.bf16.msra.mxu0 %v3298
        %4387 = vmatprep.subr.bf16.mxu0 %v3301
        %4388 = vmatpush1.bf16.msra.mxu0 %v3300
        %4389 = vmatprep.subr.bf16.mxu0 %v3303
        %4390 = vmatpush1.bf16.msra.mxu0 %v3302
        %4391 = vmatprep.subr.bf16.mxu0 %v3305
        %4392 = vmatpush1.bf16.msra.mxu0 %v3304
        %4393 = vmatprep.subr.bf16.mxu0 %v3307
        %4394 = vmatpush1.bf16.msra.mxu0 %v3306
        %4395 = vmatprep.subr.bf16.mxu0 %v3309
        %4396 = vmatpush1.bf16.msra.mxu0 %v3308
        %4397 = vmatprep.subr.bf16.mxu0 %v3311
        %4398 = vmatpush1.bf16.msra.mxu0 %v3310
        %4399 = vmatprep.mubr.bf16.mxu0 %v1527
        %4400 = vmatmul.mubr.bf16.gmra.mrb[0].mxu0 %v1526
        %v4401 = vpop.f32.mrb[0].mxu0
        %v4402 = vadd.f32 %v4349, %v4401
        %v4403 = vpop.f32.mrb[0].mxu0
        %v4404 = vadd.f32 %v4351, %v4403
        %v4405 = vpop.f32.mrb[0].mxu0
        %v4406 = vadd.f32 %v4353, %v4405
        %v4407 = vpop.f32.mrb[0].mxu0
        %v4408 = vadd.f32 %v4355, %v4407
        %4409 = vmatprep.mubr.bf16.mxu0 %v1559
        %4410 = vmatmul.mubr.bf16.gmra.mrb[0].mxu0 %v1558
        %v4411 = vpop.f32.mrb[0].mxu0
        %v4412 = vadd.f32 %v4359, %v4411
        %v4413 = vpop.f32.mrb[0].mxu0
        %v4414 = vadd.f32 %v4361, %v4413
        %v4415 = vpop.f32.mrb[0].mxu0
        %v4416 = vadd.f32 %v4363, %v4415
        %v4417 = vpop.f32.mrb[0].mxu0
        %v4418 = vadd.f32 %v4365, %v4417
        %4419 = vdwg.mxu0
        %4420 = vmatprep.subr.bf16.mxu0 %v3313
        %4421 = vmatpush1.bf16.msra.mxu0 %v3312
        %4422 = vmatprep.subr.bf16.mxu0 %v3315
        %4423 = vmatpush1.bf16.msra.mxu0 %v3314
        %4424 = vmatprep.subr.bf16.mxu0 %v3317
        %4425 = vmatpush1.bf16.msra.mxu0 %v3316
        %4426 = vmatprep.subr.bf16.mxu0 %v3319
        %4427 = vmatpush1.bf16.msra.mxu0 %v3318
        %4428 = vmatprep.subr.bf16.mxu0 %v3321
        %4429 = vmatpush1.bf16.msra.mxu0 %v3320
        %4430 = vmatprep.subr.bf16.mxu0 %v3323
        %4431 = vmatpush1.bf16.msra.mxu0 %v3322
        %4432 = vmatprep.subr.bf16.mxu0 %v3325
        %4433 = vmatpush1.bf16.msra.mxu0 %v3324
        %4434 = vmatprep.subr.bf16.mxu0 %v3327
        %4435 = vmatpush1.bf16.msra.mxu0 %v3326
        %4436 = vmatprep.subr.bf16.mxu0 %v3329
        %4437 = vmatpush1.bf16.msra.mxu0 %v3328
        %4438 = vmatprep.subr.bf16.mxu0 %v3331
        %4439 = vmatpush1.bf16.msra.mxu0 %v3330
        %4440 = vmatprep.subr.bf16.mxu0 %v3333
        %4441 = vmatpush1.bf16.msra.mxu0 %v3332
        %4442 = vmatprep.subr.bf16.mxu0 %v3335
        %4443 = vmatpush1.bf16.msra.mxu0 %v3334
        %4444 = vmatprep.subr.bf16.mxu0 %v3337
        %4445 = vmatpush1.bf16.msra.mxu0 %v3336
        %4446 = vmatprep.subr.bf16.mxu0 %v3339
        %4447 = vmatpush1.bf16.msra.mxu0 %v3338
        %4448 = vmatprep.subr.bf16.mxu0 %v3341
        %4449 = vmatpush1.bf16.msra.mxu0 %v3340
        %4450 = vmatprep.subr.bf16.mxu0 %v3343
        %4451 = vmatpush1.bf16.msra.mxu0 %v3342
        %4452 = vmatprep.mubr.bf16.mxu0 %v1529
        %4453 = vmatmul.mubr.bf16.gmra.mrb[0].mxu0 %v1528
        %v4454 = vpop.f32.mrb[0].mxu0
        %v4455 = vadd.f32 %v4402, %v4454
        %v4456 = vpop.f32.mrb[0].mxu0
        %v4457 = vadd.f32 %v4404, %v4456
        %v4458 = vpop.f32.mrb[0].mxu0
        %v4459 = vadd.f32 %v4406, %v4458
        %v4460 = vpop.f32.mrb[0].mxu0
        %v4461 = vadd.f32 %v4408, %v4460
        %4462 = vmatprep.mubr.bf16.mxu0 %v1561
        %4463 = vmatmul.mubr.bf16.gmra.mrb[0].mxu0 %v1560
        %v4464 = vpop.f32.mrb[0].mxu0
        %v4465 = vadd.f32 %v4412, %v4464
        %v4466 = vpop.f32.mrb[0].mxu0
        %v4467 = vadd.f32 %v4414, %v4466
        %v4468 = vpop.f32.mrb[0].mxu0
        %v4469 = vadd.f32 %v4416, %v4468
        %v4470 = vpop.f32.mrb[0].mxu0
        %v4471 = vadd.f32 %v4418, %v4470
        %4472 = vdwg.mxu0
        %4473 = vmatprep.subr.bf16.mxu0 %v3345
        %4474 = vmatpush1.bf16.msra.mxu0 %v3344
        %4475 = vmatprep.subr.bf16.mxu0 %v3347
        %4476 = vmatpush1.bf16.msra.mxu0 %v3346
        %4477 = vmatprep.subr.bf16.mxu0 %v3349
        %4478 = vmatpush1.bf16.msra.mxu0 %v3348
        %4479 = vmatprep.subr.bf16.mxu0 %v3351
        %4480 = vmatpush1.bf16.msra.mxu0 %v3350
        %4481 = vmatprep.subr.bf16.mxu0 %v3353
        %4482 = vmatpush1.bf16.msra.mxu0 %v3352
        %4483 = vmatprep.subr.bf16.mxu0 %v3355
        %4484 = vmatpush1.bf16.msra.mxu0 %v3354
        %4485 = vmatprep.subr.bf16.mxu0 %v3357
        %4486 = vmatpush1.bf16.msra.mxu0 %v3356
        %4487 = vmatprep.subr.bf16.mxu0 %v3359
        %4488 = vmatpush1.bf16.msra.mxu0 %v3358
        %4489 = vmatprep.subr.bf16.mxu0 %v3361
        %4490 = vmatpush1.bf16.msra.mxu0 %v3360
        %4491 = vmatprep.subr.bf16.mxu0 %v3363
        %4492 = vmatpush1.bf16.msra.mxu0 %v3362
        %4493 = vmatprep.subr.bf16.mxu0 %v3365
        %4494 = vmatpush1.bf16.msra.mxu0 %v3364
        %4495 = vmatprep.subr.bf16.mxu0 %v3367
        %4496 = vmatpush1.bf16.msra.mxu0 %v3366
        %4497 = vmatprep.subr.bf16.mxu0 %v3369
        %4498 = vmatpush1.bf16.msra.mxu0 %v3368
        %4499 = vmatprep.subr.bf16.mxu0 %v3371
        %4500 = vmatpush1.bf16.msra.mxu0 %v3370
        %4501 = vmatprep.subr.bf16.mxu0 %v3373
        %4502 = vmatpush1.bf16.msra.mxu0 %v3372
        %4503 = vmatprep.subr.bf16.mxu0 %v3375
        %4504 = vmatpush1.bf16.msra.mxu0 %v3374
        %4505 = vmatprep.mubr.bf16.mxu0 %v1531
        %4506 = vmatmul.mubr.bf16.gmra.mrb[0].mxu0 %v1530
        %v4507 = vpop.f32.mrb[0].mxu0
        %v4508 = vadd.f32 %v4455, %v4507
        %v4509 = vpop.f32.mrb[0].mxu0
        %v4510 = vadd.f32 %v4457, %v4509
        %v4511 = vpop.f32.mrb[0].mxu0
        %v4512 = vadd.f32 %v4459, %v4511
        %v4513 = vpop.f32.mrb[0].mxu0
        %v4514 = vadd.f32 %v4461, %v4513
        %4515 = vmatprep.mubr.bf16.mxu0 %v1563
        %4516 = vmatmul.mubr.bf16.gmra.mrb[0].mxu0 %v1562
        %v4517 = vpop.f32.mrb[0].mxu0
        %v4518 = vadd.f32 %v4465, %v4517
        %v4519 = vpop.f32.mrb[0].mxu0
        %v4520 = vadd.f32 %v4467, %v4519
        %v4521 = vpop.f32.mrb[0].mxu0
        %v4522 = vadd.f32 %v4469, %v4521
        %v4523 = vpop.f32.mrb[0].mxu0
        %v4524 = vadd.f32 %v4471, %v4523
        %4525 = vdwg.mxu0
        %4526 = vmatprep.subr.bf16.mxu0 %v3377
        %4527 = vmatpush1.bf16.msra.mxu0 %v3376
        %4528 = vmatprep.subr.bf16.mxu0 %v3379
        %4529 = vmatpush1.bf16.msra.mxu0 %v3378
        %4530 = vmatprep.subr.bf16.mxu0 %v3381
        %4531 = vmatpush1.bf16.msra.mxu0 %v3380
        %4532 = vmatprep.subr.bf16.mxu0 %v3383
        %4533 = vmatpush1.bf16.msra.mxu0 %v3382
        %4534 = vmatprep.subr.bf16.mxu0 %v3385
        %4535 = vmatpush1.bf16.msra.mxu0 %v3384
        %4536 = vmatprep.subr.bf16.mxu0 %v3387
        %4537 = vmatpush1.bf16.msra.mxu0 %v3386
        %4538 = vmatprep.subr.bf16.mxu0 %v3389
        %4539 = vmatpush1.bf16.msra.mxu0 %v3388
        %4540 = vmatprep.subr.bf16.mxu0 %v3391
        %4541 = vmatpush1.bf16.msra.mxu0 %v3390
        %4542 = vmatprep.subr.bf16.mxu0 %v3393
        %4543 = vmatpush1.bf16.msra.mxu0 %v3392
        %4544 = vmatprep.subr.bf16.mxu0 %v3395
        %4545 = vmatpush1.bf16.msra.mxu0 %v3394
        %4546 = vmatprep.subr.bf16.mxu0 %v3397
        %4547 = vmatpush1.bf16.msra.mxu0 %v3396
        %4548 = vmatprep.subr.bf16.mxu0 %v3399
        %4549 = vmatpush1.bf16.msra.mxu0 %v3398
        %4550 = vmatprep.subr.bf16.mxu0 %v3401
        %4551 = vmatpush1.bf16.msra.mxu0 %v3400
        %4552 = vmatprep.subr.bf16.mxu0 %v3403
        %4553 = vmatpush1.bf16.msra.mxu0 %v3402
        %4554 = vmatprep.subr.bf16.mxu0 %v3405
        %4555 = vmatpush1.bf16.msra.mxu0 %v3404
        %4556 = vmatprep.subr.bf16.mxu0 %v3407
        %4557 = vmatpush1.bf16.msra.mxu0 %v3406
        %4558 = vmatprep.mubr.bf16.mxu0 %v1533
        %4559 = vmatmul.mubr.bf16.gmra.mrb[0].mxu0 %v1532
        %v4560 = vpop.f32.mrb[0].mxu0
        %v4561 = vadd.f32 %v4508, %v4560
        %v4562 = vpop.f32.mrb[0].mxu0
        %v4563 = vadd.f32 %v4510, %v4562
        %v4564 = vpop.f32.mrb[0].mxu0
        %v4565 = vadd.f32 %v4512, %v4564
        %v4566 = vpop.f32.mrb[0].mxu0
        %v4567 = vadd.f32 %v4514, %v4566
        %4568 = vmatprep.mubr.bf16.mxu0 %v1565
        %4569 = vmatmul.mubr.bf16.gmra.mrb[0].mxu0 %v1564
        %v4570 = vpop.f32.mrb[0].mxu0
        %v4571 = vadd.f32 %v4518, %v4570
        %v4572 = vpop.f32.mrb[0].mxu0
        %v4573 = vadd.f32 %v4520, %v4572
        %v4574 = vpop.f32.mrb[0].mxu0
        %v4575 = vadd.f32 %v4522, %v4574
        %v4576 = vpop.f32.mrb[0].mxu0
        %v4577 = vadd.f32 %v4524, %v4576
        %4578 = vdwg.mxu0
        %4579 = vmatprep.subr.bf16.mxu0 %v3409
        %4580 = vmatpush1.bf16.msra.mxu0 %v3408
        %4581 = vmatprep.subr.bf16.mxu0 %v3411
        %4582 = vmatpush1.bf16.msra.mxu0 %v3410
        %4583 = vmatprep.subr.bf16.mxu0 %v3413
        %4584 = vmatpush1.bf16.msra.mxu0 %v3412
        %4585 = vmatprep.subr.bf16.mxu0 %v3415
        %4586 = vmatpush1.bf16.msra.mxu0 %v3414
        %4587 = vmatprep.subr.bf16.mxu0 %v3417
        %4588 = vmatpush1.bf16.msra.mxu0 %v3416
        %4589 = vmatprep.subr.bf16.mxu0 %v3419
        %4590 = vmatpush1.bf16.msra.mxu0 %v3418
        %4591 = vmatprep.subr.bf16.mxu0 %v3421
        %4592 = vmatpush1.bf16.msra.mxu0 %v3420
        %4593 = vmatprep.subr.bf16.mxu0 %v3423
        %4594 = vmatpush1.bf16.msra.mxu0 %v3422
        %4595 = vmatprep.subr.bf16.mxu0 %v3425
        %4596 = vmatpush1.bf16.msra.mxu0 %v3424
        %4597 = vmatprep.subr.bf16.mxu0 %v3427
        %4598 = vmatpush1.bf16.msra.mxu0 %v3426
        %4599 = vmatprep.subr.bf16.mxu0 %v3429
        %4600 = vmatpush1.bf16.msra.mxu0 %v3428
        %4601 = vmatprep.subr.bf16.mxu0 %v3431
        %4602 = vmatpush1.bf16.msra.mxu0 %v3430
        %4603 = vmatprep.subr.bf16.mxu0 %v3433
        %4604 = vmatpush1.bf16.msra.mxu0 %v3432
        %4605 = vmatprep.subr.bf16.mxu0 %v3435
        %4606 = vmatpush1.bf16.msra.mxu0 %v3434
        %4607 = vmatprep.subr.bf16.mxu0 %v3437
        %4608 = vmatpush1.bf16.msra.mxu0 %v3436
        %4609 = vmatprep.subr.bf16.mxu0 %v3439
        %4610 = vmatpush1.bf16.msra.mxu0 %v3438
        %4611 = vmatprep.mubr.bf16.mxu0 %v1535
        %4612 = vmatmul.mubr.bf16.gmra.mrb[0].mxu0 %v1534
        %v4613 = vpop.f32.mrb[0].mxu0
        %v4614 = vadd.f32 %v4561, %v4613
        %v4615 = vpop.f32.mrb[0].mxu0
        %v4616 = vadd.f32 %v4563, %v4615
        %v4617 = vpop.f32.mrb[0].mxu0
        %v4618 = vadd.f32 %v4565, %v4617
        %v4619 = vpop.f32.mrb[0].mxu0
        %v4620 = vadd.f32 %v4567, %v4619
        %4621 = vmatprep.mubr.bf16.mxu0 %v1567
        %4622 = vmatmul.mubr.bf16.gmra.mrb[0].mxu0 %v1566
        %v4623 = vpop.f32.mrb[0].mxu0
        %v4624 = vadd.f32 %v4571, %v4623
        %v4625 = vpop.f32.mrb[0].mxu0
        %v4626 = vadd.f32 %v4573, %v4625
        %v4627 = vpop.f32.mrb[0].mxu0
        %v4628 = vadd.f32 %v4575, %v4627
        %v4629 = vpop.f32.mrb[0].mxu0
        %v4630 = vadd.f32 %v4577, %v4629
        %4631 = vdwg.mxu0
        %4632 = vmatprep.subr.bf16.mxu0 %v3441
        %4633 = vmatpush1.bf16.msra.mxu0 %v3440
        %4634 = vmatprep.subr.bf16.mxu0 %v3443
        %4635 = vmatpush1.bf16.msra.mxu0 %v3442
        %4636 = vmatprep.subr.bf16.mxu0 %v3445
        %4637 = vmatpush1.bf16.msra.mxu0 %v3444
        %4638 = vmatprep.subr.bf16.mxu0 %v3447
        %4639 = vmatpush1.bf16.msra.mxu0 %v3446
        %4640 = vmatprep.subr.bf16.mxu0 %v3449
        %4641 = vmatpush1.bf16.msra.mxu0 %v3448
        %4642 = vmatprep.subr.bf16.mxu0 %v3451
        %4643 = vmatpush1.bf16.msra.mxu0 %v3450
        %4644 = vmatprep.subr.bf16.mxu0 %v3453
        %4645 = vmatpush1.bf16.msra.mxu0 %v3452
        %4646 = vmatprep.subr.bf16.mxu0 %v3455
        %4647 = vmatpush1.bf16.msra.mxu0 %v3454
        %4648 = vmatprep.subr.bf16.mxu0 %v3457
        %4649 = vmatpush1.bf16.msra.mxu0 %v3456
        %4650 = vmatprep.subr.bf16.mxu0 %v3459
        %4651 = vmatpush1.bf16.msra.mxu0 %v3458
        %4652 = vmatprep.subr.bf16.mxu0 %v3461
        %4653 = vmatpush1.bf16.msra.mxu0 %v3460
        %4654 = vmatprep.subr.bf16.mxu0 %v3463
        %4655 = vmatpush1.bf16.msra.mxu0 %v3462
        %4656 = vmatprep.subr.bf16.mxu0 %v3465
        %4657 = vmatpush1.bf16.msra.mxu0 %v3464
        %4658 = vmatprep.subr.bf16.mxu0 %v3467
        %4659 = vmatpush1.bf16.msra.mxu0 %v3466
        %4660 = vmatprep.subr.bf16.mxu0 %v3469
        %4661 = vmatpush1.bf16.msra.mxu0 %v3468
        %4662 = vmatprep.subr.bf16.mxu0 %v3471
        %4663 = vmatpush1.bf16.msra.mxu0 %v3470
        %4664 = vmatprep.mubr.bf16.mxu0 %v1537
        %4665 = vmatmul.mubr.bf16.gmra.mrb[0].mxu0 %v1536
        %v4666 = vpop.f32.mrb[0].mxu0
        %v4667 = vadd.f32 %v4614, %v4666
        %v4668 = vpop.f32.mrb[0].mxu0
        %v4669 = vadd.f32 %v4616, %v4668
        %v4670 = vpop.f32.mrb[0].mxu0
        %v4671 = vadd.f32 %v4618, %v4670
        %v4672 = vpop.f32.mrb[0].mxu0
        %v4673 = vadd.f32 %v4620, %v4672
        %4674 = vmatprep.mubr.bf16.mxu0 %v1569
        %4675 = vmatmul.mubr.bf16.gmra.mrb[0].mxu0 %v1568
        %v4676 = vpop.f32.mrb[0].mxu0
        %v4677 = vadd.f32 %v4624, %v4676
        %v4678 = vpop.f32.mrb[0].mxu0
        %v4679 = vadd.f32 %v4626, %v4678
        %v4680 = vpop.f32.mrb[0].mxu0
        %v4681 = vadd.f32 %v4628, %v4680
        %v4682 = vpop.f32.mrb[0].mxu0
        %v4683 = vadd.f32 %v4630, %v4682
        %4684 = vdwg.mxu0
        %4685 = vmatprep.subr.bf16.mxu0 %v3473
        %4686 = vmatpush1.bf16.msra.mxu0 %v3472
        %4687 = vmatprep.subr.bf16.mxu0 %v3475
        %4688 = vmatpush1.bf16.msra.mxu0 %v3474
        %4689 = vmatprep.subr.bf16.mxu0 %v3477
        %4690 = vmatpush1.bf16.msra.mxu0 %v3476
        %4691 = vmatprep.subr.bf16.mxu0 %v3479
        %4692 = vmatpush1.bf16.msra.mxu0 %v3478
        %4693 = vmatprep.subr.bf16.mxu0 %v3481
        %4694 = vmatpush1.bf16.msra.mxu0 %v3480
        %4695 = vmatprep.subr.bf16.mxu0 %v3483
        %4696 = vmatpush1.bf16.msra.mxu0 %v3482
        %4697 = vmatprep.subr.bf16.mxu0 %v3485
        %4698 = vmatpush1.bf16.msra.mxu0 %v3484
        %4699 = vmatprep.subr.bf16.mxu0 %v3487
        %4700 = vmatpush1.bf16.msra.mxu0 %v3486
        %4701 = vmatprep.subr.bf16.mxu0 %v3489
        %4702 = vmatpush1.bf16.msra.mxu0 %v3488
        %4703 = vmatprep.subr.bf16.mxu0 %v3491
        %4704 = vmatpush1.bf16.msra.mxu0 %v3490
        %4705 = vmatprep.subr.bf16.mxu0 %v3493
        %4706 = vmatpush1.bf16.msra.mxu0 %v3492
        %4707 = vmatprep.subr.bf16.mxu0 %v3495
        %4708 = vmatpush1.bf16.msra.mxu0 %v3494
        %4709 = vmatprep.subr.bf16.mxu0 %v3497
        %4710 = vmatpush1.bf16.msra.mxu0 %v3496
        %4711 = vmatprep.subr.bf16.mxu0 %v3499
        %4712 = vmatpush1.bf16.msra.mxu0 %v3498
        %4713 = vmatprep.subr.bf16.mxu0 %v3501
        %4714 = vmatpush1.bf16.msra.mxu0 %v3500
        %4715 = vmatprep.subr.bf16.mxu0 %v3503
        %4716 = vmatpush1.bf16.msra.mxu0 %v3502
        %4717 = vmatprep.mubr.bf16.mxu0 %v1539
        %4718 = vmatmul.mubr.bf16.gmra.mrb[0].mxu0 %v1538
        %v4719 = vpop.f32.mrb[0].mxu0
        %v4720 = vadd.f32 %v4667, %v4719
        %v4721 = vpop.f32.mrb[0].mxu0
        %v4722 = vadd.f32 %v4669, %v4721
        %v4723 = vpop.f32.mrb[0].mxu0
        %v4724 = vadd.f32 %v4671, %v4723
        %v4725 = vpop.f32.mrb[0].mxu0
        %v4726 = vadd.f32 %v4673, %v4725
        %4727 = vmatprep.mubr.bf16.mxu0 %v1571
        %4728 = vmatmul.mubr.bf16.gmra.mrb[0].mxu0 %v1570
        %v4729 = vpop.f32.mrb[0].mxu0
        %v4730 = vadd.f32 %v4677, %v4729
        %v4731 = vpop.f32.mrb[0].mxu0
        %v4732 = vadd.f32 %v4679, %v4731
        %v4733 = vpop.f32.mrb[0].mxu0
        %v4734 = vadd.f32 %v4681, %v4733
        %v4735 = vpop.f32.mrb[0].mxu0
        %v4736 = vadd.f32 %v4683, %v4735
        %4737 = vdwg.mxu0
        %4738 = vmatprep.subr.bf16.mxu0 %v3505
        %4739 = vmatpush1.bf16.msra.mxu0 %v3504
        %4740 = vmatprep.subr.bf16.mxu0 %v3507
        %4741 = vmatpush1.bf16.msra.mxu0 %v3506
        %4742 = vmatprep.subr.bf16.mxu0 %v3509
        %4743 = vmatpush1.bf16.msra.mxu0 %v3508
        %4744 = vmatprep.subr.bf16.mxu0 %v3511
        %4745 = vmatpush1.bf16.msra.mxu0 %v3510
        %4746 = vmatprep.subr.bf16.mxu0 %v3513
        %4747 = vmatpush1.bf16.msra.mxu0 %v3512
        %4748 = vmatprep.subr.bf16.mxu0 %v3515
        %4749 = vmatpush1.bf16.msra.mxu0 %v3514
        %4750 = vmatprep.subr.bf16.mxu0 %v3517
        %4751 = vmatpush1.bf16.msra.mxu0 %v3516
        %4752 = vmatprep.subr.bf16.mxu0 %v3519
        %4753 = vmatpush1.bf16.msra.mxu0 %v3518
        %4754 = vmatprep.subr.bf16.mxu0 %v3521
        %4755 = vmatpush1.bf16.msra.mxu0 %v3520
        %4756 = vmatprep.subr.bf16.mxu0 %v3523
        %4757 = vmatpush1.bf16.msra.mxu0 %v3522
        %4758 = vmatprep.subr.bf16.mxu0 %v3525
        %4759 = vmatpush1.bf16.msra.mxu0 %v3524
        %4760 = vmatprep.subr.bf16.mxu0 %v3527
        %4761 = vmatpush1.bf16.msra.mxu0 %v3526
        %4762 = vmatprep.subr.bf16.mxu0 %v3529
        %4763 = vmatpush1.bf16.msra.mxu0 %v3528
        %4764 = vmatprep.subr.bf16.mxu0 %v3531
        %4765 = vmatpush1.bf16.msra.mxu0 %v3530
        %4766 = vmatprep.subr.bf16.mxu0 %v3533
        %4767 = vmatpush1.bf16.msra.mxu0 %v3532
        %4768 = vmatprep.subr.bf16.mxu0 %v3535
        %4769 = vmatpush1.bf16.msra.mxu0 %v3534
        %4770 = vmatprep.mubr.bf16.mxu0 %v1541
        %4771 = vmatmul.mubr.bf16.gmra.mrb[0].mxu0 %v1540
        %v4772 = vpop.f32.mrb[0].mxu0
        %v4773 = vadd.f32 %v4720, %v4772
        %v4774 = vpop.f32.mrb[0].mxu0
        %v4775 = vadd.f32 %v4722, %v4774
        %v4776 = vpop.f32.mrb[0].mxu0
        %v4777 = vadd.f32 %v4724, %v4776
        %v4778 = vpop.f32.mrb[0].mxu0
        %v4779 = vadd.f32 %v4726, %v4778
        %4780 = vmatprep.mubr.bf16.mxu0 %v1573
        %4781 = vmatmul.mubr.bf16.gmra.mrb[0].mxu0 %v1572
        %v4782 = vpop.f32.mrb[0].mxu0
        %v4783 = vadd.f32 %v4730, %v4782
        %v4784 = vpop.f32.mrb[0].mxu0
        %v4785 = vadd.f32 %v4732, %v4784
        %v4786 = vpop.f32.mrb[0].mxu0
        %v4787 = vadd.f32 %v4734, %v4786
        %v4788 = vpop.f32.mrb[0].mxu0
        %v4789 = vadd.f32 %v4736, %v4788
        %4790 = vdwg.mxu0
        %4791 = vmatprep.subr.bf16.mxu0 %v3537
        %4792 = vmatpush1.bf16.msra.mxu0 %v3536
        %4793 = vmatprep.subr.bf16.mxu0 %v3539
        %4794 = vmatpush1.bf16.msra.mxu0 %v3538
        %4795 = vmatprep.subr.bf16.mxu0 %v3541
        %4796 = vmatpush1.bf16.msra.mxu0 %v3540
        %4797 = vmatprep.subr.bf16.mxu0 %v3543
        %4798 = vmatpush1.bf16.msra.mxu0 %v3542
        %4799 = vmatprep.subr.bf16.mxu0 %v3545
        %4800 = vmatpush1.bf16.msra.mxu0 %v3544
        %4801 = vmatprep.subr.bf16.mxu0 %v3547
        %4802 = vmatpush1.bf16.msra.mxu0 %v3546
        %4803 = vmatprep.subr.bf16.mxu0 %v3549
        %4804 = vmatpush1.bf16.msra.mxu0 %v3548
        %4805 = vmatprep.subr.bf16.mxu0 %v3551
        %4806 = vmatpush1.bf16.msra.mxu0 %v3550
        %4807 = vmatprep.subr.bf16.mxu0 %v3553
        %4808 = vmatpush1.bf16.msra.mxu0 %v3552
        %4809 = vmatprep.subr.bf16.mxu0 %v3555
        %4810 = vmatpush1.bf16.msra.mxu0 %v3554
        %4811 = vmatprep.subr.bf16.mxu0 %v3557
        %4812 = vmatpush1.bf16.msra.mxu0 %v3556
        %4813 = vmatprep.subr.bf16.mxu0 %v3559
        %4814 = vmatpush1.bf16.msra.mxu0 %v3558
        %4815 = vmatprep.subr.bf16.mxu0 %v3561
        %4816 = vmatpush1.bf16.msra.mxu0 %v3560
        %4817 = vmatprep.subr.bf16.mxu0 %v3563
        %4818 = vmatpush1.bf16.msra.mxu0 %v3562
        %4819 = vmatprep.subr.bf16.mxu0 %v3565
        %4820 = vmatpush1.bf16.msra.mxu0 %v3564
        %4821 = vmatprep.subr.bf16.mxu0 %v3567
        %4822 = vmatpush1.bf16.msra.mxu0 %v3566
        %4823 = vmatprep.mubr.bf16.mxu0 %v1543
        %4824 = vmatmul.mubr.bf16.gmra.mrb[0].mxu0 %v1542
        %v4825 = vpop.f32.mrb[0].mxu0
        %v4826 = vadd.f32 %v4773, %v4825
        %v4827 = vpop.f32.mrb[0].mxu0
        %v4828 = vadd.f32 %v4775, %v4827
        %v4829 = vpop.f32.mrb[0].mxu0
        %v4830 = vadd.f32 %v4777, %v4829
        %v4831 = vpop.f32.mrb[0].mxu0
        %v4832 = vadd.f32 %v4779, %v4831
        %4833 = vmatprep.mubr.bf16.mxu0 %v1575
        %4834 = vmatmul.mubr.bf16.gmra.mrb[0].mxu0 %v1574
        %v4835 = vpop.f32.mrb[0].mxu0
        %v4836 = vadd.f32 %v4783, %v4835
        %v4837 = vpop.f32.mrb[0].mxu0
        %v4838 = vadd.f32 %v4785, %v4837
        %v4839 = vpop.f32.mrb[0].mxu0
        %v4840 = vadd.f32 %v4787, %v4839
        %v4841 = vpop.f32.mrb[0].mxu0
        %v4842 = vadd.f32 %v4789, %v4841
        %4843 = vdwg.mxu0
        %4844 = vmatprep.subr.bf16.mxu0 %v3569
        %4845 = vmatpush1.bf16.msra.mxu0 %v3568
        %4846 = vmatprep.subr.bf16.mxu0 %v3571
        %4847 = vmatpush1.bf16.msra.mxu0 %v3570
        %4848 = vmatprep.subr.bf16.mxu0 %v3573
        %4849 = vmatpush1.bf16.msra.mxu0 %v3572
        %4850 = vmatprep.subr.bf16.mxu0 %v3575
        %4851 = vmatpush1.bf16.msra.mxu0 %v3574
        %4852 = vmatprep.subr.bf16.mxu0 %v3577
        %4853 = vmatpush1.bf16.msra.mxu0 %v3576
        %4854 = vmatprep.subr.bf16.mxu0 %v3579
        %4855 = vmatpush1.bf16.msra.mxu0 %v3578
        %4856 = vmatprep.subr.bf16.mxu0 %v3581
        %4857 = vmatpush1.bf16.msra.mxu0 %v3580
        %4858 = vmatprep.subr.bf16.mxu0 %v3583
        %4859 = vmatpush1.bf16.msra.mxu0 %v3582
        %4860 = vmatprep.subr.bf16.mxu0 %v3585
        %4861 = vmatpush1.bf16.msra.mxu0 %v3584
        %4862 = vmatprep.subr.bf16.mxu0 %v3587
        %4863 = vmatpush1.bf16.msra.mxu0 %v3586
        %4864 = vmatprep.subr.bf16.mxu0 %v3589
        %4865 = vmatpush1.bf16.msra.mxu0 %v3588
        %4866 = vmatprep.subr.bf16.mxu0 %v3591
        %4867 = vmatpush1.bf16.msra.mxu0 %v3590
        %4868 = vmatprep.subr.bf16.mxu0 %v3593
        %4869 = vmatpush1.bf16.msra.mxu0 %v3592
        %4870 = vmatprep.subr.bf16.mxu0 %v3595
        %4871 = vmatpush1.bf16.msra.mxu0 %v3594
        %4872 = vmatprep.subr.bf16.mxu0 %v3597
        %4873 = vmatpush1.bf16.msra.mxu0 %v3596
        %4874 = vmatprep.subr.bf16.mxu0 %v3599
        %4875 = vmatpush1.bf16.msra.mxu0 %v3598
        %4876 = vmatprep.mubr.bf16.mxu0 %v1545
        %4877 = vmatmul.mubr.bf16.gmra.mrb[0].mxu0 %v1544
        %v4878 = vpop.f32.mrb[0].mxu0
        %v4879 = vadd.f32 %v4826, %v4878
        %v4880 = vpop.f32.mrb[0].mxu0
        %v4881 = vadd.f32 %v4828, %v4880
        %v4882 = vpop.f32.mrb[0].mxu0
        %v4883 = vadd.f32 %v4830, %v4882
        %v4884 = vpop.f32.mrb[0].mxu0
        %v4885 = vadd.f32 %v4832, %v4884
        %4886 = vmatprep.mubr.bf16.mxu0 %v1577
        %4887 = vmatmul.mubr.bf16.gmra.mrb[0].mxu0 %v1576
        %v4888 = vpop.f32.mrb[0].mxu0
        %v4889 = vadd.f32 %v4836, %v4888
        %v4890 = vpop.f32.mrb[0].mxu0
        %v4891 = vadd.f32 %v4838, %v4890
        %v4892 = vpop.f32.mrb[0].mxu0
        %v4893 = vadd.f32 %v4840, %v4892
        %v4894 = vpop.f32.mrb[0].mxu0
        %v4895 = vadd.f32 %v4842, %v4894
        %4896 = vdwg.mxu0
        %4897 = vmatprep.subr.bf16.mxu0 %v3601
        %4898 = vmatpush1.bf16.msra.mxu0 %v3600
        %4899 = vmatprep.subr.bf16.mxu0 %v3603
        %4900 = vmatpush1.bf16.msra.mxu0 %v3602
        %4901 = vmatprep.subr.bf16.mxu0 %v3605
        %4902 = vmatpush1.bf16.msra.mxu0 %v3604
        %4903 = vmatprep.subr.bf16.mxu0 %v3607
        %4904 = vmatpush1.bf16.msra.mxu0 %v3606
        %4905 = vmatprep.subr.bf16.mxu0 %v3609
        %4906 = vmatpush1.bf16.msra.mxu0 %v3608
        %4907 = vmatprep.subr.bf16.mxu0 %v3611
        %4908 = vmatpush1.bf16.msra.mxu0 %v3610
        %4909 = vmatprep.subr.bf16.mxu0 %v3613
        %4910 = vmatpush1.bf16.msra.mxu0 %v3612
        %4911 = vmatprep.subr.bf16.mxu0 %v3615
        %4912 = vmatpush1.bf16.msra.mxu0 %v3614
        %4913 = vmatprep.subr.bf16.mxu0 %v3617
        %4914 = vmatpush1.bf16.msra.mxu0 %v3616
        %4915 = vmatprep.subr.bf16.mxu0 %v3619
        %4916 = vmatpush1.bf16.msra.mxu0 %v3618
        %4917 = vmatprep.subr.bf16.mxu0 %v3621
        %4918 = vmatpush1.bf16.msra.mxu0 %v3620
        %4919 = vmatprep.subr.bf16.mxu0 %v3623
        %4920 = vmatpush1.bf16.msra.mxu0 %v3622
        %4921 = vmatprep.subr.bf16.mxu0 %v3625
        %4922 = vmatpush1.bf16.msra.mxu0 %v3624
        %4923 = vmatprep.subr.bf16.mxu0 %v3627
        %4924 = vmatpush1.bf16.msra.mxu0 %v3626
        %4925 = vmatprep.subr.bf16.mxu0 %v3629
        %4926 = vmatpush1.bf16.msra.mxu0 %v3628
        %4927 = vmatprep.subr.bf16.mxu0 %v3631
        %4928 = vmatpush1.bf16.msra.mxu0 %v3630
        %4929 = vmatprep.mubr.bf16.mxu0 %v1547
        %4930 = vmatmul.mubr.bf16.gmra.mrb[0].mxu0 %v1546
        %v4931 = vpop.f32.mrb[0].mxu0
        %v4932 = vadd.f32 %v4879, %v4931
        %v4933 = vpop.f32.mrb[0].mxu0
        %v4934 = vadd.f32 %v4881, %v4933
        %v4935 = vpop.f32.mrb[0].mxu0
        %v4936 = vadd.f32 %v4883, %v4935
        %v4937 = vpop.f32.mrb[0].mxu0
        %v4938 = vadd.f32 %v4885, %v4937
        %4939 = vmatprep.mubr.bf16.mxu0 %v1579
        %4940 = vmatmul.mubr.bf16.gmra.mrb[0].mxu0 %v1578
        %v4941 = vpop.f32.mrb[0].mxu0
        %v4942 = vadd.f32 %v4889, %v4941
        %v4943 = vpop.f32.mrb[0].mxu0
        %v4944 = vadd.f32 %v4891, %v4943
        %v4945 = vpop.f32.mrb[0].mxu0
        %v4946 = vadd.f32 %v4893, %v4945
        %v4947 = vpop.f32.mrb[0].mxu0
        %v4948 = vadd.f32 %v4895, %v4947
        %4949 = vdwg.mxu0
        %4950 = vmatprep.subr.bf16.mxu0 %v3633
        %4951 = vmatpush1.bf16.msra.mxu0 %v3632
        %4952 = vmatprep.subr.bf16.mxu0 %v3635
        %4953 = vmatpush1.bf16.msra.mxu0 %v3634
        %4954 = vmatprep.subr.bf16.mxu0 %v3637
        %4955 = vmatpush1.bf16.msra.mxu0 %v3636
        %4956 = vmatprep.subr.bf16.mxu0 %v3639
        %4957 = vmatpush1.bf16.msra.mxu0 %v3638
        %4958 = vmatprep.subr.bf16.mxu0 %v3641
        %4959 = vmatpush1.bf16.msra.mxu0 %v3640
        %4960 = vmatprep.subr.bf16.mxu0 %v3643
        %4961 = vmatpush1.bf16.msra.mxu0 %v3642
        %4962 = vmatprep.subr.bf16.mxu0 %v3645
        %4963 = vmatpush1.bf16.msra.mxu0 %v3644
        %4964 = vmatprep.subr.bf16.mxu0 %v3647
        %4965 = vmatpush1.bf16.msra.mxu0 %v3646
        %4966 = vmatprep.subr.bf16.mxu0 %v3649
        %4967 = vmatpush1.bf16.msra.mxu0 %v3648
        %4968 = vmatprep.subr.bf16.mxu0 %v3651
        %4969 = vmatpush1.bf16.msra.mxu0 %v3650
        %4970 = vmatprep.subr.bf16.mxu0 %v3653
        %4971 = vmatpush1.bf16.msra.mxu0 %v3652
        %4972 = vmatprep.subr.bf16.mxu0 %v3655
        %4973 = vmatpush1.bf16.msra.mxu0 %v3654
        %4974 = vmatprep.subr.bf16.mxu0 %v3657
        %4975 = vmatpush1.bf16.msra.mxu0 %v3656
        %4976 = vmatprep.subr.bf16.mxu0 %v3659
        %4977 = vmatpush1.bf16.msra.mxu0 %v3658
        %4978 = vmatprep.subr.bf16.mxu0 %v3661
        %4979 = vmatpush1.bf16.msra.mxu0 %v3660
        %4980 = vmatprep.subr.bf16.mxu0 %v3663
        %4981 = vmatpush1.bf16.msra.mxu0 %v3662
        %4982 = vmatprep.mubr.bf16.mxu0 %v1549
        %4983 = vmatmul.mubr.bf16.gmra.mrb[0].mxu0 %v1548
        %v4984 = vpop.f32.mrb[0].mxu0
        %v4985 = vadd.f32 %v4932, %v4984
        %v4986 = vpop.f32.mrb[0].mxu0
        %v4987 = vadd.f32 %v4934, %v4986
        %v4988 = vpop.f32.mrb[0].mxu0
        %v4989 = vadd.f32 %v4936, %v4988
        %v4990 = vpop.f32.mrb[0].mxu0
        %v4991 = vadd.f32 %v4938, %v4990
        %4992 = vmatprep.mubr.bf16.mxu0 %v1581
        %4993 = vmatmul.mubr.bf16.gmra.mrb[0].mxu0 %v1580
        %v4994 = vpop.f32.mrb[0].mxu0
        %v4995 = vadd.f32 %v4942, %v4994
        %v4996 = vpop.f32.mrb[0].mxu0
        %v4997 = vadd.f32 %v4944, %v4996
        %v4998 = vpop.f32.mrb[0].mxu0
        %v4999 = vadd.f32 %v4946, %v4998
        %v5000 = vpop.f32.mrb[0].mxu0
        %v5001 = vadd.f32 %v4948, %v5000
        %5002 = vdwg.mxu0
        %5003 = vmatprep.subr.bf16.mxu0 %v3665
        %5004 = vmatpush1.bf16.msra.mxu0 %v3664
        %5005 = vmatprep.subr.bf16.mxu0 %v3667
        %5006 = vmatpush1.bf16.msra.mxu0 %v3666
        %5007 = vmatprep.subr.bf16.mxu0 %v3669
        %5008 = vmatpush1.bf16.msra.mxu0 %v3668
        %5009 = vmatprep.subr.bf16.mxu0 %v3671
        %5010 = vmatpush1.bf16.msra.mxu0 %v3670
        %5011 = vmatprep.subr.bf16.mxu0 %v3673
        %5012 = vmatpush1.bf16.msra.mxu0 %v3672
        %5013 = vmatprep.subr.bf16.mxu0 %v3675
        %5014 = vmatpush1.bf16.msra.mxu0 %v3674
        %5015 = vmatprep.subr.bf16.mxu0 %v3677
        %5016 = vmatpush1.bf16.msra.mxu0 %v3676
        %5017 = vmatprep.subr.bf16.mxu0 %v3679
        %5018 = vmatpush1.bf16.msra.mxu0 %v3678
        %5019 = vmatprep.subr.bf16.mxu0 %v3681
        %5020 = vmatpush1.bf16.msra.mxu0 %v3680
        %5021 = vmatprep.subr.bf16.mxu0 %v3683
        %5022 = vmatpush1.bf16.msra.mxu0 %v3682
        %5023 = vmatprep.subr.bf16.mxu0 %v3685
        %5024 = vmatpush1.bf16.msra.mxu0 %v3684
        %5025 = vmatprep.subr.bf16.mxu0 %v3687
        %5026 = vmatpush1.bf16.msra.mxu0 %v3686
        %5027 = vmatprep.subr.bf16.mxu0 %v3689
        %5028 = vmatpush1.bf16.msra.mxu0 %v3688
        %5029 = vmatprep.subr.bf16.mxu0 %v3691
        %5030 = vmatpush1.bf16.msra.mxu0 %v3690
        %5031 = vmatprep.subr.bf16.mxu0 %v3693
        %5032 = vmatpush1.bf16.msra.mxu0 %v3692
        %5033 = vmatprep.subr.bf16.mxu0 %v3695
        %5034 = vmatpush1.bf16.msra.mxu0 %v3694
        %5035 = vmatprep.mubr.bf16.mxu0 %v1551
        %5036 = vmatmul.mubr.bf16.gmra.mrb[0].mxu0 %v1550
        %v5037 = vpop.f32.mrb[0].mxu0
        %v5038 = vadd.f32 %v4985, %v5037
        %v5039 = vpop.f32.mrb[0].mxu0
        %v5040 = vadd.f32 %v4987, %v5039
        %v5041 = vpop.f32.mrb[0].mxu0
        %v5042 = vadd.f32 %v4989, %v5041
        %v5043 = vpop.f32.mrb[0].mxu0
        %v5044 = vadd.f32 %v4991, %v5043
        %5045 = vmatprep.mubr.bf16.mxu0 %v1583
        %5046 = vmatmul.mubr.bf16.gmra.mrb[0].mxu0 %v1582
        %v5047 = vpop.f32.mrb[0].mxu0
        %v5048 = vadd.f32 %v4995, %v5047
        %v5049 = vpop.f32.mrb[0].mxu0
        %v5050 = vadd.f32 %v4997, %v5049
        %v5051 = vpop.f32.mrb[0].mxu0
        %v5052 = vadd.f32 %v4999, %v5051
        %v5053 = vpop.f32.mrb[0].mxu0
        %v5054 = vadd.f32 %v5001, %v5053
        %5055 = vdwg.mxu0
        %v5056 = vld [vmem:[%s4] sm:$0x3]
        %v5058 = vlaneseq
        %v5059 = vshrl.u32 %v5058, 7
        %v5060 = vsub.s32 0, %v5059
        %v5061 = vrot.slane %v5056, %v5060
        %v5062 = vlaneseq
        %v5063 = vshrl.u32 %v5062, 7
        %v5064 = vsub.s32 1, %v5063
        %v5065 = vrot.slane %v5056, %v5064
        %v5068 = vadd.f32 %v5038, %v5061
        %v5069 = vadd.f32 %v5040, %v5065
        %v5070 = vadd.f32 %v5042, %v5061
        %v5071 = vadd.f32 %v5044, %v5065
        %v5072 = vadd.f32 %v5048, %v5061
        %v5073 = vadd.f32 %v5050, %v5065
        %v5074 = vadd.f32 %v5052, %v5061
        %v5075 = vadd.f32 %v5054, %v5065
        %v5076 = vld [vmem:[%s5] sm:$0xff]
        %v5077 = vld [vmem:[%s5 + $0x8] sm:$0xff]
        %v5078 = vld [vmem:[%s5 + $0x10] sm:$0xff]
        %v5079 = vld [vmem:[%s5 + $0x18] sm:$0xff]
        %vm5080 = vcmask 261120
        %v5082 = vsel %vm5080, %v5076, 0
        %v5085 = vsel %vm5080, %v5077, 0
        %v5088 = vsel %vm5080, %v5078, 0
        %v5091 = vsel %vm5080, %v5079, 0
        %5093 = vmatprep.subr.mxu0 %v5069
        %5094 = vmatpush1.msra.mxu0 %v5068
        %5095 = vmatprep.subr.mxu0 %v5071
        %5096 = vmatpush1.msra.mxu0 %v5070
        %5097 = vmatprep.subr.mxu0 %v5073
        %5098 = vmatpush1.msra.mxu0 %v5072
        %5099 = vmatprep.subr.mxu0 %v5075
        %5100 = vmatpush1.msra.mxu0 %v5074
        %5101 = vmatprep.subr.mxu0 0.0
        %5102 = vmatpush1.msra.mxu0 0.0
        %5103 = vmatprep.subr.mxu0 0.0
        %5104 = vmatpush1.msra.mxu0 0.0
        %5105 = vmatprep.subr.mxu0 0.0
        %5106 = vmatpush1.msra.mxu0 0.0
        %5107 = vmatprep.subr.mxu0 0.0
        %5108 = vmatpush1.msra.mxu0 0.0
        %5109 = vmatprep.subr.mxu0 0.0
        %5110 = vmatpush1.msra.mxu0 0.0
        %5111 = vmatprep.subr.mxu0 0.0
        %5112 = vmatpush1.msra.mxu0 0.0
        %5113 = vmatprep.subr.mxu0 0.0
        %5114 = vmatpush1.msra.mxu0 0.0
        %5115 = vmatprep.subr.mxu0 0.0
        %5116 = vmatpush1.msra.mxu0 0.0
        %5117 = vmatprep.subr.mxu0 0.0
        %5118 = vmatpush1.msra.mxu0 0.0
        %5119 = vmatprep.subr.mxu0 0.0
        %5120 = vmatpush1.msra.mxu0 0.0
        %5121 = vmatprep.subr.mxu0 0.0
        %5122 = vmatpush1.msra.mxu0 0.0
        %5123 = vmatprep.subr.mxu0 0.0
        %5124 = vmatpush1.msra.mxu0 0.0
        %5125 = vmatprep.subr.mxu0 0.0
        %5126 = vmatpush1.msra.mxu0 0.0
        %5127 = vmatprep.subr.mxu0 0.0
        %5128 = vmatpush1.msra.mxu0 0.0
        %5129 = vmatprep.subr.mxu0 0.0
        %5130 = vmatpush1.msra.mxu0 0.0
        %5131 = vmatprep.subr.mxu0 0.0
        %5132 = vmatpush1.msra.mxu0 0.0
        %5133 = vmatprep.subr.mxu0 0.0
        %5134 = vmatpush1.msra.mxu0 0.0
        %5135 = vmatprep.subr.mxu0 0.0
        %5136 = vmatpush1.msra.mxu0 0.0
        %5137 = vmatprep.subr.mxu0 0.0
        %5138 = vmatpush1.msra.mxu0 0.0
        %5139 = vmatprep.subr.mxu0 0.0
        %5140 = vmatpush1.msra.mxu0 0.0
        %5141 = vmatprep.subr.mxu0 0.0
        %5142 = vmatpush1.msra.mxu0 0.0
        %5143 = vmatprep.subr.mxu0 0.0
        %5144 = vmatpush1.msra.mxu0 0.0
        %5145 = vmatprep.subr.mxu0 0.0
        %5146 = vmatpush1.msra.mxu0 0.0
        %5147 = vmatprep.subr.mxu0 0.0
        %5148 = vmatpush1.msra.mxu0 0.0
        %5149 = vmatprep.subr.mxu0 0.0
        %5150 = vmatpush1.msra.mxu0 0.0
        %5151 = vmatprep.subr.mxu0 0.0
        %5152 = vmatpush1.msra.mxu0 0.0
        %5153 = vmatprep.subr.mxu0 0.0
        %5154 = vmatpush1.msra.mxu0 0.0
        %5155 = vmatprep.subr.mxu0 0.0
        %5156 = vmatpush1.msra.mxu0 0.0
        %5157 = vmatprep.mubr.f32.mxu0 0.0
        %5158 = vmatmul.mubr.f32.gmra.mrb[0].mxu0 %v5082
        %v5159 = vpop.f32.mrb[0].mxu0
        %v5160 = vadd.f32 0.0, %v5159
        %v5161 = vpop.f32.mrb[0].mxu0
        %v5162 = vadd.f32 0.0, %v5161
        %5163 = vmatprep.mubr.f32.mxu0 0.0
        %5164 = vmatmul.mubr.f32.gmra.mrb[0].mxu0 %v5085
        %v5165 = vpop.f32.mrb[0].mxu0
        %v5166 = vadd.f32 0.0, %v5165
        %v5167 = vpop.f32.mrb[0].mxu0
        %v5168 = vadd.f32 0.0, %v5167
        %5169 = vmatprep.mubr.f32.mxu0 0.0
        %5170 = vmatmul.mubr.f32.gmra.mrb[0].mxu0 %v5088
        %v5171 = vpop.f32.mrb[0].mxu0
        %v5172 = vadd.f32 0.0, %v5171
        %v5173 = vpop.f32.mrb[0].mxu0
        %v5174 = vadd.f32 0.0, %v5173
        %5175 = vmatprep.mubr.f32.mxu0 0.0
        %5176 = vmatmul.mubr.f32.gmra.mrb[0].mxu0 %v5091
        %v5177 = vpop.f32.mrb[0].mxu0
        %v5178 = vadd.f32 0.0, %v5177
        %v5179 = vpop.f32.mrb[0].mxu0
        %v5180 = vadd.f32 0.0, %v5179
        %5181 = vdwg.mxu0
        %v5182 = vmax.f32 %v5160, 0.0
        %v5183 = vmax.f32 %v5162, 0.0
        %v5184 = vmax.f32 %v5166, 0.0
        %v5185 = vmax.f32 %v5168, 0.0
        %v5186 = vmax.f32 %v5172, 0.0
        %v5187 = vmax.f32 %v5174, 0.0
        %v5188 = vmax.f32 %v5178, 0.0
        %v5189 = vmax.f32 %v5180, 0.0
        %v5190 = vld [vmem:[%s6] sm:$0xff]
        %v5192 = vsel %vm5080, %v5190, 0
        %5194 = vmatprep.subr.mxu0 %v5183
        %5195 = vmatpush1.msra.mxu0 %v5182
        %5196 = vmatprep.subr.mxu0 %v5185
        %5197 = vmatpush1.msra.mxu0 %v5184
        %5198 = vmatprep.subr.mxu0 %v5187
        %5199 = vmatpush1.msra.mxu0 %v5186
        %5200 = vmatprep.subr.mxu0 %v5189
        %5201 = vmatpush1.msra.mxu0 %v5188
        %5202 = vmatprep.subr.mxu0 0.0
        %5203 = vmatpush1.msra.mxu0 0.0
        %5204 = vmatprep.subr.mxu0 0.0
        %5205 = vmatpush1.msra.mxu0 0.0
        %5206 = vmatprep.subr.mxu0 0.0
        %5207 = vmatpush1.msra.mxu0 0.0
        %5208 = vmatprep.subr.mxu0 0.0
        %5209 = vmatpush1.msra.mxu0 0.0
        %5210 = vmatprep.subr.mxu0 0.0
        %5211 = vmatpush1.msra.mxu0 0.0
        %5212 = vmatprep.subr.mxu0 0.0
        %5213 = vmatpush1.msra.mxu0 0.0
        %5214 = vmatprep.subr.mxu0 0.0
        %5215 = vmatpush1.msra.mxu0 0.0
        %5216 = vmatprep.subr.mxu0 0.0
        %5217 = vmatpush1.msra.mxu0 0.0
        %5218 = vmatprep.subr.mxu0 0.0
        %5219 = vmatpush1.msra.mxu0 0.0
        %5220 = vmatprep.subr.mxu0 0.0
        %5221 = vmatpush1.msra.mxu0 0.0
        %5222 = vmatprep.subr.mxu0 0.0
        %5223 = vmatpush1.msra.mxu0 0.0
        %5224 = vmatprep.subr.mxu0 0.0
        %5225 = vmatpush1.msra.mxu0 0.0
        %5226 = vmatprep.subr.mxu0 0.0
        %5227 = vmatpush1.msra.mxu0 0.0
        %5228 = vmatprep.subr.mxu0 0.0
        %5229 = vmatpush1.msra.mxu0 0.0
        %5230 = vmatprep.subr.mxu0 0.0
        %5231 = vmatpush1.msra.mxu0 0.0
        %5232 = vmatprep.subr.mxu0 0.0
        %5233 = vmatpush1.msra.mxu0 0.0
        %5234 = vmatprep.subr.mxu0 0.0
        %5235 = vmatpush1.msra.mxu0 0.0
        %5236 = vmatprep.subr.mxu0 0.0
        %5237 = vmatpush1.msra.mxu0 0.0
        %5238 = vmatprep.subr.mxu0 0.0
        %5239 = vmatpush1.msra.mxu0 0.0
        %5240 = vmatprep.subr.mxu0 0.0
        %5241 = vmatpush1.msra.mxu0 0.0
        %5242 = vmatprep.subr.mxu0 0.0
        %5243 = vmatpush1.msra.mxu0 0.0
        %5244 = vmatprep.subr.mxu0 0.0
        %5245 = vmatpush1.msra.mxu0 0.0
        %5246 = vmatprep.subr.mxu0 0.0
        %5247 = vmatpush1.msra.mxu0 0.0
        %5248 = vmatprep.subr.mxu0 0.0
        %5249 = vmatpush1.msra.mxu0 0.0
        %5250 = vmatprep.subr.mxu0 0.0
        %5251 = vmatpush1.msra.mxu0 0.0
        %5252 = vmatprep.subr.mxu0 0.0
        %5253 = vmatpush1.msra.mxu0 0.0
        %5254 = vmatprep.subr.mxu0 0.0
        %5255 = vmatpush1.msra.mxu0 0.0
        %5256 = vmatprep.subr.mxu0 0.0
        %5257 = vmatpush1.msra.mxu0 0.0
        %5258 = vmatprep.mubr.f32.mxu0 0.0
        %5259 = vmatmul.mubr.f32.gmra.mrb[0].mxu0 %v5192
        %v5260 = vpop.f32.mrb[0].mxu0
        %v5261 = vadd.f32 0.0, %v5260
        %v5262 = vpop.f32.mrb[0].mxu0
        %v5263 = vadd.f32 0.0, %v5262
        %5264 = vdwg.mxu0
        %v5265 = vpack.c.bf16 %v5261, %v5261
        %v5266 = vpack.c.bf16 %v5263, %v5263
        %v5267 = vld [vmem:[%s7] sm:$0xff]
        %v5268 = vld [vmem:[%s7 + $0x8] sm:$0xff]
        %v5269 = vld [vmem:[%s7 + $0x10] sm:$0xff]
        %v5270 = vld [vmem:[%s7 + $0x18] sm:$0xff]
        %v5271 = vld [vmem:[%s7 + $0x20] sm:$0xff]
        %v5272 = vld [vmem:[%s7 + $0x28] sm:$0xff]
        %v5273 = vld [vmem:[%s7 + $0x30] sm:$0xff]
        %v5274 = vld [vmem:[%s7 + $0x38] sm:$0xff]
        %v5275 = vld [vmem:[%s7 + $0x40] sm:$0xff]
        %v5276 = vld [vmem:[%s7 + $0x48] sm:$0xff]
        %v5277 = vld [vmem:[%s7 + $0x50] sm:$0xff]
        %v5278 = vld [vmem:[%s7 + $0x58] sm:$0xff]
        %v5279 = vld [vmem:[%s7 + $0x60] sm:$0xff]
        %v5280 = vld [vmem:[%s7 + $0x68] sm:$0xff]
        %v5281 = vld [vmem:[%s7 + $0x70] sm:$0xff]
        %v5282 = vld [vmem:[%s7 + $0x78] sm:$0xff]
        %v5283 = vld [vmem:[%s7 + $0x80] sm:$0xff]
        %v5284 = vld [vmem:[%s7 + $0x88] sm:$0xff]
        %v5285 = vld [vmem:[%s7 + $0x90] sm:$0xff]
        %v5286 = vld [vmem:[%s7 + $0x98] sm:$0xff]
        %v5287 = vld [vmem:[%s7 + $0xa0] sm:$0xff]
        %v5288 = vld [vmem:[%s7 + $0xa8] sm:$0xff]
        %v5289 = vld [vmem:[%s7 + $0xb0] sm:$0xff]
        %v5290 = vld [vmem:[%s7 + $0xb8] sm:$0xff]
        %v5291 = vld [vmem:[%s7 + $0xc0] sm:$0xff]
        %v5292 = vld [vmem:[%s7 + $0xc8] sm:$0xff]
        %v5293 = vld [vmem:[%s7 + $0xd0] sm:$0xff]
        %v5294 = vld [vmem:[%s7 + $0xd8] sm:$0xff]
        %v5295 = vld [vmem:[%s7 + $0xe0] sm:$0xff]
        %v5296 = vld [vmem:[%s7 + $0xe8] sm:$0xff]
        %v5297 = vld [vmem:[%s7 + $0xf0] sm:$0xff]
        %v5298 = vld [vmem:[%s7 + $0xf8] sm:$0xff]
        %v5299 = vld [vmem:[%s7 + $0x100] sm:$0xff]
        %v5300 = vld [vmem:[%s7 + $0x108] sm:$0xff]
        %v5301 = vld [vmem:[%s7 + $0x110] sm:$0xff]
        %v5302 = vld [vmem:[%s7 + $0x118] sm:$0xff]
        %v5303 = vld [vmem:[%s7 + $0x120] sm:$0xff]
        %v5304 = vld [vmem:[%s7 + $0x128] sm:$0xff]
        %v5305 = vld [vmem:[%s7 + $0x130] sm:$0xff]
        %v5306 = vld [vmem:[%s7 + $0x138] sm:$0xff]
        %v5307 = vld [vmem:[%s7 + $0x140] sm:$0xff]
        %v5308 = vld [vmem:[%s7 + $0x148] sm:$0xff]
        %v5309 = vld [vmem:[%s7 + $0x150] sm:$0xff]
        %v5310 = vld [vmem:[%s7 + $0x158] sm:$0xff]
        %v5311 = vld [vmem:[%s7 + $0x160] sm:$0xff]
        %v5312 = vld [vmem:[%s7 + $0x168] sm:$0xff]
        %v5313 = vld [vmem:[%s7 + $0x170] sm:$0xff]
        %v5314 = vld [vmem:[%s7 + $0x178] sm:$0xff]
        %v5315 = vld [vmem:[%s7 + $0x180] sm:$0xff]
        %v5316 = vld [vmem:[%s7 + $0x188] sm:$0xff]
        %v5317 = vld [vmem:[%s7 + $0x190] sm:$0xff]
        %v5318 = vld [vmem:[%s7 + $0x198] sm:$0xff]
        %v5319 = vld [vmem:[%s7 + $0x1a0] sm:$0xff]
        %v5320 = vld [vmem:[%s7 + $0x1a8] sm:$0xff]
        %v5321 = vld [vmem:[%s7 + $0x1b0] sm:$0xff]
        %v5322 = vld [vmem:[%s7 + $0x1b8] sm:$0xff]
        %v5323 = vld [vmem:[%s7 + $0x1c0] sm:$0xff]
        %v5324 = vld [vmem:[%s7 + $0x1c8] sm:$0xff]
        %v5325 = vld [vmem:[%s7 + $0x1d0] sm:$0xff]
        %v5326 = vld [vmem:[%s7 + $0x1d8] sm:$0xff]
        %v5327 = vld [vmem:[%s7 + $0x1e0] sm:$0xff]
        %v5328 = vld [vmem:[%s7 + $0x1e8] sm:$0xff]
        %v5329 = vld [vmem:[%s7 + $0x1f0] sm:$0xff]
        %v5330 = vld [vmem:[%s7 + $0x1f8] sm:$0xff]
        %v5331 = vld [vmem:[%s7 + $0x200] sm:$0xff]
        %v5332 = vld [vmem:[%s7 + $0x208] sm:$0xff]
        %v5333 = vld [vmem:[%s7 + $0x210] sm:$0xff]
        %v5334 = vld [vmem:[%s7 + $0x218] sm:$0xff]
        %v5335 = vld [vmem:[%s7 + $0x220] sm:$0xff]
        %v5336 = vld [vmem:[%s7 + $0x228] sm:$0xff]
        %v5337 = vld [vmem:[%s7 + $0x230] sm:$0xff]
        %v5338 = vld [vmem:[%s7 + $0x238] sm:$0xff]
        %v5339 = vld [vmem:[%s7 + $0x240] sm:$0xff]
        %v5340 = vld [vmem:[%s7 + $0x248] sm:$0xff]
        %v5341 = vld [vmem:[%s7 + $0x250] sm:$0xff]
        %v5342 = vld [vmem:[%s7 + $0x258] sm:$0xff]
        %v5343 = vld [vmem:[%s7 + $0x260] sm:$0xff]
        %v5344 = vld [vmem:[%s7 + $0x268] sm:$0xff]
        %v5345 = vld [vmem:[%s7 + $0x270] sm:$0xff]
        %v5346 = vld [vmem:[%s7 + $0x278] sm:$0xff]
        %v5347 = vld [vmem:[%s7 + $0x280] sm:$0xff]
        %v5348 = vld [vmem:[%s7 + $0x288] sm:$0xff]
        %v5349 = vld [vmem:[%s7 + $0x290] sm:$0xff]
        %v5350 = vld [vmem:[%s7 + $0x298] sm:$0xff]
        %v5351 = vld [vmem:[%s7 + $0x2a0] sm:$0xff]
        %v5352 = vld [vmem:[%s7 + $0x2a8] sm:$0xff]
        %v5353 = vld [vmem:[%s7 + $0x2b0] sm:$0xff]
        %v5354 = vld [vmem:[%s7 + $0x2b8] sm:$0xff]
        %v5355 = vld [vmem:[%s7 + $0x2c0] sm:$0xff]
        %v5356 = vld [vmem:[%s7 + $0x2c8] sm:$0xff]
        %v5357 = vld [vmem:[%s7 + $0x2d0] sm:$0xff]
        %v5358 = vld [vmem:[%s7 + $0x2d8] sm:$0xff]
        %v5359 = vld [vmem:[%s7 + $0x2e0] sm:$0xff]
        %v5360 = vld [vmem:[%s7 + $0x2e8] sm:$0xff]
        %v5361 = vld [vmem:[%s7 + $0x2f0] sm:$0xff]
        %v5362 = vld [vmem:[%s7 + $0x2f8] sm:$0xff]
        %v5363 = vld [vmem:[%s8] sm:$0x3f]
        %v5365 = vlaneseq
        %v5366 = vshrl.u32 %v5365, 7
        %v5367 = vsub.s32 0, %v5366
        %v5368 = vrot.slane %v5363, %v5367
        %v5369 = vlaneseq
        %v5370 = vshrl.u32 %v5369, 7
        %v5371 = vsub.s32 1, %v5370
        %v5372 = vrot.slane %v5363, %v5371
        %v5373 = vlaneseq
        %v5374 = vshrl.u32 %v5373, 7
        %v5375 = vsub.s32 2, %v5374
        %v5376 = vrot.slane %v5363, %v5375
        %v5377 = vlaneseq
        %v5378 = vshrl.u32 %v5377, 7
        %v5379 = vsub.s32 3, %v5378
        %v5380 = vrot.slane %v5363, %v5379
        %v5381 = vlaneseq
        %v5382 = vshrl.u32 %v5381, 7
        %v5383 = vsub.s32 4, %v5382
        %v5384 = vrot.slane %v5363, %v5383
        %v5385 = vlaneseq
        %v5386 = vshrl.u32 %v5385, 7
        %v5387 = vsub.s32 5, %v5386
        %v5388 = vrot.slane %v5363, %v5387
        %v5491 = vunpack.c.l.b16 %v5267
        %v5492 = vunpack.c.h.b16 %v5267
        %v5493 = vunpack.c.l.b16 %v5268
        %v5494 = vunpack.c.h.b16 %v5268
        %v5495 = vunpack.c.l.b16 %v5269
        %v5496 = vunpack.c.h.b16 %v5269
        %v5497 = vunpack.c.l.b16 %v5270
        %v5498 = vunpack.c.h.b16 %v5270
        %v5499 = vunpack.c.l.b16 %v5271
        %v5500 = vunpack.c.h.b16 %v5271
        %v5501 = vunpack.c.l.b16 %v5272
        %v5502 = vunpack.c.h.b16 %v5272
        %v5503 = vunpack.c.l.b16 %v5273
        %v5504 = vunpack.c.h.b16 %v5273
        %v5505 = vunpack.c.l.b16 %v5274
        %v5506 = vunpack.c.h.b16 %v5274
        %v5507 = vunpack.c.l.b16 %v5275
        %v5508 = vunpack.c.h.b16 %v5275
        %v5509 = vunpack.c.l.b16 %v5276
        %v5510 = vunpack.c.h.b16 %v5276
        %v5511 = vunpack.c.l.b16 %v5277
        %v5512 = vunpack.c.h.b16 %v5277
        %v5513 = vunpack.c.l.b16 %v5278
        %v5514 = vunpack.c.h.b16 %v5278
        %v5515 = vunpack.c.l.b16 %v5279
        %v5516 = vunpack.c.h.b16 %v5279
        %v5517 = vunpack.c.l.b16 %v5280
        %v5518 = vunpack.c.h.b16 %v5280
        %v5519 = vunpack.c.l.b16 %v5281
        %v5520 = vunpack.c.h.b16 %v5281
        %v5521 = vunpack.c.l.b16 %v5282
        %v5522 = vunpack.c.h.b16 %v5282
        %v5523 = vunpack.c.l.b16 %v5283
        %v5524 = vunpack.c.h.b16 %v5283
        %v5525 = vunpack.c.l.b16 %v5284
        %v5526 = vunpack.c.h.b16 %v5284
        %v5527 = vunpack.c.l.b16 %v5285
        %v5528 = vunpack.c.h.b16 %v5285
        %v5529 = vunpack.c.l.b16 %v5286
        %v5530 = vunpack.c.h.b16 %v5286
        %v5531 = vunpack.c.l.b16 %v5287
        %v5532 = vunpack.c.h.b16 %v5287
        %v5533 = vunpack.c.l.b16 %v5288
        %v5534 = vunpack.c.h.b16 %v5288
        %v5535 = vunpack.c.l.b16 %v5289
        %v5536 = vunpack.c.h.b16 %v5289
        %v5537 = vunpack.c.l.b16 %v5290
        %v5538 = vunpack.c.h.b16 %v5290
        %v5539 = vunpack.c.l.b16 %v5291
        %v5540 = vunpack.c.h.b16 %v5291
        %v5541 = vunpack.c.l.b16 %v5292
        %v5542 = vunpack.c.h.b16 %v5292
        %v5543 = vunpack.c.l.b16 %v5293
        %v5544 = vunpack.c.h.b16 %v5293
        %v5545 = vunpack.c.l.b16 %v5294
        %v5546 = vunpack.c.h.b16 %v5294
        %v5547 = vunpack.c.l.b16 %v5295
        %v5548 = vunpack.c.h.b16 %v5295
        %v5549 = vunpack.c.l.b16 %v5296
        %v5550 = vunpack.c.h.b16 %v5296
        %v5551 = vunpack.c.l.b16 %v5297
        %v5552 = vunpack.c.h.b16 %v5297
        %v5553 = vunpack.c.l.b16 %v5298
        %v5554 = vunpack.c.h.b16 %v5298
        %v5555 = vunpack.c.l.b16 %v5299
        %v5556 = vunpack.c.h.b16 %v5299
        %v5557 = vunpack.c.l.b16 %v5300
        %v5558 = vunpack.c.h.b16 %v5300
        %v5559 = vunpack.c.l.b16 %v5301
        %v5560 = vunpack.c.h.b16 %v5301
        %v5561 = vunpack.c.l.b16 %v5302
        %v5562 = vunpack.c.h.b16 %v5302
        %v5563 = vunpack.c.l.b16 %v5303
        %v5564 = vunpack.c.h.b16 %v5303
        %v5565 = vunpack.c.l.b16 %v5304
        %v5566 = vunpack.c.h.b16 %v5304
        %v5567 = vunpack.c.l.b16 %v5305
        %v5568 = vunpack.c.h.b16 %v5305
        %v5569 = vunpack.c.l.b16 %v5306
        %v5570 = vunpack.c.h.b16 %v5306
        %v5571 = vunpack.c.l.b16 %v5307
        %v5572 = vunpack.c.h.b16 %v5307
        %v5573 = vunpack.c.l.b16 %v5308
        %v5574 = vunpack.c.h.b16 %v5308
        %v5575 = vunpack.c.l.b16 %v5309
        %v5576 = vunpack.c.h.b16 %v5309
        %v5577 = vunpack.c.l.b16 %v5310
        %v5578 = vunpack.c.h.b16 %v5310
        %v5579 = vunpack.c.l.b16 %v5311
        %v5580 = vunpack.c.h.b16 %v5311
        %v5581 = vunpack.c.l.b16 %v5312
        %v5582 = vunpack.c.h.b16 %v5312
        %v5583 = vunpack.c.l.b16 %v5313
        %v5584 = vunpack.c.h.b16 %v5313
        %v5585 = vunpack.c.l.b16 %v5314
        %v5586 = vunpack.c.h.b16 %v5314
        %v5587 = vunpack.c.l.b16 %v5315
        %v5588 = vunpack.c.h.b16 %v5315
        %v5589 = vunpack.c.l.b16 %v5316
        %v5590 = vunpack.c.h.b16 %v5316
        %v5591 = vunpack.c.l.b16 %v5317
        %v5592 = vunpack.c.h.b16 %v5317
        %v5593 = vunpack.c.l.b16 %v5318
        %v5594 = vunpack.c.h.b16 %v5318
        %v5595 = vunpack.c.l.b16 %v5319
        %v5596 = vunpack.c.h.b16 %v5319
        %v5597 = vunpack.c.l.b16 %v5320
        %v5598 = vunpack.c.h.b16 %v5320
        %v5599 = vunpack.c.l.b16 %v5321
        %v5600 = vunpack.c.h.b16 %v5321
        %v5601 = vunpack.c.l.b16 %v5322
        %v5602 = vunpack.c.h.b16 %v5322
        %v5603 = vunpack.c.l.b16 %v5323
        %v5604 = vunpack.c.h.b16 %v5323
        %v5605 = vunpack.c.l.b16 %v5324
        %v5606 = vunpack.c.h.b16 %v5324
        %v5607 = vunpack.c.l.b16 %v5325
        %v5608 = vunpack.c.h.b16 %v5325
        %v5609 = vunpack.c.l.b16 %v5326
        %v5610 = vunpack.c.h.b16 %v5326
        %v5611 = vunpack.c.l.b16 %v5327
        %v5612 = vunpack.c.h.b16 %v5327
        %v5613 = vunpack.c.l.b16 %v5328
        %v5614 = vunpack.c.h.b16 %v5328
        %v5615 = vunpack.c.l.b16 %v5329
        %v5616 = vunpack.c.h.b16 %v5329
        %v5617 = vunpack.c.l.b16 %v5330
        %v5618 = vunpack.c.h.b16 %v5330
        %v5619 = vunpack.c.l.b16 %v5331
        %v5620 = vunpack.c.h.b16 %v5331
        %v5621 = vunpack.c.l.b16 %v5332
        %v5622 = vunpack.c.h.b16 %v5332
        %v5623 = vunpack.c.l.b16 %v5333
        %v5624 = vunpack.c.h.b16 %v5333
        %v5625 = vunpack.c.l.b16 %v5334
        %v5626 = vunpack.c.h.b16 %v5334
        %v5627 = vunpack.c.l.b16 %v5335
        %v5628 = vunpack.c.h.b16 %v5335
        %v5629 = vunpack.c.l.b16 %v5336
        %v5630 = vunpack.c.h.b16 %v5336
        %v5631 = vunpack.c.l.b16 %v5337
        %v5632 = vunpack.c.h.b16 %v5337
        %v5633 = vunpack.c.l.b16 %v5338
        %v5634 = vunpack.c.h.b16 %v5338
        %v5635 = vunpack.c.l.b16 %v5339
        %v5636 = vunpack.c.h.b16 %v5339
        %v5637 = vunpack.c.l.b16 %v5340
        %v5638 = vunpack.c.h.b16 %v5340
        %v5639 = vunpack.c.l.b16 %v5341
        %v5640 = vunpack.c.h.b16 %v5341
        %v5641 = vunpack.c.l.b16 %v5342
        %v5642 = vunpack.c.h.b16 %v5342
        %v5643 = vunpack.c.l.b16 %v5343
        %v5644 = vunpack.c.h.b16 %v5343
        %v5645 = vunpack.c.l.b16 %v5344
        %v5646 = vunpack.c.h.b16 %v5344
        %v5647 = vunpack.c.l.b16 %v5345
        %v5648 = vunpack.c.h.b16 %v5345
        %v5649 = vunpack.c.l.b16 %v5346
        %v5650 = vunpack.c.h.b16 %v5346
        %v5651 = vunpack.c.l.b16 %v5347
        %v5652 = vunpack.c.h.b16 %v5347
        %v5653 = vunpack.c.l.b16 %v5348
        %v5654 = vunpack.c.h.b16 %v5348
        %v5655 = vunpack.c.l.b16 %v5349
        %v5656 = vunpack.c.h.b16 %v5349
        %v5657 = vunpack.c.l.b16 %v5350
        %v5658 = vunpack.c.h.b16 %v5350
        %v5659 = vunpack.c.l.b16 %v5351
        %v5660 = vunpack.c.h.b16 %v5351
        %v5661 = vunpack.c.l.b16 %v5352
        %v5662 = vunpack.c.h.b16 %v5352
        %v5663 = vunpack.c.l.b16 %v5353
        %v5664 = vunpack.c.h.b16 %v5353
        %v5665 = vunpack.c.l.b16 %v5354
        %v5666 = vunpack.c.h.b16 %v5354
        %v5667 = vunpack.c.l.b16 %v5355
        %v5668 = vunpack.c.h.b16 %v5355
        %v5669 = vunpack.c.l.b16 %v5356
        %v5670 = vunpack.c.h.b16 %v5356
        %v5671 = vunpack.c.l.b16 %v5357
        %v5672 = vunpack.c.h.b16 %v5357
        %v5673 = vunpack.c.l.b16 %v5358
        %v5674 = vunpack.c.h.b16 %v5358
        %v5675 = vunpack.c.l.b16 %v5359
        %v5676 = vunpack.c.h.b16 %v5359
        %v5677 = vunpack.c.l.b16 %v5360
        %v5678 = vunpack.c.h.b16 %v5360
        %v5679 = vunpack.c.l.b16 %v5361
        %v5680 = vunpack.c.h.b16 %v5361
        %v5681 = vunpack.c.l.b16 %v5362
        %v5682 = vunpack.c.h.b16 %v5362
        %v5683 = vpack.c.b16 %v5497, %v5491
        %v5684 = vpack.c.b16 %v5498, %v5492
        %v5685 = vpack.c.b16 %v5499, %v5493
        %v5686 = vpack.c.b16 %v5500, %v5494
        %v5687 = vpack.c.b16 %v5501, %v5495
        %v5688 = vpack.c.b16 %v5502, %v5496
        %v5689 = vpack.c.b16 %v5509, %v5503
        %v5690 = vpack.c.b16 %v5510, %v5504
        %v5691 = vpack.c.b16 %v5511, %v5505
        %v5692 = vpack.c.b16 %v5512, %v5506
        %v5693 = vpack.c.b16 %v5513, %v5507
        %v5694 = vpack.c.b16 %v5514, %v5508
        %v5695 = vpack.c.b16 %v5521, %v5515
        %v5696 = vpack.c.b16 %v5522, %v5516
        %v5697 = vpack.c.b16 %v5523, %v5517
        %v5698 = vpack.c.b16 %v5524, %v5518
        %v5699 = vpack.c.b16 %v5525, %v5519
        %v5700 = vpack.c.b16 %v5526, %v5520
        %v5701 = vpack.c.b16 %v5533, %v5527
        %v5702 = vpack.c.b16 %v5534, %v5528
        %v5703 = vpack.c.b16 %v5535, %v5529
        %v5704 = vpack.c.b16 %v5536, %v5530
        %v5705 = vpack.c.b16 %v5537, %v5531
        %v5706 = vpack.c.b16 %v5538, %v5532
        %v5707 = vpack.c.b16 %v5545, %v5539
        %v5708 = vpack.c.b16 %v5546, %v5540
        %v5709 = vpack.c.b16 %v5547, %v5541
        %v5710 = vpack.c.b16 %v5548, %v5542
        %v5711 = vpack.c.b16 %v5549, %v5543
        %v5712 = vpack.c.b16 %v5550, %v5544
        %v5713 = vpack.c.b16 %v5557, %v5551
        %v5714 = vpack.c.b16 %v5558, %v5552
        %v5715 = vpack.c.b16 %v5559, %v5553
        %v5716 = vpack.c.b16 %v5560, %v5554
        %v5717 = vpack.c.b16 %v5561, %v5555
        %v5718 = vpack.c.b16 %v5562, %v5556
        %v5719 = vpack.c.b16 %v5569, %v5563
        %v5720 = vpack.c.b16 %v5570, %v5564
        %v5721 = vpack.c.b16 %v5571, %v5565
        %v5722 = vpack.c.b16 %v5572, %v5566
        %v5723 = vpack.c.b16 %v5573, %v5567
        %v5724 = vpack.c.b16 %v5574, %v5568
        %v5725 = vpack.c.b16 %v5581, %v5575
        %v5726 = vpack.c.b16 %v5582, %v5576
        %v5727 = vpack.c.b16 %v5583, %v5577
        %v5728 = vpack.c.b16 %v5584, %v5578
        %v5729 = vpack.c.b16 %v5585, %v5579
        %v5730 = vpack.c.b16 %v5586, %v5580
        %v5731 = vpack.c.b16 %v5593, %v5587
        %v5732 = vpack.c.b16 %v5594, %v5588
        %v5733 = vpack.c.b16 %v5595, %v5589
        %v5734 = vpack.c.b16 %v5596, %v5590
        %v5735 = vpack.c.b16 %v5597, %v5591
        %v5736 = vpack.c.b16 %v5598, %v5592
        %v5737 = vpack.c.b16 %v5605, %v5599
        %v5738 = vpack.c.b16 %v5606, %v5600
        %v5739 = vpack.c.b16 %v5607, %v5601
        %v5740 = vpack.c.b16 %v5608, %v5602
        %v5741 = vpack.c.b16 %v5609, %v5603
        %v5742 = vpack.c.b16 %v5610, %v5604
        %v5743 = vpack.c.b16 %v5617, %v5611
        %v5744 = vpack.c.b16 %v5618, %v5612
        %v5745 = vpack.c.b16 %v5619, %v5613
        %v5746 = vpack.c.b16 %v5620, %v5614
        %v5747 = vpack.c.b16 %v5621, %v5615
        %v5748 = vpack.c.b16 %v5622, %v5616
        %v5749 = vpack.c.b16 %v5629, %v5623
        %v5750 = vpack.c.b16 %v5630, %v5624
        %v5751 = vpack.c.b16 %v5631, %v5625
        %v5752 = vpack.c.b16 %v5632, %v5626
        %v5753 = vpack.c.b16 %v5633, %v5627
        %v5754 = vpack.c.b16 %v5634, %v5628
        %v5755 = vpack.c.b16 %v5641, %v5635
        %v5756 = vpack.c.b16 %v5642, %v5636
        %v5757 = vpack.c.b16 %v5643, %v5637
        %v5758 = vpack.c.b16 %v5644, %v5638
        %v5759 = vpack.c.b16 %v5645, %v5639
        %v5760 = vpack.c.b16 %v5646, %v5640
        %v5761 = vpack.c.b16 %v5653, %v5647
        %v5762 = vpack.c.b16 %v5654, %v5648
        %v5763 = vpack.c.b16 %v5655, %v5649
        %v5764 = vpack.c.b16 %v5656, %v5650
        %v5765 = vpack.c.b16 %v5657, %v5651
        %v5766 = vpack.c.b16 %v5658, %v5652
        %v5767 = vpack.c.b16 %v5665, %v5659
        %v5768 = vpack.c.b16 %v5666, %v5660
        %v5769 = vpack.c.b16 %v5667, %v5661
        %v5770 = vpack.c.b16 %v5668, %v5662
        %v5771 = vpack.c.b16 %v5669, %v5663
        %v5772 = vpack.c.b16 %v5670, %v5664
        %v5773 = vpack.c.b16 %v5677, %v5671
        %v5774 = vpack.c.b16 %v5678, %v5672
        %v5775 = vpack.c.b16 %v5679, %v5673
        %v5776 = vpack.c.b16 %v5680, %v5674
        %v5777 = vpack.c.b16 %v5681, %v5675
        %v5778 = vpack.c.b16 %v5682, %v5676
        %5875 = vmatprep.subr.bf16.mxu0 %v5684
        %5876 = vmatpush1.bf16.msra.mxu0 %v5683
        %5877 = vmatprep.subr.bf16.mxu0 %v5690
        %5878 = vmatpush1.bf16.msra.mxu0 %v5689
        %5879 = vmatprep.subr.bf16.mxu0 %v5696
        %5880 = vmatpush1.bf16.msra.mxu0 %v5695
        %5881 = vmatprep.subr.bf16.mxu0 %v5702
        %5882 = vmatpush1.bf16.msra.mxu0 %v5701
        %5883 = vmatprep.subr.bf16.mxu0 %v5708
        %5884 = vmatpush1.bf16.msra.mxu0 %v5707
        %5885 = vmatprep.subr.bf16.mxu0 %v5714
        %5886 = vmatpush1.bf16.msra.mxu0 %v5713
        %5887 = vmatprep.subr.bf16.mxu0 %v5720
        %5888 = vmatpush1.bf16.msra.mxu0 %v5719
        %5889 = vmatprep.subr.bf16.mxu0 %v5726
        %5890 = vmatpush1.bf16.msra.mxu0 %v5725
        %5891 = vmatprep.subr.bf16.mxu0 %v5732
        %5892 = vmatpush1.bf16.msra.mxu0 %v5731
        %5893 = vmatprep.subr.bf16.mxu0 %v5738
        %5894 = vmatpush1.bf16.msra.mxu0 %v5737
        %5895 = vmatprep.subr.bf16.mxu0 %v5744
        %5896 = vmatpush1.bf16.msra.mxu0 %v5743
        %5897 = vmatprep.subr.bf16.mxu0 %v5750
        %5898 = vmatpush1.bf16.msra.mxu0 %v5749
        %5899 = vmatprep.subr.bf16.mxu0 %v5756
        %5900 = vmatpush1.bf16.msra.mxu0 %v5755
        %5901 = vmatprep.subr.bf16.mxu0 %v5762
        %5902 = vmatpush1.bf16.msra.mxu0 %v5761
        %5903 = vmatprep.subr.bf16.mxu0 %v5768
        %5904 = vmatpush1.bf16.msra.mxu0 %v5767
        %5905 = vmatprep.subr.bf16.mxu0 %v5774
        %5906 = vmatpush1.bf16.msra.mxu0 %v5773
        %5907 = vmatprep.mubr.bf16.mxu0 %v5266
        %5908 = vmatmul.mubr.bf16.gmra.mrb[0].mxu0 %v5265
        %v5909 = vpop.f32.mrb[0].mxu0
        %v5910 = vadd.f32 %v5368, %v5909
        %v5911 = vpop.f32.mrb[0].mxu0
        %v5912 = vadd.f32 %v5372, %v5911
        %v5913 = vpop.f32.mrb[0].mxu0
        %v5914 = vpop.f32.mrb[0].mxu0
        %5915 = vdwg.mxu0
        %5916 = vmatprep.subr.bf16.mxu0 %v5686
        %5917 = vmatpush1.bf16.msra.mxu0 %v5685
        %5918 = vmatprep.subr.bf16.mxu0 %v5692
        %5919 = vmatpush1.bf16.msra.mxu0 %v5691
        %5920 = vmatprep.subr.bf16.mxu0 %v5698
        %5921 = vmatpush1.bf16.msra.mxu0 %v5697
        %5922 = vmatprep.subr.bf16.mxu0 %v5704
        %5923 = vmatpush1.bf16.msra.mxu0 %v5703
        %5924 = vmatprep.subr.bf16.mxu0 %v5710
        %5925 = vmatpush1.bf16.msra.mxu0 %v5709
        %5926 = vmatprep.subr.bf16.mxu0 %v5716
        %5927 = vmatpush1.bf16.msra.mxu0 %v5715
        %5928 = vmatprep.subr.bf16.mxu0 %v5722
        %5929 = vmatpush1.bf16.msra.mxu0 %v5721
        %5930 = vmatprep.subr.bf16.mxu0 %v5728
        %5931 = vmatpush1.bf16.msra.mxu0 %v5727
        %5932 = vmatprep.subr.bf16.mxu0 %v5734
        %5933 = vmatpush1.bf16.msra.mxu0 %v5733
        %5934 = vmatprep.subr.bf16.mxu0 %v5740
        %5935 = vmatpush1.bf16.msra.mxu0 %v5739
        %5936 = vmatprep.subr.bf16.mxu0 %v5746
        %5937 = vmatpush1.bf16.msra.mxu0 %v5745
        %5938 = vmatprep.subr.bf16.mxu0 %v5752
        %5939 = vmatpush1.bf16.msra.mxu0 %v5751
        %5940 = vmatprep.subr.bf16.mxu0 %v5758
        %5941 = vmatpush1.bf16.msra.mxu0 %v5757
        %5942 = vmatprep.subr.bf16.mxu0 %v5764
        %5943 = vmatpush1.bf16.msra.mxu0 %v5763
        %5944 = vmatprep.subr.bf16.mxu0 %v5770
        %5945 = vmatpush1.bf16.msra.mxu0 %v5769
        %5946 = vmatprep.subr.bf16.mxu0 %v5776
        %5947 = vmatpush1.bf16.msra.mxu0 %v5775
        %5948 = vmatprep.mubr.bf16.mxu0 %v5266
        %5949 = vmatmul.mubr.bf16.gmra.mrb[0].mxu0 %v5265
        %v5950 = vpop.f32.mrb[0].mxu0
        %v5951 = vadd.f32 %v5376, %v5950
        %v5952 = vpop.f32.mrb[0].mxu0
        %v5953 = vadd.f32 %v5380, %v5952
        %v5954 = vpop.f32.mrb[0].mxu0
        %v5955 = vpop.f32.mrb[0].mxu0
        %5956 = vdwg.mxu0
        %5957 = vmatprep.subr.bf16.mxu0 %v5688
        %5958 = vmatpush1.bf16.msra.mxu0 %v5687
        %5959 = vmatprep.subr.bf16.mxu0 %v5694
        %5960 = vmatpush1.bf16.msra.mxu0 %v5693
        %5961 = vmatprep.subr.bf16.mxu0 %v5700
        %5962 = vmatpush1.bf16.msra.mxu0 %v5699
        %5963 = vmatprep.subr.bf16.mxu0 %v5706
        %5964 = vmatpush1.bf16.msra.mxu0 %v5705
        %5965 = vmatprep.subr.bf16.mxu0 %v5712
        %5966 = vmatpush1.bf16.msra.mxu0 %v5711
        %5967 = vmatprep.subr.bf16.mxu0 %v5718
        %5968 = vmatpush1.bf16.msra.mxu0 %v5717
        %5969 = vmatprep.subr.bf16.mxu0 %v5724
        %5970 = vmatpush1.bf16.msra.mxu0 %v5723
        %5971 = vmatprep.subr.bf16.mxu0 %v5730
        %5972 = vmatpush1.bf16.msra.mxu0 %v5729
        %5973 = vmatprep.subr.bf16.mxu0 %v5736
        %5974 = vmatpush1.bf16.msra.mxu0 %v5735
        %5975 = vmatprep.subr.bf16.mxu0 %v5742
        %5976 = vmatpush1.bf16.msra.mxu0 %v5741
        %5977 = vmatprep.subr.bf16.mxu0 %v5748
        %5978 = vmatpush1.bf16.msra.mxu0 %v5747
        %5979 = vmatprep.subr.bf16.mxu0 %v5754
        %5980 = vmatpush1.bf16.msra.mxu0 %v5753
        %5981 = vmatprep.subr.bf16.mxu0 %v5760
        %5982 = vmatpush1.bf16.msra.mxu0 %v5759
        %5983 = vmatprep.subr.bf16.mxu0 %v5766
        %5984 = vmatpush1.bf16.msra.mxu0 %v5765
        %5985 = vmatprep.subr.bf16.mxu0 %v5772
        %5986 = vmatpush1.bf16.msra.mxu0 %v5771
        %5987 = vmatprep.subr.bf16.mxu0 %v5778
        %5988 = vmatpush1.bf16.msra.mxu0 %v5777
        %5989 = vmatprep.mubr.bf16.mxu0 %v5266
        %5990 = vmatmul.mubr.bf16.gmra.mrb[0].mxu0 %v5265
        %v5991 = vpop.f32.mrb[0].mxu0
        %v5992 = vadd.f32 %v5384, %v5991
        %v5993 = vpop.f32.mrb[0].mxu0
        %v5994 = vadd.f32 %v5388, %v5993
        %v5995 = vpop.f32.mrb[0].mxu0
        %v5996 = vpop.f32.mrb[0].mxu0
        %5997 = vdwg.mxu0
        %v5998 = vpack.c.bf16 %v5910, %v5910
        %v5999 = vpack.c.bf16 %v5912, %v5912
        %v6000 = vpack.c.bf16 %v5951, %v5951
        %v6001 = vpack.c.bf16 %v5953, %v5953
        %v6002 = vpack.c.bf16 %v5992, %v5992
        %v6003 = vpack.c.bf16 %v5994, %v5994
        %6004 = vmatprep.subr.bf16.mxu0 %v6001
        %6005 = vmatpush1.bf16.xpose.msra.mxu0 %v6000
        %6006 = vmatprep.subr.bf16.mxu0 0
        %6007 = vmatpush1.bf16.xpose.msra.mxu0 0
        %6008 = vmatprep.subr.bf16.mxu0 0
        %6009 = vmatpush1.bf16.xpose.msra.mxu0 0
        %6010 = vmatprep.subr.bf16.mxu0 0
        %6011 = vmatpush1.bf16.xpose.msra.mxu0 0
        %6012 = vmatprep.subr.bf16.mxu0 0
        %6013 = vmatpush1.bf16.xpose.msra.mxu0 0
        %6014 = vmatprep.subr.bf16.mxu0 0
        %6015 = vmatpush1.bf16.xpose.msra.mxu0 0
        %6016 = vmatprep.subr.bf16.mxu0 0
        %6017 = vmatpush1.bf16.xpose.msra.mxu0 0
        %6018 = vmatprep.subr.bf16.mxu0 0
        %6019 = vmatpush1.bf16.xpose.msra.mxu0 0
        %6020 = vmatprep.subr.bf16.mxu0 0
        %6021 = vmatpush1.bf16.xpose.msra.mxu0 0
        %6022 = vmatprep.subr.bf16.mxu0 0
        %6023 = vmatpush1.bf16.xpose.msra.mxu0 0
        %6024 = vmatprep.subr.bf16.mxu0 0
        %6025 = vmatpush1.bf16.xpose.msra.mxu0 0
        %6026 = vmatprep.subr.bf16.mxu0 0
        %6027 = vmatpush1.bf16.xpose.msra.mxu0 0
        %6028 = vmatprep.subr.bf16.mxu0 0
        %6029 = vmatpush1.bf16.xpose.msra.mxu0 0
        %6030 = vmatprep.subr.bf16.mxu0 0
        %6031 = vmatpush1.bf16.xpose.msra.mxu0 0
        %6032 = vmatprep.subr.bf16.mxu0 0
        %6033 = vmatpush1.bf16.xpose.msra.mxu0 0
        %6034 = vmatprep.subr.bf16.mxu0 0
        %6035 = vmatpush1.bf16.xpose.msra.mxu0 0
        %6036 = vmatprep.mubr.bf16.mxu0 %v5999
        %6037 = vmatmul.mubr.bf16.gmra.mrb[0].mxu0 %v5998
        %v6038 = vpop.f32.mrb[0].mxu0
        %v6039 = vadd.f32 0.0, %v6038
        %v6040 = vpop.f32.mrb[0].mxu0
        %v6041 = vpop.f32.mrb[0].mxu0
        %v6042 = vpop.f32.mrb[0].mxu0
        %6043 = vdwg.mxu0
        %v6044 = vmul.f32 %v6039, 0.0625
        %vm6045 = vcmask 64512
        %v6046 = vsel %vm6045, %v6044, -inf
        %6047 = vmax.xlane.f32.xlu0 %v6046
        %v6048 = vpop.xlane.xlu0 %6047
        %v6049 = vsub.f32 %v6044, %v6048
        %v6050 = vmul.f32 %v6049, 1.442695
        %v6051 = vpow.pop %v6050
        %v6052 = vsel %vm6045, %v6051, 0.0
        %6053 = vadd.xlane.f32.xlu0 %v6052
        %v6054 = vpop.xlane.xlu0 %6053
        %v6055 = vrcp.pop %v6054
        %v6056 = vmul.f32 %v6051, %v6055
        %v6057 = vpack.c.bf16 %v6056, %v6056
        %v6059 = vsel %vm6045, %v6057, 0
        %vm6061 = vcmask 1043456
        %v6063 = vsel %vm6061, %v6002, 0
        %v6066 = vsel %vm6061, %v6003, 0
        %6068 = vmatprep.subr.bf16.mxu0 %v6066
        %6069 = vmatpush1.bf16.msra.mxu0 %v6063
        %6070 = vmatprep.subr.bf16.mxu0 0
        %6071 = vmatpush1.bf16.msra.mxu0 0
        %6072 = vmatprep.subr.bf16.mxu0 0
        %6073 = vmatpush1.bf16.msra.mxu0 0
        %6074 = vmatprep.subr.bf16.mxu0 0
        %6075 = vmatpush1.bf16.msra.mxu0 0
        %6076 = vmatprep.subr.bf16.mxu0 0
        %6077 = vmatpush1.bf16.msra.mxu0 0
        %6078 = vmatprep.subr.bf16.mxu0 0
        %6079 = vmatpush1.bf16.msra.mxu0 0
        %6080 = vmatprep.subr.bf16.mxu0 0
        %6081 = vmatpush1.bf16.msra.mxu0 0
        %6082 = vmatprep.subr.bf16.mxu0 0
        %6083 = vmatpush1.bf16.msra.mxu0 0
        %6084 = vmatprep.subr.bf16.mxu0 0
        %6085 = vmatpush1.bf16.msra.mxu0 0
        %6086 = vmatprep.subr.bf16.mxu0 0
        %6087 = vmatpush1.bf16.msra.mxu0 0
        %6088 = vmatprep.subr.bf16.mxu0 0
        %6089 = vmatpush1.bf16.msra.mxu0 0
        %6090 = vmatprep.subr.bf16.mxu0 0
        %6091 = vmatpush1.bf16.msra.mxu0 0
        %6092 = vmatprep.subr.bf16.mxu0 0
        %6093 = vmatpush1.bf16.msra.mxu0 0
        %6094 = vmatprep.subr.bf16.mxu0 0
        %6095 = vmatpush1.bf16.msra.mxu0 0
        %6096 = vmatprep.subr.bf16.mxu0 0
        %6097 = vmatpush1.bf16.msra.mxu0 0
        %6098 = vmatprep.subr.bf16.mxu0 0
        %6099 = vmatpush1.bf16.msra.mxu0 0
        %6100 = vmatprep.mubr.bf16.mxu0 0
        %6101 = vmatmul.mubr.bf16.gmra.mrb[0].mxu0 %v6059
        %v6102 = vpop.f32.mrb[0].mxu0
        %v6103 = vadd.f32 0.0, %v6102
        %v6104 = vpop.f32.mrb[0].mxu0
        %v6105 = vadd.f32 0.0, %v6104
        %v6106 = vpop.f32.mrb[0].mxu0
        %v6107 = vpop.f32.mrb[0].mxu0
        %6108 = vdwg.mxu0
        %v6109 = vpack.c.bf16 %v6103, %v6103
        %v6110 = vpack.c.bf16 %v6105, %v6105
        %v6111 = vld [vmem:[#allocation3] sm:$0xff]
        %v6112 = vld [vmem:[#allocation3 + $0x8] sm:$0xff]
        %v6113 = vld [vmem:[#allocation3 + $0x10] sm:$0xff]
        %v6114 = vld [vmem:[#allocation3 + $0x18] sm:$0xff]
        %v6115 = vld [vmem:[#allocation3 + $0x20] sm:$0xff]
        %v6116 = vld [vmem:[#allocation3 + $0x28] sm:$0xff]
        %v6117 = vld [vmem:[#allocation3 + $0x30] sm:$0xff]
        %v6118 = vld [vmem:[#allocation3 + $0x38] sm:$0xff]
        %v6119 = vld [vmem:[#allocation3 + $0x40] sm:$0xff]
        %v6120 = vld [vmem:[#allocation3 + $0x48] sm:$0xff]
        %v6121 = vld [vmem:[#allocation3 + $0x50] sm:$0xff]
        %v6122 = vld [vmem:[#allocation3 + $0x58] sm:$0xff]
        %v6123 = vld [vmem:[#allocation3 + $0x60] sm:$0xff]
        %v6124 = vld [vmem:[#allocation3 + $0x68] sm:$0xff]
        %v6125 = vld [vmem:[#allocation3 + $0x70] sm:$0xff]
        %v6126 = vld [vmem:[#allocation3 + $0x78] sm:$0xff]
        %v6127 = vld [vmem:[#allocation3 + $0x80] sm:$0xff]
        %v6128 = vld [vmem:[#allocation3 + $0x88] sm:$0xff]
        %v6129 = vld [vmem:[#allocation3 + $0x90] sm:$0xff]
        %v6130 = vld [vmem:[#allocation3 + $0x98] sm:$0xff]
        %v6131 = vld [vmem:[#allocation3 + $0xa0] sm:$0xff]
        %v6132 = vld [vmem:[#allocation3 + $0xa8] sm:$0xff]
        %v6133 = vld [vmem:[#allocation3 + $0xb0] sm:$0xff]
        %v6134 = vld [vmem:[#allocation3 + $0xb8] sm:$0xff]
        %v6135 = vld [vmem:[#allocation3 + $0xc0] sm:$0xff]
        %v6136 = vld [vmem:[#allocation3 + $0xc8] sm:$0xff]
        %v6137 = vld [vmem:[#allocation3 + $0xd0] sm:$0xff]
        %v6138 = vld [vmem:[#allocation3 + $0xd8] sm:$0xff]
        %v6139 = vld [vmem:[#allocation3 + $0xe0] sm:$0xff]
        %v6140 = vld [vmem:[#allocation3 + $0xe8] sm:$0xff]
        %v6141 = vld [vmem:[#allocation3 + $0xf0] sm:$0xff]
        %v6142 = vld [vmem:[#allocation3 + $0xf8] sm:$0xff]
        %v6143 = vld [vmem:[%s10] sm:$0x3]
        %v6145 = vlaneseq
        %v6146 = vshrl.u32 %v6145, 7
        %v6147 = vsub.s32 0, %v6146
        %v6148 = vrot.slane %v6143, %v6147
        %v6149 = vlaneseq
        %v6150 = vshrl.u32 %v6149, 7
        %v6151 = vsub.s32 1, %v6150
        %v6152 = vrot.slane %v6143, %v6151
        %v6187 = vunpack.c.l.b16 %v6111
        %v6188 = vunpack.c.h.b16 %v6111
        %v6189 = vunpack.c.l.b16 %v6112
        %v6190 = vunpack.c.h.b16 %v6112
        %v6191 = vunpack.c.l.b16 %v6113
        %v6192 = vunpack.c.h.b16 %v6113
        %v6193 = vunpack.c.l.b16 %v6114
        %v6194 = vunpack.c.h.b16 %v6114
        %v6195 = vunpack.c.l.b16 %v6115
        %v6196 = vunpack.c.h.b16 %v6115
        %v6197 = vunpack.c.l.b16 %v6116
        %v6198 = vunpack.c.h.b16 %v6116
        %v6199 = vunpack.c.l.b16 %v6117
        %v6200 = vunpack.c.h.b16 %v6117
        %v6201 = vunpack.c.l.b16 %v6118
        %v6202 = vunpack.c.h.b16 %v6118
        %v6203 = vunpack.c.l.b16 %v6119
        %v6204 = vunpack.c.h.b16 %v6119
        %v6205 = vunpack.c.l.b16 %v6120
        %v6206 = vunpack.c.h.b16 %v6120
        %v6207 = vunpack.c.l.b16 %v6121
        %v6208 = vunpack.c.h.b16 %v6121
        %v6209 = vunpack.c.l.b16 %v6122
        %v6210 = vunpack.c.h.b16 %v6122
        %v6211 = vunpack.c.l.b16 %v6123
        %v6212 = vunpack.c.h.b16 %v6123
        %v6213 = vunpack.c.l.b16 %v6124
        %v6214 = vunpack.c.h.b16 %v6124
        %v6215 = vunpack.c.l.b16 %v6125
        %v6216 = vunpack.c.h.b16 %v6125
        %v6217 = vunpack.c.l.b16 %v6126
        %v6218 = vunpack.c.h.b16 %v6126
        %v6219 = vunpack.c.l.b16 %v6127
        %v6220 = vunpack.c.h.b16 %v6127
        %v6221 = vunpack.c.l.b16 %v6128
        %v6222 = vunpack.c.h.b16 %v6128
        %v6223 = vunpack.c.l.b16 %v6129
        %v6224 = vunpack.c.h.b16 %v6129
        %v6225 = vunpack.c.l.b16 %v6130
        %v6226 = vunpack.c.h.b16 %v6130
        %v6227 = vunpack.c.l.b16 %v6131
        %v6228 = vunpack.c.h.b16 %v6131
        %v6229 = vunpack.c.l.b16 %v6132
        %v6230 = vunpack.c.h.b16 %v6132
        %v6231 = vunpack.c.l.b16 %v6133
        %v6232 = vunpack.c.h.b16 %v6133
        %v6233 = vunpack.c.l.b16 %v6134
        %v6234 = vunpack.c.h.b16 %v6134
        %v6235 = vunpack.c.l.b16 %v6135
        %v6236 = vunpack.c.h.b16 %v6135
        %v6237 = vunpack.c.l.b16 %v6136
        %v6238 = vunpack.c.h.b16 %v6136
        %v6239 = vunpack.c.l.b16 %v6137
        %v6240 = vunpack.c.h.b16 %v6137
        %v6241 = vunpack.c.l.b16 %v6138
        %v6242 = vunpack.c.h.b16 %v6138
        %v6243 = vunpack.c.l.b16 %v6139
        %v6244 = vunpack.c.h.b16 %v6139
        %v6245 = vunpack.c.l.b16 %v6140
        %v6246 = vunpack.c.h.b16 %v6140
        %v6247 = vunpack.c.l.b16 %v6141
        %v6248 = vunpack.c.h.b16 %v6141
        %v6249 = vunpack.c.l.b16 %v6142
        %v6250 = vunpack.c.h.b16 %v6142
        %v6251 = vpack.c.b16 %v6189, %v6187
        %v6252 = vpack.c.b16 %v6190, %v6188
        %v6253 = vpack.c.b16 %v6193, %v6191
        %v6254 = vpack.c.b16 %v6194, %v6192
        %v6255 = vpack.c.b16 %v6197, %v6195
        %v6256 = vpack.c.b16 %v6198, %v6196
        %v6257 = vpack.c.b16 %v6201, %v6199
        %v6258 = vpack.c.b16 %v6202, %v6200
        %v6259 = vpack.c.b16 %v6205, %v6203
        %v6260 = vpack.c.b16 %v6206, %v6204
        %v6261 = vpack.c.b16 %v6209, %v6207
        %v6262 = vpack.c.b16 %v6210, %v6208
        %v6263 = vpack.c.b16 %v6213, %v6211
        %v6264 = vpack.c.b16 %v6214, %v6212
        %v6265 = vpack.c.b16 %v6217, %v6215
        %v6266 = vpack.c.b16 %v6218, %v6216
        %v6267 = vpack.c.b16 %v6221, %v6219
        %v6268 = vpack.c.b16 %v6222, %v6220
        %v6269 = vpack.c.b16 %v6225, %v6223
        %v6270 = vpack.c.b16 %v6226, %v6224
        %v6271 = vpack.c.b16 %v6229, %v6227
        %v6272 = vpack.c.b16 %v6230, %v6228
        %v6273 = vpack.c.b16 %v6233, %v6231
        %v6274 = vpack.c.b16 %v6234, %v6232
        %v6275 = vpack.c.b16 %v6237, %v6235
        %v6276 = vpack.c.b16 %v6238, %v6236
        %v6277 = vpack.c.b16 %v6241, %v6239
        %v6278 = vpack.c.b16 %v6242, %v6240
        %v6279 = vpack.c.b16 %v6245, %v6243
        %v6280 = vpack.c.b16 %v6246, %v6244
        %v6281 = vpack.c.b16 %v6249, %v6247
        %v6282 = vpack.c.b16 %v6250, %v6248
        %6315 = vmatprep.subr.bf16.mxu0 %v6252
        %6316 = vmatpush1.bf16.msra.mxu0 %v6251
        %6317 = vmatprep.subr.bf16.mxu0 %v6254
        %6318 = vmatpush1.bf16.msra.mxu0 %v6253
        %6319 = vmatprep.subr.bf16.mxu0 %v6256
        %6320 = vmatpush1.bf16.msra.mxu0 %v6255
        %6321 = vmatprep.subr.bf16.mxu0 %v6258
        %6322 = vmatpush1.bf16.msra.mxu0 %v6257
        %6323 = vmatprep.subr.bf16.mxu0 %v6260
        %6324 = vmatpush1.bf16.msra.mxu0 %v6259
        %6325 = vmatprep.subr.bf16.mxu0 %v6262
        %6326 = vmatpush1.bf16.msra.mxu0 %v6261
        %6327 = vmatprep.subr.bf16.mxu0 %v6264
        %6328 = vmatpush1.bf16.msra.mxu0 %v6263
        %6329 = vmatprep.subr.bf16.mxu0 %v6266
        %6330 = vmatpush1.bf16.msra.mxu0 %v6265
        %6331 = vmatprep.subr.bf16.mxu0 %v6268
        %6332 = vmatpush1.bf16.msra.mxu0 %v6267
        %6333 = vmatprep.subr.bf16.mxu0 %v6270
        %6334 = vmatpush1.bf16.msra.mxu0 %v6269
        %6335 = vmatprep.subr.bf16.mxu0 %v6272
        %6336 = vmatpush1.bf16.msra.mxu0 %v6271
        %6337 = vmatprep.subr.bf16.mxu0 %v6274
        %6338 = vmatpush1.bf16.msra.mxu0 %v6273
        %6339 = vmatprep.subr.bf16.mxu0 %v6276
        %6340 = vmatpush1.bf16.msra.mxu0 %v6275
        %6341 = vmatprep.subr.bf16.mxu0 %v6278
        %6342 = vmatpush1.bf16.msra.mxu0 %v6277
        %6343 = vmatprep.subr.bf16.mxu0 %v6280
        %6344 = vmatpush1.bf16.msra.mxu0 %v6279
        %6345 = vmatprep.subr.bf16.mxu0 %v6282
        %6346 = vmatpush1.bf16.msra.mxu0 %v6281
        %6347 = vmatprep.mubr.bf16.mxu0 %v6110
        %6348 = vmatmul.mubr.bf16.gmra.mrb[0].mxu0 %v6109
        %v6349 = vpop.f32.mrb[0].mxu0
        %v6350 = vadd.f32 %v6148, %v6349
        %v6351 = vpop.f32.mrb[0].mxu0
        %v6352 = vadd.f32 %v6152, %v6351
        %v6353 = vpop.f32.mrb[0].mxu0
        %v6354 = vpop.f32.mrb[0].mxu0
        %6355 = vdwg.mxu0
        %v6356 = vadd.f32 %v5261, %v6350
        %v6357 = vadd.f32 %v5263, %v6352
        %v6358 = vld [vmem:[%s11] sm:$0x3]
        %v6359 = vld [vmem:[%s12] sm:$0x3]
        %v6360 = vadd.f32 %v6356, %v6357
        %6361 = vadd.xlane.f32.xlu0 %v6360
        %v6362 = vpop.xlane.xlu0 %6361
        %v6363 = vrcp.pop 256.0
        %v6364 = vmul.f32 %v6362, %v6363
        %v6365 = vsub.f32 %v6356, %v6364
        %v6366 = vsub.f32 %v6357, %v6364
        %v6367 = vmul.f32 %v6365, %v6365
        %v6368 = vmul.f32 %v6366, %v6366
        %v6369 = vadd.f32 %v6367, %v6368
        %6370 = vadd.xlane.f32.xlu0 %v6369
        %v6371 = vpop.xlane.xlu0 %6370
        %v6372 = vmul.f32 %v6371, %v6363
        %v6373 = vadd.f32 %v6372, 1e-05
        %v6374 = vrsqrt.pop %v6373
        %v6375 = vmul.f32 %v6365, %v6374
        %v6376 = vmul.f32 %v6366, %v6374
        %v6378 = vlaneseq
        %v6379 = vshrl.u32 %v6378, 7
        %v6380 = vsub.s32 0, %v6379
        %v6381 = vrot.slane %v6358, %v6380
        %v6382 = vlaneseq
        %v6383 = vshrl.u32 %v6382, 7
        %v6384 = vsub.s32 1, %v6383
        %v6385 = vrot.slane %v6358, %v6384
        %v6388 = vmul.f32 %v6375, %v6381
        %v6389 = vmul.f32 %v6376, %v6385
        %v6391 = vlaneseq
        %v6392 = vshrl.u32 %v6391, 7
        %v6393 = vsub.s32 0, %v6392
        %v6394 = vrot.slane %v6359, %v6393
        %v6395 = vlaneseq
        %v6396 = vshrl.u32 %v6395, 7
        %v6397 = vsub.s32 1, %v6396
        %v6398 = vrot.slane %v6359, %v6397
        %v6401 = vadd.f32 %v6388, %v6394
        %v6402 = vadd.f32 %v6389, %v6398
        %v6403 = vpack.c.bf16 %v6401, %v6401
        %v6404 = vpack.c.bf16 %v6402, %v6402
        %v6405 = vld [vmem:[%s13] sm:$0xff]
        %v6406 = vld [vmem:[%s13 + $0x8] sm:$0xff]
        %v6407 = vld [vmem:[%s13 + $0x10] sm:$0xff]
        %v6408 = vld [vmem:[%s13 + $0x18] sm:$0xff]
        %v6409 = vld [vmem:[%s13 + $0x20] sm:$0xff]
        %v6410 = vld [vmem:[%s13 + $0x28] sm:$0xff]
        %v6411 = vld [vmem:[%s13 + $0x30] sm:$0xff]
        %v6412 = vld [vmem:[%s13 + $0x38] sm:$0xff]
        %v6413 = vld [vmem:[%s13 + $0x40] sm:$0xff]
        %v6414 = vld [vmem:[%s13 + $0x48] sm:$0xff]
        %v6415 = vld [vmem:[%s13 + $0x50] sm:$0xff]
        %v6416 = vld [vmem:[%s13 + $0x58] sm:$0xff]
        %v6417 = vld [vmem:[%s13 + $0x60] sm:$0xff]
        %v6418 = vld [vmem:[%s13 + $0x68] sm:$0xff]
        %v6419 = vld [vmem:[%s13 + $0x70] sm:$0xff]
        %v6420 = vld [vmem:[%s13 + $0x78] sm:$0xff]
        %v6421 = vld [vmem:[%s13 + $0x80] sm:$0xff]
        %v6422 = vld [vmem:[%s13 + $0x88] sm:$0xff]
        %v6423 = vld [vmem:[%s13 + $0x90] sm:$0xff]
        %v6424 = vld [vmem:[%s13 + $0x98] sm:$0xff]
        %v6425 = vld [vmem:[%s13 + $0xa0] sm:$0xff]
        %v6426 = vld [vmem:[%s13 + $0xa8] sm:$0xff]
        %v6427 = vld [vmem:[%s13 + $0xb0] sm:$0xff]
        %v6428 = vld [vmem:[%s13 + $0xb8] sm:$0xff]
        %v6429 = vld [vmem:[%s13 + $0xc0] sm:$0xff]
        %v6430 = vld [vmem:[%s13 + $0xc8] sm:$0xff]
        %v6431 = vld [vmem:[%s13 + $0xd0] sm:$0xff]
        %v6432 = vld [vmem:[%s13 + $0xd8] sm:$0xff]
        %v6433 = vld [vmem:[%s13 + $0xe0] sm:$0xff]
        %v6434 = vld [vmem:[%s13 + $0xe8] sm:$0xff]
        %v6435 = vld [vmem:[%s13 + $0xf0] sm:$0xff]
        %v6436 = vld [vmem:[%s13 + $0xf8] sm:$0xff]
        %v6437 = vld [vmem:[%s13 + $0x100] sm:$0xff]
        %v6438 = vld [vmem:[%s13 + $0x108] sm:$0xff]
        %v6439 = vld [vmem:[%s13 + $0x110] sm:$0xff]
        %v6440 = vld [vmem:[%s13 + $0x118] sm:$0xff]
        %v6441 = vld [vmem:[%s13 + $0x120] sm:$0xff]
        %v6442 = vld [vmem:[%s13 + $0x128] sm:$0xff]
        %v6443 = vld [vmem:[%s13 + $0x130] sm:$0xff]
        %v6444 = vld [vmem:[%s13 + $0x138] sm:$0xff]
        %v6445 = vld [vmem:[%s13 + $0x140] sm:$0xff]
        %v6446 = vld [vmem:[%s13 + $0x148] sm:$0xff]
        %v6447 = vld [vmem:[%s13 + $0x150] sm:$0xff]
        %v6448 = vld [vmem:[%s13 + $0x158] sm:$0xff]
        %v6449 = vld [vmem:[%s13 + $0x160] sm:$0xff]
        %v6450 = vld [vmem:[%s13 + $0x168] sm:$0xff]
        %v6451 = vld [vmem:[%s13 + $0x170] sm:$0xff]
        %v6452 = vld [vmem:[%s13 + $0x178] sm:$0xff]
        %v6453 = vld [vmem:[%s13 + $0x180] sm:$0xff]
        %v6454 = vld [vmem:[%s13 + $0x188] sm:$0xff]
        %v6455 = vld [vmem:[%s13 + $0x190] sm:$0xff]
        %v6456 = vld [vmem:[%s13 + $0x198] sm:$0xff]
        %v6457 = vld [vmem:[%s13 + $0x1a0] sm:$0xff]
        %v6458 = vld [vmem:[%s13 + $0x1a8] sm:$0xff]
        %v6459 = vld [vmem:[%s13 + $0x1b0] sm:$0xff]
        %v6460 = vld [vmem:[%s13 + $0x1b8] sm:$0xff]
        %v6461 = vld [vmem:[%s13 + $0x1c0] sm:$0xff]
        %v6462 = vld [vmem:[%s13 + $0x1c8] sm:$0xff]
        %v6463 = vld [vmem:[%s13 + $0x1d0] sm:$0xff]
        %v6464 = vld [vmem:[%s13 + $0x1d8] sm:$0xff]
        %v6465 = vld [vmem:[%s13 + $0x1e0] sm:$0xff]
        %v6466 = vld [vmem:[%s13 + $0x1e8] sm:$0xff]
        %v6467 = vld [vmem:[%s13 + $0x1f0] sm:$0xff]
        %v6468 = vld [vmem:[%s13 + $0x1f8] sm:$0xff]
        %v6469 = vld [vmem:[%s14] sm:$0xf]
        %v6471 = vlaneseq
        %v6472 = vshrl.u32 %v6471, 7
        %v6473 = vsub.s32 0, %v6472
        %v6474 = vrot.slane %v6469, %v6473
        %v6475 = vlaneseq
        %v6476 = vshrl.u32 %v6475, 7
        %v6477 = vsub.s32 1, %v6476
        %v6478 = vrot.slane %v6469, %v6477
        %v6479 = vlaneseq
        %v6480 = vshrl.u32 %v6479, 7
        %v6481 = vsub.s32 2, %v6480
        %v6482 = vrot.slane %v6469, %v6481
        %v6483 = vlaneseq
        %v6484 = vshrl.u32 %v6483, 7
        %v6485 = vsub.s32 3, %v6484
        %v6486 = vrot.slane %v6469, %v6485
        %v6555 = vunpack.c.l.b16 %v6405
        %v6556 = vunpack.c.h.b16 %v6405
        %v6557 = vunpack.c.l.b16 %v6406
        %v6558 = vunpack.c.h.b16 %v6406
        %v6559 = vunpack.c.l.b16 %v6407
        %v6560 = vunpack.c.h.b16 %v6407
        %v6561 = vunpack.c.l.b16 %v6408
        %v6562 = vunpack.c.h.b16 %v6408
        %v6563 = vunpack.c.l.b16 %v6409
        %v6564 = vunpack.c.h.b16 %v6409
        %v6565 = vunpack.c.l.b16 %v6410
        %v6566 = vunpack.c.h.b16 %v6410
        %v6567 = vunpack.c.l.b16 %v6411
        %v6568 = vunpack.c.h.b16 %v6411
        %v6569 = vunpack.c.l.b16 %v6412
        %v6570 = vunpack.c.h.b16 %v6412
        %v6571 = vunpack.c.l.b16 %v6413
        %v6572 = vunpack.c.h.b16 %v6413
        %v6573 = vunpack.c.l.b16 %v6414
        %v6574 = vunpack.c.h.b16 %v6414
        %v6575 = vunpack.c.l.b16 %v6415
        %v6576 = vunpack.c.h.b16 %v6415
        %v6577 = vunpack.c.l.b16 %v6416
        %v6578 = vunpack.c.h.b16 %v6416
        %v6579 = vunpack.c.l.b16 %v6417
        %v6580 = vunpack.c.h.b16 %v6417
        %v6581 = vunpack.c.l.b16 %v6418
        %v6582 = vunpack.c.h.b16 %v6418
        %v6583 = vunpack.c.l.b16 %v6419
        %v6584 = vunpack.c.h.b16 %v6419
        %v6585 = vunpack.c.l.b16 %v6420
        %v6586 = vunpack.c.h.b16 %v6420
        %v6587 = vunpack.c.l.b16 %v6421
        %v6588 = vunpack.c.h.b16 %v6421
        %v6589 = vunpack.c.l.b16 %v6422
        %v6590 = vunpack.c.h.b16 %v6422
        %v6591 = vunpack.c.l.b16 %v6423
        %v6592 = vunpack.c.h.b16 %v6423
        %v6593 = vunpack.c.l.b16 %v6424
        %v6594 = vunpack.c.h.b16 %v6424
        %v6595 = vunpack.c.l.b16 %v6425
        %v6596 = vunpack.c.h.b16 %v6425
        %v6597 = vunpack.c.l.b16 %v6426
        %v6598 = vunpack.c.h.b16 %v6426
        %v6599 = vunpack.c.l.b16 %v6427
        %v6600 = vunpack.c.h.b16 %v6427
        %v6601 = vunpack.c.l.b16 %v6428
        %v6602 = vunpack.c.h.b16 %v6428
        %v6603 = vunpack.c.l.b16 %v6429
        %v6604 = vunpack.c.h.b16 %v6429
        %v6605 = vunpack.c.l.b16 %v6430
        %v6606 = vunpack.c.h.b16 %v6430
        %v6607 = vunpack.c.l.b16 %v6431
        %v6608 = vunpack.c.h.b16 %v6431
        %v6609 = vunpack.c.l.b16 %v6432
        %v6610 = vunpack.c.h.b16 %v6432
        %v6611 = vunpack.c.l.b16 %v6433
        %v6612 = vunpack.c.h.b16 %v6433
        %v6613 = vunpack.c.l.b16 %v6434
        %v6614 = vunpack.c.h.b16 %v6434
        %v6615 = vunpack.c.l.b16 %v6435
        %v6616 = vunpack.c.h.b16 %v6435
        %v6617 = vunpack.c.l.b16 %v6436
        %v6618 = vunpack.c.h.b16 %v6436
        %v6619 = vunpack.c.l.b16 %v6437
        %v6620 = vunpack.c.h.b16 %v6437
        %v6621 = vunpack.c.l.b16 %v6438
        %v6622 = vunpack.c.h.b16 %v6438
        %v6623 = vunpack.c.l.b16 %v6439
        %v6624 = vunpack.c.h.b16 %v6439
        %v6625 = vunpack.c.l.b16 %v6440
        %v6626 = vunpack.c.h.b16 %v6440
        %v6627 = vunpack.c.l.b16 %v6441
        %v6628 = vunpack.c.h.b16 %v6441
        %v6629 = vunpack.c.l.b16 %v6442
        %v6630 = vunpack.c.h.b16 %v6442
        %v6631 = vunpack.c.l.b16 %v6443
        %v6632 = vunpack.c.h.b16 %v6443
        %v6633 = vunpack.c.l.b16 %v6444
        %v6634 = vunpack.c.h.b16 %v6444
        %v6635 = vunpack.c.l.b16 %v6445
        %v6636 = vunpack.c.h.b16 %v6445
        %v6637 = vunpack.c.l.b16 %v6446
        %v6638 = vunpack.c.h.b16 %v6446
        %v6639 = vunpack.c.l.b16 %v6447
        %v6640 = vunpack.c.h.b16 %v6447
        %v6641 = vunpack.c.l.b16 %v6448
        %v6642 = vunpack.c.h.b16 %v6448
        %v6643 = vunpack.c.l.b16 %v6449
        %v6644 = vunpack.c.h.b16 %v6449
        %v6645 = vunpack.c.l.b16 %v6450
        %v6646 = vunpack.c.h.b16 %v6450
        %v6647 = vunpack.c.l.b16 %v6451
        %v6648 = vunpack.c.h.b16 %v6451
        %v6649 = vunpack.c.l.b16 %v6452
        %v6650 = vunpack.c.h.b16 %v6452
        %v6651 = vunpack.c.l.b16 %v6453
        %v6652 = vunpack.c.h.b16 %v6453
        %v6653 = vunpack.c.l.b16 %v6454
        %v6654 = vunpack.c.h.b16 %v6454
        %v6655 = vunpack.c.l.b16 %v6455
        %v6656 = vunpack.c.h.b16 %v6455
        %v6657 = vunpack.c.l.b16 %v6456
        %v6658 = vunpack.c.h.b16 %v6456
        %v6659 = vunpack.c.l.b16 %v6457
        %v6660 = vunpack.c.h.b16 %v6457
        %v6661 = vunpack.c.l.b16 %v6458
        %v6662 = vunpack.c.h.b16 %v6458
        %v6663 = vunpack.c.l.b16 %v6459
        %v6664 = vunpack.c.h.b16 %v6459
        %v6665 = vunpack.c.l.b16 %v6460
        %v6666 = vunpack.c.h.b16 %v6460
        %v6667 = vunpack.c.l.b16 %v6461
        %v6668 = vunpack.c.h.b16 %v6461
        %v6669 = vunpack.c.l.b16 %v6462
        %v6670 = vunpack.c.h.b16 %v6462
        %v6671 = vunpack.c.l.b16 %v6463
        %v6672 = vunpack.c.h.b16 %v6463
        %v6673 = vunpack.c.l.b16 %v6464
        %v6674 = vunpack.c.h.b16 %v6464
        %v6675 = vunpack.c.l.b16 %v6465
        %v6676 = vunpack.c.h.b16 %v6465
        %v6677 = vunpack.c.l.b16 %v6466
        %v6678 = vunpack.c.h.b16 %v6466
        %v6679 = vunpack.c.l.b16 %v6467
        %v6680 = vunpack.c.h.b16 %v6467
        %v6681 = vunpack.c.l.b16 %v6468
        %v6682 = vunpack.c.h.b16 %v6468
        %v6683 = vpack.c.b16 %v6559, %v6555
        %v6684 = vpack.c.b16 %v6560, %v6556
        %v6685 = vpack.c.b16 %v6561, %v6557
        %v6686 = vpack.c.b16 %v6562, %v6558
        %v6687 = vpack.c.b16 %v6567, %v6563
        %v6688 = vpack.c.b16 %v6568, %v6564
        %v6689 = vpack.c.b16 %v6569, %v6565
        %v6690 = vpack.c.b16 %v6570, %v6566
        %v6691 = vpack.c.b16 %v6575, %v6571
        %v6692 = vpack.c.b16 %v6576, %v6572
        %v6693 = vpack.c.b16 %v6577, %v6573
        %v6694 = vpack.c.b16 %v6578, %v6574
        %v6695 = vpack.c.b16 %v6583, %v6579
        %v6696 = vpack.c.b16 %v6584, %v6580
        %v6697 = vpack.c.b16 %v6585, %v6581
        %v6698 = vpack.c.b16 %v6586, %v6582
        %v6699 = vpack.c.b16 %v6591, %v6587
        %v6700 = vpack.c.b16 %v6592, %v6588
        %v6701 = vpack.c.b16 %v6593, %v6589
        %v6702 = vpack.c.b16 %v6594, %v6590
        %v6703 = vpack.c.b16 %v6599, %v6595
        %v6704 = vpack.c.b16 %v6600, %v6596
        %v6705 = vpack.c.b16 %v6601, %v6597
        %v6706 = vpack.c.b16 %v6602, %v6598
        %v6707 = vpack.c.b16 %v6607, %v6603
        %v6708 = vpack.c.b16 %v6608, %v6604
        %v6709 = vpack.c.b16 %v6609, %v6605
        %v6710 = vpack.c.b16 %v6610, %v6606
        %v6711 = vpack.c.b16 %v6615, %v6611
        %v6712 = vpack.c.b16 %v6616, %v6612
        %v6713 = vpack.c.b16 %v6617, %v6613
        %v6714 = vpack.c.b16 %v6618, %v6614
        %v6715 = vpack.c.b16 %v6623, %v6619
        %v6716 = vpack.c.b16 %v6624, %v6620
        %v6717 = vpack.c.b16 %v6625, %v6621
        %v6718 = vpack.c.b16 %v6626, %v6622
        %v6719 = vpack.c.b16 %v6631, %v6627
        %v6720 = vpack.c.b16 %v6632, %v6628
        %v6721 = vpack.c.b16 %v6633, %v6629
        %v6722 = vpack.c.b16 %v6634, %v6630
        %v6723 = vpack.c.b16 %v6639, %v6635
        %v6724 = vpack.c.b16 %v6640, %v6636
        %v6725 = vpack.c.b16 %v6641, %v6637
        %v6726 = vpack.c.b16 %v6642, %v6638
        %v6727 = vpack.c.b16 %v6647, %v6643
        %v6728 = vpack.c.b16 %v6648, %v6644
        %v6729 = vpack.c.b16 %v6649, %v6645
        %v6730 = vpack.c.b16 %v6650, %v6646
        %v6731 = vpack.c.b16 %v6655, %v6651
        %v6732 = vpack.c.b16 %v6656, %v6652
        %v6733 = vpack.c.b16 %v6657, %v6653
        %v6734 = vpack.c.b16 %v6658, %v6654
        %v6735 = vpack.c.b16 %v6663, %v6659
        %v6736 = vpack.c.b16 %v6664, %v6660
        %v6737 = vpack.c.b16 %v6665, %v6661
        %v6738 = vpack.c.b16 %v6666, %v6662
        %v6739 = vpack.c.b16 %v6671, %v6667
        %v6740 = vpack.c.b16 %v6672, %v6668
        %v6741 = vpack.c.b16 %v6673, %v6669
        %v6742 = vpack.c.b16 %v6674, %v6670
        %v6743 = vpack.c.b16 %v6679, %v6675
        %v6744 = vpack.c.b16 %v6680, %v6676
        %v6745 = vpack.c.b16 %v6681, %v6677
        %v6746 = vpack.c.b16 %v6682, %v6678
        %6811 = vmatprep.subr.bf16.mxu0 %v6684
        %6812 = vmatpush1.bf16.msra.mxu0 %v6683
        %6813 = vmatprep.subr.bf16.mxu0 %v6688
        %6814 = vmatpush1.bf16.msra.mxu0 %v6687
        %6815 = vmatprep.subr.bf16.mxu0 %v6692
        %6816 = vmatpush1.bf16.msra.mxu0 %v6691
        %6817 = vmatprep.subr.bf16.mxu0 %v6696
        %6818 = vmatpush1.bf16.msra.mxu0 %v6695
        %6819 = vmatprep.subr.bf16.mxu0 %v6700
        %6820 = vmatpush1.bf16.msra.mxu0 %v6699
        %6821 = vmatprep.subr.bf16.mxu0 %v6704
        %6822 = vmatpush1.bf16.msra.mxu0 %v6703
        %6823 = vmatprep.subr.bf16.mxu0 %v6708
        %6824 = vmatpush1.bf16.msra.mxu0 %v6707
        %6825 = vmatprep.subr.bf16.mxu0 %v6712
        %6826 = vmatpush1.bf16.msra.mxu0 %v6711
        %6827 = vmatprep.subr.bf16.mxu0 %v6716
        %6828 = vmatpush1.bf16.msra.mxu0 %v6715
        %6829 = vmatprep.subr.bf16.mxu0 %v6720
        %6830 = vmatpush1.bf16.msra.mxu0 %v6719
        %6831 = vmatprep.subr.bf16.mxu0 %v6724
        %6832 = vmatpush1.bf16.msra.mxu0 %v6723
        %6833 = vmatprep.subr.bf16.mxu0 %v6728
        %6834 = vmatpush1.bf16.msra.mxu0 %v6727
        %6835 = vmatprep.subr.bf16.mxu0 %v6732
        %6836 = vmatpush1.bf16.msra.mxu0 %v6731
        %6837 = vmatprep.subr.bf16.mxu0 %v6736
        %6838 = vmatpush1.bf16.msra.mxu0 %v6735
        %6839 = vmatprep.subr.bf16.mxu0 %v6740
        %6840 = vmatpush1.bf16.msra.mxu0 %v6739
        %6841 = vmatprep.subr.bf16.mxu0 %v6744
        %6842 = vmatpush1.bf16.msra.mxu0 %v6743
        %6843 = vmatprep.mubr.bf16.mxu0 %v6404
        %6844 = vmatmul.mubr.bf16.gmra.mrb[0].mxu0 %v6403
        %v6845 = vpop.f32.mrb[0].mxu0
        %v6846 = vadd.f32 %v6474, %v6845
        %v6847 = vpop.f32.mrb[0].mxu0
        %v6848 = vadd.f32 %v6478, %v6847
        %v6849 = vpop.f32.mrb[0].mxu0
        %v6850 = vpop.f32.mrb[0].mxu0
        %6851 = vdwg.mxu0
        %6852 = vmatprep.subr.bf16.mxu0 %v6686
        %6853 = vmatpush1.bf16.msra.mxu0 %v6685
        %6854 = vmatprep.subr.bf16.mxu0 %v6690
        %6855 = vmatpush1.bf16.msra.mxu0 %v6689
        %6856 = vmatprep.subr.bf16.mxu0 %v6694
        %6857 = vmatpush1.bf16.msra.mxu0 %v6693
        %6858 = vmatprep.subr.bf16.mxu0 %v6698
        %6859 = vmatpush1.bf16.msra.mxu0 %v6697
        %6860 = vmatprep.subr.bf16.mxu0 %v6702
        %6861 = vmatpush1.bf16.msra.mxu0 %v6701
        %6862 = vmatprep.subr.bf16.mxu0 %v6706
        %6863 = vmatpush1.bf16.msra.mxu0 %v6705
        %6864 = vmatprep.subr.bf16.mxu0 %v6710
        %6865 = vmatpush1.bf16.msra.mxu0 %v6709
        %6866 = vmatprep.subr.bf16.mxu0 %v6714
        %6867 = vmatpush1.bf16.msra.mxu0 %v6713
        %6868 = vmatprep.subr.bf16.mxu0 %v6718
        %6869 = vmatpush1.bf16.msra.mxu0 %v6717
        %6870 = vmatprep.subr.bf16.mxu0 %v6722
        %6871 = vmatpush1.bf16.msra.mxu0 %v6721
        %6872 = vmatprep.subr.bf16.mxu0 %v6726
        %6873 = vmatpush1.bf16.msra.mxu0 %v6725
        %6874 = vmatprep.subr.bf16.mxu0 %v6730
        %6875 = vmatpush1.bf16.msra.mxu0 %v6729
        %6876 = vmatprep.subr.bf16.mxu0 %v6734
        %6877 = vmatpush1.bf16.msra.mxu0 %v6733
        %6878 = vmatprep.subr.bf16.mxu0 %v6738
        %6879 = vmatpush1.bf16.msra.mxu0 %v6737
        %6880 = vmatprep.subr.bf16.mxu0 %v6742
        %6881 = vmatpush1.bf16.msra.mxu0 %v6741
        %6882 = vmatprep.subr.bf16.mxu0 %v6746
        %6883 = vmatpush1.bf16.msra.mxu0 %v6745
        %6884 = vmatprep.mubr.bf16.mxu0 %v6404
        %6885 = vmatmul.mubr.bf16.gmra.mrb[0].mxu0 %v6403
        %v6886 = vpop.f32.mrb[0].mxu0
        %v6887 = vadd.f32 %v6482, %v6886
        %v6888 = vpop.f32.mrb[0].mxu0
        %v6889 = vadd.f32 %v6486, %v6888
        %v6890 = vpop.f32.mrb[0].mxu0
        %v6891 = vpop.f32.mrb[0].mxu0
        %6892 = vdwg.mxu0
        %v6893 = vmax.f32 %v6846, 0.0
        %v6894 = vmax.f32 %v6848, 0.0
        %v6895 = vmax.f32 %v6887, 0.0
        %v6896 = vmax.f32 %v6889, 0.0
        %v6897 = vpack.c.bf16 %v6893, %v6893
        %v6898 = vpack.c.bf16 %v6894, %v6894
        %v6899 = vpack.c.bf16 %v6895, %v6895
        %v6900 = vpack.c.bf16 %v6896, %v6896
        %v6901 = vld [vmem:[#allocation5] sm:$0xff]
        %v6902 = vld [vmem:[#allocation5 + $0x8] sm:$0xff]
        %v6903 = vld [vmem:[#allocation5 + $0x10] sm:$0xff]
        %v6904 = vld [vmem:[#allocation5 + $0x18] sm:$0xff]
        %v6905 = vld [vmem:[#allocation5 + $0x20] sm:$0xff]
        %v6906 = vld [vmem:[#allocation5 + $0x28] sm:$0xff]
        %v6907 = vld [vmem:[#allocation5 + $0x30] sm:$0xff]
        %v6908 = vld [vmem:[#allocation5 + $0x38] sm:$0xff]
        %v6909 = vld [vmem:[#allocation5 + $0x40] sm:$0xff]
        %v6910 = vld [vmem:[#allocation5 + $0x48] sm:$0xff]
        %v6911 = vld [vmem:[#allocation5 + $0x50] sm:$0xff]
        %v6912 = vld [vmem:[#allocation5 + $0x58] sm:$0xff]
        %v6913 = vld [vmem:[#allocation5 + $0x60] sm:$0xff]
        %v6914 = vld [vmem:[#allocation5 + $0x68] sm:$0xff]
        %v6915 = vld [vmem:[#allocation5 + $0x70] sm:$0xff]
        %v6916 = vld [vmem:[#allocation5 + $0x78] sm:$0xff]
        %v6917 = vld [vmem:[#allocation5 + $0x80] sm:$0xff]
        %v6918 = vld [vmem:[#allocation5 + $0x88] sm:$0xff]
        %v6919 = vld [vmem:[#allocation5 + $0x90] sm:$0xff]
        %v6920 = vld [vmem:[#allocation5 + $0x98] sm:$0xff]
        %v6921 = vld [vmem:[#allocation5 + $0xa0] sm:$0xff]
        %v6922 = vld [vmem:[#allocation5 + $0xa8] sm:$0xff]
        %v6923 = vld [vmem:[#allocation5 + $0xb0] sm:$0xff]
        %v6924 = vld [vmem:[#allocation5 + $0xb8] sm:$0xff]
        %v6925 = vld [vmem:[#allocation5 + $0xc0] sm:$0xff]
        %v6926 = vld [vmem:[#allocation5 + $0xc8] sm:$0xff]
        %v6927 = vld [vmem:[#allocation5 + $0xd0] sm:$0xff]
        %v6928 = vld [vmem:[#allocation5 + $0xd8] sm:$0xff]
        %v6929 = vld [vmem:[#allocation5 + $0xe0] sm:$0xff]
        %v6930 = vld [vmem:[#allocation5 + $0xe8] sm:$0xff]
        %v6931 = vld [vmem:[#allocation5 + $0xf0] sm:$0xff]
        %v6932 = vld [vmem:[#allocation5 + $0xf8] sm:$0xff]
        %v6933 = vld [vmem:[#allocation5 + $0x100] sm:$0xff]
        %v6934 = vld [vmem:[#allocation5 + $0x108] sm:$0xff]
        %v6935 = vld [vmem:[#allocation5 + $0x110] sm:$0xff]
        %v6936 = vld [vmem:[#allocation5 + $0x118] sm:$0xff]
        %v6937 = vld [vmem:[#allocation5 + $0x120] sm:$0xff]
        %v6938 = vld [vmem:[#allocation5 + $0x128] sm:$0xff]
        %v6939 = vld [vmem:[#allocation5 + $0x130] sm:$0xff]
        %v6940 = vld [vmem:[#allocation5 + $0x138] sm:$0xff]
        %v6941 = vld [vmem:[#allocation5 + $0x140] sm:$0xff]
        %v6942 = vld [vmem:[#allocation5 + $0x148] sm:$0xff]
        %v6943 = vld [vmem:[#allocation5 + $0x150] sm:$0xff]
        %v6944 = vld [vmem:[#allocation5 + $0x158] sm:$0xff]
        %v6945 = vld [vmem:[#allocation5 + $0x160] sm:$0xff]
        %v6946 = vld [vmem:[#allocation5 + $0x168] sm:$0xff]
        %v6947 = vld [vmem:[#allocation5 + $0x170] sm:$0xff]
        %v6948 = vld [vmem:[#allocation5 + $0x178] sm:$0xff]
        %v6949 = vld [vmem:[#allocation5 + $0x180] sm:$0xff]
        %v6950 = vld [vmem:[#allocation5 + $0x188] sm:$0xff]
        %v6951 = vld [vmem:[#allocation5 + $0x190] sm:$0xff]
        %v6952 = vld [vmem:[#allocation5 + $0x198] sm:$0xff]
        %v6953 = vld [vmem:[#allocation5 + $0x1a0] sm:$0xff]
        %v6954 = vld [vmem:[#allocation5 + $0x1a8] sm:$0xff]
        %v6955 = vld [vmem:[#allocation5 + $0x1b0] sm:$0xff]
        %v6956 = vld [vmem:[#allocation5 + $0x1b8] sm:$0xff]
        %v6957 = vld [vmem:[#allocation5 + $0x1c0] sm:$0xff]
        %v6958 = vld [vmem:[#allocation5 + $0x1c8] sm:$0xff]
        %v6959 = vld [vmem:[#allocation5 + $0x1d0] sm:$0xff]
        %v6960 = vld [vmem:[#allocation5 + $0x1d8] sm:$0xff]
        %v6961 = vld [vmem:[#allocation5 + $0x1e0] sm:$0xff]
        %v6962 = vld [vmem:[#allocation5 + $0x1e8] sm:$0xff]
        %v6963 = vld [vmem:[#allocation5 + $0x1f0] sm:$0xff]
        %v6964 = vld [vmem:[#allocation5 + $0x1f8] sm:$0xff]
        %v6965 = vld [vmem:[%s16] sm:$0x3]
        %v6967 = vlaneseq
        %v6968 = vshrl.u32 %v6967, 7
        %v6969 = vsub.s32 0, %v6968
        %v6970 = vrot.slane %v6965, %v6969
        %v6971 = vlaneseq
        %v6972 = vshrl.u32 %v6971, 7
        %v6973 = vsub.s32 1, %v6972
        %v6974 = vrot.slane %v6965, %v6973
        %v7041 = vunpack.c.l.b16 %v6901
        %v7042 = vunpack.c.h.b16 %v6901
        %v7043 = vunpack.c.l.b16 %v6902
        %v7044 = vunpack.c.h.b16 %v6902
        %v7045 = vunpack.c.l.b16 %v6903
        %v7046 = vunpack.c.h.b16 %v6903
        %v7047 = vunpack.c.l.b16 %v6904
        %v7048 = vunpack.c.h.b16 %v6904
        %v7049 = vunpack.c.l.b16 %v6905
        %v7050 = vunpack.c.h.b16 %v6905
        %v7051 = vunpack.c.l.b16 %v6906
        %v7052 = vunpack.c.h.b16 %v6906
        %v7053 = vunpack.c.l.b16 %v6907
        %v7054 = vunpack.c.h.b16 %v6907
        %v7055 = vunpack.c.l.b16 %v6908
        %v7056 = vunpack.c.h.b16 %v6908
        %v7057 = vunpack.c.l.b16 %v6909
        %v7058 = vunpack.c.h.b16 %v6909
        %v7059 = vunpack.c.l.b16 %v6910
        %v7060 = vunpack.c.h.b16 %v6910
        %v7061 = vunpack.c.l.b16 %v6911
        %v7062 = vunpack.c.h.b16 %v6911
        %v7063 = vunpack.c.l.b16 %v6912
        %v7064 = vunpack.c.h.b16 %v6912
        %v7065 = vunpack.c.l.b16 %v6913
        %v7066 = vunpack.c.h.b16 %v6913
        %v7067 = vunpack.c.l.b16 %v6914
        %v7068 = vunpack.c.h.b16 %v6914
        %v7069 = vunpack.c.l.b16 %v6915
        %v7070 = vunpack.c.h.b16 %v6915
        %v7071 = vunpack.c.l.b16 %v6916
        %v7072 = vunpack.c.h.b16 %v6916
        %v7073 = vunpack.c.l.b16 %v6917
        %v7074 = vunpack.c.h.b16 %v6917
        %v7075 = vunpack.c.l.b16 %v6918
        %v7076 = vunpack.c.h.b16 %v6918
        %v7077 = vunpack.c.l.b16 %v6919
        %v7078 = vunpack.c.h.b16 %v6919
        %v7079 = vunpack.c.l.b16 %v6920
        %v7080 = vunpack.c.h.b16 %v6920
        %v7081 = vunpack.c.l.b16 %v6921
        %v7082 = vunpack.c.h.b16 %v6921
        %v7083 = vunpack.c.l.b16 %v6922
        %v7084 = vunpack.c.h.b16 %v6922
        %v7085 = vunpack.c.l.b16 %v6923
        %v7086 = vunpack.c.h.b16 %v6923
        %v7087 = vunpack.c.l.b16 %v6924
        %v7088 = vunpack.c.h.b16 %v6924
        %v7089 = vunpack.c.l.b16 %v6925
        %v7090 = vunpack.c.h.b16 %v6925
        %v7091 = vunpack.c.l.b16 %v6926
        %v7092 = vunpack.c.h.b16 %v6926
        %v7093 = vunpack.c.l.b16 %v6927
        %v7094 = vunpack.c.h.b16 %v6927
        %v7095 = vunpack.c.l.b16 %v6928
        %v7096 = vunpack.c.h.b16 %v6928
        %v7097 = vunpack.c.l.b16 %v6929
        %v7098 = vunpack.c.h.b16 %v6929
        %v7099 = vunpack.c.l.b16 %v6930
        %v7100 = vunpack.c.h.b16 %v6930
        %v7101 = vunpack.c.l.b16 %v6931
        %v7102 = vunpack.c.h.b16 %v6931
        %v7103 = vunpack.c.l.b16 %v6932
        %v7104 = vunpack.c.h.b16 %v6932
        %v7105 = vunpack.c.l.b16 %v6933
        %v7106 = vunpack.c.h.b16 %v6933
        %v7107 = vunpack.c.l.b16 %v6934
        %v7108 = vunpack.c.h.b16 %v6934
        %v7109 = vunpack.c.l.b16 %v6935
        %v7110 = vunpack.c.h.b16 %v6935
        %v7111 = vunpack.c.l.b16 %v6936
        %v7112 = vunpack.c.h.b16 %v6936
        %v7113 = vunpack.c.l.b16 %v6937
        %v7114 = vunpack.c.h.b16 %v6937
        %v7115 = vunpack.c.l.b16 %v6938
        %v7116 = vunpack.c.h.b16 %v6938
        %v7117 = vunpack.c.l.b16 %v6939
        %v7118 = vunpack.c.h.b16 %v6939
        %v7119 = vunpack.c.l.b16 %v6940
        %v7120 = vunpack.c.h.b16 %v6940
        %v7121 = vunpack.c.l.b16 %v6941
        %v7122 = vunpack.c.h.b16 %v6941
        %v7123 = vunpack.c.l.b16 %v6942
        %v7124 = vunpack.c.h.b16 %v6942
        %v7125 = vunpack.c.l.b16 %v6943
        %v7126 = vunpack.c.h.b16 %v6943
        %v7127 = vunpack.c.l.b16 %v6944
        %v7128 = vunpack.c.h.b16 %v6944
        %v7129 = vunpack.c.l.b16 %v6945
        %v7130 = vunpack.c.h.b16 %v6945
        %v7131 = vunpack.c.l.b16 %v6946
        %v7132 = vunpack.c.h.b16 %v6946
        %v7133 = vunpack.c.l.b16 %v6947
        %v7134 = vunpack.c.h.b16 %v6947
        %v7135 = vunpack.c.l.b16 %v6948
        %v7136 = vunpack.c.h.b16 %v6948
        %v7137 = vunpack.c.l.b16 %v6949
        %v7138 = vunpack.c.h.b16 %v6949
        %v7139 = vunpack.c.l.b16 %v6950
        %v7140 = vunpack.c.h.b16 %v6950
        %v7141 = vunpack.c.l.b16 %v6951
        %v7142 = vunpack.c.h.b16 %v6951
        %v7143 = vunpack.c.l.b16 %v6952
        %v7144 = vunpack.c.h.b16 %v6952
        %v7145 = vunpack.c.l.b16 %v6953
        %v7146 = vunpack.c.h.b16 %v6953
        %v7147 = vunpack.c.l.b16 %v6954
        %v7148 = vunpack.c.h.b16 %v6954
        %v7149 = vunpack.c.l.b16 %v6955
        %v7150 = vunpack.c.h.b16 %v6955
        %v7151 = vunpack.c.l.b16 %v6956
        %v7152 = vunpack.c.h.b16 %v6956
        %v7153 = vunpack.c.l.b16 %v6957
        %v7154 = vunpack.c.h.b16 %v6957
        %v7155 = vunpack.c.l.b16 %v6958
        %v7156 = vunpack.c.h.b16 %v6958
        %v7157 = vunpack.c.l.b16 %v6959
        %v7158 = vunpack.c.h.b16 %v6959
        %v7159 = vunpack.c.l.b16 %v6960
        %v7160 = vunpack.c.h.b16 %v6960
        %v7161 = vunpack.c.l.b16 %v6961
        %v7162 = vunpack.c.h.b16 %v6961
        %v7163 = vunpack.c.l.b16 %v6962
        %v7164 = vunpack.c.h.b16 %v6962
        %v7165 = vunpack.c.l.b16 %v6963
        %v7166 = vunpack.c.h.b16 %v6963
        %v7167 = vunpack.c.l.b16 %v6964
        %v7168 = vunpack.c.h.b16 %v6964
        %v7169 = vpack.c.b16 %v7043, %v7041
        %v7170 = vpack.c.b16 %v7044, %v7042
        %v7171 = vpack.c.b16 %v7047, %v7045
        %v7172 = vpack.c.b16 %v7048, %v7046
        %v7173 = vpack.c.b16 %v7051, %v7049
        %v7174 = vpack.c.b16 %v7052, %v7050
        %v7175 = vpack.c.b16 %v7055, %v7053
        %v7176 = vpack.c.b16 %v7056, %v7054
        %v7177 = vpack.c.b16 %v7059, %v7057
        %v7178 = vpack.c.b16 %v7060, %v7058
        %v7179 = vpack.c.b16 %v7063, %v7061
        %v7180 = vpack.c.b16 %v7064, %v7062
        %v7181 = vpack.c.b16 %v7067, %v7065
        %v7182 = vpack.c.b16 %v7068, %v7066
        %v7183 = vpack.c.b16 %v7071, %v7069
        %v7184 = vpack.c.b16 %v7072, %v7070
        %v7185 = vpack.c.b16 %v7075, %v7073
        %v7186 = vpack.c.b16 %v7076, %v7074
        %v7187 = vpack.c.b16 %v7079, %v7077
        %v7188 = vpack.c.b16 %v7080, %v7078
        %v7189 = vpack.c.b16 %v7083, %v7081
        %v7190 = vpack.c.b16 %v7084, %v7082
        %v7191 = vpack.c.b16 %v7087, %v7085
        %v7192 = vpack.c.b16 %v7088, %v7086
        %v7193 = vpack.c.b16 %v7091, %v7089
        %v7194 = vpack.c.b16 %v7092, %v7090
        %v7195 = vpack.c.b16 %v7095, %v7093
        %v7196 = vpack.c.b16 %v7096, %v7094
        %v7197 = vpack.c.b16 %v7099, %v7097
        %v7198 = vpack.c.b16 %v7100, %v7098
        %v7199 = vpack.c.b16 %v7103, %v7101
        %v7200 = vpack.c.b16 %v7104, %v7102
        %v7201 = vpack.c.b16 %v7107, %v7105
        %v7202 = vpack.c.b16 %v7108, %v7106
        %v7203 = vpack.c.b16 %v7111, %v7109
        %v7204 = vpack.c.b16 %v7112, %v7110
        %v7205 = vpack.c.b16 %v7115, %v7113
        %v7206 = vpack.c.b16 %v7116, %v7114
        %v7207 = vpack.c.b16 %v7119, %v7117
        %v7208 = vpack.c.b16 %v7120, %v7118
        %v7209 = vpack.c.b16 %v7123, %v7121
        %v7210 = vpack.c.b16 %v7124, %v7122
        %v7211 = vpack.c.b16 %v7127, %v7125
        %v7212 = vpack.c.b16 %v7128, %v7126
        %v7213 = vpack.c.b16 %v7131, %v7129
        %v7214 = vpack.c.b16 %v7132, %v7130
        %v7215 = vpack.c.b16 %v7135, %v7133
        %v7216 = vpack.c.b16 %v7136, %v7134
        %v7217 = vpack.c.b16 %v7139, %v7137
        %v7218 = vpack.c.b16 %v7140, %v7138
        %v7219 = vpack.c.b16 %v7143, %v7141
        %v7220 = vpack.c.b16 %v7144, %v7142
        %v7221 = vpack.c.b16 %v7147, %v7145
        %v7222 = vpack.c.b16 %v7148, %v7146
        %v7223 = vpack.c.b16 %v7151, %v7149
        %v7224 = vpack.c.b16 %v7152, %v7150
        %v7225 = vpack.c.b16 %v7155, %v7153
        %v7226 = vpack.c.b16 %v7156, %v7154
        %v7227 = vpack.c.b16 %v7159, %v7157
        %v7228 = vpack.c.b16 %v7160, %v7158
        %v7229 = vpack.c.b16 %v7163, %v7161
        %v7230 = vpack.c.b16 %v7164, %v7162
        %v7231 = vpack.c.b16 %v7167, %v7165
        %v7232 = vpack.c.b16 %v7168, %v7166
        %7297 = vmatprep.subr.bf16.mxu0 %v7170
        %7298 = vmatpush1.bf16.msra.mxu0 %v7169
        %7299 = vmatprep.subr.bf16.mxu0 %v7172
        %7300 = vmatpush1.bf16.msra.mxu0 %v7171
        %7301 = vmatprep.subr.bf16.mxu0 %v7174
        %7302 = vmatpush1.bf16.msra.mxu0 %v7173
        %7303 = vmatprep.subr.bf16.mxu0 %v7176
        %7304 = vmatpush1.bf16.msra.mxu0 %v7175
        %7305 = vmatprep.subr.bf16.mxu0 %v7178
        %7306 = vmatpush1.bf16.msra.mxu0 %v7177
        %7307 = vmatprep.subr.bf16.mxu0 %v7180
        %7308 = vmatpush1.bf16.msra.mxu0 %v7179
        %7309 = vmatprep.subr.bf16.mxu0 %v7182
        %7310 = vmatpush1.bf16.msra.mxu0 %v7181
        %7311 = vmatprep.subr.bf16.mxu0 %v7184
        %7312 = vmatpush1.bf16.msra.mxu0 %v7183
        %7313 = vmatprep.subr.bf16.mxu0 %v7186
        %7314 = vmatpush1.bf16.msra.mxu0 %v7185
        %7315 = vmatprep.subr.bf16.mxu0 %v7188
        %7316 = vmatpush1.bf16.msra.mxu0 %v7187
        %7317 = vmatprep.subr.bf16.mxu0 %v7190
        %7318 = vmatpush1.bf16.msra.mxu0 %v7189
        %7319 = vmatprep.subr.bf16.mxu0 %v7192
        %7320 = vmatpush1.bf16.msra.mxu0 %v7191
        %7321 = vmatprep.subr.bf16.mxu0 %v7194
        %7322 = vmatpush1.bf16.msra.mxu0 %v7193
        %7323 = vmatprep.subr.bf16.mxu0 %v7196
        %7324 = vmatpush1.bf16.msra.mxu0 %v7195
        %7325 = vmatprep.subr.bf16.mxu0 %v7198
        %7326 = vmatpush1.bf16.msra.mxu0 %v7197
        %7327 = vmatprep.subr.bf16.mxu0 %v7200
        %7328 = vmatpush1.bf16.msra.mxu0 %v7199
        %7329 = vmatprep.mubr.bf16.mxu0 %v6898
        %7330 = vmatmul.mubr.bf16.gmra.mrb[0].mxu0 %v6897
        %v7331 = vpop.f32.mrb[0].mxu0
        %v7332 = vadd.f32 %v6970, %v7331
        %v7333 = vpop.f32.mrb[0].mxu0
        %v7334 = vadd.f32 %v6974, %v7333
        %v7335 = vpop.f32.mrb[0].mxu0
        %v7336 = vpop.f32.mrb[0].mxu0
        %7337 = vdwg.mxu0
        %7338 = vmatprep.subr.bf16.mxu0 %v7202
        %7339 = vmatpush1.bf16.msra.mxu0 %v7201
        %7340 = vmatprep.subr.bf16.mxu0 %v7204
        %7341 = vmatpush1.bf16.msra.mxu0 %v7203
        %7342 = vmatprep.subr.bf16.mxu0 %v7206
        %7343 = vmatpush1.bf16.msra.mxu0 %v7205
        %7344 = vmatprep.subr.bf16.mxu0 %v7208
        %7345 = vmatpush1.bf16.msra.mxu0 %v7207
        %7346 = vmatprep.subr.bf16.mxu0 %v7210
        %7347 = vmatpush1.bf16.msra.mxu0 %v7209
        %7348 = vmatprep.subr.bf16.mxu0 %v7212
        %7349 = vmatpush1.bf16.msra.mxu0 %v7211
        %7350 = vmatprep.subr.bf16.mxu0 %v7214
        %7351 = vmatpush1.bf16.msra.mxu0 %v7213
        %7352 = vmatprep.subr.bf16.mxu0 %v7216
        %7353 = vmatpush1.bf16.msra.mxu0 %v7215
        %7354 = vmatprep.subr.bf16.mxu0 %v7218
        %7355 = vmatpush1.bf16.msra.mxu0 %v7217
        %7356 = vmatprep.subr.bf16.mxu0 %v7220
        %7357 = vmatpush1.bf16.msra.mxu0 %v7219
        %7358 = vmatprep.subr.bf16.mxu0 %v7222
        %7359 = vmatpush1.bf16.msra.mxu0 %v7221
        %7360 = vmatprep.subr.bf16.mxu0 %v7224
        %7361 = vmatpush1.bf16.msra.mxu0 %v7223
        %7362 = vmatprep.subr.bf16.mxu0 %v7226
        %7363 = vmatpush1.bf16.msra.mxu0 %v7225
        %7364 = vmatprep.subr.bf16.mxu0 %v7228
        %7365 = vmatpush1.bf16.msra.mxu0 %v7227
        %7366 = vmatprep.subr.bf16.mxu0 %v7230
        %7367 = vmatpush1.bf16.msra.mxu0 %v7229
        %7368 = vmatprep.subr.bf16.mxu0 %v7232
        %7369 = vmatpush1.bf16.msra.mxu0 %v7231
        %7370 = vmatprep.mubr.bf16.mxu0 %v6900
        %7371 = vmatmul.mubr.bf16.gmra.mrb[0].mxu0 %v6899
        %v7372 = vpop.f32.mrb[0].mxu0
        %v7373 = vadd.f32 %v7332, %v7372
        %v7374 = vpop.f32.mrb[0].mxu0
        %v7375 = vadd.f32 %v7334, %v7374
        %v7376 = vpop.f32.mrb[0].mxu0
        %v7377 = vpop.f32.mrb[0].mxu0
        %7378 = vdwg.mxu0
        %v7379 = vadd.f32 %v6401, %v7373
        %v7380 = vadd.f32 %v6402, %v7375
        %v7381 = vld [vmem:[%s17] sm:$0x3]
        %v7382 = vld [vmem:[%s18] sm:$0x3]
        %v7383 = vadd.f32 %v7379, %v7380
        %7384 = vadd.xlane.f32.xlu0 %v7383
        %v7385 = vpop.xlane.xlu0 %7384
        %v7386 = vmul.f32 %v7385, %v6363
        %v7387 = vsub.f32 %v7379, %v7386
        %v7388 = vsub.f32 %v7380, %v7386
        %v7389 = vmul.f32 %v7387, %v7387
        %v7390 = vmul.f32 %v7388, %v7388
        %v7391 = vadd.f32 %v7389, %v7390
        %7392 = vadd.xlane.f32.xlu0 %v7391
        %v7393 = vpop.xlane.xlu0 %7392
        %v7394 = vmul.f32 %v7393, %v6363
        %v7395 = vadd.f32 %v7394, 1e-05
        %v7396 = vrsqrt.pop %v7395
        %v7397 = vmul.f32 %v7387, %v7396
        %v7398 = vmul.f32 %v7388, %v7396
        %v7400 = vlaneseq
        %v7401 = vshrl.u32 %v7400, 7
        %v7402 = vsub.s32 0, %v7401
        %v7403 = vrot.slane %v7381, %v7402
        %v7404 = vlaneseq
        %v7405 = vshrl.u32 %v7404, 7
        %v7406 = vsub.s32 1, %v7405
        %v7407 = vrot.slane %v7381, %v7406
        %v7410 = vmul.f32 %v7397, %v7403
        %v7411 = vmul.f32 %v7398, %v7407
        %v7413 = vlaneseq
        %v7414 = vshrl.u32 %v7413, 7
        %v7415 = vsub.s32 0, %v7414
        %v7416 = vrot.slane %v7382, %v7415
        %v7417 = vlaneseq
        %v7418 = vshrl.u32 %v7417, 7
        %v7419 = vsub.s32 1, %v7418
        %v7420 = vrot.slane %v7382, %v7419
        %v7423 = vadd.f32 %v7410, %v7416
        %v7424 = vadd.f32 %v7411, %v7420
        %v7425 = vld [vmem:[%s19] sm:$0xff]
        %v7426 = vld [vmem:[%s19 + $0x8] sm:$0xff]
        %v7427 = vld [vmem:[%s19 + $0x10] sm:$0xff]
        %v7428 = vld [vmem:[%s19 + $0x18] sm:$0xff]
        %v7429 = vld [vmem:[%s19 + $0x20] sm:$0xff]
        %v7430 = vld [vmem:[%s19 + $0x28] sm:$0xff]
        %v7431 = vld [vmem:[%s19 + $0x30] sm:$0xff]
        %v7432 = vld [vmem:[%s19 + $0x38] sm:$0xff]
        %v7433 = vld [vmem:[%s19 + $0x40] sm:$0xff]
        %v7434 = vld [vmem:[%s19 + $0x48] sm:$0xff]
        %v7435 = vld [vmem:[%s19 + $0x50] sm:$0xff]
        %v7436 = vld [vmem:[%s19 + $0x58] sm:$0xff]
        %v7437 = vld [vmem:[%s19 + $0x60] sm:$0xff]
        %v7438 = vld [vmem:[%s19 + $0x68] sm:$0xff]
        %v7439 = vld [vmem:[%s19 + $0x70] sm:$0xff]
        %v7440 = vld [vmem:[%s19 + $0x78] sm:$0xff]
        %v7441 = vld [vmem:[%s19 + $0x80] sm:$0xff]
        %v7442 = vld [vmem:[%s19 + $0x88] sm:$0xff]
        %v7443 = vld [vmem:[%s19 + $0x90] sm:$0xff]
        %v7444 = vld [vmem:[%s19 + $0x98] sm:$0xff]
        %v7445 = vld [vmem:[%s19 + $0xa0] sm:$0xff]
        %v7446 = vld [vmem:[%s19 + $0xa8] sm:$0xff]
        %v7447 = vld [vmem:[%s19 + $0xb0] sm:$0xff]
        %v7448 = vld [vmem:[%s19 + $0xb8] sm:$0xff]
        %v7449 = vld [vmem:[%s19 + $0xc0] sm:$0xff]
        %v7450 = vld [vmem:[%s19 + $0xc8] sm:$0xff]
        %v7451 = vld [vmem:[%s19 + $0xd0] sm:$0xff]
        %v7452 = vld [vmem:[%s19 + $0xd8] sm:$0xff]
        %v7453 = vld [vmem:[%s19 + $0xe0] sm:$0xff]
        %v7454 = vld [vmem:[%s19 + $0xe8] sm:$0xff]
        %v7455 = vld [vmem:[%s19 + $0xf0] sm:$0xff]
        %v7456 = vld [vmem:[%s19 + $0xf8] sm:$0xff]
        %v7457 = vld [vmem:[#allocation2] sm:$0x1]
        %v7459 = vlaneseq
        %v7460 = vshrl.u32 %v7459, 7
        %v7461 = vsub.s32 0, %v7460
        %v7462 = vrot.slane %v7457, %v7461
        %7464 = vmatprep.subr.mxu0 0.0
        %7465 = vmatpush1.msra.mxu0 %v7425
        %7466 = vmatprep.subr.mxu0 0.0
        %7467 = vmatpush1.msra.mxu0 %v7426
        %7468 = vmatprep.subr.mxu0 0.0
        %7469 = vmatpush1.msra.mxu0 %v7427
        %7470 = vmatprep.subr.mxu0 0.0
        %7471 = vmatpush1.msra.mxu0 %v7428
        %7472 = vmatprep.subr.mxu0 0.0
        %7473 = vmatpush1.msra.mxu0 %v7429
        %7474 = vmatprep.subr.mxu0 0.0
        %7475 = vmatpush1.msra.mxu0 %v7430
        %7476 = vmatprep.subr.mxu0 0.0
        %7477 = vmatpush1.msra.mxu0 %v7431
        %7478 = vmatprep.subr.mxu0 0.0
        %7479 = vmatpush1.msra.mxu0 %v7432
        %7480 = vmatprep.subr.mxu0 0.0
        %7481 = vmatpush1.msra.mxu0 %v7433
        %7482 = vmatprep.subr.mxu0 0.0
        %7483 = vmatpush1.msra.mxu0 %v7434
        %7484 = vmatprep.subr.mxu0 0.0
        %7485 = vmatpush1.msra.mxu0 %v7435
        %7486 = vmatprep.subr.mxu0 0.0
        %7487 = vmatpush1.msra.mxu0 %v7436
        %7488 = vmatprep.subr.mxu0 0.0
        %7489 = vmatpush1.msra.mxu0 %v7437
        %7490 = vmatprep.subr.mxu0 0.0
        %7491 = vmatpush1.msra.mxu0 %v7438
        %7492 = vmatprep.subr.mxu0 0.0
        %7493 = vmatpush1.msra.mxu0 %v7439
        %7494 = vmatprep.subr.mxu0 0.0
        %7495 = vmatpush1.msra.mxu0 %v7440
        %7496 = vmatprep.subr.mxu0 0.0
        %7497 = vmatpush1.msra.mxu0 %v7441
        %7498 = vmatprep.subr.mxu0 0.0
        %7499 = vmatpush1.msra.mxu0 %v7442
        %7500 = vmatprep.subr.mxu0 0.0
        %7501 = vmatpush1.msra.mxu0 %v7443
        %7502 = vmatprep.subr.mxu0 0.0
        %7503 = vmatpush1.msra.mxu0 %v7444
        %7504 = vmatprep.subr.mxu0 0.0
        %7505 = vmatpush1.msra.mxu0 %v7445
        %7506 = vmatprep.subr.mxu0 0.0
        %7507 = vmatpush1.msra.mxu0 %v7446
        %7508 = vmatprep.subr.mxu0 0.0
        %7509 = vmatpush1.msra.mxu0 %v7447
        %7510 = vmatprep.subr.mxu0 0.0
        %7511 = vmatpush1.msra.mxu0 %v7448
        %7512 = vmatprep.subr.mxu0 0.0
        %7513 = vmatpush1.msra.mxu0 %v7449
        %7514 = vmatprep.subr.mxu0 0.0
        %7515 = vmatpush1.msra.mxu0 %v7450
        %7516 = vmatprep.subr.mxu0 0.0
        %7517 = vmatpush1.msra.mxu0 %v7451
        %7518 = vmatprep.subr.mxu0 0.0
        %7519 = vmatpush1.msra.mxu0 %v7452
        %7520 = vmatprep.subr.mxu0 0.0
        %7521 = vmatpush1.msra.mxu0 %v7453
        %7522 = vmatprep.subr.mxu0 0.0
        %7523 = vmatpush1.msra.mxu0 %v7454
        %7524 = vmatprep.subr.mxu0 0.0
        %7525 = vmatpush1.msra.mxu0 %v7455
        %7526 = vmatprep.subr.mxu0 0.0
        %7527 = vmatpush1.msra.mxu0 %v7456
        %7528 = vmatprep.mubr.f32.mxu0 %v7424
        %7529 = vmatmul.mubr.f32.gmra.mrb[0].mxu0 %v7423
        %v7530 = vpop.f32.mrb[0].mxu0
        %v7531 = vadd.f32 %v7462, %v7530
        %v7532 = vpop.f32.mrb[0].mxu0
        %7533 = vdwg.mxu0
        %v7534 = vxor.u32 %v7531, 2147483648
        %v7535 = vmul.f32 %v7534, 1.442695
        %v7536 = vpow.pop %v7535
        %v7537 = vadd.f32 %v7536, 1.0
        %v7538 = vrcp.pop %v7537
        %v7539 = vmul.f32 1.0, %v7538
        %7541 = vset.pattern.permute.xlu0 0
        %7542 = vperm.xlu0 %7541, %v7539
        %v7543 = vpop.permute.xlu0 %7542
        %7545 = vst [vmem:[%s706] sm:$0xff] %v7543
        %p7546 = scmp.lt.s32.totalorder %s36, 1
        %s7547 = scalar_select %p7546, %s36, 1
        %s7548 = smul.addr %s7547, 8
        %s7549 = scalar_lea.vmem %s21, %s7548
        // Predicated region
        $region113: #{forward.1} parent=103 // pred_check
          %p7550 = pneg %p505
        $region114: #{forward.1} parent=103 // pred_check_branch
          %7552 = sbr.rel (%p7550) target = $region116
        $region115: #{forward.1} parent=103 // pred_region
          _
        $region116: #{forward.1} parent=103 // pred_fallthru
          _
      $region104: #{forward.1} parent=5 // pred_fallthru
        _
      %p7553 = scmp.le.s32.totalorder 2, %s31
      // Predicated region
      $region117: #{forward.1} parent=5 // pred_check
        %p7554 = pneg %p7553
      $region118: #{forward.1} parent=5 // pred_check_branch
        %7556 = sbr.rel (%p7554) target = $region120
      $region119: #{forward.1} parent=5 // pred_region
        %s7557 = ssub.s32 %s31, 2
        // Predicated region
        $region121: #{forward.1} parent=119 // pred_check
          %p7558 = pneg %p511
        $region122: #{forward.1} parent=119 // pred_check_branch
          %7560 = sbr.rel (%p7558) target = $region124
        $region123: #{forward.1} parent=119 // pred_region
          %p7561 = scmp.lt.s32.totalorder %s37, 1
          %s7562 = scalar_select %p7561, %s37, 1
          %s7563 = smul.addr %s7562, 8
          %s7564 = scalar_lea.vmem %s21, %s7563
        $region124: #{forward.1} parent=119 // pred_fallthru
          _
      $region120: #{forward.1} parent=5 // pred_fallthru
        _
    $region6: #{forward.1} parent=1 // loop_footer
      %s35 = sadd.s32 1, %s31
    $region7: #{forward.1} parent=1 // loop_footer_branch
      %30 = sbr.rel target = $region3
    $region8: #{forward.1} parent=1 // loop_exit
      _
    %7565 = vsyncpa [#allocation4], 1
    %s7566 = scalar_lea.sflag [#allocation4], 1
    %7567 = vsyncpa %s7566, 1
    %7568 = vsyncpa [#allocation6], 1

</llo_original>
